<compile_context>
chip_gen: v5e
topology: v5e:2x2
jax: 0.10.0
libtpu: 0.0.40
codegen_flags: <defaults>
</compile_context>

<pallas_src>
import functools

import jax
import jax.numpy as jnp
from jax.experimental import pallas as pl
from jax.experimental.pallas import tpu as pltpu

LANE = 128
_VMEM_LIMIT = 32 << 20  # 32 MiB scoped VMEM: safe on v7x (64 MiB/TC) and v5e/v6e.


def _round_up(x, m):
    return (x + m - 1) // m * m


def _pick_tm(m, cap):
    """Row-tile size: biggest tile <= cap, but split M into >= 2 grid steps when
    possible so both of v7x's TensorCores get work on the 'parallel' axis."""
    half = -(-m // 2)  # cdiv(m, 2)
    return min(cap, _round_up(max(half, 8), 8))


# ----------------------------------------------------------------------------
# Kernel 1: tiled relu(X @ W + b) for the conv layers (after im2col).
#   grid over M rows only; full K and true-OC (unpadded) bf16 output per step.
# ----------------------------------------------------------------------------
def _matmul_bias_relu_kernel(x_ref, w_ref, b_ref, o_ref):
    acc = jnp.dot(x_ref[...], w_ref[...], preferred_element_type=jnp.float32)
    o_ref[...] = jnp.maximum(acc + b_ref[...], 0.0).astype(o_ref.dtype)


def matmul_bias_relu(x, w, b, *, cap=512):
    """x: (M, K) bf16, w: (K, OC) bf16, b: (1, OC) f32 -> (M, OC) bf16."""
    M, K = x.shape
    K2, N = w.shape
    assert K == K2, (x.shape, w.shape)
    tm = _pick_tm(M, cap)
    return pl.pallas_call(
        _matmul_bias_relu_kernel,
        out_shape=jax.ShapeDtypeStruct((M, N), jnp.bfloat16),
        grid_spec=pltpu.PrefetchScalarGridSpec(
            num_scalar_prefetch=0,
            grid=(pl.cdiv(M, tm),),
            in_specs=[
                pl.BlockSpec((tm, K), lambda i: (i, 0)),   # row tile of patches
                pl.BlockSpec((K, N), lambda i: (0, 0)),    # whole weight (resident)
                pl.BlockSpec((1, N), lambda i: (0, 0)),    # bias row
            ],
            out_specs=pl.BlockSpec((tm, N), lambda i: (i, 0)),
        ),
        compiler_params=pltpu.CompilerParams(
            dimension_semantics=("parallel",),
            vmem_limit_bytes=_VMEM_LIMIT,
        ),
    )(x, w, b)


# ----------------------------------------------------------------------------
# Kernel 2: fused MLP head  out = relu(X @ W1 + b1) @ W2 + b2
#   hidden activation never leaves vregs/VMEM (no scratch round trip, no HBM).
# ----------------------------------------------------------------------------
def _mlp_head_kernel(x_ref, w1_ref, b1_ref, w2_ref, b2_ref, o_ref):
    h = jnp.dot(x_ref[...], w1_ref[...], preferred_element_type=jnp.float32)
    h = jnp.maximum(h + b1_ref[...], 0.0).astype(jnp.bfloat16)
    acc = jnp.dot(h, w2_ref[...], preferred_element_type=jnp.float32)
    o_ref[...] = (acc + b2_ref[...]).astype(o_ref.dtype)


def mlp_head(x, w1, b1, w2, b2, *, cap=512):
    """x: (M, K) bf16, w1: (K, H) bf16, b1: (1, H) f32,
       w2: (H, Npad) bf16, b2: (1, Npad) f32 -> (M, Npad) f32."""
    M, K = x.shape
    K1, H = w1.shape
    H2, N = w2.shape
    assert K == K1 and H == H2 and N % LANE == 0
    tm = _pick_tm(M, cap)
    return pl.pallas_call(
        _mlp_head_kernel,
        out_shape=jax.ShapeDtypeStruct((M, N), jnp.float32),
        grid_spec=pltpu.PrefetchScalarGridSpec(
            num_scalar_prefetch=0,
            grid=(pl.cdiv(M, tm),),
            in_specs=[
                pl.BlockSpec((tm, K), lambda i: (i, 0)),
                pl.BlockSpec((K, H), lambda i: (0, 0)),
                pl.BlockSpec((1, H), lambda i: (0, 0)),
                pl.BlockSpec((H, N), lambda i: (0, 0)),
                pl.BlockSpec((1, N), lambda i: (0, 0)),
            ],
            out_specs=pl.BlockSpec((tm, N), lambda i: (i, 0)),
        ),
        compiler_params=pltpu.CompilerParams(
            dimension_semantics=("parallel",),
            vmem_limit_bytes=_VMEM_LIMIT,
        ),
    )(x, w1, b1, w2, b2)


# ----------------------------------------------------------------------------
# Conv2d (VALID, stride s) = NHWC im2col in bf16 (XLA glue, no transposes)
# + kernel 1.  Output stays NHWC bf16 at the true channel count.
# ----------------------------------------------------------------------------
def _im2col_nhwc(x, kh, kw, stride):
    B, H, W, C = x.shape
    oh = (H - kh) // stride + 1
    ow = (W - kw) // stride + 1
    cols = []
    for i in range(kh):
        for j in range(kw):
            cols.append(x[:, i:i + stride * oh:stride, j:j + stride * ow:stride, :])
    patches = jnp.stack(cols, axis=3)                       # (B, OH, OW, KH*KW, C)
    patches = patches.reshape(B * oh * ow, kh * kw * C)     # (kh, kw, ic) minor order
    return patches, oh, ow


def conv2d_nhwc(x, w_mat, b_row, kh, kw, stride, *, cap=512):
    B = x.shape[0]
    oc = w_mat.shape[1]
    patches, oh, ow = _im2col_nhwc(x, kh, kw, stride)        # bf16 patches
    out = matmul_bias_relu(patches, w_mat, b_row, cap=cap)   # (M, OC) bf16
    return out.reshape(B, oh, ow, oc)                        # NHWC, no pad, no slice


# ----------------------------------------------------------------------------
# Parameters: torch-style init, then a one-time "prepare" into kernel layout
# (NHWC-ordered bf16 weights at true OC; f32 bias rows; only l2 is lane-padded).
# ----------------------------------------------------------------------------
def init_conv_q_params(key, frames, num_actions):
    def uinit(k, shape, fan_in):
        bound = 1.0 / (fan_in ** 0.5)
        return jax.random.uniform(k, shape, jnp.float32, -bound, bound)

    ks = jax.random.split(key, 10)
    p = {}
    p["c1_w"] = uinit(ks[0], (32, frames, 8, 8), frames * 8 * 8)
    p["c1_b"] = uinit(ks[1], (32,), frames * 8 * 8)
    p["c2_w"] = uinit(ks[2], (64, 32, 4, 4), 32 * 4 * 4)
    p["c2_b"] = uinit(ks[3], (64,), 32 * 4 * 4)
    p["c3_w"] = uinit(ks[4], (64, 64, 3, 3), 64 * 3 * 3)
    p["c3_b"] = uinit(ks[5], (64,), 64 * 3 * 3)
    p["l1_w"] = uinit(ks[6], (512, 3136), 3136)    # torch Linear layout: (out, in)
    p["l1_b"] = uinit(ks[7], (512,), 3136)
    p["l2_w"] = uinit(ks[8], (num_actions, 512), 512)
    p["l2_b"] = uinit(ks[9], (512,) and (num_actions,), 512)
    return p


def prepare_params(params, num_actions):
    """One-time weight permutation / bf16 cast for the kernels."""
    def conv_mat(w, b):
        oc, ic, kh, kw = w.shape
        k = kh * kw * ic
        w_mat = w.transpose(2, 3, 1, 0).reshape(k, oc).astype(jnp.bfloat16)  # (kh,kw,ic,oc)
        b_row = b.reshape(1, oc).astype(jnp.float32)
        return w_mat, b_row

    prep = {}
    prep["c1_w"], prep["c1_b"] = conv_mat(params["c1_w"], params["c1_b"])
    prep["c2_w"], prep["c2_b"] = conv_mat(params["c2_w"], params["c2_b"])
    prep["c3_w"], prep["c3_b"] = conv_mat(params["c3_w"], params["c3_b"])

    # torch flattens NCHW (C-major); our activations stay NHWC, so permute l1's
    # 3136 input columns once from (C=64, H=7, W=7) to (H, W, C).
    l1_w = params["l1_w"].reshape(512, 64, 7, 7).transpose(0, 2, 3, 1).reshape(512, 3136)
    prep["l1_w"] = l1_w.T.astype(jnp.bfloat16)                        # (3136, 512)
    prep["l1_b"] = params["l1_b"].reshape(1, 512).astype(jnp.float32)

    # Final layer keeps a 128-lane pad (lane-dense store; padding is negligible).
    n_pad = _round_up(num_actions, LANE)
    l2_w = params["l2_w"].T                                           # (512, A)
    prep["l2_w"] = jnp.pad(l2_w, ((0, 0), (0, n_pad - num_actions))).astype(jnp.bfloat16)
    prep["l2_b"] = jnp.pad(params["l2_b"], (0, n_pad - num_actions)
                           ).reshape(1, n_pad).astype(jnp.float32)
    return prep


# ----------------------------------------------------------------------------
# Forward pass (mirrors Conv_Q.forward; input is NCHW like the PyTorch module).
# ----------------------------------------------------------------------------
def conv_q_forward(prep, state, *, num_actions):
    # Cast to bf16 BEFORE the layout change and patch build (halves HBM traffic).
    q = state.astype(jnp.bfloat16).transpose(0, 2, 3, 1)              # NCHW -> NHWC once
    q = conv2d_nhwc(q, prep["c1_w"], prep["c1_b"], 8, 8, 4)           # (B, 20, 20, 32)
    q = conv2d_nhwc(q, prep["c2_w"], prep["c2_b"], 4, 4, 2)           # (B,  9,  9, 64)
    q = conv2d_nhwc(q, prep["c3_w"], prep["c3_b"], 3, 3, 1)           # (B,  7,  7, 64)
    B = q.shape[0]
    feat = q.reshape(B, -1)                                           # (B, 3136) HWC-major, bf16
    out = mlp_head(feat, prep["l1_w"], prep["l1_b"], prep["l2_w"], prep["l2_b"])
    return out[:, :num_actions]


# Pure-JAX f32 reference (torch semantics) for the correctness check.
def conv_q_reference(params, state):
    def conv(x, w, b, s):
        y = jax.lax.conv_general_dilated(
            x, w, window_strides=(s, s), padding="VALID",
            dimension_numbers=("NCHW", "OIHW", "NCHW"))
        return jax.nn.relu(y + b[None, :, None, None])

    q = conv(state, params["c1_w"], params["c1_b"], 4)
    q = conv(q, params["c2_w"], params["c2_b"], 2)
    q = conv(q, params["c3_w"], params["c3_b"], 1)
    q = q.reshape(q.shape[0], -1)
    q = jax.nn.relu(q @ params["l1_w"].T + params["l1_b"])
    return q @ params["l2_w"].T + params["l2_b"]


if __name__ == "__main__":
    frames, num_actions = 4, 6
    batch = 2    # spatial must be 84x84 so the conv tower yields 64*7*7 = 3136 features

    key = jax.random.PRNGKey(0)
    k_params, k_x = jax.random.split(key)
    params = init_conv_q_params(k_params, frames, num_actions)
    prep = prepare_params(params, num_actions)
    x = jax.random.normal(k_x, (batch, frames, 84, 84), dtype=jnp.float32)

    fwd = jax.jit(functools.partial(conv_q_forward, num_actions=num_actions))
    out = jax.block_until_ready(fwd(prep, x))
    assert out.shape == (batch, num_actions), out.shape

    ref = jax.block_until_ready(jax.jit(conv_q_reference)(params, x))
    # bf16 operands / bf16 inter-layer activations (f32 MXU accumulation) ->
    # loosened tolerance vs the f32 reference.
    max_err = float(jnp.max(jnp.abs(out - ref)))
    scale = float(jnp.max(jnp.abs(ref)))
    assert max_err <= 0.05 * scale + 1e-2, (max_err, scale)

    print("KERNEL_OK")
</pallas_src>

<mosaic_0001>
module attributes {stable_mosaic.version = 11 : i64} {
  func.func @_matmul_bias_relu_kernel(%arg0: i32, %arg1: memref<400x256xbf16, #tpu.memory_space<vmem>>, %arg2: memref<256x32xbf16, #tpu.memory_space<vmem>>, %arg3: memref<1x32xf32, #tpu.memory_space<vmem>>, %arg4: memref<400x32xbf16, #tpu.memory_space<vmem>>) attributes {dimension_semantics = [#tpu.dimension_semantics<parallel>], iteration_bounds = array<i64: 2>, scalar_prefetch = 0 : i64, scratch_operands = 0 : i64, tpu.core_type = #tpu.core_type<tc>, window_params = [{transform_indices = @transform_0, window_bounds = array<i64: 400, 256>}, {pipeline_mode = #tpu.pipeline_mode<synchronous>, transform_indices = @transform_1, window_bounds = array<i64: 256, 32>}, {pipeline_mode = #tpu.pipeline_mode<synchronous>, transform_indices = @transform_2, window_bounds = array<i64: 1, 32>}, {transform_indices = @transform_3, window_bounds = array<i64: 400, 32>}]} {
    %c0 = arith.constant 0 : index
    %c0_0 = arith.constant 0 : index
    %0 = vector.load %arg1[%c0, %c0_0] : memref<400x256xbf16, #tpu.memory_space<vmem>>, vector<400x256xbf16>
    %c0_1 = arith.constant 0 : index
    %c0_2 = arith.constant 0 : index
    %1 = vector.load %arg2[%c0_1, %c0_2] : memref<256x32xbf16, #tpu.memory_space<vmem>>, vector<256x32xbf16>
    %cst = arith.constant dense<0.000000e+00> : vector<400x32xf32>
    %2 = tpu.matmul %0, %1, %cst {dimension_numbers = #tpu.dot_dimension_numbers<[1], [0], [0], [1], [0, 0, 1, 1], [], []>} : vector<400x256xbf16>, vector<256x32xbf16>, vector<400x32xf32> -> vector<400x32xf32>
    %c0_3 = arith.constant 0 : index
    %c0_4 = arith.constant 0 : index
    %3 = vector.load %arg3[%c0_3, %c0_4] : memref<1x32xf32, #tpu.memory_space<vmem>>, vector<1x32xf32>
    %4 = vector.broadcast %3 : vector<1x32xf32> to vector<400x32xf32>
    %5 = arith.addf %2, %4 : vector<400x32xf32>
    %cst_5 = arith.constant 0.000000e+00 : f32
    %6 = vector.broadcast %cst_5 : f32 to vector<400x32xf32>
    %7 = arith.maximumf %5, %6 : vector<400x32xf32>
    %8 = arith.truncf %7 : vector<400x32xf32> to vector<400x32xbf16>
    %c0_6 = arith.constant 0 : index
    %c0_7 = arith.constant 0 : index
    %9 = vector.load %arg4[%c0_6, %c0_7] : memref<400x32xbf16, #tpu.memory_space<vmem>>, vector<400x32xbf16>
    tpu.vector_store %arg4[%c0_6, %c0_7], %8 {strides = array<i32>} : memref<400x32xbf16, #tpu.memory_space<vmem>>, vector<400x32xbf16>,
    return
  }
  func.func @transform_0(%arg0: i32) -> (i32, i32) {
    %c0_i32 = arith.constant 0 : i32
    %c0_i32_0 = arith.constant 0 : i32
    return %arg0, %c0_i32 : i32, i32
  }
  func.func @transform_1(%arg0: i32) -> (i32, i32) {
    %c0_i32 = arith.constant 0 : i32
    %c0_i32_0 = arith.constant 0 : i32
    %c0_i32_1 = arith.constant 0 : i32
    return %c0_i32, %c0_i32_0 : i32, i32
  }
  func.func @transform_2(%arg0: i32) -> (i32, i32) {
    %c0_i32 = arith.constant 0 : i32
    %c0_i32_0 = arith.constant 0 : i32
    %c0_i32_1 = arith.constant 0 : i32
    return %c0_i32, %c0_i32_0 : i32, i32
  }
  func.func @transform_3(%arg0: i32) -> (i32, i32) {
    %c0_i32 = arith.constant 0 : i32
    %c0_i32_0 = arith.constant 0 : i32
    return %arg0, %c0_i32 : i32, i32
  }
}

module attributes {stable_mosaic.version = 11 : i64} {
  func.func @_matmul_bias_relu_kernel(%arg0: i32, %arg1: memref<88x512xbf16, #tpu.memory_space<vmem>>, %arg2: memref<512x64xbf16, #tpu.memory_space<vmem>>, %arg3: memref<1x64xf32, #tpu.memory_space<vmem>>, %arg4: memref<88x64xbf16, #tpu.memory_space<vmem>>) attributes {dimension_semantics = [#tpu.dimension_semantics<parallel>], iteration_bounds = array<i64: 2>, scalar_prefetch = 0 : i64, scratch_operands = 0 : i64, tpu.core_type = #tpu.core_type<tc>, window_params = [{transform_indices = @transform_0, window_bounds = array<i64: 88, 512>}, {pipeline_mode = #tpu.pipeline_mode<synchronous>, transform_indices = @transform_1, window_bounds = array<i64: 512, 64>}, {pipeline_mode = #tpu.pipeline_mode<synchronous>, transform_indices = @transform_2, window_bounds = array<i64: 1, 64>}, {transform_indices = @transform_3, window_bounds = array<i64: 88, 64>}]} {
    %c0 = arith.constant 0 : index
    %c0_0 = arith.constant 0 : index
    %0 = vector.load %arg1[%c0, %c0_0] : memref<88x512xbf16, #tpu.memory_space<vmem>>, vector<88x512xbf16>
    %c0_1 = arith.constant 0 : index
    %c0_2 = arith.constant 0 : index
    %1 = vector.load %arg2[%c0_1, %c0_2] : memref<512x64xbf16, #tpu.memory_space<vmem>>, vector<512x64xbf16>
    %cst = arith.constant dense<0.000000e+00> : vector<88x64xf32>
    %2 = tpu.matmul %0, %1, %cst {dimension_numbers = #tpu.dot_dimension_numbers<[1], [0], [0], [1], [0, 0, 1, 1], [], []>} : vector<88x512xbf16>, vector<512x64xbf16>, vector<88x64xf32> -> vector<88x64xf32>
    %c0_3 = arith.constant 0 : index
    %c0_4 = arith.constant 0 : index
    %3 = vector.load %arg3[%c0_3, %c0_4] : memref<1x64xf32, #tpu.memory_space<vmem>>, vector<1x64xf32>
    %4 = vector.broadcast %3 : vector<1x64xf32> to vector<88x64xf32>
    %5 = arith.addf %2, %4 : vector<88x64xf32>
    %cst_5 = arith.constant 0.000000e+00 : f32
    %6 = vector.broadcast %cst_5 : f32 to vector<88x64xf32>
    %7 = arith.maximumf %5, %6 : vector<88x64xf32>
    %8 = arith.truncf %7 : vector<88x64xf32> to vector<88x64xbf16>
    %c0_6 = arith.constant 0 : index
    %c0_7 = arith.constant 0 : index
    %9 = vector.load %arg4[%c0_6, %c0_7] : memref<88x64xbf16, #tpu.memory_space<vmem>>, vector<88x64xbf16>
    tpu.vector_store %arg4[%c0_6, %c0_7], %8 {strides = array<i32>} : memref<88x64xbf16, #tpu.memory_space<vmem>>, vector<88x64xbf16>,
    return
  }
  func.func @transform_0(%arg0: i32) -> (i32, i32) {
    %c0_i32 = arith.constant 0 : i32
    %c0_i32_0 = arith.constant 0 : i32
    return %arg0, %c0_i32 : i32, i32
  }
  func.func @transform_1(%arg0: i32) -> (i32, i32) {
    %c0_i32 = arith.constant 0 : i32
    %c0_i32_0 = arith.constant 0 : i32
    %c0_i32_1 = arith.constant 0 : i32
    return %c0_i32, %c0_i32_0 : i32, i32
  }
  func.func @transform_2(%arg0: i32) -> (i32, i32) {
    %c0_i32 = arith.constant 0 : i32
    %c0_i32_0 = arith.constant 0 : i32
    %c0_i32_1 = arith.constant 0 : i32
    return %c0_i32, %c0_i32_0 : i32, i32
  }
  func.func @transform_3(%arg0: i32) -> (i32, i32) {
    %c0_i32 = arith.constant 0 : i32
    %c0_i32_0 = arith.constant 0 : i32
    return %arg0, %c0_i32 : i32, i32
  }
}

module attributes {stable_mosaic.version = 11 : i64} {
  func.func @_matmul_bias_relu_kernel(%arg0: i32, %arg1: memref<56x576xbf16, #tpu.memory_space<vmem>>, %arg2: memref<576x64xbf16, #tpu.memory_space<vmem>>, %arg3: memref<1x64xf32, #tpu.memory_space<vmem>>, %arg4: memref<56x64xbf16, #tpu.memory_space<vmem>>) attributes {dimension_semantics = [#tpu.dimension_semantics<parallel>], iteration_bounds = array<i64: 2>, scalar_prefetch = 0 : i64, scratch_operands = 0 : i64, tpu.core_type = #tpu.core_type<tc>, window_params = [{transform_indices = @transform_0, window_bounds = array<i64: 56, 576>}, {pipeline_mode = #tpu.pipeline_mode<synchronous>, transform_indices = @transform_1, window_bounds = array<i64: 576, 64>}, {pipeline_mode = #tpu.pipeline_mode<synchronous>, transform_indices = @transform_2, window_bounds = array<i64: 1, 64>}, {transform_indices = @transform_3, window_bounds = array<i64: 56, 64>}]} {
    %c0 = arith.constant 0 : index
    %c0_0 = arith.constant 0 : index
    %0 = vector.load %arg1[%c0, %c0_0] : memref<56x576xbf16, #tpu.memory_space<vmem>>, vector<56x576xbf16>
    %c0_1 = arith.constant 0 : index
    %c0_2 = arith.constant 0 : index
    %1 = vector.load %arg2[%c0_1, %c0_2] : memref<576x64xbf16, #tpu.memory_space<vmem>>, vector<576x64xbf16>
    %cst = arith.constant dense<0.000000e+00> : vector<56x64xf32>
    %2 = tpu.matmul %0, %1, %cst {dimension_numbers = #tpu.dot_dimension_numbers<[1], [0], [0], [1], [0, 0, 1, 1], [], []>} : vector<56x576xbf16>, vector<576x64xbf16>, vector<56x64xf32> -> vector<56x64xf32>
    %c0_3 = arith.constant 0 : index
    %c0_4 = arith.constant 0 : index
    %3 = vector.load %arg3[%c0_3, %c0_4] : memref<1x64xf32, #tpu.memory_space<vmem>>, vector<1x64xf32>
    %4 = vector.broadcast %3 : vector<1x64xf32> to vector<56x64xf32>
    %5 = arith.addf %2, %4 : vector<56x64xf32>
    %cst_5 = arith.constant 0.000000e+00 : f32
    %6 = vector.broadcast %cst_5 : f32 to vector<56x64xf32>
    %7 = arith.maximumf %5, %6 : vector<56x64xf32>
    %8 = arith.truncf %7 : vector<56x64xf32> to vector<56x64xbf16>
    %c0_6 = arith.constant 0 : index
    %c0_7 = arith.constant 0 : index
    %9 = vector.load %arg4[%c0_6, %c0_7] : memref<56x64xbf16, #tpu.memory_space<vmem>>, vector<56x64xbf16>
    tpu.vector_store %arg4[%c0_6, %c0_7], %8 {strides = array<i32>} : memref<56x64xbf16, #tpu.memory_space<vmem>>, vector<56x64xbf16>,
    return
  }
  func.func @transform_0(%arg0: i32) -> (i32, i32) {
    %c0_i32 = arith.constant 0 : i32
    %c0_i32_0 = arith.constant 0 : i32
    return %arg0, %c0_i32 : i32, i32
  }
  func.func @transform_1(%arg0: i32) -> (i32, i32) {
    %c0_i32 = arith.constant 0 : i32
    %c0_i32_0 = arith.constant 0 : i32
    %c0_i32_1 = arith.constant 0 : i32
    return %c0_i32, %c0_i32_0 : i32, i32
  }
  func.func @transform_2(%arg0: i32) -> (i32, i32) {
    %c0_i32 = arith.constant 0 : i32
    %c0_i32_0 = arith.constant 0 : i32
    %c0_i32_1 = arith.constant 0 : i32
    return %c0_i32, %c0_i32_0 : i32, i32
  }
  func.func @transform_3(%arg0: i32) -> (i32, i32) {
    %c0_i32 = arith.constant 0 : i32
    %c0_i32_0 = arith.constant 0 : i32
    return %arg0, %c0_i32 : i32, i32
  }
}

module attributes {stable_mosaic.version = 11 : i64} {
  func.func @_mlp_head_kernel(%arg0: i32, %arg1: memref<8x3136xbf16, #tpu.memory_space<vmem>>, %arg2: memref<3136x512xbf16, #tpu.memory_space<vmem>>, %arg3: memref<1x512xf32, #tpu.memory_space<vmem>>, %arg4: memref<512x128xbf16, #tpu.memory_space<vmem>>, %arg5: memref<1x128xf32, #tpu.memory_space<vmem>>, %arg6: memref<8x128xf32, #tpu.memory_space<vmem>>) attributes {dimension_semantics = [#tpu.dimension_semantics<parallel>], iteration_bounds = array<i64: 1>, scalar_prefetch = 0 : i64, scratch_operands = 0 : i64, tpu.core_type = #tpu.core_type<tc>, window_params = [{transform_indices = @transform_0, window_bounds = array<i64: 8, 3136>}, {pipeline_mode = #tpu.pipeline_mode<synchronous>, transform_indices = @transform_1, window_bounds = array<i64: 3136, 512>}, {pipeline_mode = #tpu.pipeline_mode<synchronous>, transform_indices = @transform_2, window_bounds = array<i64: 1, 512>}, {pipeline_mode = #tpu.pipeline_mode<synchronous>, transform_indices = @transform_3, window_bounds = array<i64: 512, 128>}, {pipeline_mode = #tpu.pipeline_mode<synchronous>, transform_indices = @transform_4, window_bounds = array<i64: 1, 128>}, {transform_indices = @transform_5, window_bounds = array<i64: 8, 128>}]} {
    %c0 = arith.constant 0 : index
    %c0_0 = arith.constant 0 : index
    %0 = vector.load %arg1[%c0, %c0_0] : memref<8x3136xbf16, #tpu.memory_space<vmem>>, vector<8x3136xbf16>
    %c0_1 = arith.constant 0 : index
    %c0_2 = arith.constant 0 : index
    %1 = vector.load %arg2[%c0_1, %c0_2] : memref<3136x512xbf16, #tpu.memory_space<vmem>>, vector<3136x512xbf16>
    %cst = arith.constant dense<0.000000e+00> : vector<8x512xf32>
    %2 = tpu.matmul %0, %1, %cst {dimension_numbers = #tpu.dot_dimension_numbers<[1], [0], [0], [1], [0, 0, 1, 1], [], []>} : vector<8x3136xbf16>, vector<3136x512xbf16>, vector<8x512xf32> -> vector<8x512xf32>
    %c0_3 = arith.constant 0 : index
    %c0_4 = arith.constant 0 : index
    %3 = vector.load %arg3[%c0_3, %c0_4] : memref<1x512xf32, #tpu.memory_space<vmem>>, vector<1x512xf32>
    %4 = vector.broadcast %3 : vector<1x512xf32> to vector<8x512xf32>
    %5 = arith.addf %2, %4 : vector<8x512xf32>
    %cst_5 = arith.constant 0.000000e+00 : f32
    %6 = vector.broadcast %cst_5 : f32 to vector<8x512xf32>
    %7 = arith.maximumf %5, %6 : vector<8x512xf32>
    %8 = arith.truncf %7 : vector<8x512xf32> to vector<8x512xbf16>
    %c0_6 = arith.constant 0 : index
    %c0_7 = arith.constant 0 : index
    %9 = vector.load %arg4[%c0_6, %c0_7] : memref<512x128xbf16, #tpu.memory_space<vmem>>, vector<512x128xbf16>
    %cst_8 = arith.constant dense<0.000000e+00> : vector<8x128xf32>
    %10 = tpu.matmul %8, %9, %cst_8 {dimension_numbers = #tpu.dot_dimension_numbers<[1], [0], [0], [1], [0, 0, 1, 1], [], []>} : vector<8x512xbf16>, vector<512x128xbf16>, vector<8x128xf32> -> vector<8x128xf32>
    %c0_9 = arith.constant 0 : index
    %c0_10 = arith.constant 0 : index
    %11 = vector.load %arg5[%c0_9, %c0_10] : memref<1x128xf32, #tpu.memory_space<vmem>>, vector<1x128xf32>
    %12 = vector.broadcast %11 : vector<1x128xf32> to vector<8x128xf32>
    %13 = arith.addf %10, %12 : vector<8x128xf32>
    %c0_11 = arith.constant 0 : index
    %c0_12 = arith.constant 0 : index
    %14 = vector.load %arg6[%c0_11, %c0_12] : memref<8x128xf32, #tpu.memory_space<vmem>>, vector<8x128xf32>
    tpu.vector_store %arg6[%c0_11, %c0_12], %13 {strides = array<i32>} : memref<8x128xf32, #tpu.memory_space<vmem>>, vector<8x128xf32>,
    return
  }
  func.func @transform_0(%arg0: i32) -> (i32, i32) {
    %c0_i32 = arith.constant 0 : i32
    %c0_i32_0 = arith.constant 0 : i32
    return %arg0, %c0_i32 : i32, i32
  }
  func.func @transform_1(%arg0: i32) -> (i32, i32) {
    %c0_i32 = arith.constant 0 : i32
    %c0_i32_0 = arith.constant 0 : i32
    %c0_i32_1 = arith.constant 0 : i32
    return %c0_i32, %c0_i32_0 : i32, i32
  }
  func.func @transform_2(%arg0: i32) -> (i32, i32) {
    %c0_i32 = arith.constant 0 : i32
    %c0_i32_0 = arith.constant 0 : i32
    %c0_i32_1 = arith.constant 0 : i32
    return %c0_i32, %c0_i32_0 : i32, i32
  }
  func.func @transform_3(%arg0: i32) -> (i32, i32) {
    %c0_i32 = arith.constant 0 : i32
    %c0_i32_0 = arith.constant 0 : i32
    %c0_i32_1 = arith.constant 0 : i32
    return %c0_i32, %c0_i32_0 : i32, i32
  }
  func.func @transform_4(%arg0: i32) -> (i32, i32) {
    %c0_i32 = arith.constant 0 : i32
    %c0_i32_0 = arith.constant 0 : i32
    %c0_i32_1 = arith.constant 0 : i32
    return %c0_i32, %c0_i32_0 : i32, i32
  }
  func.func @transform_5(%arg0: i32) -> (i32, i32) {
    %c0_i32 = arith.constant 0 : i32
    %c0_i32_0 = arith.constant 0 : i32
    return %arg0, %c0_i32 : i32, i32
  }
}

</mosaic_0001>

<llo_original>
// kernel: conv_q_forward.4
$region0: #{conv_q_forward.4}
  #allocation0 [shape = 'u32[]', space=smem, size = 0x4, offset = 0x4, fixed_abs, tag = 'smem constant byte address 0x4 - core index']
  #allocation1 [shape = 'u32[72,128]{1,0:T(1,128)}', space=vmem, size = 0x9000, scoped, tag = 'internal scratch']
  %s0 = inlined_call_operand.vmem [shape: bf16[800,256], index: 0, kind: input, shape index: {}]
  %s1 = inlined_call_operand.vmem [shape: bf16[256,32], index: 1, kind: input, shape index: {}]
  %s2 = inlined_call_operand.vmem [shape: f32[1,32], index: 2, kind: input, shape index: {}]
  %s3 = inlined_call_operand.vmem [shape: bf16[800,32], index: 3, kind: output, shape index: {}]
  %s4 = sld [smem:[#allocation0]]
  $region45: #{conv_q_forward.4} parent=0
    _
  %s6 = ssub.s32 1, %s4
  %s7 = scalar_select 0, %s6, %s4
  loop: start=0, step=1, limit=4
  $region2: #{conv_q_forward.4} parent=0 // loop_pre_header
    _
  $region3: #{conv_q_forward.4} parent=0 // loop_header
    %s9 = sphi 0, %s13
    %p10 = scmp.ge.s32.totalorder %s9, 4
    %s19 = sphi 0, %s21
    %s22 = sphi 0, %s19
    %s23 = sphi 0, %s22
    %s39 = sphi 0, %s23
    %s43 = sphi 0, %s43
    %s45 = sphi 0, %s43
    %s46 = sphi 0, %s45
    %s60 = sphi 0, %s46
    %s64 = sphi 0, %s64
    %s66 = sphi 0, %s64
    %s67 = sphi 0, %s66
    %s81 = sphi 0, %s67
    %s87 = sphi 0, %s89
    %s90 = sphi 0, %s87
    %s91 = sphi 0, %s90
    %s107 = sphi 0, %s91
  $region4: #{conv_q_forward.4} parent=0 // loop_header_branch
    %12 = sbr.rel (%p10) target = $region8
  $region5: #{conv_q_forward.4} parent=0 // loop_body
    %s14 = ssub.s32 %s9, 1
    %s15 = ssub.s32 %s9, 2
    %s16 = sadd.s32 %s9, 1
    %s17 = ssub.s32 %s9, %s16
    %p18 = scmp.eq.s32.totalorder %s17, 0
    %s20 = sadd.s32 %s19, 1
    %s21 = scalar_select %p18, %s19, %s20
    %p24 = pneg %p18
    %p25 = scmp.eq.s32.totalorder %s9, 1
    %p26 = por %p24, %p25
    %p27 = scmp.ne.s32.totalorder %s19, %s22
    %p28 = scmp.eq.s32.totalorder %s9, 0
    %p29 = por %p27, %p28
    %p30 = scmp.ne.s32.totalorder %s19, %s22
    %p31 = scmp.eq.s32.totalorder %s14, 1
    %p32 = por %p30, %p31
    %p33 = scmp.ne.s32.totalorder %s22, %s23
    %p34 = scmp.eq.s32.totalorder %s14, 0
    %p35 = por %p33, %p34
    %p36 = scmp.ne.s32.totalorder %s22, %s23
    %p37 = scmp.eq.s32.totalorder %s15, 1
    %p38 = por %p36, %p37
    %p40 = scmp.ne.s32.totalorder %s23, %s39
    %p41 = scmp.eq.s32.totalorder %s15, 0
    %p42 = por %p40, %p41
    %s44 = sadd.s32 %s43, 1
    %p47 = scmp.eq.s32.totalorder %s9, 1
    %p48 = scmp.ne.s32.totalorder %s43, %s45
    %p49 = scmp.eq.s32.totalorder %s9, 0
    %p50 = por %p48, %p49
    %p51 = scmp.ne.s32.totalorder %s43, %s45
    %p52 = scmp.eq.s32.totalorder %s14, 1
    %p53 = por %p51, %p52
    %p54 = scmp.ne.s32.totalorder %s45, %s46
    %p55 = scmp.eq.s32.totalorder %s14, 0
    %p56 = por %p54, %p55
    %p57 = scmp.ne.s32.totalorder %s45, %s46
    %p58 = scmp.eq.s32.totalorder %s15, 1
    %p59 = por %p57, %p58
    %p61 = scmp.ne.s32.totalorder %s46, %s60
    %p62 = scmp.eq.s32.totalorder %s15, 0
    %p63 = por %p61, %p62
    %s65 = sadd.s32 %s64, 1
    %p68 = scmp.eq.s32.totalorder %s9, 1
    %p69 = scmp.ne.s32.totalorder %s64, %s66
    %p70 = scmp.eq.s32.totalorder %s9, 0
    %p71 = por %p69, %p70
    %p72 = scmp.ne.s32.totalorder %s64, %s66
    %p73 = scmp.eq.s32.totalorder %s14, 1
    %p74 = por %p72, %p73
    %p75 = scmp.ne.s32.totalorder %s66, %s67
    %p76 = scmp.eq.s32.totalorder %s14, 0
    %p77 = por %p75, %p76
    %p78 = scmp.ne.s32.totalorder %s66, %s67
    %p79 = scmp.eq.s32.totalorder %s15, 1
    %p80 = por %p78, %p79
    %p82 = scmp.ne.s32.totalorder %s67, %s81
    %p83 = scmp.eq.s32.totalorder %s15, 0
    %p84 = por %p82, %p83
    %s85 = ssub.s32 %s9, %s16
    %p86 = scmp.eq.s32.totalorder %s85, 0
    %s88 = sadd.s32 %s87, 1
    %s89 = scalar_select %p86, %s87, %s88
    %p92 = pneg %p86
    %p93 = scmp.eq.s32.totalorder %s9, 1
    %p94 = por %p92, %p93
    %p95 = scmp.ne.s32.totalorder %s87, %s90
    %p96 = scmp.eq.s32.totalorder %s9, 0
    %p97 = por %p95, %p96
    %p98 = scmp.ne.s32.totalorder %s87, %s90
    %p99 = scmp.eq.s32.totalorder %s14, 1
    %p100 = por %p98, %p99
    %p101 = scmp.ne.s32.totalorder %s90, %s91
    %p102 = scmp.eq.s32.totalorder %s14, 0
    %p103 = por %p101, %p102
    %p104 = scmp.ne.s32.totalorder %s90, %s91
    %p105 = scmp.eq.s32.totalorder %s15, 1
    %p106 = por %p104, %p105
    %p108 = scmp.ne.s32.totalorder %s91, %s107
    %p109 = scmp.eq.s32.totalorder %s15, 0
    %p110 = por %p108, %p109
    %p111 = scmp.le.s32.totalorder 1, %s9
    %p112 = scmp.lt.s32.totalorder %s9, 3
    %p113 = pnand %p111, %p112
    %p114 = pneg %p113
    // Predicated region
    $region9: #{conv_q_forward.4} parent=5 // pred_check
      _
    $region10: #{conv_q_forward.4} parent=5 // pred_check_branch
      %116 = sbr.rel (%p113) target = $region12
    $region11: #{conv_q_forward.4} parent=5 // pred_region
      %s117 = ssub.s32 %s9, 1
      // Predicated region
      $region13: #{conv_q_forward.4} parent=11 // pred_check
        %p118 = pneg %p56
      $region14: #{conv_q_forward.4} parent=11 // pred_check_branch
        %120 = sbr.rel (%p118) target = $region16
      $region15: #{conv_q_forward.4} parent=11 // pred_region
        _
      $region16: #{conv_q_forward.4} parent=11 // pred_fallthru
        _
      // Predicated region
      $region17: #{conv_q_forward.4} parent=11 // pred_check
        %p121 = pneg %p77
      $region18: #{conv_q_forward.4} parent=11 // pred_check_branch
        %123 = sbr.rel (%p121) target = $region20
      $region19: #{conv_q_forward.4} parent=11 // pred_region
        _
      $region20: #{conv_q_forward.4} parent=11 // pred_fallthru
        _
    $region12: #{conv_q_forward.4} parent=5 // pred_fallthru
      _
    %p124 = scmp.lt.s32.totalorder %s9, 2
    // Predicated region
    $region21: #{conv_q_forward.4} parent=5 // pred_check
      %p125 = pneg %p124
    $region22: #{conv_q_forward.4} parent=5 // pred_check_branch
      %127 = sbr.rel (%p125) target = $region24
    $region23: #{conv_q_forward.4} parent=5 // pred_region
      // Predicated region
      $region25: #{conv_q_forward.4} parent=23 // pred_check
        %p128 = pneg %p29
      $region26: #{conv_q_forward.4} parent=23 // pred_check_branch
        %130 = sbr.rel (%p128) target = $region28
      $region27: #{conv_q_forward.4} parent=23 // pred_region
        %s131 = smul.u32 50, %s9
        %p132 = scmp.lt.s32.totalorder %s131, 99
        %s133 = scalar_select %p132, %s131, 99
        %s134 = smul.addr %s133, 2
        %s135 = smul.addr %s134, 4
        %s136 = scalar_lea.vmem %s0, %s135
        %s137 = smul.u32 50, %s9
      $region28: #{conv_q_forward.4} parent=23 // pred_fallthru
        _
    $region24: #{conv_q_forward.4} parent=5 // pred_fallthru
      _
    %p138 = scmp.le.s32.totalorder 1, %s9
    %p139 = scmp.lt.s32.totalorder %s9, 3
    %p140 = pnand %p138, %p139
    %p141 = pneg %p140
    // Predicated region
    $region29: #{conv_q_forward.4} parent=5 // pred_check
      _
    $region30: #{conv_q_forward.4} parent=5 // pred_check_branch
      %143 = sbr.rel (%p140) target = $region32
    $region31: #{conv_q_forward.4} parent=5 // pred_region
      %s144 = ssub.s32 %s9, 1
      %s145 = smul.u32 50, %s14
      %p146 = scmp.lt.s32.totalorder %s145, 99
      %s147 = scalar_select %p146, %s145, 99
      %s148 = smul.addr %s147, 2
      %s149 = smul.addr %s148, 4
      %s150 = scalar_lea.vmem %s0, %s149
      %p151 = pneg %p35
      %p152 = pneg %p32
      %p153 = pneg %p56
      %p154 = pneg %p53
      %p155 = pneg %p77
      %p156 = pneg %p74
      %p157 = pneg %p103
      %p158 = pneg %p100
      %s159 = smul.u32 50, %s14
      %p160 = scmp.lt.s32.totalorder %s159, 99
      %s161 = scalar_select %p160, %s159, 99
      %s162 = smul.addr %s161, 4
      %s163 = scalar_lea.vmem %s3, %s162
      %s164 = smul.u32 50, %s14
      %p165 = scmp.lt.s32.totalorder %s164, 99
      %s166 = scalar_select %p165, %s164, 99
      %s167 = smul.addr %s166, 2
      %s168 = smul.addr %s167, 4
      %s169 = scalar_lea.vmem %s0, %s168
      %s170 = smul.u32 50, %s14
      %s171 = smul.u32 50, %s14
      %p172 = scmp.lt.s32.totalorder %s171, 99
      %s173 = scalar_select %p172, %s171, 99
      %s174 = smul.addr %s173, 4
      %s175 = scalar_lea.vmem %s3, %s174
      %s176 = smul.u32 50, %s14
      %v177 = vld [vmem:[%s169] sm:$0xff]
      %v178 = vld [vmem:[%s169 + $0x8] sm:$0xff]
      %v179 = vld [vmem:[%s169 + $0x10] sm:$0xff]
      %v180 = vld [vmem:[%s169 + $0x18] sm:$0xff]
      %v181 = vld [vmem:[%s169 + $0x20] sm:$0xff]
      %v182 = vld [vmem:[%s169 + $0x28] sm:$0xff]
      %v183 = vld [vmem:[%s169 + $0x30] sm:$0xff]
      %v184 = vld [vmem:[%s169 + $0x38] sm:$0xff]
      %v185 = vld [vmem:[%s169 + $0x40] sm:$0xff]
      %v186 = vld [vmem:[%s169 + $0x48] sm:$0xff]
      %v187 = vld [vmem:[%s169 + $0x50] sm:$0xff]
      %v188 = vld [vmem:[%s169 + $0x58] sm:$0xff]
      %v189 = vld [vmem:[%s169 + $0x60] sm:$0xff]
      %v190 = vld [vmem:[%s169 + $0x68] sm:$0xff]
      %v191 = vld [vmem:[%s169 + $0x70] sm:$0xff]
      %v192 = vld [vmem:[%s169 + $0x78] sm:$0xff]
      %v193 = vld [vmem:[%s169 + $0x80] sm:$0xff]
      %v194 = vld [vmem:[%s169 + $0x88] sm:$0xff]
      %v195 = vld [vmem:[%s169 + $0x90] sm:$0xff]
      %v196 = vld [vmem:[%s169 + $0x98] sm:$0xff]
      %v197 = vld [vmem:[%s169 + $0xa0] sm:$0xff]
      %v198 = vld [vmem:[%s169 + $0xa8] sm:$0xff]
      %v199 = vld [vmem:[%s169 + $0xb0] sm:$0xff]
      %v200 = vld [vmem:[%s169 + $0xb8] sm:$0xff]
      %v201 = vld [vmem:[%s169 + $0xc0] sm:$0xff]
      %v202 = vld [vmem:[%s169 + $0xc8] sm:$0xff]
      %v203 = vld [vmem:[%s169 + $0xd0] sm:$0xff]
      %v204 = vld [vmem:[%s169 + $0xd8] sm:$0xff]
      %v205 = vld [vmem:[%s169 + $0xe0] sm:$0xff]
      %v206 = vld [vmem:[%s169 + $0xe8] sm:$0xff]
      %v207 = vld [vmem:[%s169 + $0xf0] sm:$0xff]
      %v208 = vld [vmem:[%s169 + $0xf8] sm:$0xff]
      %v209 = vld [vmem:[%s169 + $0x100] sm:$0xff]
      %v210 = vld [vmem:[%s169 + $0x108] sm:$0xff]
      %v211 = vld [vmem:[%s169 + $0x110] sm:$0xff]
      %v212 = vld [vmem:[%s169 + $0x118] sm:$0xff]
      %v213 = vld [vmem:[%s169 + $0x120] sm:$0xff]
      %v214 = vld [vmem:[%s169 + $0x128] sm:$0xff]
      %v215 = vld [vmem:[%s169 + $0x130] sm:$0xff]
      %v216 = vld [vmem:[%s169 + $0x138] sm:$0xff]
      %v217 = vld [vmem:[%s169 + $0x140] sm:$0xff]
      %v218 = vld [vmem:[%s169 + $0x148] sm:$0xff]
      %v219 = vld [vmem:[%s169 + $0x150] sm:$0xff]
      %v220 = vld [vmem:[%s169 + $0x158] sm:$0xff]
      %v221 = vld [vmem:[%s169 + $0x160] sm:$0xff]
      %v222 = vld [vmem:[%s169 + $0x168] sm:$0xff]
      %v223 = vld [vmem:[%s169 + $0x170] sm:$0xff]
      %v224 = vld [vmem:[%s169 + $0x178] sm:$0xff]
      %v225 = vld [vmem:[%s169 + $0x180] sm:$0xff]
      %v226 = vld [vmem:[%s169 + $0x188] sm:$0xff]
      %v227 = vld [vmem:[%s1] sm:$0xf]
      %v228 = vld [vmem:[%s1 + $0x4] sm:$0xf]
      %v229 = vld [vmem:[%s1 + $0x8] sm:$0xf]
      %v230 = vld [vmem:[%s1 + $0xc] sm:$0xf]
      %v231 = vld [vmem:[%s1 + $0x10] sm:$0xf]
      %v232 = vld [vmem:[%s1 + $0x14] sm:$0xf]
      %v233 = vld [vmem:[%s1 + $0x18] sm:$0xf]
      %v234 = vld [vmem:[%s1 + $0x1c] sm:$0xf]
      %v235 = vld [vmem:[%s1 + $0x20] sm:$0xf]
      %v236 = vld [vmem:[%s1 + $0x24] sm:$0xf]
      %v237 = vld [vmem:[%s1 + $0x28] sm:$0xf]
      %v238 = vld [vmem:[%s1 + $0x2c] sm:$0xf]
      %v239 = vld [vmem:[%s1 + $0x30] sm:$0xf]
      %v240 = vld [vmem:[%s1 + $0x34] sm:$0xf]
      %v241 = vld [vmem:[%s1 + $0x38] sm:$0xf]
      %v242 = vld [vmem:[%s1 + $0x3c] sm:$0xf]
      %v243 = vld [vmem:[%s1 + $0x40] sm:$0xf]
      %v244 = vld [vmem:[%s1 + $0x44] sm:$0xf]
      %v245 = vld [vmem:[%s1 + $0x48] sm:$0xf]
      %v246 = vld [vmem:[%s1 + $0x4c] sm:$0xf]
      %v247 = vld [vmem:[%s1 + $0x50] sm:$0xf]
      %v248 = vld [vmem:[%s1 + $0x54] sm:$0xf]
      %v249 = vld [vmem:[%s1 + $0x58] sm:$0xf]
      %v250 = vld [vmem:[%s1 + $0x5c] sm:$0xf]
      %v251 = vld [vmem:[%s1 + $0x60] sm:$0xf]
      %v252 = vld [vmem:[%s1 + $0x64] sm:$0xf]
      %v253 = vld [vmem:[%s1 + $0x68] sm:$0xf]
      %v254 = vld [vmem:[%s1 + $0x6c] sm:$0xf]
      %v255 = vld [vmem:[%s1 + $0x70] sm:$0xf]
      %v256 = vld [vmem:[%s1 + $0x74] sm:$0xf]
      %v257 = vld [vmem:[%s1 + $0x78] sm:$0xf]
      %v258 = vld [vmem:[%s1 + $0x7c] sm:$0xf]
      %v259 = vld [vmem:[%s2] sm:$0x1]
      %v261 = vperm.slane %v259, 0
      %v313 = vunpack.c.l.b16 %v177
      %v314 = vunpack.c.h.b16 %v177
      %v315 = vunpack.c.l.b16 %v178
      %v316 = vunpack.c.h.b16 %v178
      %v317 = vunpack.c.l.b16 %v179
      %v318 = vunpack.c.h.b16 %v179
      %v319 = vunpack.c.l.b16 %v180
      %v320 = vunpack.c.h.b16 %v180
      %v321 = vunpack.c.l.b16 %v181
      %v322 = vunpack.c.h.b16 %v181
      %v323 = vunpack.c.l.b16 %v182
      %v324 = vunpack.c.h.b16 %v182
      %v325 = vunpack.c.l.b16 %v183
      %v326 = vunpack.c.h.b16 %v183
      %v327 = vunpack.c.l.b16 %v184
      %v328 = vunpack.c.h.b16 %v184
      %v329 = vunpack.c.l.b16 %v185
      %v330 = vunpack.c.h.b16 %v185
      %v331 = vunpack.c.l.b16 %v186
      %v332 = vunpack.c.h.b16 %v186
      %v333 = vunpack.c.l.b16 %v187
      %v334 = vunpack.c.h.b16 %v187
      %v335 = vunpack.c.l.b16 %v188
      %v336 = vunpack.c.h.b16 %v188
      %v337 = vunpack.c.l.b16 %v189
      %v338 = vunpack.c.h.b16 %v189
      %v339 = vunpack.c.l.b16 %v190
      %v340 = vunpack.c.h.b16 %v190
      %v341 = vunpack.c.l.b16 %v191
      %v342 = vunpack.c.h.b16 %v191
      %v343 = vunpack.c.l.b16 %v192
      %v344 = vunpack.c.h.b16 %v192
      %v345 = vunpack.c.l.b16 %v193
      %v346 = vunpack.c.h.b16 %v193
      %v347 = vunpack.c.l.b16 %v194
      %v348 = vunpack.c.h.b16 %v194
      %v349 = vunpack.c.l.b16 %v195
      %v350 = vunpack.c.h.b16 %v195
      %v351 = vunpack.c.l.b16 %v196
      %v352 = vunpack.c.h.b16 %v196
      %v353 = vunpack.c.l.b16 %v197
      %v354 = vunpack.c.h.b16 %v197
      %v355 = vunpack.c.l.b16 %v198
      %v356 = vunpack.c.h.b16 %v198
      %v357 = vunpack.c.l.b16 %v199
      %v358 = vunpack.c.h.b16 %v199
      %v359 = vunpack.c.l.b16 %v200
      %v360 = vunpack.c.h.b16 %v200
      %v361 = vunpack.c.l.b16 %v201
      %v362 = vunpack.c.h.b16 %v201
      %v363 = vunpack.c.l.b16 %v202
      %v364 = vunpack.c.h.b16 %v202
      %v365 = vunpack.c.l.b16 %v203
      %v366 = vunpack.c.h.b16 %v203
      %v367 = vunpack.c.l.b16 %v204
      %v368 = vunpack.c.h.b16 %v204
      %v369 = vunpack.c.l.b16 %v205
      %v370 = vunpack.c.h.b16 %v205
      %v371 = vunpack.c.l.b16 %v206
      %v372 = vunpack.c.h.b16 %v206
      %v373 = vunpack.c.l.b16 %v207
      %v374 = vunpack.c.h.b16 %v207
      %v375 = vunpack.c.l.b16 %v208
      %v376 = vunpack.c.h.b16 %v208
      %v377 = vunpack.c.l.b16 %v209
      %v378 = vunpack.c.h.b16 %v209
      %v379 = vunpack.c.l.b16 %v210
      %v380 = vunpack.c.h.b16 %v210
      %v381 = vunpack.c.l.b16 %v211
      %v382 = vunpack.c.h.b16 %v211
      %v383 = vunpack.c.l.b16 %v212
      %v384 = vunpack.c.h.b16 %v212
      %v385 = vunpack.c.l.b16 %v213
      %v386 = vunpack.c.h.b16 %v213
      %v387 = vunpack.c.l.b16 %v214
      %v388 = vunpack.c.h.b16 %v214
      %v389 = vunpack.c.l.b16 %v215
      %v390 = vunpack.c.h.b16 %v215
      %v391 = vunpack.c.l.b16 %v216
      %v392 = vunpack.c.h.b16 %v216
      %v393 = vunpack.c.l.b16 %v217
      %v394 = vunpack.c.h.b16 %v217
      %v395 = vunpack.c.l.b16 %v218
      %v396 = vunpack.c.h.b16 %v218
      %v397 = vunpack.c.l.b16 %v219
      %v398 = vunpack.c.h.b16 %v219
      %v399 = vunpack.c.l.b16 %v220
      %v400 = vunpack.c.h.b16 %v220
      %v401 = vunpack.c.l.b16 %v221
      %v402 = vunpack.c.h.b16 %v221
      %v403 = vunpack.c.l.b16 %v222
      %v404 = vunpack.c.h.b16 %v222
      %v405 = vunpack.c.l.b16 %v223
      %v406 = vunpack.c.h.b16 %v223
      %v407 = vunpack.c.l.b16 %v224
      %v408 = vunpack.c.h.b16 %v224
      %v409 = vunpack.c.l.b16 %v225
      %v410 = vunpack.c.h.b16 %v225
      %v411 = vunpack.c.l.b16 %v226
      %v412 = vunpack.c.h.b16 %v226
      %v413 = vpack.c.b16 %v315, %v313
      %v414 = vpack.c.b16 %v316, %v314
      %v415 = vpack.c.b16 %v319, %v317
      %v416 = vpack.c.b16 %v320, %v318
      %v417 = vpack.c.b16 %v323, %v321
      %v418 = vpack.c.b16 %v324, %v322
      %v419 = vpack.c.b16 %v327, %v325
      %v420 = vpack.c.b16 %v328, %v326
      %v421 = vpack.c.b16 %v331, %v329
      %v422 = vpack.c.b16 %v332, %v330
      %v423 = vpack.c.b16 %v335, %v333
      %v424 = vpack.c.b16 %v336, %v334
      %v425 = vpack.c.b16 %v339, %v337
      %v426 = vpack.c.b16 %v340, %v338
      %v427 = vpack.c.b16 %v343, %v341
      %v428 = vpack.c.b16 %v344, %v342
      %v429 = vpack.c.b16 %v347, %v345
      %v430 = vpack.c.b16 %v348, %v346
      %v431 = vpack.c.b16 %v351, %v349
      %v432 = vpack.c.b16 %v352, %v350
      %v433 = vpack.c.b16 %v355, %v353
      %v434 = vpack.c.b16 %v356, %v354
      %v435 = vpack.c.b16 %v359, %v357
      %v436 = vpack.c.b16 %v360, %v358
      %v437 = vpack.c.b16 %v363, %v361
      %v438 = vpack.c.b16 %v364, %v362
      %v439 = vpack.c.b16 %v367, %v365
      %v440 = vpack.c.b16 %v368, %v366
      %v441 = vpack.c.b16 %v371, %v369
      %v442 = vpack.c.b16 %v372, %v370
      %v443 = vpack.c.b16 %v375, %v373
      %v444 = vpack.c.b16 %v376, %v374
      %v445 = vpack.c.b16 %v379, %v377
      %v446 = vpack.c.b16 %v380, %v378
      %v447 = vpack.c.b16 %v383, %v381
      %v448 = vpack.c.b16 %v384, %v382
      %v449 = vpack.c.b16 %v387, %v385
      %v450 = vpack.c.b16 %v388, %v386
      %v451 = vpack.c.b16 %v391, %v389
      %v452 = vpack.c.b16 %v392, %v390
      %v453 = vpack.c.b16 %v395, %v393
      %v454 = vpack.c.b16 %v396, %v394
      %v455 = vpack.c.b16 %v399, %v397
      %v456 = vpack.c.b16 %v400, %v398
      %v457 = vpack.c.b16 %v403, %v401
      %v458 = vpack.c.b16 %v404, %v402
      %v459 = vpack.c.b16 %v407, %v405
      %v460 = vpack.c.b16 %v408, %v406
      %v461 = vpack.c.b16 %v411, %v409
      %v462 = vpack.c.b16 %v412, %v410
      %v545 = vunpack.c.l.b16 %v227
      %v546 = vunpack.c.l.b16 %v228
      %v547 = vunpack.c.l.b16 %v229
      %v548 = vunpack.c.l.b16 %v230
      %v549 = vunpack.c.l.b16 %v231
      %v550 = vunpack.c.l.b16 %v232
      %v551 = vunpack.c.l.b16 %v233
      %v552 = vunpack.c.l.b16 %v234
      %v553 = vunpack.c.l.b16 %v235
      %v554 = vunpack.c.l.b16 %v236
      %v555 = vunpack.c.l.b16 %v237
      %v556 = vunpack.c.l.b16 %v238
      %v557 = vunpack.c.l.b16 %v239
      %v558 = vunpack.c.l.b16 %v240
      %v559 = vunpack.c.l.b16 %v241
      %v560 = vunpack.c.l.b16 %v242
      %v561 = vunpack.c.l.b16 %v243
      %v562 = vunpack.c.l.b16 %v244
      %v563 = vunpack.c.l.b16 %v245
      %v564 = vunpack.c.l.b16 %v246
      %v565 = vunpack.c.l.b16 %v247
      %v566 = vunpack.c.l.b16 %v248
      %v567 = vunpack.c.l.b16 %v249
      %v568 = vunpack.c.l.b16 %v250
      %v569 = vunpack.c.l.b16 %v251
      %v570 = vunpack.c.l.b16 %v252
      %v571 = vunpack.c.l.b16 %v253
      %v572 = vunpack.c.l.b16 %v254
      %v573 = vunpack.c.l.b16 %v255
      %v574 = vunpack.c.l.b16 %v256
      %v575 = vunpack.c.l.b16 %v257
      %v576 = vunpack.c.l.b16 %v258
      %v577 = vpack.c.b16 %v546, %v545
      %v578 = vpack.c.b16 %v548, %v547
      %v579 = vpack.c.b16 %v550, %v549
      %v580 = vpack.c.b16 %v552, %v551
      %v581 = vpack.c.b16 %v554, %v553
      %v582 = vpack.c.b16 %v556, %v555
      %v583 = vpack.c.b16 %v558, %v557
      %v584 = vpack.c.b16 %v560, %v559
      %v585 = vpack.c.b16 %v562, %v561
      %v586 = vpack.c.b16 %v564, %v563
      %v587 = vpack.c.b16 %v566, %v565
      %v588 = vpack.c.b16 %v568, %v567
      %v589 = vpack.c.b16 %v570, %v569
      %v590 = vpack.c.b16 %v572, %v571
      %v591 = vpack.c.b16 %v574, %v573
      %v592 = vpack.c.b16 %v576, %v575
      %609 = vmatpush.bf16.msra.mxu0 %v584
      %610 = vmatpush.bf16.msra.mxu0 %v583
      %611 = vmatpush.bf16.msra.mxu0 %v582
      %612 = vmatpush.bf16.msra.mxu0 %v581
      %613 = vmatpush.bf16.msra.mxu0 %v580
      %614 = vmatpush.bf16.msra.mxu0 %v579
      %615 = vmatpush.bf16.msra.mxu0 %v578
      %616 = vmatpush.bf16.msra.mxu0 %v577
      %617 = vmatmul.bf16.gmra.mxu0 %v413
      %v618 = vpop.f32.mrf.mxu0
      %v619 = vadd.f32 %v261, %v618
      %v620 = vpop.f32.mrf.mxu0
      %v621 = vadd.f32 %v261, %v620
      %622 = vmatmul.bf16.gmra.mxu0 %v415
      %v623 = vpop.f32.mrf.mxu0
      %v624 = vadd.f32 %v261, %v623
      %v625 = vpop.f32.mrf.mxu0
      %v626 = vadd.f32 %v261, %v625
      %627 = vmatmul.bf16.gmra.mxu0 %v417
      %v628 = vpop.f32.mrf.mxu0
      %v629 = vadd.f32 %v261, %v628
      %v630 = vpop.f32.mrf.mxu0
      %v631 = vadd.f32 %v261, %v630
      %632 = vmatmul.bf16.gmra.mxu0 %v419
      %v633 = vpop.f32.mrf.mxu0
      %v634 = vadd.f32 %v261, %v633
      %v635 = vpop.f32.mrf.mxu0
      %v636 = vadd.f32 %v261, %v635
      %637 = vmatmul.bf16.gmra.mxu0 %v421
      %v638 = vpop.f32.mrf.mxu0
      %v639 = vadd.f32 %v261, %v638
      %v640 = vpop.f32.mrf.mxu0
      %v641 = vadd.f32 %v261, %v640
      %642 = vmatmul.bf16.gmra.mxu0 %v423
      %v643 = vpop.f32.mrf.mxu0
      %v644 = vadd.f32 %v261, %v643
      %v645 = vpop.f32.mrf.mxu0
      %v646 = vadd.f32 %v261, %v645
      %647 = vmatmul.bf16.gmra.mxu0 %v425
      %v648 = vpop.f32.mrf.mxu0
      %v649 = vadd.f32 %v261, %v648
      %v650 = vpop.f32.mrf.mxu0
      %v651 = vadd.f32 %v261, %v650
      %652 = vmatmul.bf16.gmra.mxu0 %v427
      %v653 = vpop.f32.mrf.mxu0
      %v654 = vadd.f32 %v261, %v653
      %v655 = vpop.f32.mrf.mxu0
      %v656 = vadd.f32 %v261, %v655
      %657 = vmatmul.bf16.gmra.mxu0 %v429
      %v658 = vpop.f32.mrf.mxu0
      %v659 = vadd.f32 %v261, %v658
      %v660 = vpop.f32.mrf.mxu0
      %v661 = vadd.f32 %v261, %v660
      %662 = vmatmul.bf16.gmra.mxu0 %v431
      %v663 = vpop.f32.mrf.mxu0
      %v664 = vadd.f32 %v261, %v663
      %v665 = vpop.f32.mrf.mxu0
      %v666 = vadd.f32 %v261, %v665
      %667 = vmatmul.bf16.gmra.mxu0 %v433
      %v668 = vpop.f32.mrf.mxu0
      %v669 = vadd.f32 %v261, %v668
      %v670 = vpop.f32.mrf.mxu0
      %v671 = vadd.f32 %v261, %v670
      %672 = vmatmul.bf16.gmra.mxu0 %v435
      %v673 = vpop.f32.mrf.mxu0
      %v674 = vadd.f32 %v261, %v673
      %v675 = vpop.f32.mrf.mxu0
      %v676 = vadd.f32 %v261, %v675
      %677 = vmatmul.bf16.gmra.mxu0 %v437
      %v678 = vpop.f32.mrf.mxu0
      %v679 = vadd.f32 %v261, %v678
      %v680 = vpop.f32.mrf.mxu0
      %v681 = vadd.f32 %v261, %v680
      %682 = vmatmul.bf16.gmra.mxu0 %v439
      %v683 = vpop.f32.mrf.mxu0
      %v684 = vadd.f32 %v261, %v683
      %v685 = vpop.f32.mrf.mxu0
      %v686 = vadd.f32 %v261, %v685
      %687 = vmatmul.bf16.gmra.mxu0 %v441
      %v688 = vpop.f32.mrf.mxu0
      %v689 = vadd.f32 %v261, %v688
      %v690 = vpop.f32.mrf.mxu0
      %v691 = vadd.f32 %v261, %v690
      %692 = vmatmul.bf16.gmra.mxu0 %v443
      %v693 = vpop.f32.mrf.mxu0
      %v694 = vadd.f32 %v261, %v693
      %v695 = vpop.f32.mrf.mxu0
      %v696 = vadd.f32 %v261, %v695
      %697 = vmatmul.bf16.gmra.mxu0 %v445
      %v698 = vpop.f32.mrf.mxu0
      %v699 = vadd.f32 %v261, %v698
      %v700 = vpop.f32.mrf.mxu0
      %v701 = vadd.f32 %v261, %v700
      %702 = vmatmul.bf16.gmra.mxu0 %v447
      %v703 = vpop.f32.mrf.mxu0
      %v704 = vadd.f32 %v261, %v703
      %v705 = vpop.f32.mrf.mxu0
      %v706 = vadd.f32 %v261, %v705
      %707 = vmatmul.bf16.gmra.mxu0 %v449
      %v708 = vpop.f32.mrf.mxu0
      %v709 = vadd.f32 %v261, %v708
      %v710 = vpop.f32.mrf.mxu0
      %v711 = vadd.f32 %v261, %v710
      %712 = vmatmul.bf16.gmra.mxu0 %v451
      %v713 = vpop.f32.mrf.mxu0
      %v714 = vadd.f32 %v261, %v713
      %v715 = vpop.f32.mrf.mxu0
      %v716 = vadd.f32 %v261, %v715
      %717 = vmatmul.bf16.gmra.mxu0 %v453
      %v718 = vpop.f32.mrf.mxu0
      %v719 = vadd.f32 %v261, %v718
      %v720 = vpop.f32.mrf.mxu0
      %v721 = vadd.f32 %v261, %v720
      %722 = vmatmul.bf16.gmra.mxu0 %v455
      %v723 = vpop.f32.mrf.mxu0
      %v724 = vadd.f32 %v261, %v723
      %v725 = vpop.f32.mrf.mxu0
      %v726 = vadd.f32 %v261, %v725
      %727 = vmatmul.bf16.gmra.mxu0 %v457
      %v728 = vpop.f32.mrf.mxu0
      %v729 = vadd.f32 %v261, %v728
      %v730 = vpop.f32.mrf.mxu0
      %v731 = vadd.f32 %v261, %v730
      %732 = vmatmul.bf16.gmra.mxu0 %v459
      %v733 = vpop.f32.mrf.mxu0
      %v734 = vadd.f32 %v261, %v733
      %v735 = vpop.f32.mrf.mxu0
      %v736 = vadd.f32 %v261, %v735
      %737 = vmatmul.bf16.gmra.mxu0 %v461
      %v738 = vpop.f32.mrf.mxu0
      %v739 = vadd.f32 %v261, %v738
      %v740 = vpop.f32.mrf.mxu0
      %v741 = vadd.f32 %v261, %v740
      %742 = vdwg.mxu0
      %743 = vmatpush.bf16.msra.mxu0 %v592
      %744 = vmatpush.bf16.msra.mxu0 %v591
      %745 = vmatpush.bf16.msra.mxu0 %v590
      %746 = vmatpush.bf16.msra.mxu0 %v589
      %747 = vmatpush.bf16.msra.mxu0 %v588
      %748 = vmatpush.bf16.msra.mxu0 %v587
      %749 = vmatpush.bf16.msra.mxu0 %v586
      %750 = vmatpush.bf16.msra.mxu0 %v585
      %751 = vmatmul.bf16.gmra.mxu0 %v414
      %v752 = vpop.f32.mrf.mxu0
      %v753 = vadd.f32 %v619, %v752
      %v754 = vpop.f32.mrf.mxu0
      %v755 = vadd.f32 %v621, %v754
      %756 = vmatmul.bf16.gmra.mxu0 %v416
      %v757 = vpop.f32.mrf.mxu0
      %v758 = vadd.f32 %v624, %v757
      %v759 = vpop.f32.mrf.mxu0
      %v760 = vadd.f32 %v626, %v759
      %761 = vmatmul.bf16.gmra.mxu0 %v418
      %v762 = vpop.f32.mrf.mxu0
      %v763 = vadd.f32 %v629, %v762
      %v764 = vpop.f32.mrf.mxu0
      %v765 = vadd.f32 %v631, %v764
      %766 = vmatmul.bf16.gmra.mxu0 %v420
      %v767 = vpop.f32.mrf.mxu0
      %v768 = vadd.f32 %v634, %v767
      %v769 = vpop.f32.mrf.mxu0
      %v770 = vadd.f32 %v636, %v769
      %771 = vmatmul.bf16.gmra.mxu0 %v422
      %v772 = vpop.f32.mrf.mxu0
      %v773 = vadd.f32 %v639, %v772
      %v774 = vpop.f32.mrf.mxu0
      %v775 = vadd.f32 %v641, %v774
      %776 = vmatmul.bf16.gmra.mxu0 %v424
      %v777 = vpop.f32.mrf.mxu0
      %v778 = vadd.f32 %v644, %v777
      %v779 = vpop.f32.mrf.mxu0
      %v780 = vadd.f32 %v646, %v779
      %781 = vmatmul.bf16.gmra.mxu0 %v426
      %v782 = vpop.f32.mrf.mxu0
      %v783 = vadd.f32 %v649, %v782
      %v784 = vpop.f32.mrf.mxu0
      %v785 = vadd.f32 %v651, %v784
      %786 = vmatmul.bf16.gmra.mxu0 %v428
      %v787 = vpop.f32.mrf.mxu0
      %v788 = vadd.f32 %v654, %v787
      %v789 = vpop.f32.mrf.mxu0
      %v790 = vadd.f32 %v656, %v789
      %791 = vmatmul.bf16.gmra.mxu0 %v430
      %v792 = vpop.f32.mrf.mxu0
      %v793 = vadd.f32 %v659, %v792
      %v794 = vpop.f32.mrf.mxu0
      %v795 = vadd.f32 %v661, %v794
      %796 = vmatmul.bf16.gmra.mxu0 %v432
      %v797 = vpop.f32.mrf.mxu0
      %v798 = vadd.f32 %v664, %v797
      %v799 = vpop.f32.mrf.mxu0
      %v800 = vadd.f32 %v666, %v799
      %801 = vmatmul.bf16.gmra.mxu0 %v434
      %v802 = vpop.f32.mrf.mxu0
      %v803 = vadd.f32 %v669, %v802
      %v804 = vpop.f32.mrf.mxu0
      %v805 = vadd.f32 %v671, %v804
      %806 = vmatmul.bf16.gmra.mxu0 %v436
      %v807 = vpop.f32.mrf.mxu0
      %v808 = vadd.f32 %v674, %v807
      %v809 = vpop.f32.mrf.mxu0
      %v810 = vadd.f32 %v676, %v809
      %811 = vmatmul.bf16.gmra.mxu0 %v438
      %v812 = vpop.f32.mrf.mxu0
      %v813 = vadd.f32 %v679, %v812
      %v814 = vpop.f32.mrf.mxu0
      %v815 = vadd.f32 %v681, %v814
      %816 = vmatmul.bf16.gmra.mxu0 %v440
      %v817 = vpop.f32.mrf.mxu0
      %v818 = vadd.f32 %v684, %v817
      %v819 = vpop.f32.mrf.mxu0
      %v820 = vadd.f32 %v686, %v819
      %821 = vmatmul.bf16.gmra.mxu0 %v442
      %v822 = vpop.f32.mrf.mxu0
      %v823 = vadd.f32 %v689, %v822
      %v824 = vpop.f32.mrf.mxu0
      %v825 = vadd.f32 %v691, %v824
      %826 = vmatmul.bf16.gmra.mxu0 %v444
      %v827 = vpop.f32.mrf.mxu0
      %v828 = vadd.f32 %v694, %v827
      %v829 = vpop.f32.mrf.mxu0
      %v830 = vadd.f32 %v696, %v829
      %831 = vmatmul.bf16.gmra.mxu0 %v446
      %v832 = vpop.f32.mrf.mxu0
      %v833 = vadd.f32 %v699, %v832
      %v834 = vpop.f32.mrf.mxu0
      %v835 = vadd.f32 %v701, %v834
      %836 = vmatmul.bf16.gmra.mxu0 %v448
      %v837 = vpop.f32.mrf.mxu0
      %v838 = vadd.f32 %v704, %v837
      %v839 = vpop.f32.mrf.mxu0
      %v840 = vadd.f32 %v706, %v839
      %841 = vmatmul.bf16.gmra.mxu0 %v450
      %v842 = vpop.f32.mrf.mxu0
      %v843 = vadd.f32 %v709, %v842
      %v844 = vpop.f32.mrf.mxu0
      %v845 = vadd.f32 %v711, %v844
      %846 = vmatmul.bf16.gmra.mxu0 %v452
      %v847 = vpop.f32.mrf.mxu0
      %v848 = vadd.f32 %v714, %v847
      %v849 = vpop.f32.mrf.mxu0
      %v850 = vadd.f32 %v716, %v849
      %851 = vmatmul.bf16.gmra.mxu0 %v454
      %v852 = vpop.f32.mrf.mxu0
      %v853 = vadd.f32 %v719, %v852
      %v854 = vpop.f32.mrf.mxu0
      %v855 = vadd.f32 %v721, %v854
      %856 = vmatmul.bf16.gmra.mxu0 %v456
      %v857 = vpop.f32.mrf.mxu0
      %v858 = vadd.f32 %v724, %v857
      %v859 = vpop.f32.mrf.mxu0
      %v860 = vadd.f32 %v726, %v859
      %861 = vmatmul.bf16.gmra.mxu0 %v458
      %v862 = vpop.f32.mrf.mxu0
      %v863 = vadd.f32 %v729, %v862
      %v864 = vpop.f32.mrf.mxu0
      %v865 = vadd.f32 %v731, %v864
      %866 = vmatmul.bf16.gmra.mxu0 %v460
      %v867 = vpop.f32.mrf.mxu0
      %v868 = vadd.f32 %v734, %v867
      %v869 = vpop.f32.mrf.mxu0
      %v870 = vadd.f32 %v736, %v869
      %871 = vmatmul.bf16.gmra.mxu0 %v462
      %v872 = vpop.f32.mrf.mxu0
      %v873 = vadd.f32 %v739, %v872
      %v874 = vpop.f32.mrf.mxu0
      %v875 = vadd.f32 %v741, %v874
      %876 = vdwg.mxu0
      %v877 = vmax.f32 %v753, 0.0
      %v878 = vmax.f32 %v755, 0.0
      %v879 = vmax.f32 %v758, 0.0
      %v880 = vmax.f32 %v760, 0.0
      %v881 = vmax.f32 %v763, 0.0
      %v882 = vmax.f32 %v765, 0.0
      %v883 = vmax.f32 %v768, 0.0
      %v884 = vmax.f32 %v770, 0.0
      %v885 = vmax.f32 %v773, 0.0
      %v886 = vmax.f32 %v775, 0.0
      %v887 = vmax.f32 %v778, 0.0
      %v888 = vmax.f32 %v780, 0.0
      %v889 = vmax.f32 %v783, 0.0
      %v890 = vmax.f32 %v785, 0.0
      %v891 = vmax.f32 %v788, 0.0
      %v892 = vmax.f32 %v790, 0.0
      %v893 = vmax.f32 %v793, 0.0
      %v894 = vmax.f32 %v795, 0.0
      %v895 = vmax.f32 %v798, 0.0
      %v896 = vmax.f32 %v800, 0.0
      %v897 = vmax.f32 %v803, 0.0
      %v898 = vmax.f32 %v805, 0.0
      %v899 = vmax.f32 %v808, 0.0
      %v900 = vmax.f32 %v810, 0.0
      %v901 = vmax.f32 %v813, 0.0
      %v902 = vmax.f32 %v815, 0.0
      %v903 = vmax.f32 %v818, 0.0
      %v904 = vmax.f32 %v820, 0.0
      %v905 = vmax.f32 %v823, 0.0
      %v906 = vmax.f32 %v825, 0.0
      %v907 = vmax.f32 %v828, 0.0
      %v908 = vmax.f32 %v830, 0.0
      %v909 = vmax.f32 %v833, 0.0
      %v910 = vmax.f32 %v835, 0.0
      %v911 = vmax.f32 %v838, 0.0
      %v912 = vmax.f32 %v840, 0.0
      %v913 = vmax.f32 %v843, 0.0
      %v914 = vmax.f32 %v845, 0.0
      %v915 = vmax.f32 %v848, 0.0
      %v916 = vmax.f32 %v850, 0.0
      %v917 = vmax.f32 %v853, 0.0
      %v918 = vmax.f32 %v855, 0.0
      %v919 = vmax.f32 %v858, 0.0
      %v920 = vmax.f32 %v860, 0.0
      %v921 = vmax.f32 %v863, 0.0
      %v922 = vmax.f32 %v865, 0.0
      %v923 = vmax.f32 %v868, 0.0
      %v924 = vmax.f32 %v870, 0.0
      %v925 = vmax.f32 %v873, 0.0
      %v926 = vmax.f32 %v875, 0.0
      %v927 = vpack.c.bf16 %v877, %v877
      %v928 = vpack.c.bf16 %v878, %v878
      %v929 = vpack.c.bf16 %v879, %v879
      %v930 = vpack.c.bf16 %v880, %v880
      %v931 = vpack.c.bf16 %v881, %v881
      %v932 = vpack.c.bf16 %v882, %v882
      %v933 = vpack.c.bf16 %v883, %v883
      %v934 = vpack.c.bf16 %v884, %v884
      %v935 = vpack.c.bf16 %v885, %v885
      %v936 = vpack.c.bf16 %v886, %v886
      %v937 = vpack.c.bf16 %v887, %v887
      %v938 = vpack.c.bf16 %v888, %v888
      %v939 = vpack.c.bf16 %v889, %v889
      %v940 = vpack.c.bf16 %v890, %v890
      %v941 = vpack.c.bf16 %v891, %v891
      %v942 = vpack.c.bf16 %v892, %v892
      %v943 = vpack.c.bf16 %v893, %v893
      %v944 = vpack.c.bf16 %v894, %v894
      %v945 = vpack.c.bf16 %v895, %v895
      %v946 = vpack.c.bf16 %v896, %v896
      %v947 = vpack.c.bf16 %v897, %v897
      %v948 = vpack.c.bf16 %v898, %v898
      %v949 = vpack.c.bf16 %v899, %v899
      %v950 = vpack.c.bf16 %v900, %v900
      %v951 = vpack.c.bf16 %v901, %v901
      %v952 = vpack.c.bf16 %v902, %v902
      %v953 = vpack.c.bf16 %v903, %v903
      %v954 = vpack.c.bf16 %v904, %v904
      %v955 = vpack.c.bf16 %v905, %v905
      %v956 = vpack.c.bf16 %v906, %v906
      %v957 = vpack.c.bf16 %v907, %v907
      %v958 = vpack.c.bf16 %v908, %v908
      %v959 = vpack.c.bf16 %v909, %v909
      %v960 = vpack.c.bf16 %v910, %v910
      %v961 = vpack.c.bf16 %v911, %v911
      %v962 = vpack.c.bf16 %v912, %v912
      %v963 = vpack.c.bf16 %v913, %v913
      %v964 = vpack.c.bf16 %v914, %v914
      %v965 = vpack.c.bf16 %v915, %v915
      %v966 = vpack.c.bf16 %v916, %v916
      %v967 = vpack.c.bf16 %v917, %v917
      %v968 = vpack.c.bf16 %v918, %v918
      %v969 = vpack.c.bf16 %v919, %v919
      %v970 = vpack.c.bf16 %v920, %v920
      %v971 = vpack.c.bf16 %v921, %v921
      %v972 = vpack.c.bf16 %v922, %v922
      %v973 = vpack.c.bf16 %v923, %v923
      %v974 = vpack.c.bf16 %v924, %v924
      %v975 = vpack.c.bf16 %v925, %v925
      %v976 = vpack.c.bf16 %v926, %v926
      %vm977 = vcmask 257024
      %978 = vst.msk [vmem:[%s175] sm:$0xf] %vm977, %v927
      %979 = vst.msk [vmem:[%s175 + $0x4] sm:$0xf] %vm977, %v928
      %980 = vst.msk [vmem:[%s175 + $0x8] sm:$0xf] %vm977, %v929
      %981 = vst.msk [vmem:[%s175 + $0xc] sm:$0xf] %vm977, %v930
      %982 = vst.msk [vmem:[%s175 + $0x10] sm:$0xf] %vm977, %v931
      %983 = vst.msk [vmem:[%s175 + $0x14] sm:$0xf] %vm977, %v932
      %984 = vst.msk [vmem:[%s175 + $0x18] sm:$0xf] %vm977, %v933
      %985 = vst.msk [vmem:[%s175 + $0x1c] sm:$0xf] %vm977, %v934
      %986 = vst.msk [vmem:[%s175 + $0x20] sm:$0xf] %vm977, %v935
      %987 = vst.msk [vmem:[%s175 + $0x24] sm:$0xf] %vm977, %v936
      %988 = vst.msk [vmem:[%s175 + $0x28] sm:$0xf] %vm977, %v937
      %989 = vst.msk [vmem:[%s175 + $0x2c] sm:$0xf] %vm977, %v938
      %990 = vst.msk [vmem:[%s175 + $0x30] sm:$0xf] %vm977, %v939
      %991 = vst.msk [vmem:[%s175 + $0x34] sm:$0xf] %vm977, %v940
      %992 = vst.msk [vmem:[%s175 + $0x38] sm:$0xf] %vm977, %v941
      %993 = vst.msk [vmem:[%s175 + $0x3c] sm:$0xf] %vm977, %v942
      %994 = vst.msk [vmem:[%s175 + $0x40] sm:$0xf] %vm977, %v943
      %995 = vst.msk [vmem:[%s175 + $0x44] sm:$0xf] %vm977, %v944
      %996 = vst.msk [vmem:[%s175 + $0x48] sm:$0xf] %vm977, %v945
      %997 = vst.msk [vmem:[%s175 + $0x4c] sm:$0xf] %vm977, %v946
      %998 = vst.msk [vmem:[%s175 + $0x50] sm:$0xf] %vm977, %v947
      %999 = vst.msk [vmem:[%s175 + $0x54] sm:$0xf] %vm977, %v948
      %1000 = vst.msk [vmem:[%s175 + $0x58] sm:$0xf] %vm977, %v949
      %1001 = vst.msk [vmem:[%s175 + $0x5c] sm:$0xf] %vm977, %v950
      %1002 = vst.msk [vmem:[%s175 + $0x60] sm:$0xf] %vm977, %v951
      %1003 = vst.msk [vmem:[%s175 + $0x64] sm:$0xf] %vm977, %v952
      %1004 = vst.msk [vmem:[%s175 + $0x68] sm:$0xf] %vm977, %v953
      %1005 = vst.msk [vmem:[%s175 + $0x6c] sm:$0xf] %vm977, %v954
      %1006 = vst.msk [vmem:[%s175 + $0x70] sm:$0xf] %vm977, %v955
      %1007 = vst.msk [vmem:[%s175 + $0x74] sm:$0xf] %vm977, %v956
      %1008 = vst.msk [vmem:[%s175 + $0x78] sm:$0xf] %vm977, %v957
      %1009 = vst.msk [vmem:[%s175 + $0x7c] sm:$0xf] %vm977, %v958
      %1010 = vst.msk [vmem:[%s175 + $0x80] sm:$0xf] %vm977, %v959
      %1011 = vst.msk [vmem:[%s175 + $0x84] sm:$0xf] %vm977, %v960
      %1012 = vst.msk [vmem:[%s175 + $0x88] sm:$0xf] %vm977, %v961
      %1013 = vst.msk [vmem:[%s175 + $0x8c] sm:$0xf] %vm977, %v962
      %1014 = vst.msk [vmem:[%s175 + $0x90] sm:$0xf] %vm977, %v963
      %1015 = vst.msk [vmem:[%s175 + $0x94] sm:$0xf] %vm977, %v964
      %1016 = vst.msk [vmem:[%s175 + $0x98] sm:$0xf] %vm977, %v965
      %1017 = vst.msk [vmem:[%s175 + $0x9c] sm:$0xf] %vm977, %v966
      %1018 = vst.msk [vmem:[%s175 + $0xa0] sm:$0xf] %vm977, %v967
      %1019 = vst.msk [vmem:[%s175 + $0xa4] sm:$0xf] %vm977, %v968
      %1020 = vst.msk [vmem:[%s175 + $0xa8] sm:$0xf] %vm977, %v969
      %1021 = vst.msk [vmem:[%s175 + $0xac] sm:$0xf] %vm977, %v970
      %1022 = vst.msk [vmem:[%s175 + $0xb0] sm:$0xf] %vm977, %v971
      %1023 = vst.msk [vmem:[%s175 + $0xb4] sm:$0xf] %vm977, %v972
      %1024 = vst.msk [vmem:[%s175 + $0xb8] sm:$0xf] %vm977, %v973
      %1025 = vst.msk [vmem:[%s175 + $0xbc] sm:$0xf] %vm977, %v974
      %1026 = vst.msk [vmem:[%s175 + $0xc0] sm:$0xf] %vm977, %v975
      %1027 = vst.msk [vmem:[%s175 + $0xc4] sm:$0xf] %vm977, %v976
      %s1028 = smul.u32 50, %s14
      %p1029 = scmp.lt.s32.totalorder %s1028, 99
      %s1030 = scalar_select %p1029, %s1028, 99
      %s1031 = smul.addr %s1030, 4
      %s1032 = scalar_lea.vmem %s3, %s1031
      // Predicated region
      $region33: #{conv_q_forward.4} parent=31 // pred_check
        %p1033 = pneg %p100
      $region34: #{conv_q_forward.4} parent=31 // pred_check_branch
        %1035 = sbr.rel (%p1033) target = $region36
      $region35: #{conv_q_forward.4} parent=31 // pred_region
        %s1036 = smul.u32 50, %s14
      $region36: #{conv_q_forward.4} parent=31 // pred_fallthru
        _
    $region32: #{conv_q_forward.4} parent=5 // pred_fallthru
      _
    %p1037 = scmp.le.s32.totalorder 2, %s9
    // Predicated region
    $region37: #{conv_q_forward.4} parent=5 // pred_check
      %p1038 = pneg %p1037
    $region38: #{conv_q_forward.4} parent=5 // pred_check_branch
      %1040 = sbr.rel (%p1038) target = $region40
    $region39: #{conv_q_forward.4} parent=5 // pred_region
      %s1041 = ssub.s32 %s9, 2
      // Predicated region
      $region41: #{conv_q_forward.4} parent=39 // pred_check
        %p1042 = pneg %p106
      $region42: #{conv_q_forward.4} parent=39 // pred_check_branch
        %1044 = sbr.rel (%p1042) target = $region44
      $region43: #{conv_q_forward.4} parent=39 // pred_region
        %s1045 = smul.u32 50, %s15
        %p1046 = scmp.lt.s32.totalorder %s1045, 99
        %s1047 = scalar_select %p1046, %s1045, 99
        %s1048 = smul.addr %s1047, 4
        %s1049 = scalar_lea.vmem %s3, %s1048
      $region44: #{conv_q_forward.4} parent=39 // pred_fallthru
        _
    $region40: #{conv_q_forward.4} parent=5 // pred_fallthru
      _
  $region6: #{conv_q_forward.4} parent=0 // loop_footer
    %s13 = sadd.s32 1, %s9
  $region7: #{conv_q_forward.4} parent=0 // loop_footer_branch
    %8 = sbr.rel target = $region3
  $region8: #{conv_q_forward.4} parent=0 // loop_exit
    _

// kernel: conv_q_forward.5
$region0: #{conv_q_forward.5}
  #allocation0 [shape = 'u32[]', space=smem, size = 0x4, offset = 0x4, fixed_abs, tag = 'smem constant byte address 0x4 - core index']
  #allocation1 [shape = 'u32[72,128]{1,0:T(1,128)}', space=vmem, size = 0x9000, scoped, tag = 'internal scratch']
  %s0 = inlined_call_operand.vmem [shape: bf16[162,512], index: 0, kind: input, shape index: {}]
  %s1 = inlined_call_operand.vmem [shape: bf16[512,64], index: 1, kind: input, shape index: {}]
  %s2 = inlined_call_operand.vmem [shape: f32[1,64], index: 2, kind: input, shape index: {}]
  %s3 = inlined_call_operand.vmem [shape: bf16[162,64], index: 3, kind: output, shape index: {}]
  %s4 = sld [smem:[#allocation0]]
  $region89: #{conv_q_forward.5} parent=0
    _
  %s6 = ssub.s32 1, %s4
  %s7 = scalar_select 0, %s6, %s4
  $region1: #{conv_q_forward.5} parent=0
    #allocation2 [shape = 'u8[45056]{0}', space=vmem, size = 0xb000, scoped, tag = 'output window, operand 0']
    loop: start=0, step=1, limit=4
    $region2: #{conv_q_forward.5} parent=1 // loop_pre_header
      _
    $region3: #{conv_q_forward.5} parent=1 // loop_header
      %s9 = sphi 0, %s13
      %p10 = scmp.ge.s32.totalorder %s9, 4
      %s19 = sphi 0, %s21
      %s22 = sphi 0, %s19
      %s23 = sphi 0, %s22
      %s39 = sphi 0, %s23
      %s43 = sphi 0, %s43
      %s45 = sphi 0, %s43
      %s46 = sphi 0, %s45
      %s60 = sphi 0, %s46
      %s64 = sphi 0, %s64
      %s66 = sphi 0, %s64
      %s67 = sphi 0, %s66
      %s81 = sphi 0, %s67
      %s87 = sphi 0, %s89
      %s90 = sphi 0, %s87
      %s91 = sphi 0, %s90
      %s107 = sphi 0, %s91
    $region4: #{conv_q_forward.5} parent=1 // loop_header_branch
      %12 = sbr.rel (%p10) target = $region8
    $region5: #{conv_q_forward.5} parent=1 // loop_body
      %s14 = ssub.s32 %s9, 1
      %s15 = ssub.s32 %s9, 2
      %s16 = sadd.s32 %s9, 1
      %s17 = ssub.s32 %s9, %s16
      %p18 = scmp.eq.s32.totalorder %s17, 0
      %s20 = sadd.s32 %s19, 1
      %s21 = scalar_select %p18, %s19, %s20
      %p24 = pneg %p18
      %p25 = scmp.eq.s32.totalorder %s9, 1
      %p26 = por %p24, %p25
      %p27 = scmp.ne.s32.totalorder %s19, %s22
      %p28 = scmp.eq.s32.totalorder %s9, 0
      %p29 = por %p27, %p28
      %p30 = scmp.ne.s32.totalorder %s19, %s22
      %p31 = scmp.eq.s32.totalorder %s14, 1
      %p32 = por %p30, %p31
      %p33 = scmp.ne.s32.totalorder %s22, %s23
      %p34 = scmp.eq.s32.totalorder %s14, 0
      %p35 = por %p33, %p34
      %p36 = scmp.ne.s32.totalorder %s22, %s23
      %p37 = scmp.eq.s32.totalorder %s15, 1
      %p38 = por %p36, %p37
      %p40 = scmp.ne.s32.totalorder %s23, %s39
      %p41 = scmp.eq.s32.totalorder %s15, 0
      %p42 = por %p40, %p41
      %s44 = sadd.s32 %s43, 1
      %p47 = scmp.eq.s32.totalorder %s9, 1
      %p48 = scmp.ne.s32.totalorder %s43, %s45
      %p49 = scmp.eq.s32.totalorder %s9, 0
      %p50 = por %p48, %p49
      %p51 = scmp.ne.s32.totalorder %s43, %s45
      %p52 = scmp.eq.s32.totalorder %s14, 1
      %p53 = por %p51, %p52
      %p54 = scmp.ne.s32.totalorder %s45, %s46
      %p55 = scmp.eq.s32.totalorder %s14, 0
      %p56 = por %p54, %p55
      %p57 = scmp.ne.s32.totalorder %s45, %s46
      %p58 = scmp.eq.s32.totalorder %s15, 1
      %p59 = por %p57, %p58
      %p61 = scmp.ne.s32.totalorder %s46, %s60
      %p62 = scmp.eq.s32.totalorder %s15, 0
      %p63 = por %p61, %p62
      %s65 = sadd.s32 %s64, 1
      %p68 = scmp.eq.s32.totalorder %s9, 1
      %p69 = scmp.ne.s32.totalorder %s64, %s66
      %p70 = scmp.eq.s32.totalorder %s9, 0
      %p71 = por %p69, %p70
      %p72 = scmp.ne.s32.totalorder %s64, %s66
      %p73 = scmp.eq.s32.totalorder %s14, 1
      %p74 = por %p72, %p73
      %p75 = scmp.ne.s32.totalorder %s66, %s67
      %p76 = scmp.eq.s32.totalorder %s14, 0
      %p77 = por %p75, %p76
      %p78 = scmp.ne.s32.totalorder %s66, %s67
      %p79 = scmp.eq.s32.totalorder %s15, 1
      %p80 = por %p78, %p79
      %p82 = scmp.ne.s32.totalorder %s67, %s81
      %p83 = scmp.eq.s32.totalorder %s15, 0
      %p84 = por %p82, %p83
      %s85 = ssub.s32 %s9, %s16
      %p86 = scmp.eq.s32.totalorder %s85, 0
      %s88 = sadd.s32 %s87, 1
      %s89 = scalar_select %p86, %s87, %s88
      %p92 = pneg %p86
      %p93 = scmp.eq.s32.totalorder %s9, 1
      %p94 = por %p92, %p93
      %p95 = scmp.ne.s32.totalorder %s87, %s90
      %p96 = scmp.eq.s32.totalorder %s9, 0
      %p97 = por %p95, %p96
      %p98 = scmp.ne.s32.totalorder %s87, %s90
      %p99 = scmp.eq.s32.totalorder %s14, 1
      %p100 = por %p98, %p99
      %p101 = scmp.ne.s32.totalorder %s90, %s91
      %p102 = scmp.eq.s32.totalorder %s14, 0
      %p103 = por %p101, %p102
      %p104 = scmp.ne.s32.totalorder %s90, %s91
      %p105 = scmp.eq.s32.totalorder %s15, 1
      %p106 = por %p104, %p105
      %p108 = scmp.ne.s32.totalorder %s91, %s107
      %p109 = scmp.eq.s32.totalorder %s15, 0
      %p110 = por %p108, %p109
      %p111 = scmp.le.s32.totalorder 1, %s9
      %p112 = scmp.lt.s32.totalorder %s9, 3
      %p113 = pnand %p111, %p112
      %p114 = pneg %p113
      // Predicated region
      $region9: #{conv_q_forward.5} parent=5 // pred_check
        _
      $region10: #{conv_q_forward.5} parent=5 // pred_check_branch
        %116 = sbr.rel (%p113) target = $region12
      $region11: #{conv_q_forward.5} parent=5 // pred_region
        %s117 = ssub.s32 %s9, 1
        // Predicated region
        $region13: #{conv_q_forward.5} parent=11 // pred_check
          %p118 = pneg %p56
        $region14: #{conv_q_forward.5} parent=11 // pred_check_branch
          %120 = sbr.rel (%p118) target = $region16
        $region15: #{conv_q_forward.5} parent=11 // pred_region
          _
        $region16: #{conv_q_forward.5} parent=11 // pred_fallthru
          _
        // Predicated region
        $region17: #{conv_q_forward.5} parent=11 // pred_check
          %p121 = pneg %p77
        $region18: #{conv_q_forward.5} parent=11 // pred_check_branch
          %123 = sbr.rel (%p121) target = $region20
        $region19: #{conv_q_forward.5} parent=11 // pred_region
          _
        $region20: #{conv_q_forward.5} parent=11 // pred_fallthru
          _
      $region12: #{conv_q_forward.5} parent=5 // pred_fallthru
        _
      %p124 = scmp.lt.s32.totalorder %s9, 2
      // Predicated region
      $region21: #{conv_q_forward.5} parent=5 // pred_check
        %p125 = pneg %p124
      $region22: #{conv_q_forward.5} parent=5 // pred_check_branch
        %127 = sbr.rel (%p125) target = $region24
      $region23: #{conv_q_forward.5} parent=5 // pred_region
        // Predicated region
        $region25: #{conv_q_forward.5} parent=23 // pred_check
          %p128 = pneg %p29
        $region26: #{conv_q_forward.5} parent=23 // pred_check_branch
          %130 = sbr.rel (%p128) target = $region28
        $region27: #{conv_q_forward.5} parent=23 // pred_region
          %s131 = smul.u32 11, %s9
          %s132 = ssub.s32 21, %s131
          %p133 = scmp.lt.s32.totalorder %s132, 11
          %s134 = scalar_select %p133, %s132, 11
          %s135 = smul.u32 4, %s134
          %s136 = smul.u32 %s135, 4
          %p137 = scmp.lt.s32.totalorder %s131, 20
          %s138 = scalar_select %p137, %s131, 20
          %s139 = smul.addr %s138, 4
          %s140 = smul.addr %s139, 4
          %s141 = scalar_lea.vmem %s0, %s140
          %s142 = smul.u32 11, %s9
          %s143 = ssub.s32 21, %s142
          %p144 = scmp.lt.s32.totalorder %s143, 11
          %s145 = scalar_select %p144, %s143, 11
          %s146 = smul.u32 4, %s145
          %s147 = smul.u32 %s146, 4
        $region28: #{conv_q_forward.5} parent=23 // pred_fallthru
          _
      $region24: #{conv_q_forward.5} parent=5 // pred_fallthru
        _
      %p148 = scmp.le.s32.totalorder 1, %s9
      %p149 = scmp.lt.s32.totalorder %s9, 3
      %p150 = pnand %p148, %p149
      %p151 = pneg %p150
      // Predicated region
      $region29: #{conv_q_forward.5} parent=5 // pred_check
        _
      $region30: #{conv_q_forward.5} parent=5 // pred_check_branch
        %153 = sbr.rel (%p150) target = $region32
      $region31: #{conv_q_forward.5} parent=5 // pred_region
        %s154 = ssub.s32 %s9, 1
        %s155 = smul.u32 11, %s14
        %s156 = ssub.s32 21, %s155
        %p157 = scmp.lt.s32.totalorder %s156, 11
        %s158 = scalar_select %p157, %s156, 11
        %s159 = smul.u32 4, %s158
        %s160 = smul.u32 %s159, 4
        %p161 = scmp.lt.s32.totalorder %s155, 20
        %s162 = scalar_select %p161, %s155, 20
        %s163 = smul.addr %s162, 4
        %s164 = smul.addr %s163, 4
        %s165 = scalar_lea.vmem %s0, %s164
        %p166 = pneg %p35
        %p167 = pneg %p32
        %p168 = pneg %p56
        %p169 = pneg %p53
        %p170 = pneg %p77
        %p171 = pneg %p74
        %p172 = pneg %p103
        %p173 = pneg %p100
        %s174 = sand.u32 %s90, 1
        %s175 = sand.u32 %s90, 1
        %s176 = smul.addr %s175, 44
        %s177 = scalar_lea.vmem [#allocation2], %s176
        %s178 = smul.u32 11, %s14
        %s179 = ssub.s32 21, %s178
        %p180 = scmp.lt.s32.totalorder %s179, 11
        %s181 = scalar_select %p180, %s179, 11
        %s182 = smul.u32 4, %s181
        %s183 = smul.u32 %s182, 4
        %p184 = scmp.lt.s32.totalorder %s178, 20
        %s185 = scalar_select %p184, %s178, 20
        %s186 = smul.addr %s185, 4
        %s187 = smul.addr %s186, 4
        %s188 = scalar_lea.vmem %s0, %s187
        %s189 = smul.u32 11, %s14
        %s190 = ssub.s32 21, %s189
        %p191 = scmp.lt.s32.totalorder %s190, 11
        %s192 = scalar_select %p191, %s190, 11
        %s193 = smul.u32 4, %s192
        %s194 = smul.u32 %s193, 4
        %s195 = smul.u32 11, %s14
        %s196 = ssub.s32 21, %s195
        %p197 = scmp.lt.s32.totalorder %s196, 11
        %s198 = scalar_select %p197, %s196, 11
        %s199 = smul.u32 4, %s198
        %v200 = vld [vmem:[%s188] sm:$0xff]
        %v201 = vld [vmem:[%s188 + $0x8] sm:$0xff]
        %v202 = vld [vmem:[%s188 + $0x10] sm:$0xff]
        %v203 = vld [vmem:[%s188 + $0x18] sm:$0xff]
        %v204 = vld [vmem:[%s188 + $0x20] sm:$0xff]
        %v205 = vld [vmem:[%s188 + $0x28] sm:$0xff]
        %v206 = vld [vmem:[%s188 + $0x30] sm:$0xff]
        %v207 = vld [vmem:[%s188 + $0x38] sm:$0xff]
        %v208 = vld [vmem:[%s188 + $0x40] sm:$0xff]
        %v209 = vld [vmem:[%s188 + $0x48] sm:$0xff]
        %v210 = vld [vmem:[%s188 + $0x50] sm:$0xff]
        %v211 = vld [vmem:[%s188 + $0x58] sm:$0xff]
        %v212 = vld [vmem:[%s188 + $0x60] sm:$0xff]
        %v213 = vld [vmem:[%s188 + $0x68] sm:$0xff]
        %v214 = vld [vmem:[%s188 + $0x70] sm:$0xff]
        %v215 = vld [vmem:[%s188 + $0x78] sm:$0xff]
        %v216 = vld [vmem:[%s188 + $0x80] sm:$0xff]
        %v217 = vld [vmem:[%s188 + $0x88] sm:$0xff]
        %v218 = vld [vmem:[%s188 + $0x90] sm:$0xff]
        %v219 = vld [vmem:[%s188 + $0x98] sm:$0xff]
        %v220 = vld [vmem:[%s188 + $0xa0] sm:$0xff]
        %v221 = vld [vmem:[%s188 + $0xa8] sm:$0xff]
        %v222 = vld [vmem:[%s1] sm:$0xf]
        %v223 = vld [vmem:[%s1 + $0x4] sm:$0xf]
        %v224 = vld [vmem:[%s1 + $0x8] sm:$0xf]
        %v225 = vld [vmem:[%s1 + $0xc] sm:$0xf]
        %v226 = vld [vmem:[%s1 + $0x10] sm:$0xf]
        %v227 = vld [vmem:[%s1 + $0x14] sm:$0xf]
        %v228 = vld [vmem:[%s1 + $0x18] sm:$0xf]
        %v229 = vld [vmem:[%s1 + $0x1c] sm:$0xf]
        %v230 = vld [vmem:[%s1 + $0x20] sm:$0xf]
        %v231 = vld [vmem:[%s1 + $0x24] sm:$0xf]
        %v232 = vld [vmem:[%s1 + $0x28] sm:$0xf]
        %v233 = vld [vmem:[%s1 + $0x2c] sm:$0xf]
        %v234 = vld [vmem:[%s1 + $0x30] sm:$0xf]
        %v235 = vld [vmem:[%s1 + $0x34] sm:$0xf]
        %v236 = vld [vmem:[%s1 + $0x38] sm:$0xf]
        %v237 = vld [vmem:[%s1 + $0x3c] sm:$0xf]
        %v238 = vld [vmem:[%s1 + $0x40] sm:$0xf]
        %v239 = vld [vmem:[%s1 + $0x44] sm:$0xf]
        %v240 = vld [vmem:[%s1 + $0x48] sm:$0xf]
        %v241 = vld [vmem:[%s1 + $0x4c] sm:$0xf]
        %v242 = vld [vmem:[%s1 + $0x50] sm:$0xf]
        %v243 = vld [vmem:[%s1 + $0x54] sm:$0xf]
        %v244 = vld [vmem:[%s1 + $0x58] sm:$0xf]
        %v245 = vld [vmem:[%s1 + $0x5c] sm:$0xf]
        %v246 = vld [vmem:[%s1 + $0x60] sm:$0xf]
        %v247 = vld [vmem:[%s1 + $0x64] sm:$0xf]
        %v248 = vld [vmem:[%s1 + $0x68] sm:$0xf]
        %v249 = vld [vmem:[%s1 + $0x6c] sm:$0xf]
        %v250 = vld [vmem:[%s1 + $0x70] sm:$0xf]
        %v251 = vld [vmem:[%s1 + $0x74] sm:$0xf]
        %v252 = vld [vmem:[%s1 + $0x78] sm:$0xf]
        %v253 = vld [vmem:[%s1 + $0x7c] sm:$0xf]
        %v254 = vld [vmem:[%s1 + $0x80] sm:$0xf]
        %v255 = vld [vmem:[%s1 + $0x84] sm:$0xf]
        %v256 = vld [vmem:[%s1 + $0x88] sm:$0xf]
        %v257 = vld [vmem:[%s1 + $0x8c] sm:$0xf]
        %v258 = vld [vmem:[%s1 + $0x90] sm:$0xf]
        %v259 = vld [vmem:[%s1 + $0x94] sm:$0xf]
        %v260 = vld [vmem:[%s1 + $0x98] sm:$0xf]
        %v261 = vld [vmem:[%s1 + $0x9c] sm:$0xf]
        %v262 = vld [vmem:[%s1 + $0xa0] sm:$0xf]
        %v263 = vld [vmem:[%s1 + $0xa4] sm:$0xf]
        %v264 = vld [vmem:[%s1 + $0xa8] sm:$0xf]
        %v265 = vld [vmem:[%s1 + $0xac] sm:$0xf]
        %v266 = vld [vmem:[%s1 + $0xb0] sm:$0xf]
        %v267 = vld [vmem:[%s1 + $0xb4] sm:$0xf]
        %v268 = vld [vmem:[%s1 + $0xb8] sm:$0xf]
        %v269 = vld [vmem:[%s1 + $0xbc] sm:$0xf]
        %v270 = vld [vmem:[%s1 + $0xc0] sm:$0xf]
        %v271 = vld [vmem:[%s1 + $0xc4] sm:$0xf]
        %v272 = vld [vmem:[%s1 + $0xc8] sm:$0xf]
        %v273 = vld [vmem:[%s1 + $0xcc] sm:$0xf]
        %v274 = vld [vmem:[%s1 + $0xd0] sm:$0xf]
        %v275 = vld [vmem:[%s1 + $0xd4] sm:$0xf]
        %v276 = vld [vmem:[%s1 + $0xd8] sm:$0xf]
        %v277 = vld [vmem:[%s1 + $0xdc] sm:$0xf]
        %v278 = vld [vmem:[%s1 + $0xe0] sm:$0xf]
        %v279 = vld [vmem:[%s1 + $0xe4] sm:$0xf]
        %v280 = vld [vmem:[%s1 + $0xe8] sm:$0xf]
        %v281 = vld [vmem:[%s1 + $0xec] sm:$0xf]
        %v282 = vld [vmem:[%s1 + $0xf0] sm:$0xf]
        %v283 = vld [vmem:[%s1 + $0xf4] sm:$0xf]
        %v284 = vld [vmem:[%s1 + $0xf8] sm:$0xf]
        %v285 = vld [vmem:[%s1 + $0xfc] sm:$0xf]
        %v286 = vld [vmem:[%s2] sm:$0x1]
        %v288 = vperm.slane %v286, 0
        %v312 = vunpack.c.l.b16 %v200
        %v313 = vunpack.c.h.b16 %v200
        %v314 = vunpack.c.l.b16 %v201
        %v315 = vunpack.c.h.b16 %v201
        %v316 = vunpack.c.l.b16 %v202
        %v317 = vunpack.c.h.b16 %v202
        %v318 = vunpack.c.l.b16 %v203
        %v319 = vunpack.c.h.b16 %v203
        %v320 = vunpack.c.l.b16 %v204
        %v321 = vunpack.c.h.b16 %v204
        %v322 = vunpack.c.l.b16 %v205
        %v323 = vunpack.c.h.b16 %v205
        %v324 = vunpack.c.l.b16 %v206
        %v325 = vunpack.c.h.b16 %v206
        %v326 = vunpack.c.l.b16 %v207
        %v327 = vunpack.c.h.b16 %v207
        %v328 = vunpack.c.l.b16 %v208
        %v329 = vunpack.c.h.b16 %v208
        %v330 = vunpack.c.l.b16 %v209
        %v331 = vunpack.c.h.b16 %v209
        %v332 = vunpack.c.l.b16 %v210
        %v333 = vunpack.c.h.b16 %v210
        %v334 = vunpack.c.l.b16 %v211
        %v335 = vunpack.c.h.b16 %v211
        %v336 = vunpack.c.l.b16 %v212
        %v337 = vunpack.c.h.b16 %v212
        %v338 = vunpack.c.l.b16 %v213
        %v339 = vunpack.c.h.b16 %v213
        %v340 = vunpack.c.l.b16 %v214
        %v341 = vunpack.c.h.b16 %v214
        %v342 = vunpack.c.l.b16 %v215
        %v343 = vunpack.c.h.b16 %v215
        %v344 = vunpack.c.l.b16 %v216
        %v345 = vunpack.c.h.b16 %v216
        %v346 = vunpack.c.l.b16 %v217
        %v347 = vunpack.c.h.b16 %v217
        %v348 = vunpack.c.l.b16 %v218
        %v349 = vunpack.c.h.b16 %v218
        %v350 = vunpack.c.l.b16 %v219
        %v351 = vunpack.c.h.b16 %v219
        %v352 = vunpack.c.l.b16 %v220
        %v353 = vunpack.c.h.b16 %v220
        %v354 = vunpack.c.l.b16 %v221
        %v355 = vunpack.c.h.b16 %v221
        %v356 = vpack.c.b16 %v316, %v312
        %v357 = vpack.c.b16 %v317, %v313
        %v358 = vpack.c.b16 %v318, %v314
        %v359 = vpack.c.b16 %v319, %v315
        %v360 = vpack.c.b16 %v324, %v320
        %v361 = vpack.c.b16 %v325, %v321
        %v362 = vpack.c.b16 %v326, %v322
        %v363 = vpack.c.b16 %v327, %v323
        %v364 = vpack.c.b16 %v332, %v328
        %v365 = vpack.c.b16 %v333, %v329
        %v366 = vpack.c.b16 %v334, %v330
        %v367 = vpack.c.b16 %v335, %v331
        %v368 = vpack.c.b16 %v340, %v336
        %v369 = vpack.c.b16 %v341, %v337
        %v370 = vpack.c.b16 %v342, %v338
        %v371 = vpack.c.b16 %v343, %v339
        %v372 = vpack.c.b16 %v348, %v344
        %v373 = vpack.c.b16 %v349, %v345
        %v374 = vpack.c.b16 %v350, %v346
        %v375 = vpack.c.b16 %v351, %v347
        %v376 = vpack.c.b16 %v352, %v352
        %v377 = vpack.c.b16 %v353, %v353
        %v378 = vpack.c.b16 %v354, %v354
        %v379 = vpack.c.b16 %v355, %v355
        %v468 = vunpack.c.l.b16 %v222
        %v469 = vunpack.c.l.b16 %v223
        %v470 = vunpack.c.l.b16 %v224
        %v471 = vunpack.c.l.b16 %v225
        %v472 = vunpack.c.l.b16 %v226
        %v473 = vunpack.c.l.b16 %v227
        %v474 = vunpack.c.l.b16 %v228
        %v475 = vunpack.c.l.b16 %v229
        %v476 = vunpack.c.l.b16 %v230
        %v477 = vunpack.c.l.b16 %v231
        %v478 = vunpack.c.l.b16 %v232
        %v479 = vunpack.c.l.b16 %v233
        %v480 = vunpack.c.l.b16 %v234
        %v481 = vunpack.c.l.b16 %v235
        %v482 = vunpack.c.l.b16 %v236
        %v483 = vunpack.c.l.b16 %v237
        %v484 = vunpack.c.l.b16 %v238
        %v485 = vunpack.c.l.b16 %v239
        %v486 = vunpack.c.l.b16 %v240
        %v487 = vunpack.c.l.b16 %v241
        %v488 = vunpack.c.l.b16 %v242
        %v489 = vunpack.c.l.b16 %v243
        %v490 = vunpack.c.l.b16 %v244
        %v491 = vunpack.c.l.b16 %v245
        %v492 = vunpack.c.l.b16 %v246
        %v493 = vunpack.c.l.b16 %v247
        %v494 = vunpack.c.l.b16 %v248
        %v495 = vunpack.c.l.b16 %v249
        %v496 = vunpack.c.l.b16 %v250
        %v497 = vunpack.c.l.b16 %v251
        %v498 = vunpack.c.l.b16 %v252
        %v499 = vunpack.c.l.b16 %v253
        %v500 = vunpack.c.l.b16 %v254
        %v501 = vunpack.c.l.b16 %v255
        %v502 = vunpack.c.l.b16 %v256
        %v503 = vunpack.c.l.b16 %v257
        %v504 = vunpack.c.l.b16 %v258
        %v505 = vunpack.c.l.b16 %v259
        %v506 = vunpack.c.l.b16 %v260
        %v507 = vunpack.c.l.b16 %v261
        %v508 = vunpack.c.l.b16 %v262
        %v509 = vunpack.c.l.b16 %v263
        %v510 = vunpack.c.l.b16 %v264
        %v511 = vunpack.c.l.b16 %v265
        %v512 = vunpack.c.l.b16 %v266
        %v513 = vunpack.c.l.b16 %v267
        %v514 = vunpack.c.l.b16 %v268
        %v515 = vunpack.c.l.b16 %v269
        %v516 = vunpack.c.l.b16 %v270
        %v517 = vunpack.c.l.b16 %v271
        %v518 = vunpack.c.l.b16 %v272
        %v519 = vunpack.c.l.b16 %v273
        %v520 = vunpack.c.l.b16 %v274
        %v521 = vunpack.c.l.b16 %v275
        %v522 = vunpack.c.l.b16 %v276
        %v523 = vunpack.c.l.b16 %v277
        %v524 = vunpack.c.l.b16 %v278
        %v525 = vunpack.c.l.b16 %v279
        %v526 = vunpack.c.l.b16 %v280
        %v527 = vunpack.c.l.b16 %v281
        %v528 = vunpack.c.l.b16 %v282
        %v529 = vunpack.c.l.b16 %v283
        %v530 = vunpack.c.l.b16 %v284
        %v531 = vunpack.c.l.b16 %v285
        %v532 = vpack.c.b16 %v469, %v468
        %v533 = vpack.c.b16 %v471, %v470
        %v534 = vpack.c.b16 %v473, %v472
        %v535 = vpack.c.b16 %v475, %v474
        %v536 = vpack.c.b16 %v477, %v476
        %v537 = vpack.c.b16 %v479, %v478
        %v538 = vpack.c.b16 %v481, %v480
        %v539 = vpack.c.b16 %v483, %v482
        %v540 = vpack.c.b16 %v485, %v484
        %v541 = vpack.c.b16 %v487, %v486
        %v542 = vpack.c.b16 %v489, %v488
        %v543 = vpack.c.b16 %v491, %v490
        %v544 = vpack.c.b16 %v493, %v492
        %v545 = vpack.c.b16 %v495, %v494
        %v546 = vpack.c.b16 %v497, %v496
        %v547 = vpack.c.b16 %v499, %v498
        %v548 = vpack.c.b16 %v501, %v500
        %v549 = vpack.c.b16 %v503, %v502
        %v550 = vpack.c.b16 %v505, %v504
        %v551 = vpack.c.b16 %v507, %v506
        %v552 = vpack.c.b16 %v509, %v508
        %v553 = vpack.c.b16 %v511, %v510
        %v554 = vpack.c.b16 %v513, %v512
        %v555 = vpack.c.b16 %v515, %v514
        %v556 = vpack.c.b16 %v517, %v516
        %v557 = vpack.c.b16 %v519, %v518
        %v558 = vpack.c.b16 %v521, %v520
        %v559 = vpack.c.b16 %v523, %v522
        %v560 = vpack.c.b16 %v525, %v524
        %v561 = vpack.c.b16 %v527, %v526
        %v562 = vpack.c.b16 %v529, %v528
        %v563 = vpack.c.b16 %v531, %v530
        %596 = vmatpush.bf16.msra.mxu0 %v539
        %597 = vmatpush.bf16.msra.mxu0 %v538
        %598 = vmatpush.bf16.msra.mxu0 %v537
        %599 = vmatpush.bf16.msra.mxu0 %v536
        %600 = vmatpush.bf16.msra.mxu0 %v535
        %601 = vmatpush.bf16.msra.mxu0 %v534
        %602 = vmatpush.bf16.msra.mxu0 %v533
        %603 = vmatpush.bf16.msra.mxu0 %v532
        %604 = vmatmul.bf16.gmra.mxu0 %v356
        %v605 = vpop.f32.mrf.mxu0
        %v606 = vadd.f32 %v288, %v605
        %v607 = vpop.f32.mrf.mxu0
        %v608 = vadd.f32 %v288, %v607
        %609 = vmatmul.bf16.gmra.mxu0 %v360
        %v610 = vpop.f32.mrf.mxu0
        %v611 = vadd.f32 %v288, %v610
        %v612 = vpop.f32.mrf.mxu0
        %v613 = vadd.f32 %v288, %v612
        %614 = vmatmul.bf16.gmra.mxu0 %v364
        %v615 = vpop.f32.mrf.mxu0
        %v616 = vadd.f32 %v288, %v615
        %v617 = vpop.f32.mrf.mxu0
        %v618 = vadd.f32 %v288, %v617
        %619 = vmatmul.bf16.gmra.mxu0 %v368
        %v620 = vpop.f32.mrf.mxu0
        %v621 = vadd.f32 %v288, %v620
        %v622 = vpop.f32.mrf.mxu0
        %v623 = vadd.f32 %v288, %v622
        %624 = vmatmul.bf16.gmra.mxu0 %v372
        %v625 = vpop.f32.mrf.mxu0
        %v626 = vadd.f32 %v288, %v625
        %v627 = vpop.f32.mrf.mxu0
        %v628 = vadd.f32 %v288, %v627
        %629 = vmatmul.bf16.gmra.mxu0 %v376
        %v630 = vpop.f32.mrf.mxu0
        %v631 = vadd.f32 %v288, %v630
        %v632 = vpop.f32.mrf.mxu0
        %633 = vdwg.mxu0
        %634 = vmatpush.bf16.msra.mxu0 %v547
        %635 = vmatpush.bf16.msra.mxu0 %v546
        %636 = vmatpush.bf16.msra.mxu0 %v545
        %637 = vmatpush.bf16.msra.mxu0 %v544
        %638 = vmatpush.bf16.msra.mxu0 %v543
        %639 = vmatpush.bf16.msra.mxu0 %v542
        %640 = vmatpush.bf16.msra.mxu0 %v541
        %641 = vmatpush.bf16.msra.mxu0 %v540
        %642 = vmatmul.bf16.gmra.mxu0 %v357
        %v643 = vpop.f32.mrf.mxu0
        %v644 = vadd.f32 %v606, %v643
        %v645 = vpop.f32.mrf.mxu0
        %v646 = vadd.f32 %v608, %v645
        %647 = vmatmul.bf16.gmra.mxu0 %v361
        %v648 = vpop.f32.mrf.mxu0
        %v649 = vadd.f32 %v611, %v648
        %v650 = vpop.f32.mrf.mxu0
        %v651 = vadd.f32 %v613, %v650
        %652 = vmatmul.bf16.gmra.mxu0 %v365
        %v653 = vpop.f32.mrf.mxu0
        %v654 = vadd.f32 %v616, %v653
        %v655 = vpop.f32.mrf.mxu0
        %v656 = vadd.f32 %v618, %v655
        %657 = vmatmul.bf16.gmra.mxu0 %v369
        %v658 = vpop.f32.mrf.mxu0
        %v659 = vadd.f32 %v621, %v658
        %v660 = vpop.f32.mrf.mxu0
        %v661 = vadd.f32 %v623, %v660
        %662 = vmatmul.bf16.gmra.mxu0 %v373
        %v663 = vpop.f32.mrf.mxu0
        %v664 = vadd.f32 %v626, %v663
        %v665 = vpop.f32.mrf.mxu0
        %v666 = vadd.f32 %v628, %v665
        %667 = vmatmul.bf16.gmra.mxu0 %v377
        %v668 = vpop.f32.mrf.mxu0
        %v669 = vadd.f32 %v631, %v668
        %v670 = vpop.f32.mrf.mxu0
        %671 = vdwg.mxu0
        %672 = vmatpush.bf16.msra.mxu0 %v555
        %673 = vmatpush.bf16.msra.mxu0 %v554
        %674 = vmatpush.bf16.msra.mxu0 %v553
        %675 = vmatpush.bf16.msra.mxu0 %v552
        %676 = vmatpush.bf16.msra.mxu0 %v551
        %677 = vmatpush.bf16.msra.mxu0 %v550
        %678 = vmatpush.bf16.msra.mxu0 %v549
        %679 = vmatpush.bf16.msra.mxu0 %v548
        %680 = vmatmul.bf16.gmra.mxu0 %v358
        %v681 = vpop.f32.mrf.mxu0
        %v682 = vadd.f32 %v644, %v681
        %v683 = vpop.f32.mrf.mxu0
        %v684 = vadd.f32 %v646, %v683
        %685 = vmatmul.bf16.gmra.mxu0 %v362
        %v686 = vpop.f32.mrf.mxu0
        %v687 = vadd.f32 %v649, %v686
        %v688 = vpop.f32.mrf.mxu0
        %v689 = vadd.f32 %v651, %v688
        %690 = vmatmul.bf16.gmra.mxu0 %v366
        %v691 = vpop.f32.mrf.mxu0
        %v692 = vadd.f32 %v654, %v691
        %v693 = vpop.f32.mrf.mxu0
        %v694 = vadd.f32 %v656, %v693
        %695 = vmatmul.bf16.gmra.mxu0 %v370
        %v696 = vpop.f32.mrf.mxu0
        %v697 = vadd.f32 %v659, %v696
        %v698 = vpop.f32.mrf.mxu0
        %v699 = vadd.f32 %v661, %v698
        %700 = vmatmul.bf16.gmra.mxu0 %v374
        %v701 = vpop.f32.mrf.mxu0
        %v702 = vadd.f32 %v664, %v701
        %v703 = vpop.f32.mrf.mxu0
        %v704 = vadd.f32 %v666, %v703
        %705 = vmatmul.bf16.gmra.mxu0 %v378
        %v706 = vpop.f32.mrf.mxu0
        %v707 = vadd.f32 %v669, %v706
        %v708 = vpop.f32.mrf.mxu0
        %709 = vdwg.mxu0
        %710 = vmatpush.bf16.msra.mxu0 %v563
        %711 = vmatpush.bf16.msra.mxu0 %v562
        %712 = vmatpush.bf16.msra.mxu0 %v561
        %713 = vmatpush.bf16.msra.mxu0 %v560
        %714 = vmatpush.bf16.msra.mxu0 %v559
        %715 = vmatpush.bf16.msra.mxu0 %v558
        %716 = vmatpush.bf16.msra.mxu0 %v557
        %717 = vmatpush.bf16.msra.mxu0 %v556
        %718 = vmatmul.bf16.gmra.mxu0 %v359
        %v719 = vpop.f32.mrf.mxu0
        %v720 = vadd.f32 %v682, %v719
        %v721 = vpop.f32.mrf.mxu0
        %v722 = vadd.f32 %v684, %v721
        %723 = vmatmul.bf16.gmra.mxu0 %v363
        %v724 = vpop.f32.mrf.mxu0
        %v725 = vadd.f32 %v687, %v724
        %v726 = vpop.f32.mrf.mxu0
        %v727 = vadd.f32 %v689, %v726
        %728 = vmatmul.bf16.gmra.mxu0 %v367
        %v729 = vpop.f32.mrf.mxu0
        %v730 = vadd.f32 %v692, %v729
        %v731 = vpop.f32.mrf.mxu0
        %v732 = vadd.f32 %v694, %v731
        %733 = vmatmul.bf16.gmra.mxu0 %v371
        %v734 = vpop.f32.mrf.mxu0
        %v735 = vadd.f32 %v697, %v734
        %v736 = vpop.f32.mrf.mxu0
        %v737 = vadd.f32 %v699, %v736
        %738 = vmatmul.bf16.gmra.mxu0 %v375
        %v739 = vpop.f32.mrf.mxu0
        %v740 = vadd.f32 %v702, %v739
        %v741 = vpop.f32.mrf.mxu0
        %v742 = vadd.f32 %v704, %v741
        %743 = vmatmul.bf16.gmra.mxu0 %v379
        %v744 = vpop.f32.mrf.mxu0
        %v745 = vadd.f32 %v707, %v744
        %v746 = vpop.f32.mrf.mxu0
        %747 = vdwg.mxu0
        %v748 = vmax.f32 %v720, 0.0
        %v749 = vmax.f32 %v722, 0.0
        %v750 = vmax.f32 %v725, 0.0
        %v751 = vmax.f32 %v727, 0.0
        %v752 = vmax.f32 %v730, 0.0
        %v753 = vmax.f32 %v732, 0.0
        %v754 = vmax.f32 %v735, 0.0
        %v755 = vmax.f32 %v737, 0.0
        %v756 = vmax.f32 %v740, 0.0
        %v757 = vmax.f32 %v742, 0.0
        %v758 = vmax.f32 %v745, 0.0
        %v759 = vpack.c.bf16 %v748, %v748
        %v760 = vpack.c.bf16 %v749, %v749
        %v761 = vpack.c.bf16 %v750, %v750
        %v762 = vpack.c.bf16 %v751, %v751
        %v763 = vpack.c.bf16 %v752, %v752
        %v764 = vpack.c.bf16 %v753, %v753
        %v765 = vpack.c.bf16 %v754, %v754
        %v766 = vpack.c.bf16 %v755, %v755
        %v767 = vpack.c.bf16 %v756, %v756
        %v768 = vpack.c.bf16 %v757, %v757
        %v769 = vpack.c.bf16 %v758, %v758
        %vm770 = vcmask 519168
        %771 = vst.msk [vmem:[%s177] sm:$0xf] %vm770, %v759
        %772 = vst.msk [vmem:[%s177 + $0x4] sm:$0xf] %vm770, %v760
        %773 = vst.msk [vmem:[%s177 + $0x8] sm:$0xf] %vm770, %v761
        %774 = vst.msk [vmem:[%s177 + $0xc] sm:$0xf] %vm770, %v762
        %775 = vst.msk [vmem:[%s177 + $0x10] sm:$0xf] %vm770, %v763
        %776 = vst.msk [vmem:[%s177 + $0x14] sm:$0xf] %vm770, %v764
        %777 = vst.msk [vmem:[%s177 + $0x18] sm:$0xf] %vm770, %v765
        %778 = vst.msk [vmem:[%s177 + $0x1c] sm:$0xf] %vm770, %v766
        %779 = vst.msk [vmem:[%s177 + $0x20] sm:$0xf] %vm770, %v767
        %780 = vst.msk [vmem:[%s177 + $0x24] sm:$0xf] %vm770, %v768
        %781 = vst.msk [vmem:[%s177 + $0x28] sm:$0xf] %vm770, %v769
        %s782 = sand.u32 %s90, 1
        %s783 = sand.u32 %s90, 1
        %s784 = smul.addr %s783, 44
        %s785 = scalar_lea.vmem [#allocation2], %s784
        // Predicated region
        $region33: #{conv_q_forward.5} parent=31 // pred_check
          %p786 = pneg %p100
        $region34: #{conv_q_forward.5} parent=31 // pred_check_branch
          %788 = sbr.rel (%p786) target = $region36
        $region35: #{conv_q_forward.5} parent=31 // pred_region
          %s789 = smul.u32 11, %s14
          %s790 = ssub.s32 21, %s789
          %p791 = scmp.lt.s32.totalorder %s790, 11
          %s792 = scalar_select %p791, %s790, 11
          %s793 = smul.u32 4, %s792
          %p794 = scmp.ne.s32.totalorder 0, %s793
          %s795 = smul.addr %s789, 4
          %s796 = scalar_lea.vmem %s3, %s795
          // Predicated region
          $region37: #{conv_q_forward.5} parent=35 // pred_check
            %p797 = pneg %p794
          $region38: #{conv_q_forward.5} parent=35 // pred_check_branch
            %799 = sbr.rel (%p797) target = $region40
          $region39: #{conv_q_forward.5} parent=35 // pred_region
            // Predicated region
            $region41: #{conv_q_forward.5} parent=39 // pred_check
              _
            $region42: #{conv_q_forward.5} parent=39 // pred_check_branch
              %801 = sbr.rel target = $region44
            $region43: #{conv_q_forward.5} parent=39 // pred_region
              // Predicated region
              $region63: #{conv_q_forward.5} parent=43 // pred_check
                _
              $region64: #{conv_q_forward.5} parent=43 // pred_check_branch
                %872 = sbr.rel (0) target = $region66
              $region65: #{conv_q_forward.5} parent=43 // pred_region
                %s874 = ssub.s32 16, 1
                %s875 = sdiv.u32.pop %s792, 11
                %s876 = srem.u32.pop %s792, 11
                // While loop
                $region67: #{conv_q_forward.5} parent=65 // loop_pre_header
                  _
                $region68: #{conv_q_forward.5} parent=65 // loop_header
                  %s878 = sphi 0, %s880
                  %p879 = scmp.ge.s32.totalorder %s878, %s875
                  %s883 = sphi 0, %s910
                  %s884 = sphi %s785, %s913
                  %s885 = sphi %s796, %s914
                $region69: #{conv_q_forward.5} parent=65 // loop_header_branch
                  %882 = sbr.rel (%p879) target = $region73
                $region70: #{conv_q_forward.5} parent=65 // loop_body
                  %v886 = vld [vmem:[%s884] sm:%s874]
                  %887 = vst [vmem:[%s885] sm:%s874] %v886
                  %v888 = vld [vmem:[%s884 + $0x4] sm:%s874]
                  %889 = vst [vmem:[%s885 + $0x4] sm:%s874] %v888
                  %v890 = vld [vmem:[%s884 + $0x8] sm:%s874]
                  %891 = vst [vmem:[%s885 + $0x8] sm:%s874] %v890
                  %v892 = vld [vmem:[%s884 + $0xc] sm:%s874]
                  %893 = vst [vmem:[%s885 + $0xc] sm:%s874] %v892
                  %v894 = vld [vmem:[%s884 + $0x10] sm:%s874]
                  %895 = vst [vmem:[%s885 + $0x10] sm:%s874] %v894
                  %v896 = vld [vmem:[%s884 + $0x14] sm:%s874]
                  %897 = vst [vmem:[%s885 + $0x14] sm:%s874] %v896
                  %v898 = vld [vmem:[%s884 + $0x18] sm:%s874]
                  %899 = vst [vmem:[%s885 + $0x18] sm:%s874] %v898
                  %v900 = vld [vmem:[%s884 + $0x1c] sm:%s874]
                  %901 = vst [vmem:[%s885 + $0x1c] sm:%s874] %v900
                  %v902 = vld [vmem:[%s884 + $0x20] sm:%s874]
                  %903 = vst [vmem:[%s885 + $0x20] sm:%s874] %v902
                  %v904 = vld [vmem:[%s884 + $0x24] sm:%s874]
                  %905 = vst [vmem:[%s885 + $0x24] sm:%s874] %v904
                  %v906 = vld [vmem:[%s884 + $0x28] sm:%s874]
                  %907 = vst [vmem:[%s885 + $0x28] sm:%s874] %v906
                  %s908 = sadd.s32 1, %s883
                  %p909 = scmp.ge.s32.totalorder %s908, %s875
                  %s910 = scalar_select %p909, 0, %s908
                  %s911 = smul.u32 %s910, 44
                  %s912 = smul.u32 %s910, 44
                  %s913 = scalar_lea.vmem %s785, %s911 [#allocation2]
                  %s914 = scalar_lea.vmem %s796, %s912
                $region71: #{conv_q_forward.5} parent=65 // loop_footer
                  %s880 = sadd.s32 %s878, 1
                $region72: #{conv_q_forward.5} parent=65 // loop_footer_branch
                  %877 = sbr.rel target = $region68
                $region73: #{conv_q_forward.5} parent=65 // loop_exit
                  _
                %s915 = sdiv.u32.pop %s792, 11
                %s916 = srem.u32.pop %s792, 11
                %s917 = smul.u32 %s915, 11
                %s918 = smul.u32 4, %s917
                %s919 = scalar_lea.vmem %s785, %s918 [#allocation2]
                %s920 = smul.u32 4, %s917
                %s921 = scalar_lea.vmem %s796, %s920
                // While loop
                $region74: #{conv_q_forward.5} parent=65 // loop_pre_header
                  _
                $region75: #{conv_q_forward.5} parent=65 // loop_header
                  %s923 = sphi 0, %s925
                  %p924 = scmp.ge.s32.totalorder %s923, %s916
                  %s928 = sphi 0, %s935
                  %s929 = sphi %s919, %s938
                  %s930 = sphi %s921, %s939
                $region76: #{conv_q_forward.5} parent=65 // loop_header_branch
                  %927 = sbr.rel (%p924) target = $region80
                $region77: #{conv_q_forward.5} parent=65 // loop_body
                  %v931 = vld [vmem:[%s929] sm:%s874]
                  %932 = vst [vmem:[%s930] sm:%s874] %v931
                  %s933 = sadd.s32 1, %s928
                  %p934 = scmp.ge.s32.totalorder %s933, %s916
                  %s935 = scalar_select %p934, 0, %s933
                  %s936 = smul.u32 %s935, 4
                  %s937 = smul.u32 %s935, 4
                  %s938 = scalar_lea.vmem %s919, %s936 [#allocation2]
                  %s939 = scalar_lea.vmem %s921, %s937
                $region78: #{conv_q_forward.5} parent=65 // loop_footer
                  %s925 = sadd.s32 %s923, 1
                $region79: #{conv_q_forward.5} parent=65 // loop_footer_branch
                  %922 = sbr.rel target = $region75
                $region80: #{conv_q_forward.5} parent=65 // loop_exit
                  _
              $region66: #{conv_q_forward.5} parent=43 // pred_fallthru
                _
            $region44: #{conv_q_forward.5} parent=39 // pred_fallthru
              _
            // Predicated region
            $region45: #{conv_q_forward.5} parent=39 // pred_check
              _
            $region46: #{conv_q_forward.5} parent=39 // pred_check_branch
              %803 = sbr.rel (0) target = $region48
            $region47: #{conv_q_forward.5} parent=39 // pred_region
              %s805 = ssub.s32 16, 1
              %s806 = sdiv.u32.pop %s792, 11
              %s807 = srem.u32.pop %s792, 11
              // While loop
              $region49: #{conv_q_forward.5} parent=47 // loop_pre_header
                _
              $region50: #{conv_q_forward.5} parent=47 // loop_header
                %s809 = sphi 0, %s811
                %p810 = scmp.ge.s32.totalorder %s809, %s806
                %s814 = sphi 0, %s841
                %s815 = sphi %s785, %s844
                %s816 = sphi %s796, %s845
              $region51: #{conv_q_forward.5} parent=47 // loop_header_branch
                %813 = sbr.rel (%p810) target = $region55
              $region52: #{conv_q_forward.5} parent=47 // loop_body
                %v817 = vld [vmem:[%s815] sm:%s805]
                %818 = vst [vmem:[%s816] sm:%s805] %v817
                %v819 = vld [vmem:[%s815 + $0x4] sm:%s805]
                %820 = vst [vmem:[%s816 + $0x4] sm:%s805] %v819
                %v821 = vld [vmem:[%s815 + $0x8] sm:%s805]
                %822 = vst [vmem:[%s816 + $0x8] sm:%s805] %v821
                %v823 = vld [vmem:[%s815 + $0xc] sm:%s805]
                %824 = vst [vmem:[%s816 + $0xc] sm:%s805] %v823
                %v825 = vld [vmem:[%s815 + $0x10] sm:%s805]
                %826 = vst [vmem:[%s816 + $0x10] sm:%s805] %v825
                %v827 = vld [vmem:[%s815 + $0x14] sm:%s805]
                %828 = vst [vmem:[%s816 + $0x14] sm:%s805] %v827
                %v829 = vld [vmem:[%s815 + $0x18] sm:%s805]
                %830 = vst [vmem:[%s816 + $0x18] sm:%s805] %v829
                %v831 = vld [vmem:[%s815 + $0x1c] sm:%s805]
                %832 = vst [vmem:[%s816 + $0x1c] sm:%s805] %v831
                %v833 = vld [vmem:[%s815 + $0x20] sm:%s805]
                %834 = vst [vmem:[%s816 + $0x20] sm:%s805] %v833
                %v835 = vld [vmem:[%s815 + $0x24] sm:%s805]
                %836 = vst [vmem:[%s816 + $0x24] sm:%s805] %v835
                %v837 = vld [vmem:[%s815 + $0x28] sm:%s805]
                %838 = vst [vmem:[%s816 + $0x28] sm:%s805] %v837
                %s839 = sadd.s32 1, %s814
                %p840 = scmp.ge.s32.totalorder %s839, %s806
                %s841 = scalar_select %p840, 0, %s839
                %s842 = smul.u32 %s841, 44
                %s843 = smul.u32 %s841, 44
                %s844 = scalar_lea.vmem %s785, %s842 [#allocation2]
                %s845 = scalar_lea.vmem %s796, %s843
              $region53: #{conv_q_forward.5} parent=47 // loop_footer
                %s811 = sadd.s32 %s809, 1
              $region54: #{conv_q_forward.5} parent=47 // loop_footer_branch
                %808 = sbr.rel target = $region50
              $region55: #{conv_q_forward.5} parent=47 // loop_exit
                _
              %s846 = sdiv.u32.pop %s792, 11
              %s847 = srem.u32.pop %s792, 11
              %s848 = smul.u32 %s846, 11
              %s849 = smul.u32 4, %s848
              %s850 = scalar_lea.vmem %s785, %s849 [#allocation2]
              %s851 = smul.u32 4, %s848
              %s852 = scalar_lea.vmem %s796, %s851
              // While loop
              $region56: #{conv_q_forward.5} parent=47 // loop_pre_header
                _
              $region57: #{conv_q_forward.5} parent=47 // loop_header
                %s854 = sphi 0, %s856
                %p855 = scmp.ge.s32.totalorder %s854, %s847
                %s859 = sphi 0, %s866
                %s860 = sphi %s850, %s869
                %s861 = sphi %s852, %s870
              $region58: #{conv_q_forward.5} parent=47 // loop_header_branch
                %858 = sbr.rel (%p855) target = $region62
              $region59: #{conv_q_forward.5} parent=47 // loop_body
                %v862 = vld [vmem:[%s860] sm:%s805]
                %863 = vst [vmem:[%s861] sm:%s805] %v862
                %s864 = sadd.s32 1, %s859
                %p865 = scmp.ge.s32.totalorder %s864, %s847
                %s866 = scalar_select %p865, 0, %s864
                %s867 = smul.u32 %s866, 4
                %s868 = smul.u32 %s866, 4
                %s869 = scalar_lea.vmem %s850, %s867 [#allocation2]
                %s870 = scalar_lea.vmem %s852, %s868
              $region60: #{conv_q_forward.5} parent=47 // loop_footer
                %s856 = sadd.s32 %s854, 1
              $region61: #{conv_q_forward.5} parent=47 // loop_footer_branch
                %853 = sbr.rel target = $region57
              $region62: #{conv_q_forward.5} parent=47 // loop_exit
                _
            $region48: #{conv_q_forward.5} parent=39 // pred_fallthru
              _
          $region40: #{conv_q_forward.5} parent=35 // pred_fallthru
            _
          %940 = vnop
        $region36: #{conv_q_forward.5} parent=31 // pred_fallthru
          _
      $region32: #{conv_q_forward.5} parent=5 // pred_fallthru
        _
      %p941 = scmp.le.s32.totalorder 2, %s9
      // Predicated region
      $region81: #{conv_q_forward.5} parent=5 // pred_check
        %p942 = pneg %p941
      $region82: #{conv_q_forward.5} parent=5 // pred_check_branch
        %944 = sbr.rel (%p942) target = $region84
      $region83: #{conv_q_forward.5} parent=5 // pred_region
        %s945 = ssub.s32 %s9, 2
        // Predicated region
        $region85: #{conv_q_forward.5} parent=83 // pred_check
          %p946 = pneg %p106
        $region86: #{conv_q_forward.5} parent=83 // pred_check_branch
          %948 = sbr.rel (%p946) target = $region88
        $region87: #{conv_q_forward.5} parent=83 // pred_region
          %s949 = sand.u32 %s91, 1
          %s950 = sand.u32 %s91, 1
          %s951 = smul.addr %s950, 44
          %s952 = scalar_lea.vmem [#allocation2], %s951
        $region88: #{conv_q_forward.5} parent=83 // pred_fallthru
          _
      $region84: #{conv_q_forward.5} parent=5 // pred_fallthru
        _
    $region6: #{conv_q_forward.5} parent=1 // loop_footer
      %s13 = sadd.s32 1, %s9
    $region7: #{conv_q_forward.5} parent=1 // loop_footer_branch
      %8 = sbr.rel target = $region3
    $region8: #{conv_q_forward.5} parent=1 // loop_exit
      _

// kernel: conv_q_forward.6
$region0: #{conv_q_forward.6}
  #allocation0 [shape = 'u32[]', space=smem, size = 0x4, offset = 0x4, fixed_abs, tag = 'smem constant byte address 0x4 - core index']
  #allocation1 [shape = 'u32[72,128]{1,0:T(1,128)}', space=vmem, size = 0x9000, scoped, tag = 'internal scratch']
  %s0 = inlined_call_operand.vmem [shape: bf16[98,576], index: 0, kind: input, shape index: {}]
  %s1 = inlined_call_operand.vmem [shape: bf16[576,64], index: 1, kind: input, shape index: {}]
  %s2 = inlined_call_operand.vmem [shape: f32[1,64], index: 2, kind: input, shape index: {}]
  %s3 = inlined_call_operand.vmem [shape: bf16[98,64], index: 3, kind: output, shape index: {}]
  %s4 = sld [smem:[#allocation0]]
  $region89: #{conv_q_forward.6} parent=0
    _
  %s6 = ssub.s32 1, %s4
  %s7 = scalar_select 0, %s6, %s4
  $region1: #{conv_q_forward.6} parent=0
    #allocation2 [shape = 'u8[28672]{0}', space=vmem, size = 0x7000, scoped, tag = 'output window, operand 0']
    loop: start=0, step=1, limit=4
    $region2: #{conv_q_forward.6} parent=1 // loop_pre_header
      _
    $region3: #{conv_q_forward.6} parent=1 // loop_header
      %s9 = sphi 0, %s13
      %p10 = scmp.ge.s32.totalorder %s9, 4
      %s19 = sphi 0, %s21
      %s22 = sphi 0, %s19
      %s23 = sphi 0, %s22
      %s39 = sphi 0, %s23
      %s43 = sphi 0, %s43
      %s45 = sphi 0, %s43
      %s46 = sphi 0, %s45
      %s60 = sphi 0, %s46
      %s64 = sphi 0, %s64
      %s66 = sphi 0, %s64
      %s67 = sphi 0, %s66
      %s81 = sphi 0, %s67
      %s87 = sphi 0, %s89
      %s90 = sphi 0, %s87
      %s91 = sphi 0, %s90
      %s107 = sphi 0, %s91
    $region4: #{conv_q_forward.6} parent=1 // loop_header_branch
      %12 = sbr.rel (%p10) target = $region8
    $region5: #{conv_q_forward.6} parent=1 // loop_body
      %s14 = ssub.s32 %s9, 1
      %s15 = ssub.s32 %s9, 2
      %s16 = sadd.s32 %s9, 1
      %s17 = ssub.s32 %s9, %s16
      %p18 = scmp.eq.s32.totalorder %s17, 0
      %s20 = sadd.s32 %s19, 1
      %s21 = scalar_select %p18, %s19, %s20
      %p24 = pneg %p18
      %p25 = scmp.eq.s32.totalorder %s9, 1
      %p26 = por %p24, %p25
      %p27 = scmp.ne.s32.totalorder %s19, %s22
      %p28 = scmp.eq.s32.totalorder %s9, 0
      %p29 = por %p27, %p28
      %p30 = scmp.ne.s32.totalorder %s19, %s22
      %p31 = scmp.eq.s32.totalorder %s14, 1
      %p32 = por %p30, %p31
      %p33 = scmp.ne.s32.totalorder %s22, %s23
      %p34 = scmp.eq.s32.totalorder %s14, 0
      %p35 = por %p33, %p34
      %p36 = scmp.ne.s32.totalorder %s22, %s23
      %p37 = scmp.eq.s32.totalorder %s15, 1
      %p38 = por %p36, %p37
      %p40 = scmp.ne.s32.totalorder %s23, %s39
      %p41 = scmp.eq.s32.totalorder %s15, 0
      %p42 = por %p40, %p41
      %s44 = sadd.s32 %s43, 1
      %p47 = scmp.eq.s32.totalorder %s9, 1
      %p48 = scmp.ne.s32.totalorder %s43, %s45
      %p49 = scmp.eq.s32.totalorder %s9, 0
      %p50 = por %p48, %p49
      %p51 = scmp.ne.s32.totalorder %s43, %s45
      %p52 = scmp.eq.s32.totalorder %s14, 1
      %p53 = por %p51, %p52
      %p54 = scmp.ne.s32.totalorder %s45, %s46
      %p55 = scmp.eq.s32.totalorder %s14, 0
      %p56 = por %p54, %p55
      %p57 = scmp.ne.s32.totalorder %s45, %s46
      %p58 = scmp.eq.s32.totalorder %s15, 1
      %p59 = por %p57, %p58
      %p61 = scmp.ne.s32.totalorder %s46, %s60
      %p62 = scmp.eq.s32.totalorder %s15, 0
      %p63 = por %p61, %p62
      %s65 = sadd.s32 %s64, 1
      %p68 = scmp.eq.s32.totalorder %s9, 1
      %p69 = scmp.ne.s32.totalorder %s64, %s66
      %p70 = scmp.eq.s32.totalorder %s9, 0
      %p71 = por %p69, %p70
      %p72 = scmp.ne.s32.totalorder %s64, %s66
      %p73 = scmp.eq.s32.totalorder %s14, 1
      %p74 = por %p72, %p73
      %p75 = scmp.ne.s32.totalorder %s66, %s67
      %p76 = scmp.eq.s32.totalorder %s14, 0
      %p77 = por %p75, %p76
      %p78 = scmp.ne.s32.totalorder %s66, %s67
      %p79 = scmp.eq.s32.totalorder %s15, 1
      %p80 = por %p78, %p79
      %p82 = scmp.ne.s32.totalorder %s67, %s81
      %p83 = scmp.eq.s32.totalorder %s15, 0
      %p84 = por %p82, %p83
      %s85 = ssub.s32 %s9, %s16
      %p86 = scmp.eq.s32.totalorder %s85, 0
      %s88 = sadd.s32 %s87, 1
      %s89 = scalar_select %p86, %s87, %s88
      %p92 = pneg %p86
      %p93 = scmp.eq.s32.totalorder %s9, 1
      %p94 = por %p92, %p93
      %p95 = scmp.ne.s32.totalorder %s87, %s90
      %p96 = scmp.eq.s32.totalorder %s9, 0
      %p97 = por %p95, %p96
      %p98 = scmp.ne.s32.totalorder %s87, %s90
      %p99 = scmp.eq.s32.totalorder %s14, 1
      %p100 = por %p98, %p99
      %p101 = scmp.ne.s32.totalorder %s90, %s91
      %p102 = scmp.eq.s32.totalorder %s14, 0
      %p103 = por %p101, %p102
      %p104 = scmp.ne.s32.totalorder %s90, %s91
      %p105 = scmp.eq.s32.totalorder %s15, 1
      %p106 = por %p104, %p105
      %p108 = scmp.ne.s32.totalorder %s91, %s107
      %p109 = scmp.eq.s32.totalorder %s15, 0
      %p110 = por %p108, %p109
      %p111 = scmp.le.s32.totalorder 1, %s9
      %p112 = scmp.lt.s32.totalorder %s9, 3
      %p113 = pnand %p111, %p112
      %p114 = pneg %p113
      // Predicated region
      $region9: #{conv_q_forward.6} parent=5 // pred_check
        _
      $region10: #{conv_q_forward.6} parent=5 // pred_check_branch
        %116 = sbr.rel (%p113) target = $region12
      $region11: #{conv_q_forward.6} parent=5 // pred_region
        %s117 = ssub.s32 %s9, 1
        // Predicated region
        $region13: #{conv_q_forward.6} parent=11 // pred_check
          %p118 = pneg %p56
        $region14: #{conv_q_forward.6} parent=11 // pred_check_branch
          %120 = sbr.rel (%p118) target = $region16
        $region15: #{conv_q_forward.6} parent=11 // pred_region
          _
        $region16: #{conv_q_forward.6} parent=11 // pred_fallthru
          _
        // Predicated region
        $region17: #{conv_q_forward.6} parent=11 // pred_check
          %p121 = pneg %p77
        $region18: #{conv_q_forward.6} parent=11 // pred_check_branch
          %123 = sbr.rel (%p121) target = $region20
        $region19: #{conv_q_forward.6} parent=11 // pred_region
          _
        $region20: #{conv_q_forward.6} parent=11 // pred_fallthru
          _
      $region12: #{conv_q_forward.6} parent=5 // pred_fallthru
        _
      %p124 = scmp.lt.s32.totalorder %s9, 2
      // Predicated region
      $region21: #{conv_q_forward.6} parent=5 // pred_check
        %p125 = pneg %p124
      $region22: #{conv_q_forward.6} parent=5 // pred_check_branch
        %127 = sbr.rel (%p125) target = $region24
      $region23: #{conv_q_forward.6} parent=5 // pred_region
        // Predicated region
        $region25: #{conv_q_forward.6} parent=23 // pred_check
          %p128 = pneg %p29
        $region26: #{conv_q_forward.6} parent=23 // pred_check_branch
          %130 = sbr.rel (%p128) target = $region28
        $region27: #{conv_q_forward.6} parent=23 // pred_region
          %s131 = smul.u32 7, %s9
          %s132 = ssub.s32 13, %s131
          %p133 = scmp.lt.s32.totalorder %s132, 7
          %s134 = scalar_select %p133, %s132, 7
          %s135 = smul.u32 4, %s134
          %s136 = smul.u32 %s135, 5
          %p137 = scmp.lt.s32.totalorder %s131, 12
          %s138 = scalar_select %p137, %s131, 12
          %s139 = smul.addr %s138, 5
          %s140 = smul.addr %s139, 4
          %s141 = scalar_lea.vmem %s0, %s140
          %s142 = smul.u32 7, %s9
          %s143 = ssub.s32 13, %s142
          %p144 = scmp.lt.s32.totalorder %s143, 7
          %s145 = scalar_select %p144, %s143, 7
          %s146 = smul.u32 4, %s145
          %s147 = smul.u32 %s146, 5
        $region28: #{conv_q_forward.6} parent=23 // pred_fallthru
          _
      $region24: #{conv_q_forward.6} parent=5 // pred_fallthru
        _
      %p148 = scmp.le.s32.totalorder 1, %s9
      %p149 = scmp.lt.s32.totalorder %s9, 3
      %p150 = pnand %p148, %p149
      %p151 = pneg %p150
      // Predicated region
      $region29: #{conv_q_forward.6} parent=5 // pred_check
        _
      $region30: #{conv_q_forward.6} parent=5 // pred_check_branch
        %153 = sbr.rel (%p150) target = $region32
      $region31: #{conv_q_forward.6} parent=5 // pred_region
        %s154 = ssub.s32 %s9, 1
        %s155 = smul.u32 7, %s14
        %s156 = ssub.s32 13, %s155
        %p157 = scmp.lt.s32.totalorder %s156, 7
        %s158 = scalar_select %p157, %s156, 7
        %s159 = smul.u32 4, %s158
        %s160 = smul.u32 %s159, 5
        %p161 = scmp.lt.s32.totalorder %s155, 12
        %s162 = scalar_select %p161, %s155, 12
        %s163 = smul.addr %s162, 5
        %s164 = smul.addr %s163, 4
        %s165 = scalar_lea.vmem %s0, %s164
        %p166 = pneg %p35
        %p167 = pneg %p32
        %p168 = pneg %p56
        %p169 = pneg %p53
        %p170 = pneg %p77
        %p171 = pneg %p74
        %p172 = pneg %p103
        %p173 = pneg %p100
        %s174 = sand.u32 %s90, 1
        %s175 = sand.u32 %s90, 1
        %s176 = smul.addr %s175, 28
        %s177 = scalar_lea.vmem [#allocation2], %s176
        %s178 = smul.u32 7, %s14
        %s179 = ssub.s32 13, %s178
        %p180 = scmp.lt.s32.totalorder %s179, 7
        %s181 = scalar_select %p180, %s179, 7
        %s182 = smul.u32 4, %s181
        %s183 = smul.u32 %s182, 5
        %p184 = scmp.lt.s32.totalorder %s178, 12
        %s185 = scalar_select %p184, %s178, 12
        %s186 = smul.addr %s185, 5
        %s187 = smul.addr %s186, 4
        %s188 = scalar_lea.vmem %s0, %s187
        %s189 = smul.u32 7, %s14
        %s190 = ssub.s32 13, %s189
        %p191 = scmp.lt.s32.totalorder %s190, 7
        %s192 = scalar_select %p191, %s190, 7
        %s193 = smul.u32 4, %s192
        %s194 = smul.u32 %s193, 5
        %s195 = smul.u32 7, %s14
        %s196 = ssub.s32 13, %s195
        %p197 = scmp.lt.s32.totalorder %s196, 7
        %s198 = scalar_select %p197, %s196, 7
        %s199 = smul.u32 4, %s198
        %v201 = vld [vmem:[%s188] sm:$0xff]
        %v202 = vld [vmem:[%s188 + $0x8] sm:$0xff]
        %v203 = vld [vmem:[%s188 + $0x10] sm:$0xf]
        %v204 = vld [vmem:[%s188 + $0x14] sm:$0xff]
        %v205 = vld [vmem:[%s188 + $0x1c] sm:$0xff]
        %v206 = vld [vmem:[%s188 + $0x24] sm:$0xf]
        %v207 = vld [vmem:[%s188 + $0x28] sm:$0xff]
        %v208 = vld [vmem:[%s188 + $0x30] sm:$0xff]
        %v209 = vld [vmem:[%s188 + $0x38] sm:$0xf]
        %v210 = vld [vmem:[%s188 + $0x3c] sm:$0xff]
        %v211 = vld [vmem:[%s188 + $0x44] sm:$0xff]
        %v212 = vld [vmem:[%s188 + $0x4c] sm:$0xf]
        %v213 = vld [vmem:[%s188 + $0x50] sm:$0xff]
        %v214 = vld [vmem:[%s188 + $0x58] sm:$0xff]
        %v215 = vld [vmem:[%s188 + $0x60] sm:$0xf]
        %v216 = vld [vmem:[%s188 + $0x64] sm:$0xff]
        %v217 = vld [vmem:[%s188 + $0x6c] sm:$0xff]
        %v218 = vld [vmem:[%s188 + $0x74] sm:$0xf]
        %v219 = vld [vmem:[%s188 + $0x78] sm:$0xff]
        %v220 = vld [vmem:[%s188 + $0x80] sm:$0xff]
        %v221 = vld [vmem:[%s188 + $0x88] sm:$0xf]
        %v222 = vld [vmem:[%s1] sm:$0xf]
        %v223 = vld [vmem:[%s1 + $0x4] sm:$0xf]
        %v224 = vld [vmem:[%s1 + $0x8] sm:$0xf]
        %v225 = vld [vmem:[%s1 + $0xc] sm:$0xf]
        %v226 = vld [vmem:[%s1 + $0x10] sm:$0xf]
        %v227 = vld [vmem:[%s1 + $0x14] sm:$0xf]
        %v228 = vld [vmem:[%s1 + $0x18] sm:$0xf]
        %v229 = vld [vmem:[%s1 + $0x1c] sm:$0xf]
        %v230 = vld [vmem:[%s1 + $0x20] sm:$0xf]
        %v231 = vld [vmem:[%s1 + $0x24] sm:$0xf]
        %v232 = vld [vmem:[%s1 + $0x28] sm:$0xf]
        %v233 = vld [vmem:[%s1 + $0x2c] sm:$0xf]
        %v234 = vld [vmem:[%s1 + $0x30] sm:$0xf]
        %v235 = vld [vmem:[%s1 + $0x34] sm:$0xf]
        %v236 = vld [vmem:[%s1 + $0x38] sm:$0xf]
        %v237 = vld [vmem:[%s1 + $0x3c] sm:$0xf]
        %v238 = vld [vmem:[%s1 + $0x40] sm:$0xf]
        %v239 = vld [vmem:[%s1 + $0x44] sm:$0xf]
        %v240 = vld [vmem:[%s1 + $0x48] sm:$0xf]
        %v241 = vld [vmem:[%s1 + $0x4c] sm:$0xf]
        %v242 = vld [vmem:[%s1 + $0x50] sm:$0xf]
        %v243 = vld [vmem:[%s1 + $0x54] sm:$0xf]
        %v244 = vld [vmem:[%s1 + $0x58] sm:$0xf]
        %v245 = vld [vmem:[%s1 + $0x5c] sm:$0xf]
        %v246 = vld [vmem:[%s1 + $0x60] sm:$0xf]
        %v247 = vld [vmem:[%s1 + $0x64] sm:$0xf]
        %v248 = vld [vmem:[%s1 + $0x68] sm:$0xf]
        %v249 = vld [vmem:[%s1 + $0x6c] sm:$0xf]
        %v250 = vld [vmem:[%s1 + $0x70] sm:$0xf]
        %v251 = vld [vmem:[%s1 + $0x74] sm:$0xf]
        %v252 = vld [vmem:[%s1 + $0x78] sm:$0xf]
        %v253 = vld [vmem:[%s1 + $0x7c] sm:$0xf]
        %v254 = vld [vmem:[%s1 + $0x80] sm:$0xf]
        %v255 = vld [vmem:[%s1 + $0x84] sm:$0xf]
        %v256 = vld [vmem:[%s1 + $0x88] sm:$0xf]
        %v257 = vld [vmem:[%s1 + $0x8c] sm:$0xf]
        %v258 = vld [vmem:[%s1 + $0x90] sm:$0xf]
        %v259 = vld [vmem:[%s1 + $0x94] sm:$0xf]
        %v260 = vld [vmem:[%s1 + $0x98] sm:$0xf]
        %v261 = vld [vmem:[%s1 + $0x9c] sm:$0xf]
        %v262 = vld [vmem:[%s1 + $0xa0] sm:$0xf]
        %v263 = vld [vmem:[%s1 + $0xa4] sm:$0xf]
        %v264 = vld [vmem:[%s1 + $0xa8] sm:$0xf]
        %v265 = vld [vmem:[%s1 + $0xac] sm:$0xf]
        %v266 = vld [vmem:[%s1 + $0xb0] sm:$0xf]
        %v267 = vld [vmem:[%s1 + $0xb4] sm:$0xf]
        %v268 = vld [vmem:[%s1 + $0xb8] sm:$0xf]
        %v269 = vld [vmem:[%s1 + $0xbc] sm:$0xf]
        %v270 = vld [vmem:[%s1 + $0xc0] sm:$0xf]
        %v271 = vld [vmem:[%s1 + $0xc4] sm:$0xf]
        %v272 = vld [vmem:[%s1 + $0xc8] sm:$0xf]
        %v273 = vld [vmem:[%s1 + $0xcc] sm:$0xf]
        %v274 = vld [vmem:[%s1 + $0xd0] sm:$0xf]
        %v275 = vld [vmem:[%s1 + $0xd4] sm:$0xf]
        %v276 = vld [vmem:[%s1 + $0xd8] sm:$0xf]
        %v277 = vld [vmem:[%s1 + $0xdc] sm:$0xf]
        %v278 = vld [vmem:[%s1 + $0xe0] sm:$0xf]
        %v279 = vld [vmem:[%s1 + $0xe4] sm:$0xf]
        %v280 = vld [vmem:[%s1 + $0xe8] sm:$0xf]
        %v281 = vld [vmem:[%s1 + $0xec] sm:$0xf]
        %v282 = vld [vmem:[%s1 + $0xf0] sm:$0xf]
        %v283 = vld [vmem:[%s1 + $0xf4] sm:$0xf]
        %v284 = vld [vmem:[%s1 + $0xf8] sm:$0xf]
        %v285 = vld [vmem:[%s1 + $0xfc] sm:$0xf]
        %v286 = vld [vmem:[%s1 + $0x100] sm:$0xf]
        %v287 = vld [vmem:[%s1 + $0x104] sm:$0xf]
        %v288 = vld [vmem:[%s1 + $0x108] sm:$0xf]
        %v289 = vld [vmem:[%s1 + $0x10c] sm:$0xf]
        %v290 = vld [vmem:[%s1 + $0x110] sm:$0xf]
        %v291 = vld [vmem:[%s1 + $0x114] sm:$0xf]
        %v292 = vld [vmem:[%s1 + $0x118] sm:$0xf]
        %v293 = vld [vmem:[%s1 + $0x11c] sm:$0xf]
        %v294 = vld [vmem:[%s2] sm:$0x1]
        %v296 = vperm.slane %v294, 0
        %v319 = vunpack.c.l.b16 %v201
        %v320 = vunpack.c.h.b16 %v201
        %v321 = vunpack.c.l.b16 %v202
        %v322 = vunpack.c.h.b16 %v202
        %v323 = vunpack.c.l.b16 %v203
        %v324 = vunpack.c.l.b16 %v204
        %v325 = vunpack.c.h.b16 %v204
        %v326 = vunpack.c.l.b16 %v205
        %v327 = vunpack.c.h.b16 %v205
        %v328 = vunpack.c.l.b16 %v206
        %v329 = vunpack.c.l.b16 %v207
        %v330 = vunpack.c.h.b16 %v207
        %v331 = vunpack.c.l.b16 %v208
        %v332 = vunpack.c.h.b16 %v208
        %v333 = vunpack.c.l.b16 %v209
        %v334 = vunpack.c.l.b16 %v210
        %v335 = vunpack.c.h.b16 %v210
        %v336 = vunpack.c.l.b16 %v211
        %v337 = vunpack.c.h.b16 %v211
        %v338 = vunpack.c.l.b16 %v212
        %v339 = vunpack.c.l.b16 %v213
        %v340 = vunpack.c.h.b16 %v213
        %v341 = vunpack.c.l.b16 %v214
        %v342 = vunpack.c.h.b16 %v214
        %v343 = vunpack.c.l.b16 %v215
        %v344 = vunpack.c.l.b16 %v216
        %v345 = vunpack.c.h.b16 %v216
        %v346 = vunpack.c.l.b16 %v217
        %v347 = vunpack.c.h.b16 %v217
        %v348 = vunpack.c.l.b16 %v218
        %v349 = vunpack.c.l.b16 %v219
        %v350 = vunpack.c.h.b16 %v219
        %v351 = vunpack.c.l.b16 %v220
        %v352 = vunpack.c.h.b16 %v220
        %v353 = vunpack.c.l.b16 %v221
        %v354 = vpack.c.b16 %v324, %v319
        %v355 = vpack.c.b16 %v325, %v320
        %v356 = vpack.c.b16 %v326, %v321
        %v357 = vpack.c.b16 %v327, %v322
        %v358 = vpack.c.b16 %v328, %v323
        %v359 = vpack.c.b16 %v334, %v329
        %v360 = vpack.c.b16 %v335, %v330
        %v361 = vpack.c.b16 %v336, %v331
        %v362 = vpack.c.b16 %v337, %v332
        %v363 = vpack.c.b16 %v338, %v333
        %v364 = vpack.c.b16 %v344, %v339
        %v365 = vpack.c.b16 %v345, %v340
        %v366 = vpack.c.b16 %v346, %v341
        %v367 = vpack.c.b16 %v347, %v342
        %v368 = vpack.c.b16 %v348, %v343
        %v369 = vpack.c.b16 %v349, %v349
        %v370 = vpack.c.b16 %v350, %v350
        %v371 = vpack.c.b16 %v351, %v351
        %v372 = vpack.c.b16 %v352, %v352
        %v373 = vpack.c.b16 %v353, %v353
        %v462 = vunpack.c.l.b16 %v222
        %v463 = vunpack.c.l.b16 %v223
        %v464 = vunpack.c.l.b16 %v224
        %v465 = vunpack.c.l.b16 %v225
        %v466 = vunpack.c.l.b16 %v226
        %v467 = vunpack.c.l.b16 %v227
        %v468 = vunpack.c.l.b16 %v228
        %v469 = vunpack.c.l.b16 %v229
        %v470 = vunpack.c.l.b16 %v230
        %v471 = vunpack.c.l.b16 %v231
        %v472 = vunpack.c.l.b16 %v232
        %v473 = vunpack.c.l.b16 %v233
        %v474 = vunpack.c.l.b16 %v234
        %v475 = vunpack.c.l.b16 %v235
        %v476 = vunpack.c.l.b16 %v236
        %v477 = vunpack.c.l.b16 %v237
        %v478 = vunpack.c.l.b16 %v238
        %v479 = vunpack.c.l.b16 %v239
        %v480 = vunpack.c.l.b16 %v240
        %v481 = vunpack.c.l.b16 %v241
        %v482 = vunpack.c.l.b16 %v242
        %v483 = vunpack.c.l.b16 %v243
        %v484 = vunpack.c.l.b16 %v244
        %v485 = vunpack.c.l.b16 %v245
        %v486 = vunpack.c.l.b16 %v246
        %v487 = vunpack.c.l.b16 %v247
        %v488 = vunpack.c.l.b16 %v248
        %v489 = vunpack.c.l.b16 %v249
        %v490 = vunpack.c.l.b16 %v250
        %v491 = vunpack.c.l.b16 %v251
        %v492 = vunpack.c.l.b16 %v252
        %v493 = vunpack.c.l.b16 %v253
        %v494 = vunpack.c.l.b16 %v254
        %v495 = vunpack.c.l.b16 %v255
        %v496 = vunpack.c.l.b16 %v256
        %v497 = vunpack.c.l.b16 %v257
        %v498 = vunpack.c.l.b16 %v258
        %v499 = vunpack.c.l.b16 %v259
        %v500 = vunpack.c.l.b16 %v260
        %v501 = vunpack.c.l.b16 %v261
        %v502 = vunpack.c.l.b16 %v262
        %v503 = vunpack.c.l.b16 %v263
        %v504 = vunpack.c.l.b16 %v264
        %v505 = vunpack.c.l.b16 %v265
        %v506 = vunpack.c.l.b16 %v266
        %v507 = vunpack.c.l.b16 %v267
        %v508 = vunpack.c.l.b16 %v268
        %v509 = vunpack.c.l.b16 %v269
        %v510 = vunpack.c.l.b16 %v270
        %v511 = vunpack.c.l.b16 %v271
        %v512 = vunpack.c.l.b16 %v272
        %v513 = vunpack.c.l.b16 %v273
        %v514 = vunpack.c.l.b16 %v274
        %v515 = vunpack.c.l.b16 %v275
        %v516 = vunpack.c.l.b16 %v276
        %v517 = vunpack.c.l.b16 %v277
        %v518 = vunpack.c.l.b16 %v278
        %v519 = vunpack.c.l.b16 %v279
        %v520 = vunpack.c.l.b16 %v280
        %v521 = vunpack.c.l.b16 %v281
        %v522 = vunpack.c.l.b16 %v282
        %v523 = vunpack.c.l.b16 %v283
        %v524 = vunpack.c.l.b16 %v284
        %v525 = vunpack.c.l.b16 %v285
        %v526 = vunpack.c.l.b16 %v286
        %v527 = vunpack.c.l.b16 %v287
        %v528 = vunpack.c.l.b16 %v288
        %v529 = vunpack.c.l.b16 %v289
        %v530 = vunpack.c.l.b16 %v290
        %v531 = vunpack.c.l.b16 %v291
        %v532 = vunpack.c.l.b16 %v292
        %v533 = vunpack.c.l.b16 %v293
        %v534 = vpack.c.b16 %v463, %v462
        %v535 = vpack.c.b16 %v465, %v464
        %v536 = vpack.c.b16 %v467, %v466
        %v537 = vpack.c.b16 %v469, %v468
        %v538 = vpack.c.b16 %v471, %v470
        %v539 = vpack.c.b16 %v473, %v472
        %v540 = vpack.c.b16 %v475, %v474
        %v541 = vpack.c.b16 %v477, %v476
        %v542 = vpack.c.b16 %v479, %v478
        %v543 = vpack.c.b16 %v481, %v480
        %v544 = vpack.c.b16 %v483, %v482
        %v545 = vpack.c.b16 %v485, %v484
        %v546 = vpack.c.b16 %v487, %v486
        %v547 = vpack.c.b16 %v489, %v488
        %v548 = vpack.c.b16 %v491, %v490
        %v549 = vpack.c.b16 %v493, %v492
        %v550 = vpack.c.b16 %v495, %v494
        %v551 = vpack.c.b16 %v497, %v496
        %v552 = vpack.c.b16 %v499, %v498
        %v553 = vpack.c.b16 %v501, %v500
        %v554 = vpack.c.b16 %v503, %v502
        %v555 = vpack.c.b16 %v505, %v504
        %v556 = vpack.c.b16 %v507, %v506
        %v557 = vpack.c.b16 %v509, %v508
        %v558 = vpack.c.b16 %v511, %v510
        %v559 = vpack.c.b16 %v513, %v512
        %v560 = vpack.c.b16 %v515, %v514
        %v561 = vpack.c.b16 %v517, %v516
        %v562 = vpack.c.b16 %v519, %v518
        %v563 = vpack.c.b16 %v521, %v520
        %v564 = vpack.c.b16 %v523, %v522
        %v565 = vpack.c.b16 %v525, %v524
        %v566 = vpack.c.b16 %v527, %v526
        %v567 = vpack.c.b16 %v529, %v528
        %v568 = vpack.c.b16 %v531, %v530
        %v569 = vpack.c.b16 %v533, %v532
        %vm606 = vcmask 523264
        %v608 = vsel %vm606, %v358, 0
        %v611 = vsel %vm606, %v363, 0
        %v614 = vsel %vm606, %v368, 0
        %v617 = vsel %vm606, %v373, 0
        %619 = vmatpush.bf16.msra.mxu0 %v541
        %620 = vmatpush.bf16.msra.mxu0 %v540
        %621 = vmatpush.bf16.msra.mxu0 %v539
        %622 = vmatpush.bf16.msra.mxu0 %v538
        %623 = vmatpush.bf16.msra.mxu0 %v537
        %624 = vmatpush.bf16.msra.mxu0 %v536
        %625 = vmatpush.bf16.msra.mxu0 %v535
        %626 = vmatpush.bf16.msra.mxu0 %v534
        %627 = vmatmul.bf16.gmra.mxu0 %v354
        %v628 = vpop.f32.mrf.mxu0
        %v629 = vadd.f32 %v296, %v628
        %v630 = vpop.f32.mrf.mxu0
        %v631 = vadd.f32 %v296, %v630
        %632 = vmatmul.bf16.gmra.mxu0 %v359
        %v633 = vpop.f32.mrf.mxu0
        %v634 = vadd.f32 %v296, %v633
        %v635 = vpop.f32.mrf.mxu0
        %v636 = vadd.f32 %v296, %v635
        %637 = vmatmul.bf16.gmra.mxu0 %v364
        %v638 = vpop.f32.mrf.mxu0
        %v639 = vadd.f32 %v296, %v638
        %v640 = vpop.f32.mrf.mxu0
        %v641 = vadd.f32 %v296, %v640
        %642 = vmatmul.bf16.gmra.mxu0 %v369
        %v643 = vpop.f32.mrf.mxu0
        %v644 = vadd.f32 %v296, %v643
        %v645 = vpop.f32.mrf.mxu0
        %646 = vdwg.mxu0
        %647 = vmatpush.bf16.msra.mxu0 %v549
        %648 = vmatpush.bf16.msra.mxu0 %v548
        %649 = vmatpush.bf16.msra.mxu0 %v547
        %650 = vmatpush.bf16.msra.mxu0 %v546
        %651 = vmatpush.bf16.msra.mxu0 %v545
        %652 = vmatpush.bf16.msra.mxu0 %v544
        %653 = vmatpush.bf16.msra.mxu0 %v543
        %654 = vmatpush.bf16.msra.mxu0 %v542
        %655 = vmatmul.bf16.gmra.mxu0 %v355
        %v656 = vpop.f32.mrf.mxu0
        %v657 = vadd.f32 %v629, %v656
        %v658 = vpop.f32.mrf.mxu0
        %v659 = vadd.f32 %v631, %v658
        %660 = vmatmul.bf16.gmra.mxu0 %v360
        %v661 = vpop.f32.mrf.mxu0
        %v662 = vadd.f32 %v634, %v661
        %v663 = vpop.f32.mrf.mxu0
        %v664 = vadd.f32 %v636, %v663
        %665 = vmatmul.bf16.gmra.mxu0 %v365
        %v666 = vpop.f32.mrf.mxu0
        %v667 = vadd.f32 %v639, %v666
        %v668 = vpop.f32.mrf.mxu0
        %v669 = vadd.f32 %v641, %v668
        %670 = vmatmul.bf16.gmra.mxu0 %v370
        %v671 = vpop.f32.mrf.mxu0
        %v672 = vadd.f32 %v644, %v671
        %v673 = vpop.f32.mrf.mxu0
        %674 = vdwg.mxu0
        %675 = vmatpush.bf16.msra.mxu0 %v557
        %676 = vmatpush.bf16.msra.mxu0 %v556
        %677 = vmatpush.bf16.msra.mxu0 %v555
        %678 = vmatpush.bf16.msra.mxu0 %v554
        %679 = vmatpush.bf16.msra.mxu0 %v553
        %680 = vmatpush.bf16.msra.mxu0 %v552
        %681 = vmatpush.bf16.msra.mxu0 %v551
        %682 = vmatpush.bf16.msra.mxu0 %v550
        %683 = vmatmul.bf16.gmra.mxu0 %v356
        %v684 = vpop.f32.mrf.mxu0
        %v685 = vadd.f32 %v657, %v684
        %v686 = vpop.f32.mrf.mxu0
        %v687 = vadd.f32 %v659, %v686
        %688 = vmatmul.bf16.gmra.mxu0 %v361
        %v689 = vpop.f32.mrf.mxu0
        %v690 = vadd.f32 %v662, %v689
        %v691 = vpop.f32.mrf.mxu0
        %v692 = vadd.f32 %v664, %v691
        %693 = vmatmul.bf16.gmra.mxu0 %v366
        %v694 = vpop.f32.mrf.mxu0
        %v695 = vadd.f32 %v667, %v694
        %v696 = vpop.f32.mrf.mxu0
        %v697 = vadd.f32 %v669, %v696
        %698 = vmatmul.bf16.gmra.mxu0 %v371
        %v699 = vpop.f32.mrf.mxu0
        %v700 = vadd.f32 %v672, %v699
        %v701 = vpop.f32.mrf.mxu0
        %702 = vdwg.mxu0
        %703 = vmatpush.bf16.msra.mxu0 %v565
        %704 = vmatpush.bf16.msra.mxu0 %v564
        %705 = vmatpush.bf16.msra.mxu0 %v563
        %706 = vmatpush.bf16.msra.mxu0 %v562
        %707 = vmatpush.bf16.msra.mxu0 %v561
        %708 = vmatpush.bf16.msra.mxu0 %v560
        %709 = vmatpush.bf16.msra.mxu0 %v559
        %710 = vmatpush.bf16.msra.mxu0 %v558
        %711 = vmatmul.bf16.gmra.mxu0 %v357
        %v712 = vpop.f32.mrf.mxu0
        %v713 = vadd.f32 %v685, %v712
        %v714 = vpop.f32.mrf.mxu0
        %v715 = vadd.f32 %v687, %v714
        %716 = vmatmul.bf16.gmra.mxu0 %v362
        %v717 = vpop.f32.mrf.mxu0
        %v718 = vadd.f32 %v690, %v717
        %v719 = vpop.f32.mrf.mxu0
        %v720 = vadd.f32 %v692, %v719
        %721 = vmatmul.bf16.gmra.mxu0 %v367
        %v722 = vpop.f32.mrf.mxu0
        %v723 = vadd.f32 %v695, %v722
        %v724 = vpop.f32.mrf.mxu0
        %v725 = vadd.f32 %v697, %v724
        %726 = vmatmul.bf16.gmra.mxu0 %v372
        %v727 = vpop.f32.mrf.mxu0
        %v728 = vadd.f32 %v700, %v727
        %v729 = vpop.f32.mrf.mxu0
        %730 = vdwg.mxu0
        %731 = vmatpush.bf16.msra.mxu0 0
        %732 = vmatpush.bf16.msra.mxu0 0
        %733 = vmatpush.bf16.msra.mxu0 0
        %734 = vmatpush.bf16.msra.mxu0 0
        %735 = vmatpush.bf16.msra.mxu0 %v569
        %736 = vmatpush.bf16.msra.mxu0 %v568
        %737 = vmatpush.bf16.msra.mxu0 %v567
        %738 = vmatpush.bf16.msra.mxu0 %v566
        %739 = vmatmul.bf16.gmra.mxu0 %v608
        %v740 = vpop.f32.mrf.mxu0
        %v741 = vadd.f32 %v713, %v740
        %v742 = vpop.f32.mrf.mxu0
        %v743 = vadd.f32 %v715, %v742
        %744 = vmatmul.bf16.gmra.mxu0 %v611
        %v745 = vpop.f32.mrf.mxu0
        %v746 = vadd.f32 %v718, %v745
        %v747 = vpop.f32.mrf.mxu0
        %v748 = vadd.f32 %v720, %v747
        %749 = vmatmul.bf16.gmra.mxu0 %v614
        %v750 = vpop.f32.mrf.mxu0
        %v751 = vadd.f32 %v723, %v750
        %v752 = vpop.f32.mrf.mxu0
        %v753 = vadd.f32 %v725, %v752
        %754 = vmatmul.bf16.gmra.mxu0 %v617
        %v755 = vpop.f32.mrf.mxu0
        %v756 = vadd.f32 %v728, %v755
        %v757 = vpop.f32.mrf.mxu0
        %758 = vdwg.mxu0
        %v759 = vmax.f32 %v741, 0.0
        %v760 = vmax.f32 %v743, 0.0
        %v761 = vmax.f32 %v746, 0.0
        %v762 = vmax.f32 %v748, 0.0
        %v763 = vmax.f32 %v751, 0.0
        %v764 = vmax.f32 %v753, 0.0
        %v765 = vmax.f32 %v756, 0.0
        %v766 = vpack.c.bf16 %v759, %v759
        %v767 = vpack.c.bf16 %v760, %v760
        %v768 = vpack.c.bf16 %v761, %v761
        %v769 = vpack.c.bf16 %v762, %v762
        %v770 = vpack.c.bf16 %v763, %v763
        %v771 = vpack.c.bf16 %v764, %v764
        %v772 = vpack.c.bf16 %v765, %v765
        %vm773 = vcmask 519168
        %774 = vst.msk [vmem:[%s177] sm:$0xf] %vm773, %v766
        %775 = vst.msk [vmem:[%s177 + $0x4] sm:$0xf] %vm773, %v767
        %776 = vst.msk [vmem:[%s177 + $0x8] sm:$0xf] %vm773, %v768
        %777 = vst.msk [vmem:[%s177 + $0xc] sm:$0xf] %vm773, %v769
        %778 = vst.msk [vmem:[%s177 + $0x10] sm:$0xf] %vm773, %v770
        %779 = vst.msk [vmem:[%s177 + $0x14] sm:$0xf] %vm773, %v771
        %780 = vst.msk [vmem:[%s177 + $0x18] sm:$0xf] %vm773, %v772
        %s781 = sand.u32 %s90, 1
        %s782 = sand.u32 %s90, 1
        %s783 = smul.addr %s782, 28
        %s784 = scalar_lea.vmem [#allocation2], %s783
        // Predicated region
        $region33: #{conv_q_forward.6} parent=31 // pred_check
          %p785 = pneg %p100
        $region34: #{conv_q_forward.6} parent=31 // pred_check_branch
          %787 = sbr.rel (%p785) target = $region36
        $region35: #{conv_q_forward.6} parent=31 // pred_region
          %s788 = smul.u32 7, %s14
          %s789 = ssub.s32 13, %s788
          %p790 = scmp.lt.s32.totalorder %s789, 7
          %s791 = scalar_select %p790, %s789, 7
          %s792 = smul.u32 4, %s791
          %p793 = scmp.ne.s32.totalorder 0, %s792
          %s794 = smul.addr %s788, 4
          %s795 = scalar_lea.vmem %s3, %s794
          // Predicated region
          $region37: #{conv_q_forward.6} parent=35 // pred_check
            %p796 = pneg %p793
          $region38: #{conv_q_forward.6} parent=35 // pred_check_branch
            %798 = sbr.rel (%p796) target = $region40
          $region39: #{conv_q_forward.6} parent=35 // pred_region
            // Predicated region
            $region41: #{conv_q_forward.6} parent=39 // pred_check
              _
            $region42: #{conv_q_forward.6} parent=39 // pred_check_branch
              %800 = sbr.rel target = $region44
            $region43: #{conv_q_forward.6} parent=39 // pred_region
              // Predicated region
              $region63: #{conv_q_forward.6} parent=43 // pred_check
                _
              $region64: #{conv_q_forward.6} parent=43 // pred_check_branch
                %863 = sbr.rel (0) target = $region66
              $region65: #{conv_q_forward.6} parent=43 // pred_region
                %s865 = ssub.s32 16, 1
                %s866 = sdiv.u32.pop %s791, 7
                %s867 = srem.u32.pop %s791, 7
                // While loop
                $region67: #{conv_q_forward.6} parent=65 // loop_pre_header
                  _
                $region68: #{conv_q_forward.6} parent=65 // loop_header
                  %s869 = sphi 0, %s871
                  %p870 = scmp.ge.s32.totalorder %s869, %s866
                  %s874 = sphi 0, %s893
                  %s875 = sphi %s784, %s896
                  %s876 = sphi %s795, %s897
                $region69: #{conv_q_forward.6} parent=65 // loop_header_branch
                  %873 = sbr.rel (%p870) target = $region73
                $region70: #{conv_q_forward.6} parent=65 // loop_body
                  %v877 = vld [vmem:[%s875] sm:%s865]
                  %878 = vst [vmem:[%s876] sm:%s865] %v877
                  %v879 = vld [vmem:[%s875 + $0x4] sm:%s865]
                  %880 = vst [vmem:[%s876 + $0x4] sm:%s865] %v879
                  %v881 = vld [vmem:[%s875 + $0x8] sm:%s865]
                  %882 = vst [vmem:[%s876 + $0x8] sm:%s865] %v881
                  %v883 = vld [vmem:[%s875 + $0xc] sm:%s865]
                  %884 = vst [vmem:[%s876 + $0xc] sm:%s865] %v883
                  %v885 = vld [vmem:[%s875 + $0x10] sm:%s865]
                  %886 = vst [vmem:[%s876 + $0x10] sm:%s865] %v885
                  %v887 = vld [vmem:[%s875 + $0x14] sm:%s865]
                  %888 = vst [vmem:[%s876 + $0x14] sm:%s865] %v887
                  %v889 = vld [vmem:[%s875 + $0x18] sm:%s865]
                  %890 = vst [vmem:[%s876 + $0x18] sm:%s865] %v889
                  %s891 = sadd.s32 1, %s874
                  %p892 = scmp.ge.s32.totalorder %s891, %s866
                  %s893 = scalar_select %p892, 0, %s891
                  %s894 = smul.u32 %s893, 28
                  %s895 = smul.u32 %s893, 28
                  %s896 = scalar_lea.vmem %s784, %s894 [#allocation2]
                  %s897 = scalar_lea.vmem %s795, %s895
                $region71: #{conv_q_forward.6} parent=65 // loop_footer
                  %s871 = sadd.s32 %s869, 1
                $region72: #{conv_q_forward.6} parent=65 // loop_footer_branch
                  %868 = sbr.rel target = $region68
                $region73: #{conv_q_forward.6} parent=65 // loop_exit
                  _
                %s898 = sdiv.u32.pop %s791, 7
                %s899 = srem.u32.pop %s791, 7
                %s900 = smul.u32 %s898, 7
                %s901 = smul.u32 4, %s900
                %s902 = scalar_lea.vmem %s784, %s901 [#allocation2]
                %s903 = smul.u32 4, %s900
                %s904 = scalar_lea.vmem %s795, %s903
                // While loop
                $region74: #{conv_q_forward.6} parent=65 // loop_pre_header
                  _
                $region75: #{conv_q_forward.6} parent=65 // loop_header
                  %s906 = sphi 0, %s908
                  %p907 = scmp.ge.s32.totalorder %s906, %s899
                  %s911 = sphi 0, %s918
                  %s912 = sphi %s902, %s921
                  %s913 = sphi %s904, %s922
                $region76: #{conv_q_forward.6} parent=65 // loop_header_branch
                  %910 = sbr.rel (%p907) target = $region80
                $region77: #{conv_q_forward.6} parent=65 // loop_body
                  %v914 = vld [vmem:[%s912] sm:%s865]
                  %915 = vst [vmem:[%s913] sm:%s865] %v914
                  %s916 = sadd.s32 1, %s911
                  %p917 = scmp.ge.s32.totalorder %s916, %s899
                  %s918 = scalar_select %p917, 0, %s916
                  %s919 = smul.u32 %s918, 4
                  %s920 = smul.u32 %s918, 4
                  %s921 = scalar_lea.vmem %s902, %s919 [#allocation2]
                  %s922 = scalar_lea.vmem %s904, %s920
                $region78: #{conv_q_forward.6} parent=65 // loop_footer
                  %s908 = sadd.s32 %s906, 1
                $region79: #{conv_q_forward.6} parent=65 // loop_footer_branch
                  %905 = sbr.rel target = $region75
                $region80: #{conv_q_forward.6} parent=65 // loop_exit
                  _
              $region66: #{conv_q_forward.6} parent=43 // pred_fallthru
                _
            $region44: #{conv_q_forward.6} parent=39 // pred_fallthru
              _
            // Predicated region
            $region45: #{conv_q_forward.6} parent=39 // pred_check
              _
            $region46: #{conv_q_forward.6} parent=39 // pred_check_branch
              %802 = sbr.rel (0) target = $region48
            $region47: #{conv_q_forward.6} parent=39 // pred_region
              %s804 = ssub.s32 16, 1
              %s805 = sdiv.u32.pop %s791, 7
              %s806 = srem.u32.pop %s791, 7
              // While loop
              $region49: #{conv_q_forward.6} parent=47 // loop_pre_header
                _
              $region50: #{conv_q_forward.6} parent=47 // loop_header
                %s808 = sphi 0, %s810
                %p809 = scmp.ge.s32.totalorder %s808, %s805
                %s813 = sphi 0, %s832
                %s814 = sphi %s784, %s835
                %s815 = sphi %s795, %s836
              $region51: #{conv_q_forward.6} parent=47 // loop_header_branch
                %812 = sbr.rel (%p809) target = $region55
              $region52: #{conv_q_forward.6} parent=47 // loop_body
                %v816 = vld [vmem:[%s814] sm:%s804]
                %817 = vst [vmem:[%s815] sm:%s804] %v816
                %v818 = vld [vmem:[%s814 + $0x4] sm:%s804]
                %819 = vst [vmem:[%s815 + $0x4] sm:%s804] %v818
                %v820 = vld [vmem:[%s814 + $0x8] sm:%s804]
                %821 = vst [vmem:[%s815 + $0x8] sm:%s804] %v820
                %v822 = vld [vmem:[%s814 + $0xc] sm:%s804]
                %823 = vst [vmem:[%s815 + $0xc] sm:%s804] %v822
                %v824 = vld [vmem:[%s814 + $0x10] sm:%s804]
                %825 = vst [vmem:[%s815 + $0x10] sm:%s804] %v824
                %v826 = vld [vmem:[%s814 + $0x14] sm:%s804]
                %827 = vst [vmem:[%s815 + $0x14] sm:%s804] %v826
                %v828 = vld [vmem:[%s814 + $0x18] sm:%s804]
                %829 = vst [vmem:[%s815 + $0x18] sm:%s804] %v828
                %s830 = sadd.s32 1, %s813
                %p831 = scmp.ge.s32.totalorder %s830, %s805
                %s832 = scalar_select %p831, 0, %s830
                %s833 = smul.u32 %s832, 28
                %s834 = smul.u32 %s832, 28
                %s835 = scalar_lea.vmem %s784, %s833 [#allocation2]
                %s836 = scalar_lea.vmem %s795, %s834
              $region53: #{conv_q_forward.6} parent=47 // loop_footer
                %s810 = sadd.s32 %s808, 1
              $region54: #{conv_q_forward.6} parent=47 // loop_footer_branch
                %807 = sbr.rel target = $region50
              $region55: #{conv_q_forward.6} parent=47 // loop_exit
                _
              %s837 = sdiv.u32.pop %s791, 7
              %s838 = srem.u32.pop %s791, 7
              %s839 = smul.u32 %s837, 7
              %s840 = smul.u32 4, %s839
              %s841 = scalar_lea.vmem %s784, %s840 [#allocation2]
              %s842 = smul.u32 4, %s839
              %s843 = scalar_lea.vmem %s795, %s842
              // While loop
              $region56: #{conv_q_forward.6} parent=47 // loop_pre_header
                _
              $region57: #{conv_q_forward.6} parent=47 // loop_header
                %s845 = sphi 0, %s847
                %p846 = scmp.ge.s32.totalorder %s845, %s838
                %s850 = sphi 0, %s857
                %s851 = sphi %s841, %s860
                %s852 = sphi %s843, %s861
              $region58: #{conv_q_forward.6} parent=47 // loop_header_branch
                %849 = sbr.rel (%p846) target = $region62
              $region59: #{conv_q_forward.6} parent=47 // loop_body
                %v853 = vld [vmem:[%s851] sm:%s804]
                %854 = vst [vmem:[%s852] sm:%s804] %v853
                %s855 = sadd.s32 1, %s850
                %p856 = scmp.ge.s32.totalorder %s855, %s838
                %s857 = scalar_select %p856, 0, %s855
                %s858 = smul.u32 %s857, 4
                %s859 = smul.u32 %s857, 4
                %s860 = scalar_lea.vmem %s841, %s858 [#allocation2]
                %s861 = scalar_lea.vmem %s843, %s859
              $region60: #{conv_q_forward.6} parent=47 // loop_footer
                %s847 = sadd.s32 %s845, 1
              $region61: #{conv_q_forward.6} parent=47 // loop_footer_branch
                %844 = sbr.rel target = $region57
              $region62: #{conv_q_forward.6} parent=47 // loop_exit
                _
            $region48: #{conv_q_forward.6} parent=39 // pred_fallthru
              _
          $region40: #{conv_q_forward.6} parent=35 // pred_fallthru
            _
          %923 = vnop
        $region36: #{conv_q_forward.6} parent=31 // pred_fallthru
          _
      $region32: #{conv_q_forward.6} parent=5 // pred_fallthru
        _
      %p924 = scmp.le.s32.totalorder 2, %s9
      // Predicated region
      $region81: #{conv_q_forward.6} parent=5 // pred_check
        %p925 = pneg %p924
      $region82: #{conv_q_forward.6} parent=5 // pred_check_branch
        %927 = sbr.rel (%p925) target = $region84
      $region83: #{conv_q_forward.6} parent=5 // pred_region
        %s928 = ssub.s32 %s9, 2
        // Predicated region
        $region85: #{conv_q_forward.6} parent=83 // pred_check
          %p929 = pneg %p106
        $region86: #{conv_q_forward.6} parent=83 // pred_check_branch
          %931 = sbr.rel (%p929) target = $region88
        $region87: #{conv_q_forward.6} parent=83 // pred_region
          %s932 = sand.u32 %s91, 1
          %s933 = sand.u32 %s91, 1
          %s934 = smul.addr %s933, 28
          %s935 = scalar_lea.vmem [#allocation2], %s934
        $region88: #{conv_q_forward.6} parent=83 // pred_fallthru
          _
      $region84: #{conv_q_forward.6} parent=5 // pred_fallthru
        _
    $region6: #{conv_q_forward.6} parent=1 // loop_footer
      %s13 = sadd.s32 1, %s9
    $region7: #{conv_q_forward.6} parent=1 // loop_footer_branch
      %8 = sbr.rel target = $region3
    $region8: #{conv_q_forward.6} parent=1 // loop_exit
      _

// kernel: conv_q_forward.7
$region0: #{conv_q_forward.7}
  #allocation0 [shape = 'u32[]', space=smem, size = 0x4, offset = 0x4, fixed_abs, tag = 'smem constant byte address 0x4 - core index']
  #allocation1 [shape = 'u32[72,128]{1,0:T(1,128)}', space=vmem, size = 0x9000, scoped, tag = 'internal scratch']
  %s0 = inlined_call_operand.vmem [shape: bf16[2,3136], index: 0, kind: input, shape index: {}]
  %s1 = inlined_call_operand.vmem [shape: bf16[3136,512], index: 1, kind: input, shape index: {}]
  %s2 = inlined_call_operand.vmem [shape: f32[1,512], index: 2, kind: input, shape index: {}]
  %s3 = inlined_call_operand.vmem [shape: bf16[512,128], index: 3, kind: input, shape index: {}]
  %s4 = inlined_call_operand.vmem [shape: f32[1,128], index: 4, kind: input, shape index: {}]
  %s5 = inlined_call_operand.hbm [shape: f32[2,128], index: 5, kind: output, shape index: {}]
  %s6 = sld [smem:[#allocation0]]
  $region30: #{conv_q_forward.7} parent=0
    _
  %s8 = ssub.s32 1, %s6
  %s9 = scalar_select 0, %s8, %s6
  $region1: #{conv_q_forward.7} parent=0
    #allocation2 [shape = 'u8[4096]{0}', space=vmem, size = 0x1000, scoped, tag = 'output window, operand 0, single buffered']
    #allocation3 [shape = 's32[1]{0}', space=sflag, size = 0x4, scoped, tag = 'scoped memory for conv_q_forward.7']
    %10 = vsyncpa [#allocation3], 0
    // Predicated region
    $region2: #{conv_q_forward.7} parent=1 // pred_check
      _
    $region3: #{conv_q_forward.7} parent=1 // pred_check_branch
      %12 = sbr.rel (0) target = $region5
    $region4: #{conv_q_forward.7} parent=1 // pred_region
      _
    $region5: #{conv_q_forward.7} parent=1 // pred_fallthru
      _
    // Predicated region
    $region6: #{conv_q_forward.7} parent=1 // pred_check
      _
    $region7: #{conv_q_forward.7} parent=1 // pred_check_branch
      %14 = sbr.rel (0) target = $region9
    $region8: #{conv_q_forward.7} parent=1 // pred_region
      _
    $region9: #{conv_q_forward.7} parent=1 // pred_fallthru
      _
    // Predicated region
    $region10: #{conv_q_forward.7} parent=1 // pred_check
      _
    $region11: #{conv_q_forward.7} parent=1 // pred_check_branch
      %16 = sbr.rel (0) target = $region13
    $region12: #{conv_q_forward.7} parent=1 // pred_region
      _
    $region13: #{conv_q_forward.7} parent=1 // pred_fallthru
      _
    // Predicated region
    $region14: #{conv_q_forward.7} parent=1 // pred_check
      _
    $region15: #{conv_q_forward.7} parent=1 // pred_check_branch
      %18 = sbr.rel (0) target = $region17
    $region16: #{conv_q_forward.7} parent=1 // pred_region
      _
    $region17: #{conv_q_forward.7} parent=1 // pred_fallthru
      _
    // Predicated region
    $region18: #{conv_q_forward.7} parent=1 // pred_check
      _
    $region19: #{conv_q_forward.7} parent=1 // pred_check_branch
      %20 = sbr.rel (0) target = $region21
    $region20: #{conv_q_forward.7} parent=1 // pred_region
      _
    $region21: #{conv_q_forward.7} parent=1 // pred_fallthru
      _
    %v22 = vld [vmem:[%s0] sm:$0xff]
    %v23 = vld [vmem:[%s0 + $0x8] sm:$0xff]
    %v24 = vld [vmem:[%s0 + $0x10] sm:$0xff]
    %v25 = vld [vmem:[%s0 + $0x18] sm:$0x1]
    %v26 = vld [vmem:[%s0 + $0x19] sm:$0xff]
    %v27 = vld [vmem:[%s0 + $0x21] sm:$0xff]
    %v28 = vld [vmem:[%s0 + $0x29] sm:$0xff]
    %v29 = vld [vmem:[%s0 + $0x31] sm:$0x1]
    %v30 = vld [vmem:[%s0 + $0x32] sm:$0xff]
    %v31 = vld [vmem:[%s0 + $0x3a] sm:$0xff]
    %v32 = vld [vmem:[%s0 + $0x42] sm:$0xff]
    %v33 = vld [vmem:[%s0 + $0x4a] sm:$0x1]
    %v34 = vld [vmem:[%s0 + $0x4b] sm:$0xff]
    %v35 = vld [vmem:[%s0 + $0x53] sm:$0xff]
    %v36 = vld [vmem:[%s0 + $0x5b] sm:$0xff]
    %v37 = vld [vmem:[%s0 + $0x63] sm:$0x1]
    %v38 = vld [vmem:[%s1] sm:$0xff]
    %v39 = vld [vmem:[%s1 + $0x8] sm:$0xff]
    %v40 = vld [vmem:[%s1 + $0x10] sm:$0xff]
    %v41 = vld [vmem:[%s1 + $0x18] sm:$0xff]
    %v42 = vld [vmem:[%s1 + $0x20] sm:$0xff]
    %v43 = vld [vmem:[%s1 + $0x28] sm:$0xff]
    %v44 = vld [vmem:[%s1 + $0x30] sm:$0xff]
    %v45 = vld [vmem:[%s1 + $0x38] sm:$0xff]
    %v46 = vld [vmem:[%s1 + $0x40] sm:$0xff]
    %v47 = vld [vmem:[%s1 + $0x48] sm:$0xff]
    %v48 = vld [vmem:[%s1 + $0x50] sm:$0xff]
    %v49 = vld [vmem:[%s1 + $0x58] sm:$0xff]
    %v50 = vld [vmem:[%s1 + $0x60] sm:$0xff]
    %v51 = vld [vmem:[%s1 + $0x68] sm:$0xff]
    %v52 = vld [vmem:[%s1 + $0x70] sm:$0xff]
    %v53 = vld [vmem:[%s1 + $0x78] sm:$0xff]
    %v54 = vld [vmem:[%s1 + $0x80] sm:$0xff]
    %v55 = vld [vmem:[%s1 + $0x88] sm:$0xff]
    %v56 = vld [vmem:[%s1 + $0x90] sm:$0xff]
    %v57 = vld [vmem:[%s1 + $0x98] sm:$0xff]
    %v58 = vld [vmem:[%s1 + $0xa0] sm:$0xff]
    %v59 = vld [vmem:[%s1 + $0xa8] sm:$0xff]
    %v60 = vld [vmem:[%s1 + $0xb0] sm:$0xff]
    %v61 = vld [vmem:[%s1 + $0xb8] sm:$0xff]
    %v62 = vld [vmem:[%s1 + $0xc0] sm:$0xff]
    %v63 = vld [vmem:[%s1 + $0xc8] sm:$0xff]
    %v64 = vld [vmem:[%s1 + $0xd0] sm:$0xff]
    %v65 = vld [vmem:[%s1 + $0xd8] sm:$0xff]
    %v66 = vld [vmem:[%s1 + $0xe0] sm:$0xff]
    %v67 = vld [vmem:[%s1 + $0xe8] sm:$0xff]
    %v68 = vld [vmem:[%s1 + $0xf0] sm:$0xff]
    %v69 = vld [vmem:[%s1 + $0xf8] sm:$0xff]
    %v70 = vld [vmem:[%s1 + $0x100] sm:$0xff]
    %v71 = vld [vmem:[%s1 + $0x108] sm:$0xff]
    %v72 = vld [vmem:[%s1 + $0x110] sm:$0xff]
    %v73 = vld [vmem:[%s1 + $0x118] sm:$0xff]
    %v74 = vld [vmem:[%s1 + $0x120] sm:$0xff]
    %v75 = vld [vmem:[%s1 + $0x128] sm:$0xff]
    %v76 = vld [vmem:[%s1 + $0x130] sm:$0xff]
    %v77 = vld [vmem:[%s1 + $0x138] sm:$0xff]
    %v78 = vld [vmem:[%s1 + $0x140] sm:$0xff]
    %v79 = vld [vmem:[%s1 + $0x148] sm:$0xff]
    %v80 = vld [vmem:[%s1 + $0x150] sm:$0xff]
    %v81 = vld [vmem:[%s1 + $0x158] sm:$0xff]
    %v82 = vld [vmem:[%s1 + $0x160] sm:$0xff]
    %v83 = vld [vmem:[%s1 + $0x168] sm:$0xff]
    %v84 = vld [vmem:[%s1 + $0x170] sm:$0xff]
    %v85 = vld [vmem:[%s1 + $0x178] sm:$0xff]
    %v86 = vld [vmem:[%s1 + $0x180] sm:$0xff]
    %v87 = vld [vmem:[%s1 + $0x188] sm:$0xff]
    %v88 = vld [vmem:[%s1 + $0x190] sm:$0xff]
    %v89 = vld [vmem:[%s1 + $0x198] sm:$0xff]
    %v90 = vld [vmem:[%s1 + $0x1a0] sm:$0xff]
    %v91 = vld [vmem:[%s1 + $0x1a8] sm:$0xff]
    %v92 = vld [vmem:[%s1 + $0x1b0] sm:$0xff]
    %v93 = vld [vmem:[%s1 + $0x1b8] sm:$0xff]
    %v94 = vld [vmem:[%s1 + $0x1c0] sm:$0xff]
    %v95 = vld [vmem:[%s1 + $0x1c8] sm:$0xff]
    %v96 = vld [vmem:[%s1 + $0x1d0] sm:$0xff]
    %v97 = vld [vmem:[%s1 + $0x1d8] sm:$0xff]
    %v98 = vld [vmem:[%s1 + $0x1e0] sm:$0xff]
    %v99 = vld [vmem:[%s1 + $0x1e8] sm:$0xff]
    %v100 = vld [vmem:[%s1 + $0x1f0] sm:$0xff]
    %v101 = vld [vmem:[%s1 + $0x1f8] sm:$0xff]
    %v102 = vld [vmem:[%s1 + $0x200] sm:$0xff]
    %v103 = vld [vmem:[%s1 + $0x208] sm:$0xff]
    %v104 = vld [vmem:[%s1 + $0x210] sm:$0xff]
    %v105 = vld [vmem:[%s1 + $0x218] sm:$0xff]
    %v106 = vld [vmem:[%s1 + $0x220] sm:$0xff]
    %v107 = vld [vmem:[%s1 + $0x228] sm:$0xff]
    %v108 = vld [vmem:[%s1 + $0x230] sm:$0xff]
    %v109 = vld [vmem:[%s1 + $0x238] sm:$0xff]
    %v110 = vld [vmem:[%s1 + $0x240] sm:$0xff]
    %v111 = vld [vmem:[%s1 + $0x248] sm:$0xff]
    %v112 = vld [vmem:[%s1 + $0x250] sm:$0xff]
    %v113 = vld [vmem:[%s1 + $0x258] sm:$0xff]
    %v114 = vld [vmem:[%s1 + $0x260] sm:$0xff]
    %v115 = vld [vmem:[%s1 + $0x268] sm:$0xff]
    %v116 = vld [vmem:[%s1 + $0x270] sm:$0xff]
    %v117 = vld [vmem:[%s1 + $0x278] sm:$0xff]
    %v118 = vld [vmem:[%s1 + $0x280] sm:$0xff]
    %v119 = vld [vmem:[%s1 + $0x288] sm:$0xff]
    %v120 = vld [vmem:[%s1 + $0x290] sm:$0xff]
    %v121 = vld [vmem:[%s1 + $0x298] sm:$0xff]
    %v122 = vld [vmem:[%s1 + $0x2a0] sm:$0xff]
    %v123 = vld [vmem:[%s1 + $0x2a8] sm:$0xff]
    %v124 = vld [vmem:[%s1 + $0x2b0] sm:$0xff]
    %v125 = vld [vmem:[%s1 + $0x2b8] sm:$0xff]
    %v126 = vld [vmem:[%s1 + $0x2c0] sm:$0xff]
    %v127 = vld [vmem:[%s1 + $0x2c8] sm:$0xff]
    %v128 = vld [vmem:[%s1 + $0x2d0] sm:$0xff]
    %v129 = vld [vmem:[%s1 + $0x2d8] sm:$0xff]
    %v130 = vld [vmem:[%s1 + $0x2e0] sm:$0xff]
    %v131 = vld [vmem:[%s1 + $0x2e8] sm:$0xff]
    %v132 = vld [vmem:[%s1 + $0x2f0] sm:$0xff]
    %v133 = vld [vmem:[%s1 + $0x2f8] sm:$0xff]
    %v134 = vld [vmem:[%s1 + $0x300] sm:$0xff]
    %v135 = vld [vmem:[%s1 + $0x308] sm:$0xff]
    %v136 = vld [vmem:[%s1 + $0x310] sm:$0xff]
    %v137 = vld [vmem:[%s1 + $0x318] sm:$0xff]
    %v138 = vld [vmem:[%s1 + $0x320] sm:$0xff]
    %v139 = vld [vmem:[%s1 + $0x328] sm:$0xff]
    %v140 = vld [vmem:[%s1 + $0x330] sm:$0xff]
    %v141 = vld [vmem:[%s1 + $0x338] sm:$0xff]
    %v142 = vld [vmem:[%s1 + $0x340] sm:$0xff]
    %v143 = vld [vmem:[%s1 + $0x348] sm:$0xff]
    %v144 = vld [vmem:[%s1 + $0x350] sm:$0xff]
    %v145 = vld [vmem:[%s1 + $0x358] sm:$0xff]
    %v146 = vld [vmem:[%s1 + $0x360] sm:$0xff]
    %v147 = vld [vmem:[%s1 + $0x368] sm:$0xff]
    %v148 = vld [vmem:[%s1 + $0x370] sm:$0xff]
    %v149 = vld [vmem:[%s1 + $0x378] sm:$0xff]
    %v150 = vld [vmem:[%s1 + $0x380] sm:$0xff]
    %v151 = vld [vmem:[%s1 + $0x388] sm:$0xff]
    %v152 = vld [vmem:[%s1 + $0x390] sm:$0xff]
    %v153 = vld [vmem:[%s1 + $0x398] sm:$0xff]
    %v154 = vld [vmem:[%s1 + $0x3a0] sm:$0xff]
    %v155 = vld [vmem:[%s1 + $0x3a8] sm:$0xff]
    %v156 = vld [vmem:[%s1 + $0x3b0] sm:$0xff]
    %v157 = vld [vmem:[%s1 + $0x3b8] sm:$0xff]
    %v158 = vld [vmem:[%s1 + $0x3c0] sm:$0xff]
    %v159 = vld [vmem:[%s1 + $0x3c8] sm:$0xff]
    %v160 = vld [vmem:[%s1 + $0x3d0] sm:$0xff]
    %v161 = vld [vmem:[%s1 + $0x3d8] sm:$0xff]
    %v162 = vld [vmem:[%s1 + $0x3e0] sm:$0xff]
    %v163 = vld [vmem:[%s1 + $0x3e8] sm:$0xff]
    %v164 = vld [vmem:[%s1 + $0x3f0] sm:$0xff]
    %v165 = vld [vmem:[%s1 + $0x3f8] sm:$0xff]
    %v166 = vld [vmem:[%s1 + $0x400] sm:$0xff]
    %v167 = vld [vmem:[%s1 + $0x408] sm:$0xff]
    %v168 = vld [vmem:[%s1 + $0x410] sm:$0xff]
    %v169 = vld [vmem:[%s1 + $0x418] sm:$0xff]
    %v170 = vld [vmem:[%s1 + $0x420] sm:$0xff]
    %v171 = vld [vmem:[%s1 + $0x428] sm:$0xff]
    %v172 = vld [vmem:[%s1 + $0x430] sm:$0xff]
    %v173 = vld [vmem:[%s1 + $0x438] sm:$0xff]
    %v174 = vld [vmem:[%s1 + $0x440] sm:$0xff]
    %v175 = vld [vmem:[%s1 + $0x448] sm:$0xff]
    %v176 = vld [vmem:[%s1 + $0x450] sm:$0xff]
    %v177 = vld [vmem:[%s1 + $0x458] sm:$0xff]
    %v178 = vld [vmem:[%s1 + $0x460] sm:$0xff]
    %v179 = vld [vmem:[%s1 + $0x468] sm:$0xff]
    %v180 = vld [vmem:[%s1 + $0x470] sm:$0xff]
    %v181 = vld [vmem:[%s1 + $0x478] sm:$0xff]
    %v182 = vld [vmem:[%s1 + $0x480] sm:$0xff]
    %v183 = vld [vmem:[%s1 + $0x488] sm:$0xff]
    %v184 = vld [vmem:[%s1 + $0x490] sm:$0xff]
    %v185 = vld [vmem:[%s1 + $0x498] sm:$0xff]
    %v186 = vld [vmem:[%s1 + $0x4a0] sm:$0xff]
    %v187 = vld [vmem:[%s1 + $0x4a8] sm:$0xff]
    %v188 = vld [vmem:[%s1 + $0x4b0] sm:$0xff]
    %v189 = vld [vmem:[%s1 + $0x4b8] sm:$0xff]
    %v190 = vld [vmem:[%s1 + $0x4c0] sm:$0xff]
    %v191 = vld [vmem:[%s1 + $0x4c8] sm:$0xff]
    %v192 = vld [vmem:[%s1 + $0x4d0] sm:$0xff]
    %v193 = vld [vmem:[%s1 + $0x4d8] sm:$0xff]
    %v194 = vld [vmem:[%s1 + $0x4e0] sm:$0xff]
    %v195 = vld [vmem:[%s1 + $0x4e8] sm:$0xff]
    %v196 = vld [vmem:[%s1 + $0x4f0] sm:$0xff]
    %v197 = vld [vmem:[%s1 + $0x4f8] sm:$0xff]
    %v198 = vld [vmem:[%s1 + $0x500] sm:$0xff]
    %v199 = vld [vmem:[%s1 + $0x508] sm:$0xff]
    %v200 = vld [vmem:[%s1 + $0x510] sm:$0xff]
    %v201 = vld [vmem:[%s1 + $0x518] sm:$0xff]
    %v202 = vld [vmem:[%s1 + $0x520] sm:$0xff]
    %v203 = vld [vmem:[%s1 + $0x528] sm:$0xff]
    %v204 = vld [vmem:[%s1 + $0x530] sm:$0xff]
    %v205 = vld [vmem:[%s1 + $0x538] sm:$0xff]
    %v206 = vld [vmem:[%s1 + $0x540] sm:$0xff]
    %v207 = vld [vmem:[%s1 + $0x548] sm:$0xff]
    %v208 = vld [vmem:[%s1 + $0x550] sm:$0xff]
    %v209 = vld [vmem:[%s1 + $0x558] sm:$0xff]
    %v210 = vld [vmem:[%s1 + $0x560] sm:$0xff]
    %v211 = vld [vmem:[%s1 + $0x568] sm:$0xff]
    %v212 = vld [vmem:[%s1 + $0x570] sm:$0xff]
    %v213 = vld [vmem:[%s1 + $0x578] sm:$0xff]
    %v214 = vld [vmem:[%s1 + $0x580] sm:$0xff]
    %v215 = vld [vmem:[%s1 + $0x588] sm:$0xff]
    %v216 = vld [vmem:[%s1 + $0x590] sm:$0xff]
    %v217 = vld [vmem:[%s1 + $0x598] sm:$0xff]
    %v218 = vld [vmem:[%s1 + $0x5a0] sm:$0xff]
    %v219 = vld [vmem:[%s1 + $0x5a8] sm:$0xff]
    %v220 = vld [vmem:[%s1 + $0x5b0] sm:$0xff]
    %v221 = vld [vmem:[%s1 + $0x5b8] sm:$0xff]
    %v222 = vld [vmem:[%s1 + $0x5c0] sm:$0xff]
    %v223 = vld [vmem:[%s1 + $0x5c8] sm:$0xff]
    %v224 = vld [vmem:[%s1 + $0x5d0] sm:$0xff]
    %v225 = vld [vmem:[%s1 + $0x5d8] sm:$0xff]
    %v226 = vld [vmem:[%s1 + $0x5e0] sm:$0xff]
    %v227 = vld [vmem:[%s1 + $0x5e8] sm:$0xff]
    %v228 = vld [vmem:[%s1 + $0x5f0] sm:$0xff]
    %v229 = vld [vmem:[%s1 + $0x5f8] sm:$0xff]
    %v230 = vld [vmem:[%s1 + $0x600] sm:$0xff]
    %v231 = vld [vmem:[%s1 + $0x608] sm:$0xff]
    %v232 = vld [vmem:[%s1 + $0x610] sm:$0xff]
    %v233 = vld [vmem:[%s1 + $0x618] sm:$0xff]
    %v234 = vld [vmem:[%s1 + $0x620] sm:$0xff]
    %v235 = vld [vmem:[%s1 + $0x628] sm:$0xff]
    %v236 = vld [vmem:[%s1 + $0x630] sm:$0xff]
    %v237 = vld [vmem:[%s1 + $0x638] sm:$0xff]
    %v238 = vld [vmem:[%s1 + $0x640] sm:$0xff]
    %v239 = vld [vmem:[%s1 + $0x648] sm:$0xff]
    %v240 = vld [vmem:[%s1 + $0x650] sm:$0xff]
    %v241 = vld [vmem:[%s1 + $0x658] sm:$0xff]
    %v242 = vld [vmem:[%s1 + $0x660] sm:$0xff]
    %v243 = vld [vmem:[%s1 + $0x668] sm:$0xff]
    %v244 = vld [vmem:[%s1 + $0x670] sm:$0xff]
    %v245 = vld [vmem:[%s1 + $0x678] sm:$0xff]
    %v246 = vld [vmem:[%s1 + $0x680] sm:$0xff]
    %v247 = vld [vmem:[%s1 + $0x688] sm:$0xff]
    %v248 = vld [vmem:[%s1 + $0x690] sm:$0xff]
    %v249 = vld [vmem:[%s1 + $0x698] sm:$0xff]
    %v250 = vld [vmem:[%s1 + $0x6a0] sm:$0xff]
    %v251 = vld [vmem:[%s1 + $0x6a8] sm:$0xff]
    %v252 = vld [vmem:[%s1 + $0x6b0] sm:$0xff]
    %v253 = vld [vmem:[%s1 + $0x6b8] sm:$0xff]
    %v254 = vld [vmem:[%s1 + $0x6c0] sm:$0xff]
    %v255 = vld [vmem:[%s1 + $0x6c8] sm:$0xff]
    %v256 = vld [vmem:[%s1 + $0x6d0] sm:$0xff]
    %v257 = vld [vmem:[%s1 + $0x6d8] sm:$0xff]
    %v258 = vld [vmem:[%s1 + $0x6e0] sm:$0xff]
    %v259 = vld [vmem:[%s1 + $0x6e8] sm:$0xff]
    %v260 = vld [vmem:[%s1 + $0x6f0] sm:$0xff]
    %v261 = vld [vmem:[%s1 + $0x6f8] sm:$0xff]
    %v262 = vld [vmem:[%s1 + $0x700] sm:$0xff]
    %v263 = vld [vmem:[%s1 + $0x708] sm:$0xff]
    %v264 = vld [vmem:[%s1 + $0x710] sm:$0xff]
    %v265 = vld [vmem:[%s1 + $0x718] sm:$0xff]
    %v266 = vld [vmem:[%s1 + $0x720] sm:$0xff]
    %v267 = vld [vmem:[%s1 + $0x728] sm:$0xff]
    %v268 = vld [vmem:[%s1 + $0x730] sm:$0xff]
    %v269 = vld [vmem:[%s1 + $0x738] sm:$0xff]
    %v270 = vld [vmem:[%s1 + $0x740] sm:$0xff]
    %v271 = vld [vmem:[%s1 + $0x748] sm:$0xff]
    %v272 = vld [vmem:[%s1 + $0x750] sm:$0xff]
    %v273 = vld [vmem:[%s1 + $0x758] sm:$0xff]
    %v274 = vld [vmem:[%s1 + $0x760] sm:$0xff]
    %v275 = vld [vmem:[%s1 + $0x768] sm:$0xff]
    %v276 = vld [vmem:[%s1 + $0x770] sm:$0xff]
    %v277 = vld [vmem:[%s1 + $0x778] sm:$0xff]
    %v278 = vld [vmem:[%s1 + $0x780] sm:$0xff]
    %v279 = vld [vmem:[%s1 + $0x788] sm:$0xff]
    %v280 = vld [vmem:[%s1 + $0x790] sm:$0xff]
    %v281 = vld [vmem:[%s1 + $0x798] sm:$0xff]
    %v282 = vld [vmem:[%s1 + $0x7a0] sm:$0xff]
    %v283 = vld [vmem:[%s1 + $0x7a8] sm:$0xff]
    %v284 = vld [vmem:[%s1 + $0x7b0] sm:$0xff]
    %v285 = vld [vmem:[%s1 + $0x7b8] sm:$0xff]
    %v286 = vld [vmem:[%s1 + $0x7c0] sm:$0xff]
    %v287 = vld [vmem:[%s1 + $0x7c8] sm:$0xff]
    %v288 = vld [vmem:[%s1 + $0x7d0] sm:$0xff]
    %v289 = vld [vmem:[%s1 + $0x7d8] sm:$0xff]
    %v290 = vld [vmem:[%s1 + $0x7e0] sm:$0xff]
    %v291 = vld [vmem:[%s1 + $0x7e8] sm:$0xff]
    %v292 = vld [vmem:[%s1 + $0x7f0] sm:$0xff]
    %v293 = vld [vmem:[%s1 + $0x7f8] sm:$0xff]
    %v294 = vld [vmem:[%s1 + $0x800] sm:$0xff]
    %v295 = vld [vmem:[%s1 + $0x808] sm:$0xff]
    %v296 = vld [vmem:[%s1 + $0x810] sm:$0xff]
    %v297 = vld [vmem:[%s1 + $0x818] sm:$0xff]
    %v298 = vld [vmem:[%s1 + $0x820] sm:$0xff]
    %v299 = vld [vmem:[%s1 + $0x828] sm:$0xff]
    %v300 = vld [vmem:[%s1 + $0x830] sm:$0xff]
    %v301 = vld [vmem:[%s1 + $0x838] sm:$0xff]
    %v302 = vld [vmem:[%s1 + $0x840] sm:$0xff]
    %v303 = vld [vmem:[%s1 + $0x848] sm:$0xff]
    %v304 = vld [vmem:[%s1 + $0x850] sm:$0xff]
    %v305 = vld [vmem:[%s1 + $0x858] sm:$0xff]
    %v306 = vld [vmem:[%s1 + $0x860] sm:$0xff]
    %v307 = vld [vmem:[%s1 + $0x868] sm:$0xff]
    %v308 = vld [vmem:[%s1 + $0x870] sm:$0xff]
    %v309 = vld [vmem:[%s1 + $0x878] sm:$0xff]
    %v310 = vld [vmem:[%s1 + $0x880] sm:$0xff]
    %v311 = vld [vmem:[%s1 + $0x888] sm:$0xff]
    %v312 = vld [vmem:[%s1 + $0x890] sm:$0xff]
    %v313 = vld [vmem:[%s1 + $0x898] sm:$0xff]
    %v314 = vld [vmem:[%s1 + $0x8a0] sm:$0xff]
    %v315 = vld [vmem:[%s1 + $0x8a8] sm:$0xff]
    %v316 = vld [vmem:[%s1 + $0x8b0] sm:$0xff]
    %v317 = vld [vmem:[%s1 + $0x8b8] sm:$0xff]
    %v318 = vld [vmem:[%s1 + $0x8c0] sm:$0xff]
    %v319 = vld [vmem:[%s1 + $0x8c8] sm:$0xff]
    %v320 = vld [vmem:[%s1 + $0x8d0] sm:$0xff]
    %v321 = vld [vmem:[%s1 + $0x8d8] sm:$0xff]
    %v322 = vld [vmem:[%s1 + $0x8e0] sm:$0xff]
    %v323 = vld [vmem:[%s1 + $0x8e8] sm:$0xff]
    %v324 = vld [vmem:[%s1 + $0x8f0] sm:$0xff]
    %v325 = vld [vmem:[%s1 + $0x8f8] sm:$0xff]
    %v326 = vld [vmem:[%s1 + $0x900] sm:$0xff]
    %v327 = vld [vmem:[%s1 + $0x908] sm:$0xff]
    %v328 = vld [vmem:[%s1 + $0x910] sm:$0xff]
    %v329 = vld [vmem:[%s1 + $0x918] sm:$0xff]
    %v330 = vld [vmem:[%s1 + $0x920] sm:$0xff]
    %v331 = vld [vmem:[%s1 + $0x928] sm:$0xff]
    %v332 = vld [vmem:[%s1 + $0x930] sm:$0xff]
    %v333 = vld [vmem:[%s1 + $0x938] sm:$0xff]
    %v334 = vld [vmem:[%s1 + $0x940] sm:$0xff]
    %v335 = vld [vmem:[%s1 + $0x948] sm:$0xff]
    %v336 = vld [vmem:[%s1 + $0x950] sm:$0xff]
    %v337 = vld [vmem:[%s1 + $0x958] sm:$0xff]
    %v338 = vld [vmem:[%s1 + $0x960] sm:$0xff]
    %v339 = vld [vmem:[%s1 + $0x968] sm:$0xff]
    %v340 = vld [vmem:[%s1 + $0x970] sm:$0xff]
    %v341 = vld [vmem:[%s1 + $0x978] sm:$0xff]
    %v342 = vld [vmem:[%s1 + $0x980] sm:$0xff]
    %v343 = vld [vmem:[%s1 + $0x988] sm:$0xff]
    %v344 = vld [vmem:[%s1 + $0x990] sm:$0xff]
    %v345 = vld [vmem:[%s1 + $0x998] sm:$0xff]
    %v346 = vld [vmem:[%s1 + $0x9a0] sm:$0xff]
    %v347 = vld [vmem:[%s1 + $0x9a8] sm:$0xff]
    %v348 = vld [vmem:[%s1 + $0x9b0] sm:$0xff]
    %v349 = vld [vmem:[%s1 + $0x9b8] sm:$0xff]
    %v350 = vld [vmem:[%s1 + $0x9c0] sm:$0xff]
    %v351 = vld [vmem:[%s1 + $0x9c8] sm:$0xff]
    %v352 = vld [vmem:[%s1 + $0x9d0] sm:$0xff]
    %v353 = vld [vmem:[%s1 + $0x9d8] sm:$0xff]
    %v354 = vld [vmem:[%s1 + $0x9e0] sm:$0xff]
    %v355 = vld [vmem:[%s1 + $0x9e8] sm:$0xff]
    %v356 = vld [vmem:[%s1 + $0x9f0] sm:$0xff]
    %v357 = vld [vmem:[%s1 + $0x9f8] sm:$0xff]
    %v358 = vld [vmem:[%s1 + $0xa00] sm:$0xff]
    %v359 = vld [vmem:[%s1 + $0xa08] sm:$0xff]
    %v360 = vld [vmem:[%s1 + $0xa10] sm:$0xff]
    %v361 = vld [vmem:[%s1 + $0xa18] sm:$0xff]
    %v362 = vld [vmem:[%s1 + $0xa20] sm:$0xff]
    %v363 = vld [vmem:[%s1 + $0xa28] sm:$0xff]
    %v364 = vld [vmem:[%s1 + $0xa30] sm:$0xff]
    %v365 = vld [vmem:[%s1 + $0xa38] sm:$0xff]
    %v366 = vld [vmem:[%s1 + $0xa40] sm:$0xff]
    %v367 = vld [vmem:[%s1 + $0xa48] sm:$0xff]
    %v368 = vld [vmem:[%s1 + $0xa50] sm:$0xff]
    %v369 = vld [vmem:[%s1 + $0xa58] sm:$0xff]
    %v370 = vld [vmem:[%s1 + $0xa60] sm:$0xff]
    %v371 = vld [vmem:[%s1 + $0xa68] sm:$0xff]
    %v372 = vld [vmem:[%s1 + $0xa70] sm:$0xff]
    %v373 = vld [vmem:[%s1 + $0xa78] sm:$0xff]
    %v374 = vld [vmem:[%s1 + $0xa80] sm:$0xff]
    %v375 = vld [vmem:[%s1 + $0xa88] sm:$0xff]
    %v376 = vld [vmem:[%s1 + $0xa90] sm:$0xff]
    %v377 = vld [vmem:[%s1 + $0xa98] sm:$0xff]
    %v378 = vld [vmem:[%s1 + $0xaa0] sm:$0xff]
    %v379 = vld [vmem:[%s1 + $0xaa8] sm:$0xff]
    %v380 = vld [vmem:[%s1 + $0xab0] sm:$0xff]
    %v381 = vld [vmem:[%s1 + $0xab8] sm:$0xff]
    %v382 = vld [vmem:[%s1 + $0xac0] sm:$0xff]
    %v383 = vld [vmem:[%s1 + $0xac8] sm:$0xff]
    %v384 = vld [vmem:[%s1 + $0xad0] sm:$0xff]
    %v385 = vld [vmem:[%s1 + $0xad8] sm:$0xff]
    %v386 = vld [vmem:[%s1 + $0xae0] sm:$0xff]
    %v387 = vld [vmem:[%s1 + $0xae8] sm:$0xff]
    %v388 = vld [vmem:[%s1 + $0xaf0] sm:$0xff]
    %v389 = vld [vmem:[%s1 + $0xaf8] sm:$0xff]
    %v390 = vld [vmem:[%s1 + $0xb00] sm:$0xff]
    %v391 = vld [vmem:[%s1 + $0xb08] sm:$0xff]
    %v392 = vld [vmem:[%s1 + $0xb10] sm:$0xff]
    %v393 = vld [vmem:[%s1 + $0xb18] sm:$0xff]
    %v394 = vld [vmem:[%s1 + $0xb20] sm:$0xff]
    %v395 = vld [vmem:[%s1 + $0xb28] sm:$0xff]
    %v396 = vld [vmem:[%s1 + $0xb30] sm:$0xff]
    %v397 = vld [vmem:[%s1 + $0xb38] sm:$0xff]
    %v398 = vld [vmem:[%s1 + $0xb40] sm:$0xff]
    %v399 = vld [vmem:[%s1 + $0xb48] sm:$0xff]
    %v400 = vld [vmem:[%s1 + $0xb50] sm:$0xff]
    %v401 = vld [vmem:[%s1 + $0xb58] sm:$0xff]
    %v402 = vld [vmem:[%s1 + $0xb60] sm:$0xff]
    %v403 = vld [vmem:[%s1 + $0xb68] sm:$0xff]
    %v404 = vld [vmem:[%s1 + $0xb70] sm:$0xff]
    %v405 = vld [vmem:[%s1 + $0xb78] sm:$0xff]
    %v406 = vld [vmem:[%s1 + $0xb80] sm:$0xff]
    %v407 = vld [vmem:[%s1 + $0xb88] sm:$0xff]
    %v408 = vld [vmem:[%s1 + $0xb90] sm:$0xff]
    %v409 = vld [vmem:[%s1 + $0xb98] sm:$0xff]
    %v410 = vld [vmem:[%s1 + $0xba0] sm:$0xff]
    %v411 = vld [vmem:[%s1 + $0xba8] sm:$0xff]
    %v412 = vld [vmem:[%s1 + $0xbb0] sm:$0xff]
    %v413 = vld [vmem:[%s1 + $0xbb8] sm:$0xff]
    %v414 = vld [vmem:[%s1 + $0xbc0] sm:$0xff]
    %v415 = vld [vmem:[%s1 + $0xbc8] sm:$0xff]
    %v416 = vld [vmem:[%s1 + $0xbd0] sm:$0xff]
    %v417 = vld [vmem:[%s1 + $0xbd8] sm:$0xff]
    %v418 = vld [vmem:[%s1 + $0xbe0] sm:$0xff]
    %v419 = vld [vmem:[%s1 + $0xbe8] sm:$0xff]
    %v420 = vld [vmem:[%s1 + $0xbf0] sm:$0xff]
    %v421 = vld [vmem:[%s1 + $0xbf8] sm:$0xff]
    %v422 = vld [vmem:[%s1 + $0xc00] sm:$0xff]
    %v423 = vld [vmem:[%s1 + $0xc08] sm:$0xff]
    %v424 = vld [vmem:[%s1 + $0xc10] sm:$0xff]
    %v425 = vld [vmem:[%s1 + $0xc18] sm:$0xff]
    %v426 = vld [vmem:[%s1 + $0xc20] sm:$0xff]
    %v427 = vld [vmem:[%s1 + $0xc28] sm:$0xff]
    %v428 = vld [vmem:[%s1 + $0xc30] sm:$0xff]
    %v429 = vld [vmem:[%s1 + $0xc38] sm:$0xff]
    %v430 = vld [vmem:[%s1 + $0xc40] sm:$0xff]
    %v431 = vld [vmem:[%s1 + $0xc48] sm:$0xff]
    %v432 = vld [vmem:[%s1 + $0xc50] sm:$0xff]
    %v433 = vld [vmem:[%s1 + $0xc58] sm:$0xff]
    %v434 = vld [vmem:[%s1 + $0xc60] sm:$0xff]
    %v435 = vld [vmem:[%s1 + $0xc68] sm:$0xff]
    %v436 = vld [vmem:[%s1 + $0xc70] sm:$0xff]
    %v437 = vld [vmem:[%s1 + $0xc78] sm:$0xff]
    %v438 = vld [vmem:[%s1 + $0xc80] sm:$0xff]
    %v439 = vld [vmem:[%s1 + $0xc88] sm:$0xff]
    %v440 = vld [vmem:[%s1 + $0xc90] sm:$0xff]
    %v441 = vld [vmem:[%s1 + $0xc98] sm:$0xff]
    %v442 = vld [vmem:[%s1 + $0xca0] sm:$0xff]
    %v443 = vld [vmem:[%s1 + $0xca8] sm:$0xff]
    %v444 = vld [vmem:[%s1 + $0xcb0] sm:$0xff]
    %v445 = vld [vmem:[%s1 + $0xcb8] sm:$0xff]
    %v446 = vld [vmem:[%s1 + $0xcc0] sm:$0xff]
    %v447 = vld [vmem:[%s1 + $0xcc8] sm:$0xff]
    %v448 = vld [vmem:[%s1 + $0xcd0] sm:$0xff]
    %v449 = vld [vmem:[%s1 + $0xcd8] sm:$0xff]
    %v450 = vld [vmem:[%s1 + $0xce0] sm:$0xff]
    %v451 = vld [vmem:[%s1 + $0xce8] sm:$0xff]
    %v452 = vld [vmem:[%s1 + $0xcf0] sm:$0xff]
    %v453 = vld [vmem:[%s1 + $0xcf8] sm:$0xff]
    %v454 = vld [vmem:[%s1 + $0xd00] sm:$0xff]
    %v455 = vld [vmem:[%s1 + $0xd08] sm:$0xff]
    %v456 = vld [vmem:[%s1 + $0xd10] sm:$0xff]
    %v457 = vld [vmem:[%s1 + $0xd18] sm:$0xff]
    %v458 = vld [vmem:[%s1 + $0xd20] sm:$0xff]
    %v459 = vld [vmem:[%s1 + $0xd28] sm:$0xff]
    %v460 = vld [vmem:[%s1 + $0xd30] sm:$0xff]
    %v461 = vld [vmem:[%s1 + $0xd38] sm:$0xff]
    %v462 = vld [vmem:[%s1 + $0xd40] sm:$0xff]
    %v463 = vld [vmem:[%s1 + $0xd48] sm:$0xff]
    %v464 = vld [vmem:[%s1 + $0xd50] sm:$0xff]
    %v465 = vld [vmem:[%s1 + $0xd58] sm:$0xff]
    %v466 = vld [vmem:[%s1 + $0xd60] sm:$0xff]
    %v467 = vld [vmem:[%s1 + $0xd68] sm:$0xff]
    %v468 = vld [vmem:[%s1 + $0xd70] sm:$0xff]
    %v469 = vld [vmem:[%s1 + $0xd78] sm:$0xff]
    %v470 = vld [vmem:[%s1 + $0xd80] sm:$0xff]
    %v471 = vld [vmem:[%s1 + $0xd88] sm:$0xff]
    %v472 = vld [vmem:[%s1 + $0xd90] sm:$0xff]
    %v473 = vld [vmem:[%s1 + $0xd98] sm:$0xff]
    %v474 = vld [vmem:[%s1 + $0xda0] sm:$0xff]
    %v475 = vld [vmem:[%s1 + $0xda8] sm:$0xff]
    %v476 = vld [vmem:[%s1 + $0xdb0] sm:$0xff]
    %v477 = vld [vmem:[%s1 + $0xdb8] sm:$0xff]
    %v478 = vld [vmem:[%s1 + $0xdc0] sm:$0xff]
    %v479 = vld [vmem:[%s1 + $0xdc8] sm:$0xff]
    %v480 = vld [vmem:[%s1 + $0xdd0] sm:$0xff]
    %v481 = vld [vmem:[%s1 + $0xdd8] sm:$0xff]
    %v482 = vld [vmem:[%s1 + $0xde0] sm:$0xff]
    %v483 = vld [vmem:[%s1 + $0xde8] sm:$0xff]
    %v484 = vld [vmem:[%s1 + $0xdf0] sm:$0xff]
    %v485 = vld [vmem:[%s1 + $0xdf8] sm:$0xff]
    %v486 = vld [vmem:[%s1 + $0xe00] sm:$0xff]
    %v487 = vld [vmem:[%s1 + $0xe08] sm:$0xff]
    %v488 = vld [vmem:[%s1 + $0xe10] sm:$0xff]
    %v489 = vld [vmem:[%s1 + $0xe18] sm:$0xff]
    %v490 = vld [vmem:[%s1 + $0xe20] sm:$0xff]
    %v491 = vld [vmem:[%s1 + $0xe28] sm:$0xff]
    %v492 = vld [vmem:[%s1 + $0xe30] sm:$0xff]
    %v493 = vld [vmem:[%s1 + $0xe38] sm:$0xff]
    %v494 = vld [vmem:[%s1 + $0xe40] sm:$0xff]
    %v495 = vld [vmem:[%s1 + $0xe48] sm:$0xff]
    %v496 = vld [vmem:[%s1 + $0xe50] sm:$0xff]
    %v497 = vld [vmem:[%s1 + $0xe58] sm:$0xff]
    %v498 = vld [vmem:[%s1 + $0xe60] sm:$0xff]
    %v499 = vld [vmem:[%s1 + $0xe68] sm:$0xff]
    %v500 = vld [vmem:[%s1 + $0xe70] sm:$0xff]
    %v501 = vld [vmem:[%s1 + $0xe78] sm:$0xff]
    %v502 = vld [vmem:[%s1 + $0xe80] sm:$0xff]
    %v503 = vld [vmem:[%s1 + $0xe88] sm:$0xff]
    %v504 = vld [vmem:[%s1 + $0xe90] sm:$0xff]
    %v505 = vld [vmem:[%s1 + $0xe98] sm:$0xff]
    %v506 = vld [vmem:[%s1 + $0xea0] sm:$0xff]
    %v507 = vld [vmem:[%s1 + $0xea8] sm:$0xff]
    %v508 = vld [vmem:[%s1 + $0xeb0] sm:$0xff]
    %v509 = vld [vmem:[%s1 + $0xeb8] sm:$0xff]
    %v510 = vld [vmem:[%s1 + $0xec0] sm:$0xff]
    %v511 = vld [vmem:[%s1 + $0xec8] sm:$0xff]
    %v512 = vld [vmem:[%s1 + $0xed0] sm:$0xff]
    %v513 = vld [vmem:[%s1 + $0xed8] sm:$0xff]
    %v514 = vld [vmem:[%s1 + $0xee0] sm:$0xff]
    %v515 = vld [vmem:[%s1 + $0xee8] sm:$0xff]
    %v516 = vld [vmem:[%s1 + $0xef0] sm:$0xff]
    %v517 = vld [vmem:[%s1 + $0xef8] sm:$0xff]
    %v518 = vld [vmem:[%s1 + $0xf00] sm:$0xff]
    %v519 = vld [vmem:[%s1 + $0xf08] sm:$0xff]
    %v520 = vld [vmem:[%s1 + $0xf10] sm:$0xff]
    %v521 = vld [vmem:[%s1 + $0xf18] sm:$0xff]
    %v522 = vld [vmem:[%s1 + $0xf20] sm:$0xff]
    %v523 = vld [vmem:[%s1 + $0xf28] sm:$0xff]
    %v524 = vld [vmem:[%s1 + $0xf30] sm:$0xff]
    %v525 = vld [vmem:[%s1 + $0xf38] sm:$0xff]
    %v526 = vld [vmem:[%s1 + $0xf40] sm:$0xff]
    %v527 = vld [vmem:[%s1 + $0xf48] sm:$0xff]
    %v528 = vld [vmem:[%s1 + $0xf50] sm:$0xff]
    %v529 = vld [vmem:[%s1 + $0xf58] sm:$0xff]
    %v530 = vld [vmem:[%s1 + $0xf60] sm:$0xff]
    %v531 = vld [vmem:[%s1 + $0xf68] sm:$0xff]
    %v532 = vld [vmem:[%s1 + $0xf70] sm:$0xff]
    %v533 = vld [vmem:[%s1 + $0xf78] sm:$0xff]
    %v534 = vld [vmem:[%s1 + $0xf80] sm:$0xff]
    %v535 = vld [vmem:[%s1 + $0xf88] sm:$0xff]
    %v536 = vld [vmem:[%s1 + $0xf90] sm:$0xff]
    %v537 = vld [vmem:[%s1 + $0xf98] sm:$0xff]
    %v538 = vld [vmem:[%s1 + $0xfa0] sm:$0xff]
    %v539 = vld [vmem:[%s1 + $0xfa8] sm:$0xff]
    %v540 = vld [vmem:[%s1 + $0xfb0] sm:$0xff]
    %v541 = vld [vmem:[%s1 + $0xfb8] sm:$0xff]
    %v542 = vld [vmem:[%s1 + $0xfc0] sm:$0xff]
    %v543 = vld [vmem:[%s1 + $0xfc8] sm:$0xff]
    %v544 = vld [vmem:[%s1 + $0xfd0] sm:$0xff]
    %v545 = vld [vmem:[%s1 + $0xfd8] sm:$0xff]
    %v546 = vld [vmem:[%s1 + $0xfe0] sm:$0xff]
    %v547 = vld [vmem:[%s1 + $0xfe8] sm:$0xff]
    %v548 = vld [vmem:[%s1 + $0xff0] sm:$0xff]
    %v549 = vld [vmem:[%s1 + $0xff8] sm:$0xff]
    %v550 = vld [vmem:[%s1 + $0x1000] sm:$0xff]
    %v551 = vld [vmem:[%s1 + $0x1008] sm:$0xff]
    %v552 = vld [vmem:[%s1 + $0x1010] sm:$0xff]
    %v553 = vld [vmem:[%s1 + $0x1018] sm:$0xff]
    %v554 = vld [vmem:[%s1 + $0x1020] sm:$0xff]
    %v555 = vld [vmem:[%s1 + $0x1028] sm:$0xff]
    %v556 = vld [vmem:[%s1 + $0x1030] sm:$0xff]
    %v557 = vld [vmem:[%s1 + $0x1038] sm:$0xff]
    %v558 = vld [vmem:[%s1 + $0x1040] sm:$0xff]
    %v559 = vld [vmem:[%s1 + $0x1048] sm:$0xff]
    %v560 = vld [vmem:[%s1 + $0x1050] sm:$0xff]
    %v561 = vld [vmem:[%s1 + $0x1058] sm:$0xff]
    %v562 = vld [vmem:[%s1 + $0x1060] sm:$0xff]
    %v563 = vld [vmem:[%s1 + $0x1068] sm:$0xff]
    %v564 = vld [vmem:[%s1 + $0x1070] sm:$0xff]
    %v565 = vld [vmem:[%s1 + $0x1078] sm:$0xff]
    %v566 = vld [vmem:[%s1 + $0x1080] sm:$0xff]
    %v567 = vld [vmem:[%s1 + $0x1088] sm:$0xff]
    %v568 = vld [vmem:[%s1 + $0x1090] sm:$0xff]
    %v569 = vld [vmem:[%s1 + $0x1098] sm:$0xff]
    %v570 = vld [vmem:[%s1 + $0x10a0] sm:$0xff]
    %v571 = vld [vmem:[%s1 + $0x10a8] sm:$0xff]
    %v572 = vld [vmem:[%s1 + $0x10b0] sm:$0xff]
    %v573 = vld [vmem:[%s1 + $0x10b8] sm:$0xff]
    %v574 = vld [vmem:[%s1 + $0x10c0] sm:$0xff]
    %v575 = vld [vmem:[%s1 + $0x10c8] sm:$0xff]
    %v576 = vld [vmem:[%s1 + $0x10d0] sm:$0xff]
    %v577 = vld [vmem:[%s1 + $0x10d8] sm:$0xff]
    %v578 = vld [vmem:[%s1 + $0x10e0] sm:$0xff]
    %v579 = vld [vmem:[%s1 + $0x10e8] sm:$0xff]
    %v580 = vld [vmem:[%s1 + $0x10f0] sm:$0xff]
    %v581 = vld [vmem:[%s1 + $0x10f8] sm:$0xff]
    %v582 = vld [vmem:[%s1 + $0x1100] sm:$0xff]
    %v583 = vld [vmem:[%s1 + $0x1108] sm:$0xff]
    %v584 = vld [vmem:[%s1 + $0x1110] sm:$0xff]
    %v585 = vld [vmem:[%s1 + $0x1118] sm:$0xff]
    %v586 = vld [vmem:[%s1 + $0x1120] sm:$0xff]
    %v587 = vld [vmem:[%s1 + $0x1128] sm:$0xff]
    %v588 = vld [vmem:[%s1 + $0x1130] sm:$0xff]
    %v589 = vld [vmem:[%s1 + $0x1138] sm:$0xff]
    %v590 = vld [vmem:[%s1 + $0x1140] sm:$0xff]
    %v591 = vld [vmem:[%s1 + $0x1148] sm:$0xff]
    %v592 = vld [vmem:[%s1 + $0x1150] sm:$0xff]
    %v593 = vld [vmem:[%s1 + $0x1158] sm:$0xff]
    %v594 = vld [vmem:[%s1 + $0x1160] sm:$0xff]
    %v595 = vld [vmem:[%s1 + $0x1168] sm:$0xff]
    %v596 = vld [vmem:[%s1 + $0x1170] sm:$0xff]
    %v597 = vld [vmem:[%s1 + $0x1178] sm:$0xff]
    %v598 = vld [vmem:[%s1 + $0x1180] sm:$0xff]
    %v599 = vld [vmem:[%s1 + $0x1188] sm:$0xff]
    %v600 = vld [vmem:[%s1 + $0x1190] sm:$0xff]
    %v601 = vld [vmem:[%s1 + $0x1198] sm:$0xff]
    %v602 = vld [vmem:[%s1 + $0x11a0] sm:$0xff]
    %v603 = vld [vmem:[%s1 + $0x11a8] sm:$0xff]
    %v604 = vld [vmem:[%s1 + $0x11b0] sm:$0xff]
    %v605 = vld [vmem:[%s1 + $0x11b8] sm:$0xff]
    %v606 = vld [vmem:[%s1 + $0x11c0] sm:$0xff]
    %v607 = vld [vmem:[%s1 + $0x11c8] sm:$0xff]
    %v608 = vld [vmem:[%s1 + $0x11d0] sm:$0xff]
    %v609 = vld [vmem:[%s1 + $0x11d8] sm:$0xff]
    %v610 = vld [vmem:[%s1 + $0x11e0] sm:$0xff]
    %v611 = vld [vmem:[%s1 + $0x11e8] sm:$0xff]
    %v612 = vld [vmem:[%s1 + $0x11f0] sm:$0xff]
    %v613 = vld [vmem:[%s1 + $0x11f8] sm:$0xff]
    %v614 = vld [vmem:[%s1 + $0x1200] sm:$0xff]
    %v615 = vld [vmem:[%s1 + $0x1208] sm:$0xff]
    %v616 = vld [vmem:[%s1 + $0x1210] sm:$0xff]
    %v617 = vld [vmem:[%s1 + $0x1218] sm:$0xff]
    %v618 = vld [vmem:[%s1 + $0x1220] sm:$0xff]
    %v619 = vld [vmem:[%s1 + $0x1228] sm:$0xff]
    %v620 = vld [vmem:[%s1 + $0x1230] sm:$0xff]
    %v621 = vld [vmem:[%s1 + $0x1238] sm:$0xff]
    %v622 = vld [vmem:[%s1 + $0x1240] sm:$0xff]
    %v623 = vld [vmem:[%s1 + $0x1248] sm:$0xff]
    %v624 = vld [vmem:[%s1 + $0x1250] sm:$0xff]
    %v625 = vld [vmem:[%s1 + $0x1258] sm:$0xff]
    %v626 = vld [vmem:[%s1 + $0x1260] sm:$0xff]
    %v627 = vld [vmem:[%s1 + $0x1268] sm:$0xff]
    %v628 = vld [vmem:[%s1 + $0x1270] sm:$0xff]
    %v629 = vld [vmem:[%s1 + $0x1278] sm:$0xff]
    %v630 = vld [vmem:[%s1 + $0x1280] sm:$0xff]
    %v631 = vld [vmem:[%s1 + $0x1288] sm:$0xff]
    %v632 = vld [vmem:[%s1 + $0x1290] sm:$0xff]
    %v633 = vld [vmem:[%s1 + $0x1298] sm:$0xff]
    %v634 = vld [vmem:[%s1 + $0x12a0] sm:$0xff]
    %v635 = vld [vmem:[%s1 + $0x12a8] sm:$0xff]
    %v636 = vld [vmem:[%s1 + $0x12b0] sm:$0xff]
    %v637 = vld [vmem:[%s1 + $0x12b8] sm:$0xff]
    %v638 = vld [vmem:[%s1 + $0x12c0] sm:$0xff]
    %v639 = vld [vmem:[%s1 + $0x12c8] sm:$0xff]
    %v640 = vld [vmem:[%s1 + $0x12d0] sm:$0xff]
    %v641 = vld [vmem:[%s1 + $0x12d8] sm:$0xff]
    %v642 = vld [vmem:[%s1 + $0x12e0] sm:$0xff]
    %v643 = vld [vmem:[%s1 + $0x12e8] sm:$0xff]
    %v644 = vld [vmem:[%s1 + $0x12f0] sm:$0xff]
    %v645 = vld [vmem:[%s1 + $0x12f8] sm:$0xff]
    %v646 = vld [vmem:[%s1 + $0x1300] sm:$0xff]
    %v647 = vld [vmem:[%s1 + $0x1308] sm:$0xff]
    %v648 = vld [vmem:[%s1 + $0x1310] sm:$0xff]
    %v649 = vld [vmem:[%s1 + $0x1318] sm:$0xff]
    %v650 = vld [vmem:[%s1 + $0x1320] sm:$0xff]
    %v651 = vld [vmem:[%s1 + $0x1328] sm:$0xff]
    %v652 = vld [vmem:[%s1 + $0x1330] sm:$0xff]
    %v653 = vld [vmem:[%s1 + $0x1338] sm:$0xff]
    %v654 = vld [vmem:[%s1 + $0x1340] sm:$0xff]
    %v655 = vld [vmem:[%s1 + $0x1348] sm:$0xff]
    %v656 = vld [vmem:[%s1 + $0x1350] sm:$0xff]
    %v657 = vld [vmem:[%s1 + $0x1358] sm:$0xff]
    %v658 = vld [vmem:[%s1 + $0x1360] sm:$0xff]
    %v659 = vld [vmem:[%s1 + $0x1368] sm:$0xff]
    %v660 = vld [vmem:[%s1 + $0x1370] sm:$0xff]
    %v661 = vld [vmem:[%s1 + $0x1378] sm:$0xff]
    %v662 = vld [vmem:[%s1 + $0x1380] sm:$0xff]
    %v663 = vld [vmem:[%s1 + $0x1388] sm:$0xff]
    %v664 = vld [vmem:[%s1 + $0x1390] sm:$0xff]
    %v665 = vld [vmem:[%s1 + $0x1398] sm:$0xff]
    %v666 = vld [vmem:[%s1 + $0x13a0] sm:$0xff]
    %v667 = vld [vmem:[%s1 + $0x13a8] sm:$0xff]
    %v668 = vld [vmem:[%s1 + $0x13b0] sm:$0xff]
    %v669 = vld [vmem:[%s1 + $0x13b8] sm:$0xff]
    %v670 = vld [vmem:[%s1 + $0x13c0] sm:$0xff]
    %v671 = vld [vmem:[%s1 + $0x13c8] sm:$0xff]
    %v672 = vld [vmem:[%s1 + $0x13d0] sm:$0xff]
    %v673 = vld [vmem:[%s1 + $0x13d8] sm:$0xff]
    %v674 = vld [vmem:[%s1 + $0x13e0] sm:$0xff]
    %v675 = vld [vmem:[%s1 + $0x13e8] sm:$0xff]
    %v676 = vld [vmem:[%s1 + $0x13f0] sm:$0xff]
    %v677 = vld [vmem:[%s1 + $0x13f8] sm:$0xff]
    %v678 = vld [vmem:[%s1 + $0x1400] sm:$0xff]
    %v679 = vld [vmem:[%s1 + $0x1408] sm:$0xff]
    %v680 = vld [vmem:[%s1 + $0x1410] sm:$0xff]
    %v681 = vld [vmem:[%s1 + $0x1418] sm:$0xff]
    %v682 = vld [vmem:[%s1 + $0x1420] sm:$0xff]
    %v683 = vld [vmem:[%s1 + $0x1428] sm:$0xff]
    %v684 = vld [vmem:[%s1 + $0x1430] sm:$0xff]
    %v685 = vld [vmem:[%s1 + $0x1438] sm:$0xff]
    %v686 = vld [vmem:[%s1 + $0x1440] sm:$0xff]
    %v687 = vld [vmem:[%s1 + $0x1448] sm:$0xff]
    %v688 = vld [vmem:[%s1 + $0x1450] sm:$0xff]
    %v689 = vld [vmem:[%s1 + $0x1458] sm:$0xff]
    %v690 = vld [vmem:[%s1 + $0x1460] sm:$0xff]
    %v691 = vld [vmem:[%s1 + $0x1468] sm:$0xff]
    %v692 = vld [vmem:[%s1 + $0x1470] sm:$0xff]
    %v693 = vld [vmem:[%s1 + $0x1478] sm:$0xff]
    %v694 = vld [vmem:[%s1 + $0x1480] sm:$0xff]
    %v695 = vld [vmem:[%s1 + $0x1488] sm:$0xff]
    %v696 = vld [vmem:[%s1 + $0x1490] sm:$0xff]
    %v697 = vld [vmem:[%s1 + $0x1498] sm:$0xff]
    %v698 = vld [vmem:[%s1 + $0x14a0] sm:$0xff]
    %v699 = vld [vmem:[%s1 + $0x14a8] sm:$0xff]
    %v700 = vld [vmem:[%s1 + $0x14b0] sm:$0xff]
    %v701 = vld [vmem:[%s1 + $0x14b8] sm:$0xff]
    %v702 = vld [vmem:[%s1 + $0x14c0] sm:$0xff]
    %v703 = vld [vmem:[%s1 + $0x14c8] sm:$0xff]
    %v704 = vld [vmem:[%s1 + $0x14d0] sm:$0xff]
    %v705 = vld [vmem:[%s1 + $0x14d8] sm:$0xff]
    %v706 = vld [vmem:[%s1 + $0x14e0] sm:$0xff]
    %v707 = vld [vmem:[%s1 + $0x14e8] sm:$0xff]
    %v708 = vld [vmem:[%s1 + $0x14f0] sm:$0xff]
    %v709 = vld [vmem:[%s1 + $0x14f8] sm:$0xff]
    %v710 = vld [vmem:[%s1 + $0x1500] sm:$0xff]
    %v711 = vld [vmem:[%s1 + $0x1508] sm:$0xff]
    %v712 = vld [vmem:[%s1 + $0x1510] sm:$0xff]
    %v713 = vld [vmem:[%s1 + $0x1518] sm:$0xff]
    %v714 = vld [vmem:[%s1 + $0x1520] sm:$0xff]
    %v715 = vld [vmem:[%s1 + $0x1528] sm:$0xff]
    %v716 = vld [vmem:[%s1 + $0x1530] sm:$0xff]
    %v717 = vld [vmem:[%s1 + $0x1538] sm:$0xff]
    %v718 = vld [vmem:[%s1 + $0x1540] sm:$0xff]
    %v719 = vld [vmem:[%s1 + $0x1548] sm:$0xff]
    %v720 = vld [vmem:[%s1 + $0x1550] sm:$0xff]
    %v721 = vld [vmem:[%s1 + $0x1558] sm:$0xff]
    %v722 = vld [vmem:[%s1 + $0x1560] sm:$0xff]
    %v723 = vld [vmem:[%s1 + $0x1568] sm:$0xff]
    %v724 = vld [vmem:[%s1 + $0x1570] sm:$0xff]
    %v725 = vld [vmem:[%s1 + $0x1578] sm:$0xff]
    %v726 = vld [vmem:[%s1 + $0x1580] sm:$0xff]
    %v727 = vld [vmem:[%s1 + $0x1588] sm:$0xff]
    %v728 = vld [vmem:[%s1 + $0x1590] sm:$0xff]
    %v729 = vld [vmem:[%s1 + $0x1598] sm:$0xff]
    %v730 = vld [vmem:[%s1 + $0x15a0] sm:$0xff]
    %v731 = vld [vmem:[%s1 + $0x15a8] sm:$0xff]
    %v732 = vld [vmem:[%s1 + $0x15b0] sm:$0xff]
    %v733 = vld [vmem:[%s1 + $0x15b8] sm:$0xff]
    %v734 = vld [vmem:[%s1 + $0x15c0] sm:$0xff]
    %v735 = vld [vmem:[%s1 + $0x15c8] sm:$0xff]
    %v736 = vld [vmem:[%s1 + $0x15d0] sm:$0xff]
    %v737 = vld [vmem:[%s1 + $0x15d8] sm:$0xff]
    %v738 = vld [vmem:[%s1 + $0x15e0] sm:$0xff]
    %v739 = vld [vmem:[%s1 + $0x15e8] sm:$0xff]
    %v740 = vld [vmem:[%s1 + $0x15f0] sm:$0xff]
    %v741 = vld [vmem:[%s1 + $0x15f8] sm:$0xff]
    %v742 = vld [vmem:[%s1 + $0x1600] sm:$0xff]
    %v743 = vld [vmem:[%s1 + $0x1608] sm:$0xff]
    %v744 = vld [vmem:[%s1 + $0x1610] sm:$0xff]
    %v745 = vld [vmem:[%s1 + $0x1618] sm:$0xff]
    %v746 = vld [vmem:[%s1 + $0x1620] sm:$0xff]
    %v747 = vld [vmem:[%s1 + $0x1628] sm:$0xff]
    %v748 = vld [vmem:[%s1 + $0x1630] sm:$0xff]
    %v749 = vld [vmem:[%s1 + $0x1638] sm:$0xff]
    %v750 = vld [vmem:[%s1 + $0x1640] sm:$0xff]
    %v751 = vld [vmem:[%s1 + $0x1648] sm:$0xff]
    %v752 = vld [vmem:[%s1 + $0x1650] sm:$0xff]
    %v753 = vld [vmem:[%s1 + $0x1658] sm:$0xff]
    %v754 = vld [vmem:[%s1 + $0x1660] sm:$0xff]
    %v755 = vld [vmem:[%s1 + $0x1668] sm:$0xff]
    %v756 = vld [vmem:[%s1 + $0x1670] sm:$0xff]
    %v757 = vld [vmem:[%s1 + $0x1678] sm:$0xff]
    %v758 = vld [vmem:[%s1 + $0x1680] sm:$0xff]
    %v759 = vld [vmem:[%s1 + $0x1688] sm:$0xff]
    %v760 = vld [vmem:[%s1 + $0x1690] sm:$0xff]
    %v761 = vld [vmem:[%s1 + $0x1698] sm:$0xff]
    %v762 = vld [vmem:[%s1 + $0x16a0] sm:$0xff]
    %v763 = vld [vmem:[%s1 + $0x16a8] sm:$0xff]
    %v764 = vld [vmem:[%s1 + $0x16b0] sm:$0xff]
    %v765 = vld [vmem:[%s1 + $0x16b8] sm:$0xff]
    %v766 = vld [vmem:[%s1 + $0x16c0] sm:$0xff]
    %v767 = vld [vmem:[%s1 + $0x16c8] sm:$0xff]
    %v768 = vld [vmem:[%s1 + $0x16d0] sm:$0xff]
    %v769 = vld [vmem:[%s1 + $0x16d8] sm:$0xff]
    %v770 = vld [vmem:[%s1 + $0x16e0] sm:$0xff]
    %v771 = vld [vmem:[%s1 + $0x16e8] sm:$0xff]
    %v772 = vld [vmem:[%s1 + $0x16f0] sm:$0xff]
    %v773 = vld [vmem:[%s1 + $0x16f8] sm:$0xff]
    %v774 = vld [vmem:[%s1 + $0x1700] sm:$0xff]
    %v775 = vld [vmem:[%s1 + $0x1708] sm:$0xff]
    %v776 = vld [vmem:[%s1 + $0x1710] sm:$0xff]
    %v777 = vld [vmem:[%s1 + $0x1718] sm:$0xff]
    %v778 = vld [vmem:[%s1 + $0x1720] sm:$0xff]
    %v779 = vld [vmem:[%s1 + $0x1728] sm:$0xff]
    %v780 = vld [vmem:[%s1 + $0x1730] sm:$0xff]
    %v781 = vld [vmem:[%s1 + $0x1738] sm:$0xff]
    %v782 = vld [vmem:[%s1 + $0x1740] sm:$0xff]
    %v783 = vld [vmem:[%s1 + $0x1748] sm:$0xff]
    %v784 = vld [vmem:[%s1 + $0x1750] sm:$0xff]
    %v785 = vld [vmem:[%s1 + $0x1758] sm:$0xff]
    %v786 = vld [vmem:[%s1 + $0x1760] sm:$0xff]
    %v787 = vld [vmem:[%s1 + $0x1768] sm:$0xff]
    %v788 = vld [vmem:[%s1 + $0x1770] sm:$0xff]
    %v789 = vld [vmem:[%s1 + $0x1778] sm:$0xff]
    %v790 = vld [vmem:[%s1 + $0x1780] sm:$0xff]
    %v791 = vld [vmem:[%s1 + $0x1788] sm:$0xff]
    %v792 = vld [vmem:[%s1 + $0x1790] sm:$0xff]
    %v793 = vld [vmem:[%s1 + $0x1798] sm:$0xff]
    %v794 = vld [vmem:[%s1 + $0x17a0] sm:$0xff]
    %v795 = vld [vmem:[%s1 + $0x17a8] sm:$0xff]
    %v796 = vld [vmem:[%s1 + $0x17b0] sm:$0xff]
    %v797 = vld [vmem:[%s1 + $0x17b8] sm:$0xff]
    %v798 = vld [vmem:[%s1 + $0x17c0] sm:$0xff]
    %v799 = vld [vmem:[%s1 + $0x17c8] sm:$0xff]
    %v800 = vld [vmem:[%s1 + $0x17d0] sm:$0xff]
    %v801 = vld [vmem:[%s1 + $0x17d8] sm:$0xff]
    %v802 = vld [vmem:[%s1 + $0x17e0] sm:$0xff]
    %v803 = vld [vmem:[%s1 + $0x17e8] sm:$0xff]
    %v804 = vld [vmem:[%s1 + $0x17f0] sm:$0xff]
    %v805 = vld [vmem:[%s1 + $0x17f8] sm:$0xff]
    %v806 = vld [vmem:[%s1 + $0x1800] sm:$0xff]
    %v807 = vld [vmem:[%s1 + $0x1808] sm:$0xff]
    %v808 = vld [vmem:[%s1 + $0x1810] sm:$0xff]
    %v809 = vld [vmem:[%s1 + $0x1818] sm:$0xff]
    %v810 = vld [vmem:[%s1 + $0x1820] sm:$0xff]
    %v811 = vld [vmem:[%s1 + $0x1828] sm:$0xff]
    %v812 = vld [vmem:[%s1 + $0x1830] sm:$0xff]
    %v813 = vld [vmem:[%s1 + $0x1838] sm:$0xff]
    %v814 = vld [vmem:[%s1 + $0x1840] sm:$0xff]
    %v815 = vld [vmem:[%s1 + $0x1848] sm:$0xff]
    %v816 = vld [vmem:[%s1 + $0x1850] sm:$0xff]
    %v817 = vld [vmem:[%s1 + $0x1858] sm:$0xff]
    %v818 = vld [vmem:[%s1 + $0x1860] sm:$0xff]
    %v819 = vld [vmem:[%s1 + $0x1868] sm:$0xff]
    %v820 = vld [vmem:[%s1 + $0x1870] sm:$0xff]
    %v821 = vld [vmem:[%s1 + $0x1878] sm:$0xff]
    %v822 = vld [vmem:[%s2] sm:$0xf]
    %v824 = vperm.slane %v822, 0
    %v825 = vperm.slane %v822, 1
    %v826 = vperm.slane %v822, 2
    %v827 = vperm.slane %v822, 3
    %833 = vst [vmem:[#allocation1] ss:$9 sm:$0xff] %v22
    %s835 = scalar_lea.vmem [#allocation1], 1
    %836 = vst [vmem:[%s835] ss:$9 sm:$0xff] %v26
    %s838 = scalar_lea.vmem [#allocation1], 2
    %839 = vst [vmem:[%s838] ss:$9 sm:$0xff] %v30
    %s841 = scalar_lea.vmem [#allocation1], 3
    %842 = vst [vmem:[%s841] ss:$9 sm:$0xff] %v34
    %v843 = vld [vmem:[#allocation1] sm:$0xff]
    %v844 = vld [vmem:[#allocation1 + $0x9] sm:$0xff]
    %v845 = vld [vmem:[#allocation1 + $0x12] sm:$0xff]
    %v846 = vld [vmem:[#allocation1 + $0x1b] sm:$0xff]
    %v847 = vld [vmem:[#allocation1 + $0x24] sm:$0xff]
    %v848 = vld [vmem:[#allocation1 + $0x2d] sm:$0xff]
    %v849 = vld [vmem:[#allocation1 + $0x36] sm:$0xff]
    %v850 = vld [vmem:[#allocation1 + $0x3f] sm:$0xff]
    %852 = vst [vmem:[#allocation1] ss:$9 sm:$0xff] %v23
    %854 = vst [vmem:[%s835] ss:$9 sm:$0xff] %v27
    %856 = vst [vmem:[%s838] ss:$9 sm:$0xff] %v31
    %858 = vst [vmem:[%s841] ss:$9 sm:$0xff] %v35
    %v859 = vld [vmem:[#allocation1] sm:$0xff]
    %v860 = vld [vmem:[#allocation1 + $0x9] sm:$0xff]
    %v861 = vld [vmem:[#allocation1 + $0x12] sm:$0xff]
    %v862 = vld [vmem:[#allocation1 + $0x1b] sm:$0xff]
    %v863 = vld [vmem:[#allocation1 + $0x24] sm:$0xff]
    %v864 = vld [vmem:[#allocation1 + $0x2d] sm:$0xff]
    %v865 = vld [vmem:[#allocation1 + $0x36] sm:$0xff]
    %v866 = vld [vmem:[#allocation1 + $0x3f] sm:$0xff]
    %868 = vst [vmem:[#allocation1] ss:$9 sm:$0xff] %v24
    %870 = vst [vmem:[%s835] ss:$9 sm:$0xff] %v28
    %872 = vst [vmem:[%s838] ss:$9 sm:$0xff] %v32
    %874 = vst [vmem:[%s841] ss:$9 sm:$0xff] %v36
    %v875 = vld [vmem:[#allocation1] sm:$0xff]
    %v876 = vld [vmem:[#allocation1 + $0x9] sm:$0xff]
    %v877 = vld [vmem:[#allocation1 + $0x12] sm:$0xff]
    %v878 = vld [vmem:[#allocation1 + $0x1b] sm:$0xff]
    %v879 = vld [vmem:[#allocation1 + $0x24] sm:$0xff]
    %v880 = vld [vmem:[#allocation1 + $0x2d] sm:$0xff]
    %v881 = vld [vmem:[#allocation1 + $0x36] sm:$0xff]
    %v882 = vld [vmem:[#allocation1 + $0x3f] sm:$0xff]
    %884 = vst [vmem:[#allocation1] ss:$9 sm:$0xff] %v25
    %886 = vst [vmem:[%s835] ss:$9 sm:$0xff] %v29
    %888 = vst [vmem:[%s838] ss:$9 sm:$0xff] %v33
    %890 = vst [vmem:[%s841] ss:$9 sm:$0xff] %v37
    %v891 = vld [vmem:[#allocation1] sm:$0xff]
    %v1700 = vunpack.c.l.b16 %v38
    %v1701 = vunpack.c.h.b16 %v38
    %v1702 = vunpack.c.l.b16 %v39
    %v1703 = vunpack.c.h.b16 %v39
    %v1704 = vunpack.c.l.b16 %v40
    %v1705 = vunpack.c.h.b16 %v40
    %v1706 = vunpack.c.l.b16 %v41
    %v1707 = vunpack.c.h.b16 %v41
    %v1708 = vunpack.c.l.b16 %v42
    %v1709 = vunpack.c.h.b16 %v42
    %v1710 = vunpack.c.l.b16 %v43
    %v1711 = vunpack.c.h.b16 %v43
    %v1712 = vunpack.c.l.b16 %v44
    %v1713 = vunpack.c.h.b16 %v44
    %v1714 = vunpack.c.l.b16 %v45
    %v1715 = vunpack.c.h.b16 %v45
    %v1716 = vunpack.c.l.b16 %v46
    %v1717 = vunpack.c.h.b16 %v46
    %v1718 = vunpack.c.l.b16 %v47
    %v1719 = vunpack.c.h.b16 %v47
    %v1720 = vunpack.c.l.b16 %v48
    %v1721 = vunpack.c.h.b16 %v48
    %v1722 = vunpack.c.l.b16 %v49
    %v1723 = vunpack.c.h.b16 %v49
    %v1724 = vunpack.c.l.b16 %v50
    %v1725 = vunpack.c.h.b16 %v50
    %v1726 = vunpack.c.l.b16 %v51
    %v1727 = vunpack.c.h.b16 %v51
    %v1728 = vunpack.c.l.b16 %v52
    %v1729 = vunpack.c.h.b16 %v52
    %v1730 = vunpack.c.l.b16 %v53
    %v1731 = vunpack.c.h.b16 %v53
    %v1732 = vunpack.c.l.b16 %v54
    %v1733 = vunpack.c.h.b16 %v54
    %v1734 = vunpack.c.l.b16 %v55
    %v1735 = vunpack.c.h.b16 %v55
    %v1736 = vunpack.c.l.b16 %v56
    %v1737 = vunpack.c.h.b16 %v56
    %v1738 = vunpack.c.l.b16 %v57
    %v1739 = vunpack.c.h.b16 %v57
    %v1740 = vunpack.c.l.b16 %v58
    %v1741 = vunpack.c.h.b16 %v58
    %v1742 = vunpack.c.l.b16 %v59
    %v1743 = vunpack.c.h.b16 %v59
    %v1744 = vunpack.c.l.b16 %v60
    %v1745 = vunpack.c.h.b16 %v60
    %v1746 = vunpack.c.l.b16 %v61
    %v1747 = vunpack.c.h.b16 %v61
    %v1748 = vunpack.c.l.b16 %v62
    %v1749 = vunpack.c.h.b16 %v62
    %v1750 = vunpack.c.l.b16 %v63
    %v1751 = vunpack.c.h.b16 %v63
    %v1752 = vunpack.c.l.b16 %v64
    %v1753 = vunpack.c.h.b16 %v64
    %v1754 = vunpack.c.l.b16 %v65
    %v1755 = vunpack.c.h.b16 %v65
    %v1756 = vunpack.c.l.b16 %v66
    %v1757 = vunpack.c.h.b16 %v66
    %v1758 = vunpack.c.l.b16 %v67
    %v1759 = vunpack.c.h.b16 %v67
    %v1760 = vunpack.c.l.b16 %v68
    %v1761 = vunpack.c.h.b16 %v68
    %v1762 = vunpack.c.l.b16 %v69
    %v1763 = vunpack.c.h.b16 %v69
    %v1764 = vunpack.c.l.b16 %v70
    %v1765 = vunpack.c.h.b16 %v70
    %v1766 = vunpack.c.l.b16 %v71
    %v1767 = vunpack.c.h.b16 %v71
    %v1768 = vunpack.c.l.b16 %v72
    %v1769 = vunpack.c.h.b16 %v72
    %v1770 = vunpack.c.l.b16 %v73
    %v1771 = vunpack.c.h.b16 %v73
    %v1772 = vunpack.c.l.b16 %v74
    %v1773 = vunpack.c.h.b16 %v74
    %v1774 = vunpack.c.l.b16 %v75
    %v1775 = vunpack.c.h.b16 %v75
    %v1776 = vunpack.c.l.b16 %v76
    %v1777 = vunpack.c.h.b16 %v76
    %v1778 = vunpack.c.l.b16 %v77
    %v1779 = vunpack.c.h.b16 %v77
    %v1780 = vunpack.c.l.b16 %v78
    %v1781 = vunpack.c.h.b16 %v78
    %v1782 = vunpack.c.l.b16 %v79
    %v1783 = vunpack.c.h.b16 %v79
    %v1784 = vunpack.c.l.b16 %v80
    %v1785 = vunpack.c.h.b16 %v80
    %v1786 = vunpack.c.l.b16 %v81
    %v1787 = vunpack.c.h.b16 %v81
    %v1788 = vunpack.c.l.b16 %v82
    %v1789 = vunpack.c.h.b16 %v82
    %v1790 = vunpack.c.l.b16 %v83
    %v1791 = vunpack.c.h.b16 %v83
    %v1792 = vunpack.c.l.b16 %v84
    %v1793 = vunpack.c.h.b16 %v84
    %v1794 = vunpack.c.l.b16 %v85
    %v1795 = vunpack.c.h.b16 %v85
    %v1796 = vunpack.c.l.b16 %v86
    %v1797 = vunpack.c.h.b16 %v86
    %v1798 = vunpack.c.l.b16 %v87
    %v1799 = vunpack.c.h.b16 %v87
    %v1800 = vunpack.c.l.b16 %v88
    %v1801 = vunpack.c.h.b16 %v88
    %v1802 = vunpack.c.l.b16 %v89
    %v1803 = vunpack.c.h.b16 %v89
    %v1804 = vunpack.c.l.b16 %v90
    %v1805 = vunpack.c.h.b16 %v90
    %v1806 = vunpack.c.l.b16 %v91
    %v1807 = vunpack.c.h.b16 %v91
    %v1808 = vunpack.c.l.b16 %v92
    %v1809 = vunpack.c.h.b16 %v92
    %v1810 = vunpack.c.l.b16 %v93
    %v1811 = vunpack.c.h.b16 %v93
    %v1812 = vunpack.c.l.b16 %v94
    %v1813 = vunpack.c.h.b16 %v94
    %v1814 = vunpack.c.l.b16 %v95
    %v1815 = vunpack.c.h.b16 %v95
    %v1816 = vunpack.c.l.b16 %v96
    %v1817 = vunpack.c.h.b16 %v96
    %v1818 = vunpack.c.l.b16 %v97
    %v1819 = vunpack.c.h.b16 %v97
    %v1820 = vunpack.c.l.b16 %v98
    %v1821 = vunpack.c.h.b16 %v98
    %v1822 = vunpack.c.l.b16 %v99
    %v1823 = vunpack.c.h.b16 %v99
    %v1824 = vunpack.c.l.b16 %v100
    %v1825 = vunpack.c.h.b16 %v100
    %v1826 = vunpack.c.l.b16 %v101
    %v1827 = vunpack.c.h.b16 %v101
    %v1828 = vunpack.c.l.b16 %v102
    %v1829 = vunpack.c.h.b16 %v102
    %v1830 = vunpack.c.l.b16 %v103
    %v1831 = vunpack.c.h.b16 %v103
    %v1832 = vunpack.c.l.b16 %v104
    %v1833 = vunpack.c.h.b16 %v104
    %v1834 = vunpack.c.l.b16 %v105
    %v1835 = vunpack.c.h.b16 %v105
    %v1836 = vunpack.c.l.b16 %v106
    %v1837 = vunpack.c.h.b16 %v106
    %v1838 = vunpack.c.l.b16 %v107
    %v1839 = vunpack.c.h.b16 %v107
    %v1840 = vunpack.c.l.b16 %v108
    %v1841 = vunpack.c.h.b16 %v108
    %v1842 = vunpack.c.l.b16 %v109
    %v1843 = vunpack.c.h.b16 %v109
    %v1844 = vunpack.c.l.b16 %v110
    %v1845 = vunpack.c.h.b16 %v110
    %v1846 = vunpack.c.l.b16 %v111
    %v1847 = vunpack.c.h.b16 %v111
    %v1848 = vunpack.c.l.b16 %v112
    %v1849 = vunpack.c.h.b16 %v112
    %v1850 = vunpack.c.l.b16 %v113
    %v1851 = vunpack.c.h.b16 %v113
    %v1852 = vunpack.c.l.b16 %v114
    %v1853 = vunpack.c.h.b16 %v114
    %v1854 = vunpack.c.l.b16 %v115
    %v1855 = vunpack.c.h.b16 %v115
    %v1856 = vunpack.c.l.b16 %v116
    %v1857 = vunpack.c.h.b16 %v116
    %v1858 = vunpack.c.l.b16 %v117
    %v1859 = vunpack.c.h.b16 %v117
    %v1860 = vunpack.c.l.b16 %v118
    %v1861 = vunpack.c.h.b16 %v118
    %v1862 = vunpack.c.l.b16 %v119
    %v1863 = vunpack.c.h.b16 %v119
    %v1864 = vunpack.c.l.b16 %v120
    %v1865 = vunpack.c.h.b16 %v120
    %v1866 = vunpack.c.l.b16 %v121
    %v1867 = vunpack.c.h.b16 %v121
    %v1868 = vunpack.c.l.b16 %v122
    %v1869 = vunpack.c.h.b16 %v122
    %v1870 = vunpack.c.l.b16 %v123
    %v1871 = vunpack.c.h.b16 %v123
    %v1872 = vunpack.c.l.b16 %v124
    %v1873 = vunpack.c.h.b16 %v124
    %v1874 = vunpack.c.l.b16 %v125
    %v1875 = vunpack.c.h.b16 %v125
    %v1876 = vunpack.c.l.b16 %v126
    %v1877 = vunpack.c.h.b16 %v126
    %v1878 = vunpack.c.l.b16 %v127
    %v1879 = vunpack.c.h.b16 %v127
    %v1880 = vunpack.c.l.b16 %v128
    %v1881 = vunpack.c.h.b16 %v128
    %v1882 = vunpack.c.l.b16 %v129
    %v1883 = vunpack.c.h.b16 %v129
    %v1884 = vunpack.c.l.b16 %v130
    %v1885 = vunpack.c.h.b16 %v130
    %v1886 = vunpack.c.l.b16 %v131
    %v1887 = vunpack.c.h.b16 %v131
    %v1888 = vunpack.c.l.b16 %v132
    %v1889 = vunpack.c.h.b16 %v132
    %v1890 = vunpack.c.l.b16 %v133
    %v1891 = vunpack.c.h.b16 %v133
    %v1892 = vunpack.c.l.b16 %v134
    %v1893 = vunpack.c.h.b16 %v134
    %v1894 = vunpack.c.l.b16 %v135
    %v1895 = vunpack.c.h.b16 %v135
    %v1896 = vunpack.c.l.b16 %v136
    %v1897 = vunpack.c.h.b16 %v136
    %v1898 = vunpack.c.l.b16 %v137
    %v1899 = vunpack.c.h.b16 %v137
    %v1900 = vunpack.c.l.b16 %v138
    %v1901 = vunpack.c.h.b16 %v138
    %v1902 = vunpack.c.l.b16 %v139
    %v1903 = vunpack.c.h.b16 %v139
    %v1904 = vunpack.c.l.b16 %v140
    %v1905 = vunpack.c.h.b16 %v140
    %v1906 = vunpack.c.l.b16 %v141
    %v1907 = vunpack.c.h.b16 %v141
    %v1908 = vunpack.c.l.b16 %v142
    %v1909 = vunpack.c.h.b16 %v142
    %v1910 = vunpack.c.l.b16 %v143
    %v1911 = vunpack.c.h.b16 %v143
    %v1912 = vunpack.c.l.b16 %v144
    %v1913 = vunpack.c.h.b16 %v144
    %v1914 = vunpack.c.l.b16 %v145
    %v1915 = vunpack.c.h.b16 %v145
    %v1916 = vunpack.c.l.b16 %v146
    %v1917 = vunpack.c.h.b16 %v146
    %v1918 = vunpack.c.l.b16 %v147
    %v1919 = vunpack.c.h.b16 %v147
    %v1920 = vunpack.c.l.b16 %v148
    %v1921 = vunpack.c.h.b16 %v148
    %v1922 = vunpack.c.l.b16 %v149
    %v1923 = vunpack.c.h.b16 %v149
    %v1924 = vunpack.c.l.b16 %v150
    %v1925 = vunpack.c.h.b16 %v150
    %v1926 = vunpack.c.l.b16 %v151
    %v1927 = vunpack.c.h.b16 %v151
    %v1928 = vunpack.c.l.b16 %v152
    %v1929 = vunpack.c.h.b16 %v152
    %v1930 = vunpack.c.l.b16 %v153
    %v1931 = vunpack.c.h.b16 %v153
    %v1932 = vunpack.c.l.b16 %v154
    %v1933 = vunpack.c.h.b16 %v154
    %v1934 = vunpack.c.l.b16 %v155
    %v1935 = vunpack.c.h.b16 %v155
    %v1936 = vunpack.c.l.b16 %v156
    %v1937 = vunpack.c.h.b16 %v156
    %v1938 = vunpack.c.l.b16 %v157
    %v1939 = vunpack.c.h.b16 %v157
    %v1940 = vunpack.c.l.b16 %v158
    %v1941 = vunpack.c.h.b16 %v158
    %v1942 = vunpack.c.l.b16 %v159
    %v1943 = vunpack.c.h.b16 %v159
    %v1944 = vunpack.c.l.b16 %v160
    %v1945 = vunpack.c.h.b16 %v160
    %v1946 = vunpack.c.l.b16 %v161
    %v1947 = vunpack.c.h.b16 %v161
    %v1948 = vunpack.c.l.b16 %v162
    %v1949 = vunpack.c.h.b16 %v162
    %v1950 = vunpack.c.l.b16 %v163
    %v1951 = vunpack.c.h.b16 %v163
    %v1952 = vunpack.c.l.b16 %v164
    %v1953 = vunpack.c.h.b16 %v164
    %v1954 = vunpack.c.l.b16 %v165
    %v1955 = vunpack.c.h.b16 %v165
    %v1956 = vunpack.c.l.b16 %v166
    %v1957 = vunpack.c.h.b16 %v166
    %v1958 = vunpack.c.l.b16 %v167
    %v1959 = vunpack.c.h.b16 %v167
    %v1960 = vunpack.c.l.b16 %v168
    %v1961 = vunpack.c.h.b16 %v168
    %v1962 = vunpack.c.l.b16 %v169
    %v1963 = vunpack.c.h.b16 %v169
    %v1964 = vunpack.c.l.b16 %v170
    %v1965 = vunpack.c.h.b16 %v170
    %v1966 = vunpack.c.l.b16 %v171
    %v1967 = vunpack.c.h.b16 %v171
    %v1968 = vunpack.c.l.b16 %v172
    %v1969 = vunpack.c.h.b16 %v172
    %v1970 = vunpack.c.l.b16 %v173
    %v1971 = vunpack.c.h.b16 %v173
    %v1972 = vunpack.c.l.b16 %v174
    %v1973 = vunpack.c.h.b16 %v174
    %v1974 = vunpack.c.l.b16 %v175
    %v1975 = vunpack.c.h.b16 %v175
    %v1976 = vunpack.c.l.b16 %v176
    %v1977 = vunpack.c.h.b16 %v176
    %v1978 = vunpack.c.l.b16 %v177
    %v1979 = vunpack.c.h.b16 %v177
    %v1980 = vunpack.c.l.b16 %v178
    %v1981 = vunpack.c.h.b16 %v178
    %v1982 = vunpack.c.l.b16 %v179
    %v1983 = vunpack.c.h.b16 %v179
    %v1984 = vunpack.c.l.b16 %v180
    %v1985 = vunpack.c.h.b16 %v180
    %v1986 = vunpack.c.l.b16 %v181
    %v1987 = vunpack.c.h.b16 %v181
    %v1988 = vunpack.c.l.b16 %v182
    %v1989 = vunpack.c.h.b16 %v182
    %v1990 = vunpack.c.l.b16 %v183
    %v1991 = vunpack.c.h.b16 %v183
    %v1992 = vunpack.c.l.b16 %v184
    %v1993 = vunpack.c.h.b16 %v184
    %v1994 = vunpack.c.l.b16 %v185
    %v1995 = vunpack.c.h.b16 %v185
    %v1996 = vunpack.c.l.b16 %v186
    %v1997 = vunpack.c.h.b16 %v186
    %v1998 = vunpack.c.l.b16 %v187
    %v1999 = vunpack.c.h.b16 %v187
    %v2000 = vunpack.c.l.b16 %v188
    %v2001 = vunpack.c.h.b16 %v188
    %v2002 = vunpack.c.l.b16 %v189
    %v2003 = vunpack.c.h.b16 %v189
    %v2004 = vunpack.c.l.b16 %v190
    %v2005 = vunpack.c.h.b16 %v190
    %v2006 = vunpack.c.l.b16 %v191
    %v2007 = vunpack.c.h.b16 %v191
    %v2008 = vunpack.c.l.b16 %v192
    %v2009 = vunpack.c.h.b16 %v192
    %v2010 = vunpack.c.l.b16 %v193
    %v2011 = vunpack.c.h.b16 %v193
    %v2012 = vunpack.c.l.b16 %v194
    %v2013 = vunpack.c.h.b16 %v194
    %v2014 = vunpack.c.l.b16 %v195
    %v2015 = vunpack.c.h.b16 %v195
    %v2016 = vunpack.c.l.b16 %v196
    %v2017 = vunpack.c.h.b16 %v196
    %v2018 = vunpack.c.l.b16 %v197
    %v2019 = vunpack.c.h.b16 %v197
    %v2020 = vunpack.c.l.b16 %v198
    %v2021 = vunpack.c.h.b16 %v198
    %v2022 = vunpack.c.l.b16 %v199
    %v2023 = vunpack.c.h.b16 %v199
    %v2024 = vunpack.c.l.b16 %v200
    %v2025 = vunpack.c.h.b16 %v200
    %v2026 = vunpack.c.l.b16 %v201
    %v2027 = vunpack.c.h.b16 %v201
    %v2028 = vunpack.c.l.b16 %v202
    %v2029 = vunpack.c.h.b16 %v202
    %v2030 = vunpack.c.l.b16 %v203
    %v2031 = vunpack.c.h.b16 %v203
    %v2032 = vunpack.c.l.b16 %v204
    %v2033 = vunpack.c.h.b16 %v204
    %v2034 = vunpack.c.l.b16 %v205
    %v2035 = vunpack.c.h.b16 %v205
    %v2036 = vunpack.c.l.b16 %v206
    %v2037 = vunpack.c.h.b16 %v206
    %v2038 = vunpack.c.l.b16 %v207
    %v2039 = vunpack.c.h.b16 %v207
    %v2040 = vunpack.c.l.b16 %v208
    %v2041 = vunpack.c.h.b16 %v208
    %v2042 = vunpack.c.l.b16 %v209
    %v2043 = vunpack.c.h.b16 %v209
    %v2044 = vunpack.c.l.b16 %v210
    %v2045 = vunpack.c.h.b16 %v210
    %v2046 = vunpack.c.l.b16 %v211
    %v2047 = vunpack.c.h.b16 %v211
    %v2048 = vunpack.c.l.b16 %v212
    %v2049 = vunpack.c.h.b16 %v212
    %v2050 = vunpack.c.l.b16 %v213
    %v2051 = vunpack.c.h.b16 %v213
    %v2052 = vunpack.c.l.b16 %v214
    %v2053 = vunpack.c.h.b16 %v214
    %v2054 = vunpack.c.l.b16 %v215
    %v2055 = vunpack.c.h.b16 %v215
    %v2056 = vunpack.c.l.b16 %v216
    %v2057 = vunpack.c.h.b16 %v216
    %v2058 = vunpack.c.l.b16 %v217
    %v2059 = vunpack.c.h.b16 %v217
    %v2060 = vunpack.c.l.b16 %v218
    %v2061 = vunpack.c.h.b16 %v218
    %v2062 = vunpack.c.l.b16 %v219
    %v2063 = vunpack.c.h.b16 %v219
    %v2064 = vunpack.c.l.b16 %v220
    %v2065 = vunpack.c.h.b16 %v220
    %v2066 = vunpack.c.l.b16 %v221
    %v2067 = vunpack.c.h.b16 %v221
    %v2068 = vunpack.c.l.b16 %v222
    %v2069 = vunpack.c.h.b16 %v222
    %v2070 = vunpack.c.l.b16 %v223
    %v2071 = vunpack.c.h.b16 %v223
    %v2072 = vunpack.c.l.b16 %v224
    %v2073 = vunpack.c.h.b16 %v224
    %v2074 = vunpack.c.l.b16 %v225
    %v2075 = vunpack.c.h.b16 %v225
    %v2076 = vunpack.c.l.b16 %v226
    %v2077 = vunpack.c.h.b16 %v226
    %v2078 = vunpack.c.l.b16 %v227
    %v2079 = vunpack.c.h.b16 %v227
    %v2080 = vunpack.c.l.b16 %v228
    %v2081 = vunpack.c.h.b16 %v228
    %v2082 = vunpack.c.l.b16 %v229
    %v2083 = vunpack.c.h.b16 %v229
    %v2084 = vunpack.c.l.b16 %v230
    %v2085 = vunpack.c.h.b16 %v230
    %v2086 = vunpack.c.l.b16 %v231
    %v2087 = vunpack.c.h.b16 %v231
    %v2088 = vunpack.c.l.b16 %v232
    %v2089 = vunpack.c.h.b16 %v232
    %v2090 = vunpack.c.l.b16 %v233
    %v2091 = vunpack.c.h.b16 %v233
    %v2092 = vunpack.c.l.b16 %v234
    %v2093 = vunpack.c.h.b16 %v234
    %v2094 = vunpack.c.l.b16 %v235
    %v2095 = vunpack.c.h.b16 %v235
    %v2096 = vunpack.c.l.b16 %v236
    %v2097 = vunpack.c.h.b16 %v236
    %v2098 = vunpack.c.l.b16 %v237
    %v2099 = vunpack.c.h.b16 %v237
    %v2100 = vunpack.c.l.b16 %v238
    %v2101 = vunpack.c.h.b16 %v238
    %v2102 = vunpack.c.l.b16 %v239
    %v2103 = vunpack.c.h.b16 %v239
    %v2104 = vunpack.c.l.b16 %v240
    %v2105 = vunpack.c.h.b16 %v240
    %v2106 = vunpack.c.l.b16 %v241
    %v2107 = vunpack.c.h.b16 %v241
    %v2108 = vunpack.c.l.b16 %v242
    %v2109 = vunpack.c.h.b16 %v242
    %v2110 = vunpack.c.l.b16 %v243
    %v2111 = vunpack.c.h.b16 %v243
    %v2112 = vunpack.c.l.b16 %v244
    %v2113 = vunpack.c.h.b16 %v244
    %v2114 = vunpack.c.l.b16 %v245
    %v2115 = vunpack.c.h.b16 %v245
    %v2116 = vunpack.c.l.b16 %v246
    %v2117 = vunpack.c.h.b16 %v246
    %v2118 = vunpack.c.l.b16 %v247
    %v2119 = vunpack.c.h.b16 %v247
    %v2120 = vunpack.c.l.b16 %v248
    %v2121 = vunpack.c.h.b16 %v248
    %v2122 = vunpack.c.l.b16 %v249
    %v2123 = vunpack.c.h.b16 %v249
    %v2124 = vunpack.c.l.b16 %v250
    %v2125 = vunpack.c.h.b16 %v250
    %v2126 = vunpack.c.l.b16 %v251
    %v2127 = vunpack.c.h.b16 %v251
    %v2128 = vunpack.c.l.b16 %v252
    %v2129 = vunpack.c.h.b16 %v252
    %v2130 = vunpack.c.l.b16 %v253
    %v2131 = vunpack.c.h.b16 %v253
    %v2132 = vunpack.c.l.b16 %v254
    %v2133 = vunpack.c.h.b16 %v254
    %v2134 = vunpack.c.l.b16 %v255
    %v2135 = vunpack.c.h.b16 %v255
    %v2136 = vunpack.c.l.b16 %v256
    %v2137 = vunpack.c.h.b16 %v256
    %v2138 = vunpack.c.l.b16 %v257
    %v2139 = vunpack.c.h.b16 %v257
    %v2140 = vunpack.c.l.b16 %v258
    %v2141 = vunpack.c.h.b16 %v258
    %v2142 = vunpack.c.l.b16 %v259
    %v2143 = vunpack.c.h.b16 %v259
    %v2144 = vunpack.c.l.b16 %v260
    %v2145 = vunpack.c.h.b16 %v260
    %v2146 = vunpack.c.l.b16 %v261
    %v2147 = vunpack.c.h.b16 %v261
    %v2148 = vunpack.c.l.b16 %v262
    %v2149 = vunpack.c.h.b16 %v262
    %v2150 = vunpack.c.l.b16 %v263
    %v2151 = vunpack.c.h.b16 %v263
    %v2152 = vunpack.c.l.b16 %v264
    %v2153 = vunpack.c.h.b16 %v264
    %v2154 = vunpack.c.l.b16 %v265
    %v2155 = vunpack.c.h.b16 %v265
    %v2156 = vunpack.c.l.b16 %v266
    %v2157 = vunpack.c.h.b16 %v266
    %v2158 = vunpack.c.l.b16 %v267
    %v2159 = vunpack.c.h.b16 %v267
    %v2160 = vunpack.c.l.b16 %v268
    %v2161 = vunpack.c.h.b16 %v268
    %v2162 = vunpack.c.l.b16 %v269
    %v2163 = vunpack.c.h.b16 %v269
    %v2164 = vunpack.c.l.b16 %v270
    %v2165 = vunpack.c.h.b16 %v270
    %v2166 = vunpack.c.l.b16 %v271
    %v2167 = vunpack.c.h.b16 %v271
    %v2168 = vunpack.c.l.b16 %v272
    %v2169 = vunpack.c.h.b16 %v272
    %v2170 = vunpack.c.l.b16 %v273
    %v2171 = vunpack.c.h.b16 %v273
    %v2172 = vunpack.c.l.b16 %v274
    %v2173 = vunpack.c.h.b16 %v274
    %v2174 = vunpack.c.l.b16 %v275
    %v2175 = vunpack.c.h.b16 %v275
    %v2176 = vunpack.c.l.b16 %v276
    %v2177 = vunpack.c.h.b16 %v276
    %v2178 = vunpack.c.l.b16 %v277
    %v2179 = vunpack.c.h.b16 %v277
    %v2180 = vunpack.c.l.b16 %v278
    %v2181 = vunpack.c.h.b16 %v278
    %v2182 = vunpack.c.l.b16 %v279
    %v2183 = vunpack.c.h.b16 %v279
    %v2184 = vunpack.c.l.b16 %v280
    %v2185 = vunpack.c.h.b16 %v280
    %v2186 = vunpack.c.l.b16 %v281
    %v2187 = vunpack.c.h.b16 %v281
    %v2188 = vunpack.c.l.b16 %v282
    %v2189 = vunpack.c.h.b16 %v282
    %v2190 = vunpack.c.l.b16 %v283
    %v2191 = vunpack.c.h.b16 %v283
    %v2192 = vunpack.c.l.b16 %v284
    %v2193 = vunpack.c.h.b16 %v284
    %v2194 = vunpack.c.l.b16 %v285
    %v2195 = vunpack.c.h.b16 %v285
    %v2196 = vunpack.c.l.b16 %v286
    %v2197 = vunpack.c.h.b16 %v286
    %v2198 = vunpack.c.l.b16 %v287
    %v2199 = vunpack.c.h.b16 %v287
    %v2200 = vunpack.c.l.b16 %v288
    %v2201 = vunpack.c.h.b16 %v288
    %v2202 = vunpack.c.l.b16 %v289
    %v2203 = vunpack.c.h.b16 %v289
    %v2204 = vunpack.c.l.b16 %v290
    %v2205 = vunpack.c.h.b16 %v290
    %v2206 = vunpack.c.l.b16 %v291
    %v2207 = vunpack.c.h.b16 %v291
    %v2208 = vunpack.c.l.b16 %v292
    %v2209 = vunpack.c.h.b16 %v292
    %v2210 = vunpack.c.l.b16 %v293
    %v2211 = vunpack.c.h.b16 %v293
    %v2212 = vunpack.c.l.b16 %v294
    %v2213 = vunpack.c.h.b16 %v294
    %v2214 = vunpack.c.l.b16 %v295
    %v2215 = vunpack.c.h.b16 %v295
    %v2216 = vunpack.c.l.b16 %v296
    %v2217 = vunpack.c.h.b16 %v296
    %v2218 = vunpack.c.l.b16 %v297
    %v2219 = vunpack.c.h.b16 %v297
    %v2220 = vunpack.c.l.b16 %v298
    %v2221 = vunpack.c.h.b16 %v298
    %v2222 = vunpack.c.l.b16 %v299
    %v2223 = vunpack.c.h.b16 %v299
    %v2224 = vunpack.c.l.b16 %v300
    %v2225 = vunpack.c.h.b16 %v300
    %v2226 = vunpack.c.l.b16 %v301
    %v2227 = vunpack.c.h.b16 %v301
    %v2228 = vunpack.c.l.b16 %v302
    %v2229 = vunpack.c.h.b16 %v302
    %v2230 = vunpack.c.l.b16 %v303
    %v2231 = vunpack.c.h.b16 %v303
    %v2232 = vunpack.c.l.b16 %v304
    %v2233 = vunpack.c.h.b16 %v304
    %v2234 = vunpack.c.l.b16 %v305
    %v2235 = vunpack.c.h.b16 %v305
    %v2236 = vunpack.c.l.b16 %v306
    %v2237 = vunpack.c.h.b16 %v306
    %v2238 = vunpack.c.l.b16 %v307
    %v2239 = vunpack.c.h.b16 %v307
    %v2240 = vunpack.c.l.b16 %v308
    %v2241 = vunpack.c.h.b16 %v308
    %v2242 = vunpack.c.l.b16 %v309
    %v2243 = vunpack.c.h.b16 %v309
    %v2244 = vunpack.c.l.b16 %v310
    %v2245 = vunpack.c.h.b16 %v310
    %v2246 = vunpack.c.l.b16 %v311
    %v2247 = vunpack.c.h.b16 %v311
    %v2248 = vunpack.c.l.b16 %v312
    %v2249 = vunpack.c.h.b16 %v312
    %v2250 = vunpack.c.l.b16 %v313
    %v2251 = vunpack.c.h.b16 %v313
    %v2252 = vunpack.c.l.b16 %v314
    %v2253 = vunpack.c.h.b16 %v314
    %v2254 = vunpack.c.l.b16 %v315
    %v2255 = vunpack.c.h.b16 %v315
    %v2256 = vunpack.c.l.b16 %v316
    %v2257 = vunpack.c.h.b16 %v316
    %v2258 = vunpack.c.l.b16 %v317
    %v2259 = vunpack.c.h.b16 %v317
    %v2260 = vunpack.c.l.b16 %v318
    %v2261 = vunpack.c.h.b16 %v318
    %v2262 = vunpack.c.l.b16 %v319
    %v2263 = vunpack.c.h.b16 %v319
    %v2264 = vunpack.c.l.b16 %v320
    %v2265 = vunpack.c.h.b16 %v320
    %v2266 = vunpack.c.l.b16 %v321
    %v2267 = vunpack.c.h.b16 %v321
    %v2268 = vunpack.c.l.b16 %v322
    %v2269 = vunpack.c.h.b16 %v322
    %v2270 = vunpack.c.l.b16 %v323
    %v2271 = vunpack.c.h.b16 %v323
    %v2272 = vunpack.c.l.b16 %v324
    %v2273 = vunpack.c.h.b16 %v324
    %v2274 = vunpack.c.l.b16 %v325
    %v2275 = vunpack.c.h.b16 %v325
    %v2276 = vunpack.c.l.b16 %v326
    %v2277 = vunpack.c.h.b16 %v326
    %v2278 = vunpack.c.l.b16 %v327
    %v2279 = vunpack.c.h.b16 %v327
    %v2280 = vunpack.c.l.b16 %v328
    %v2281 = vunpack.c.h.b16 %v328
    %v2282 = vunpack.c.l.b16 %v329
    %v2283 = vunpack.c.h.b16 %v329
    %v2284 = vunpack.c.l.b16 %v330
    %v2285 = vunpack.c.h.b16 %v330
    %v2286 = vunpack.c.l.b16 %v331
    %v2287 = vunpack.c.h.b16 %v331
    %v2288 = vunpack.c.l.b16 %v332
    %v2289 = vunpack.c.h.b16 %v332
    %v2290 = vunpack.c.l.b16 %v333
    %v2291 = vunpack.c.h.b16 %v333
    %v2292 = vunpack.c.l.b16 %v334
    %v2293 = vunpack.c.h.b16 %v334
    %v2294 = vunpack.c.l.b16 %v335
    %v2295 = vunpack.c.h.b16 %v335
    %v2296 = vunpack.c.l.b16 %v336
    %v2297 = vunpack.c.h.b16 %v336
    %v2298 = vunpack.c.l.b16 %v337
    %v2299 = vunpack.c.h.b16 %v337
    %v2300 = vunpack.c.l.b16 %v338
    %v2301 = vunpack.c.h.b16 %v338
    %v2302 = vunpack.c.l.b16 %v339
    %v2303 = vunpack.c.h.b16 %v339
    %v2304 = vunpack.c.l.b16 %v340
    %v2305 = vunpack.c.h.b16 %v340
    %v2306 = vunpack.c.l.b16 %v341
    %v2307 = vunpack.c.h.b16 %v341
    %v2308 = vunpack.c.l.b16 %v342
    %v2309 = vunpack.c.h.b16 %v342
    %v2310 = vunpack.c.l.b16 %v343
    %v2311 = vunpack.c.h.b16 %v343
    %v2312 = vunpack.c.l.b16 %v344
    %v2313 = vunpack.c.h.b16 %v344
    %v2314 = vunpack.c.l.b16 %v345
    %v2315 = vunpack.c.h.b16 %v345
    %v2316 = vunpack.c.l.b16 %v346
    %v2317 = vunpack.c.h.b16 %v346
    %v2318 = vunpack.c.l.b16 %v347
    %v2319 = vunpack.c.h.b16 %v347
    %v2320 = vunpack.c.l.b16 %v348
    %v2321 = vunpack.c.h.b16 %v348
    %v2322 = vunpack.c.l.b16 %v349
    %v2323 = vunpack.c.h.b16 %v349
    %v2324 = vunpack.c.l.b16 %v350
    %v2325 = vunpack.c.h.b16 %v350
    %v2326 = vunpack.c.l.b16 %v351
    %v2327 = vunpack.c.h.b16 %v351
    %v2328 = vunpack.c.l.b16 %v352
    %v2329 = vunpack.c.h.b16 %v352
    %v2330 = vunpack.c.l.b16 %v353
    %v2331 = vunpack.c.h.b16 %v353
    %v2332 = vunpack.c.l.b16 %v354
    %v2333 = vunpack.c.h.b16 %v354
    %v2334 = vunpack.c.l.b16 %v355
    %v2335 = vunpack.c.h.b16 %v355
    %v2336 = vunpack.c.l.b16 %v356
    %v2337 = vunpack.c.h.b16 %v356
    %v2338 = vunpack.c.l.b16 %v357
    %v2339 = vunpack.c.h.b16 %v357
    %v2340 = vunpack.c.l.b16 %v358
    %v2341 = vunpack.c.h.b16 %v358
    %v2342 = vunpack.c.l.b16 %v359
    %v2343 = vunpack.c.h.b16 %v359
    %v2344 = vunpack.c.l.b16 %v360
    %v2345 = vunpack.c.h.b16 %v360
    %v2346 = vunpack.c.l.b16 %v361
    %v2347 = vunpack.c.h.b16 %v361
    %v2348 = vunpack.c.l.b16 %v362
    %v2349 = vunpack.c.h.b16 %v362
    %v2350 = vunpack.c.l.b16 %v363
    %v2351 = vunpack.c.h.b16 %v363
    %v2352 = vunpack.c.l.b16 %v364
    %v2353 = vunpack.c.h.b16 %v364
    %v2354 = vunpack.c.l.b16 %v365
    %v2355 = vunpack.c.h.b16 %v365
    %v2356 = vunpack.c.l.b16 %v366
    %v2357 = vunpack.c.h.b16 %v366
    %v2358 = vunpack.c.l.b16 %v367
    %v2359 = vunpack.c.h.b16 %v367
    %v2360 = vunpack.c.l.b16 %v368
    %v2361 = vunpack.c.h.b16 %v368
    %v2362 = vunpack.c.l.b16 %v369
    %v2363 = vunpack.c.h.b16 %v369
    %v2364 = vunpack.c.l.b16 %v370
    %v2365 = vunpack.c.h.b16 %v370
    %v2366 = vunpack.c.l.b16 %v371
    %v2367 = vunpack.c.h.b16 %v371
    %v2368 = vunpack.c.l.b16 %v372
    %v2369 = vunpack.c.h.b16 %v372
    %v2370 = vunpack.c.l.b16 %v373
    %v2371 = vunpack.c.h.b16 %v373
    %v2372 = vunpack.c.l.b16 %v374
    %v2373 = vunpack.c.h.b16 %v374
    %v2374 = vunpack.c.l.b16 %v375
    %v2375 = vunpack.c.h.b16 %v375
    %v2376 = vunpack.c.l.b16 %v376
    %v2377 = vunpack.c.h.b16 %v376
    %v2378 = vunpack.c.l.b16 %v377
    %v2379 = vunpack.c.h.b16 %v377
    %v2380 = vunpack.c.l.b16 %v378
    %v2381 = vunpack.c.h.b16 %v378
    %v2382 = vunpack.c.l.b16 %v379
    %v2383 = vunpack.c.h.b16 %v379
    %v2384 = vunpack.c.l.b16 %v380
    %v2385 = vunpack.c.h.b16 %v380
    %v2386 = vunpack.c.l.b16 %v381
    %v2387 = vunpack.c.h.b16 %v381
    %v2388 = vunpack.c.l.b16 %v382
    %v2389 = vunpack.c.h.b16 %v382
    %v2390 = vunpack.c.l.b16 %v383
    %v2391 = vunpack.c.h.b16 %v383
    %v2392 = vunpack.c.l.b16 %v384
    %v2393 = vunpack.c.h.b16 %v384
    %v2394 = vunpack.c.l.b16 %v385
    %v2395 = vunpack.c.h.b16 %v385
    %v2396 = vunpack.c.l.b16 %v386
    %v2397 = vunpack.c.h.b16 %v386
    %v2398 = vunpack.c.l.b16 %v387
    %v2399 = vunpack.c.h.b16 %v387
    %v2400 = vunpack.c.l.b16 %v388
    %v2401 = vunpack.c.h.b16 %v388
    %v2402 = vunpack.c.l.b16 %v389
    %v2403 = vunpack.c.h.b16 %v389
    %v2404 = vunpack.c.l.b16 %v390
    %v2405 = vunpack.c.h.b16 %v390
    %v2406 = vunpack.c.l.b16 %v391
    %v2407 = vunpack.c.h.b16 %v391
    %v2408 = vunpack.c.l.b16 %v392
    %v2409 = vunpack.c.h.b16 %v392
    %v2410 = vunpack.c.l.b16 %v393
    %v2411 = vunpack.c.h.b16 %v393
    %v2412 = vunpack.c.l.b16 %v394
    %v2413 = vunpack.c.h.b16 %v394
    %v2414 = vunpack.c.l.b16 %v395
    %v2415 = vunpack.c.h.b16 %v395
    %v2416 = vunpack.c.l.b16 %v396
    %v2417 = vunpack.c.h.b16 %v396
    %v2418 = vunpack.c.l.b16 %v397
    %v2419 = vunpack.c.h.b16 %v397
    %v2420 = vunpack.c.l.b16 %v398
    %v2421 = vunpack.c.h.b16 %v398
    %v2422 = vunpack.c.l.b16 %v399
    %v2423 = vunpack.c.h.b16 %v399
    %v2424 = vunpack.c.l.b16 %v400
    %v2425 = vunpack.c.h.b16 %v400
    %v2426 = vunpack.c.l.b16 %v401
    %v2427 = vunpack.c.h.b16 %v401
    %v2428 = vunpack.c.l.b16 %v402
    %v2429 = vunpack.c.h.b16 %v402
    %v2430 = vunpack.c.l.b16 %v403
    %v2431 = vunpack.c.h.b16 %v403
    %v2432 = vunpack.c.l.b16 %v404
    %v2433 = vunpack.c.h.b16 %v404
    %v2434 = vunpack.c.l.b16 %v405
    %v2435 = vunpack.c.h.b16 %v405
    %v2436 = vunpack.c.l.b16 %v406
    %v2437 = vunpack.c.h.b16 %v406
    %v2438 = vunpack.c.l.b16 %v407
    %v2439 = vunpack.c.h.b16 %v407
    %v2440 = vunpack.c.l.b16 %v408
    %v2441 = vunpack.c.h.b16 %v408
    %v2442 = vunpack.c.l.b16 %v409
    %v2443 = vunpack.c.h.b16 %v409
    %v2444 = vunpack.c.l.b16 %v410
    %v2445 = vunpack.c.h.b16 %v410
    %v2446 = vunpack.c.l.b16 %v411
    %v2447 = vunpack.c.h.b16 %v411
    %v2448 = vunpack.c.l.b16 %v412
    %v2449 = vunpack.c.h.b16 %v412
    %v2450 = vunpack.c.l.b16 %v413
    %v2451 = vunpack.c.h.b16 %v413
    %v2452 = vunpack.c.l.b16 %v414
    %v2453 = vunpack.c.h.b16 %v414
    %v2454 = vunpack.c.l.b16 %v415
    %v2455 = vunpack.c.h.b16 %v415
    %v2456 = vunpack.c.l.b16 %v416
    %v2457 = vunpack.c.h.b16 %v416
    %v2458 = vunpack.c.l.b16 %v417
    %v2459 = vunpack.c.h.b16 %v417
    %v2460 = vunpack.c.l.b16 %v418
    %v2461 = vunpack.c.h.b16 %v418
    %v2462 = vunpack.c.l.b16 %v419
    %v2463 = vunpack.c.h.b16 %v419
    %v2464 = vunpack.c.l.b16 %v420
    %v2465 = vunpack.c.h.b16 %v420
    %v2466 = vunpack.c.l.b16 %v421
    %v2467 = vunpack.c.h.b16 %v421
    %v2468 = vunpack.c.l.b16 %v422
    %v2469 = vunpack.c.h.b16 %v422
    %v2470 = vunpack.c.l.b16 %v423
    %v2471 = vunpack.c.h.b16 %v423
    %v2472 = vunpack.c.l.b16 %v424
    %v2473 = vunpack.c.h.b16 %v424
    %v2474 = vunpack.c.l.b16 %v425
    %v2475 = vunpack.c.h.b16 %v425
    %v2476 = vunpack.c.l.b16 %v426
    %v2477 = vunpack.c.h.b16 %v426
    %v2478 = vunpack.c.l.b16 %v427
    %v2479 = vunpack.c.h.b16 %v427
    %v2480 = vunpack.c.l.b16 %v428
    %v2481 = vunpack.c.h.b16 %v428
    %v2482 = vunpack.c.l.b16 %v429
    %v2483 = vunpack.c.h.b16 %v429
    %v2484 = vunpack.c.l.b16 %v430
    %v2485 = vunpack.c.h.b16 %v430
    %v2486 = vunpack.c.l.b16 %v431
    %v2487 = vunpack.c.h.b16 %v431
    %v2488 = vunpack.c.l.b16 %v432
    %v2489 = vunpack.c.h.b16 %v432
    %v2490 = vunpack.c.l.b16 %v433
    %v2491 = vunpack.c.h.b16 %v433
    %v2492 = vunpack.c.l.b16 %v434
    %v2493 = vunpack.c.h.b16 %v434
    %v2494 = vunpack.c.l.b16 %v435
    %v2495 = vunpack.c.h.b16 %v435
    %v2496 = vunpack.c.l.b16 %v436
    %v2497 = vunpack.c.h.b16 %v436
    %v2498 = vunpack.c.l.b16 %v437
    %v2499 = vunpack.c.h.b16 %v437
    %v2500 = vunpack.c.l.b16 %v438
    %v2501 = vunpack.c.h.b16 %v438
    %v2502 = vunpack.c.l.b16 %v439
    %v2503 = vunpack.c.h.b16 %v439
    %v2504 = vunpack.c.l.b16 %v440
    %v2505 = vunpack.c.h.b16 %v440
    %v2506 = vunpack.c.l.b16 %v441
    %v2507 = vunpack.c.h.b16 %v441
    %v2508 = vunpack.c.l.b16 %v442
    %v2509 = vunpack.c.h.b16 %v442
    %v2510 = vunpack.c.l.b16 %v443
    %v2511 = vunpack.c.h.b16 %v443
    %v2512 = vunpack.c.l.b16 %v444
    %v2513 = vunpack.c.h.b16 %v444
    %v2514 = vunpack.c.l.b16 %v445
    %v2515 = vunpack.c.h.b16 %v445
    %v2516 = vunpack.c.l.b16 %v446
    %v2517 = vunpack.c.h.b16 %v446
    %v2518 = vunpack.c.l.b16 %v447
    %v2519 = vunpack.c.h.b16 %v447
    %v2520 = vunpack.c.l.b16 %v448
    %v2521 = vunpack.c.h.b16 %v448
    %v2522 = vunpack.c.l.b16 %v449
    %v2523 = vunpack.c.h.b16 %v449
    %v2524 = vunpack.c.l.b16 %v450
    %v2525 = vunpack.c.h.b16 %v450
    %v2526 = vunpack.c.l.b16 %v451
    %v2527 = vunpack.c.h.b16 %v451
    %v2528 = vunpack.c.l.b16 %v452
    %v2529 = vunpack.c.h.b16 %v452
    %v2530 = vunpack.c.l.b16 %v453
    %v2531 = vunpack.c.h.b16 %v453
    %v2532 = vunpack.c.l.b16 %v454
    %v2533 = vunpack.c.h.b16 %v454
    %v2534 = vunpack.c.l.b16 %v455
    %v2535 = vunpack.c.h.b16 %v455
    %v2536 = vunpack.c.l.b16 %v456
    %v2537 = vunpack.c.h.b16 %v456
    %v2538 = vunpack.c.l.b16 %v457
    %v2539 = vunpack.c.h.b16 %v457
    %v2540 = vunpack.c.l.b16 %v458
    %v2541 = vunpack.c.h.b16 %v458
    %v2542 = vunpack.c.l.b16 %v459
    %v2543 = vunpack.c.h.b16 %v459
    %v2544 = vunpack.c.l.b16 %v460
    %v2545 = vunpack.c.h.b16 %v460
    %v2546 = vunpack.c.l.b16 %v461
    %v2547 = vunpack.c.h.b16 %v461
    %v2548 = vunpack.c.l.b16 %v462
    %v2549 = vunpack.c.h.b16 %v462
    %v2550 = vunpack.c.l.b16 %v463
    %v2551 = vunpack.c.h.b16 %v463
    %v2552 = vunpack.c.l.b16 %v464
    %v2553 = vunpack.c.h.b16 %v464
    %v2554 = vunpack.c.l.b16 %v465
    %v2555 = vunpack.c.h.b16 %v465
    %v2556 = vunpack.c.l.b16 %v466
    %v2557 = vunpack.c.h.b16 %v466
    %v2558 = vunpack.c.l.b16 %v467
    %v2559 = vunpack.c.h.b16 %v467
    %v2560 = vunpack.c.l.b16 %v468
    %v2561 = vunpack.c.h.b16 %v468
    %v2562 = vunpack.c.l.b16 %v469
    %v2563 = vunpack.c.h.b16 %v469
    %v2564 = vunpack.c.l.b16 %v470
    %v2565 = vunpack.c.h.b16 %v470
    %v2566 = vunpack.c.l.b16 %v471
    %v2567 = vunpack.c.h.b16 %v471
    %v2568 = vunpack.c.l.b16 %v472
    %v2569 = vunpack.c.h.b16 %v472
    %v2570 = vunpack.c.l.b16 %v473
    %v2571 = vunpack.c.h.b16 %v473
    %v2572 = vunpack.c.l.b16 %v474
    %v2573 = vunpack.c.h.b16 %v474
    %v2574 = vunpack.c.l.b16 %v475
    %v2575 = vunpack.c.h.b16 %v475
    %v2576 = vunpack.c.l.b16 %v476
    %v2577 = vunpack.c.h.b16 %v476
    %v2578 = vunpack.c.l.b16 %v477
    %v2579 = vunpack.c.h.b16 %v477
    %v2580 = vunpack.c.l.b16 %v478
    %v2581 = vunpack.c.h.b16 %v478
    %v2582 = vunpack.c.l.b16 %v479
    %v2583 = vunpack.c.h.b16 %v479
    %v2584 = vunpack.c.l.b16 %v480
    %v2585 = vunpack.c.h.b16 %v480
    %v2586 = vunpack.c.l.b16 %v481
    %v2587 = vunpack.c.h.b16 %v481
    %v2588 = vunpack.c.l.b16 %v482
    %v2589 = vunpack.c.h.b16 %v482
    %v2590 = vunpack.c.l.b16 %v483
    %v2591 = vunpack.c.h.b16 %v483
    %v2592 = vunpack.c.l.b16 %v484
    %v2593 = vunpack.c.h.b16 %v484
    %v2594 = vunpack.c.l.b16 %v485
    %v2595 = vunpack.c.h.b16 %v485
    %v2596 = vunpack.c.l.b16 %v486
    %v2597 = vunpack.c.h.b16 %v486
    %v2598 = vunpack.c.l.b16 %v487
    %v2599 = vunpack.c.h.b16 %v487
    %v2600 = vunpack.c.l.b16 %v488
    %v2601 = vunpack.c.h.b16 %v488
    %v2602 = vunpack.c.l.b16 %v489
    %v2603 = vunpack.c.h.b16 %v489
    %v2604 = vunpack.c.l.b16 %v490
    %v2605 = vunpack.c.h.b16 %v490
    %v2606 = vunpack.c.l.b16 %v491
    %v2607 = vunpack.c.h.b16 %v491
    %v2608 = vunpack.c.l.b16 %v492
    %v2609 = vunpack.c.h.b16 %v492
    %v2610 = vunpack.c.l.b16 %v493
    %v2611 = vunpack.c.h.b16 %v493
    %v2612 = vunpack.c.l.b16 %v494
    %v2613 = vunpack.c.h.b16 %v494
    %v2614 = vunpack.c.l.b16 %v495
    %v2615 = vunpack.c.h.b16 %v495
    %v2616 = vunpack.c.l.b16 %v496
    %v2617 = vunpack.c.h.b16 %v496
    %v2618 = vunpack.c.l.b16 %v497
    %v2619 = vunpack.c.h.b16 %v497
    %v2620 = vunpack.c.l.b16 %v498
    %v2621 = vunpack.c.h.b16 %v498
    %v2622 = vunpack.c.l.b16 %v499
    %v2623 = vunpack.c.h.b16 %v499
    %v2624 = vunpack.c.l.b16 %v500
    %v2625 = vunpack.c.h.b16 %v500
    %v2626 = vunpack.c.l.b16 %v501
    %v2627 = vunpack.c.h.b16 %v501
    %v2628 = vunpack.c.l.b16 %v502
    %v2629 = vunpack.c.h.b16 %v502
    %v2630 = vunpack.c.l.b16 %v503
    %v2631 = vunpack.c.h.b16 %v503
    %v2632 = vunpack.c.l.b16 %v504
    %v2633 = vunpack.c.h.b16 %v504
    %v2634 = vunpack.c.l.b16 %v505
    %v2635 = vunpack.c.h.b16 %v505
    %v2636 = vunpack.c.l.b16 %v506
    %v2637 = vunpack.c.h.b16 %v506
    %v2638 = vunpack.c.l.b16 %v507
    %v2639 = vunpack.c.h.b16 %v507
    %v2640 = vunpack.c.l.b16 %v508
    %v2641 = vunpack.c.h.b16 %v508
    %v2642 = vunpack.c.l.b16 %v509
    %v2643 = vunpack.c.h.b16 %v509
    %v2644 = vunpack.c.l.b16 %v510
    %v2645 = vunpack.c.h.b16 %v510
    %v2646 = vunpack.c.l.b16 %v511
    %v2647 = vunpack.c.h.b16 %v511
    %v2648 = vunpack.c.l.b16 %v512
    %v2649 = vunpack.c.h.b16 %v512
    %v2650 = vunpack.c.l.b16 %v513
    %v2651 = vunpack.c.h.b16 %v513
    %v2652 = vunpack.c.l.b16 %v514
    %v2653 = vunpack.c.h.b16 %v514
    %v2654 = vunpack.c.l.b16 %v515
    %v2655 = vunpack.c.h.b16 %v515
    %v2656 = vunpack.c.l.b16 %v516
    %v2657 = vunpack.c.h.b16 %v516
    %v2658 = vunpack.c.l.b16 %v517
    %v2659 = vunpack.c.h.b16 %v517
    %v2660 = vunpack.c.l.b16 %v518
    %v2661 = vunpack.c.h.b16 %v518
    %v2662 = vunpack.c.l.b16 %v519
    %v2663 = vunpack.c.h.b16 %v519
    %v2664 = vunpack.c.l.b16 %v520
    %v2665 = vunpack.c.h.b16 %v520
    %v2666 = vunpack.c.l.b16 %v521
    %v2667 = vunpack.c.h.b16 %v521
    %v2668 = vunpack.c.l.b16 %v522
    %v2669 = vunpack.c.h.b16 %v522
    %v2670 = vunpack.c.l.b16 %v523
    %v2671 = vunpack.c.h.b16 %v523
    %v2672 = vunpack.c.l.b16 %v524
    %v2673 = vunpack.c.h.b16 %v524
    %v2674 = vunpack.c.l.b16 %v525
    %v2675 = vunpack.c.h.b16 %v525
    %v2676 = vunpack.c.l.b16 %v526
    %v2677 = vunpack.c.h.b16 %v526
    %v2678 = vunpack.c.l.b16 %v527
    %v2679 = vunpack.c.h.b16 %v527
    %v2680 = vunpack.c.l.b16 %v528
    %v2681 = vunpack.c.h.b16 %v528
    %v2682 = vunpack.c.l.b16 %v529
    %v2683 = vunpack.c.h.b16 %v529
    %v2684 = vunpack.c.l.b16 %v530
    %v2685 = vunpack.c.h.b16 %v530
    %v2686 = vunpack.c.l.b16 %v531
    %v2687 = vunpack.c.h.b16 %v531
    %v2688 = vunpack.c.l.b16 %v532
    %v2689 = vunpack.c.h.b16 %v532
    %v2690 = vunpack.c.l.b16 %v533
    %v2691 = vunpack.c.h.b16 %v533
    %v2692 = vunpack.c.l.b16 %v534
    %v2693 = vunpack.c.h.b16 %v534
    %v2694 = vunpack.c.l.b16 %v535
    %v2695 = vunpack.c.h.b16 %v535
    %v2696 = vunpack.c.l.b16 %v536
    %v2697 = vunpack.c.h.b16 %v536
    %v2698 = vunpack.c.l.b16 %v537
    %v2699 = vunpack.c.h.b16 %v537
    %v2700 = vunpack.c.l.b16 %v538
    %v2701 = vunpack.c.h.b16 %v538
    %v2702 = vunpack.c.l.b16 %v539
    %v2703 = vunpack.c.h.b16 %v539
    %v2704 = vunpack.c.l.b16 %v540
    %v2705 = vunpack.c.h.b16 %v540
    %v2706 = vunpack.c.l.b16 %v541
    %v2707 = vunpack.c.h.b16 %v541
    %v2708 = vunpack.c.l.b16 %v542
    %v2709 = vunpack.c.h.b16 %v542
    %v2710 = vunpack.c.l.b16 %v543
    %v2711 = vunpack.c.h.b16 %v543
    %v2712 = vunpack.c.l.b16 %v544
    %v2713 = vunpack.c.h.b16 %v544
    %v2714 = vunpack.c.l.b16 %v545
    %v2715 = vunpack.c.h.b16 %v545
    %v2716 = vunpack.c.l.b16 %v546
    %v2717 = vunpack.c.h.b16 %v546
    %v2718 = vunpack.c.l.b16 %v547
    %v2719 = vunpack.c.h.b16 %v547
    %v2720 = vunpack.c.l.b16 %v548
    %v2721 = vunpack.c.h.b16 %v548
    %v2722 = vunpack.c.l.b16 %v549
    %v2723 = vunpack.c.h.b16 %v549
    %v2724 = vunpack.c.l.b16 %v550
    %v2725 = vunpack.c.h.b16 %v550
    %v2726 = vunpack.c.l.b16 %v551
    %v2727 = vunpack.c.h.b16 %v551
    %v2728 = vunpack.c.l.b16 %v552
    %v2729 = vunpack.c.h.b16 %v552
    %v2730 = vunpack.c.l.b16 %v553
    %v2731 = vunpack.c.h.b16 %v553
    %v2732 = vunpack.c.l.b16 %v554
    %v2733 = vunpack.c.h.b16 %v554
    %v2734 = vunpack.c.l.b16 %v555
    %v2735 = vunpack.c.h.b16 %v555
    %v2736 = vunpack.c.l.b16 %v556
    %v2737 = vunpack.c.h.b16 %v556
    %v2738 = vunpack.c.l.b16 %v557
    %v2739 = vunpack.c.h.b16 %v557
    %v2740 = vunpack.c.l.b16 %v558
    %v2741 = vunpack.c.h.b16 %v558
    %v2742 = vunpack.c.l.b16 %v559
    %v2743 = vunpack.c.h.b16 %v559
    %v2744 = vunpack.c.l.b16 %v560
    %v2745 = vunpack.c.h.b16 %v560
    %v2746 = vunpack.c.l.b16 %v561
    %v2747 = vunpack.c.h.b16 %v561
    %v2748 = vunpack.c.l.b16 %v562
    %v2749 = vunpack.c.h.b16 %v562
    %v2750 = vunpack.c.l.b16 %v563
    %v2751 = vunpack.c.h.b16 %v563
    %v2752 = vunpack.c.l.b16 %v564
    %v2753 = vunpack.c.h.b16 %v564
    %v2754 = vunpack.c.l.b16 %v565
    %v2755 = vunpack.c.h.b16 %v565
    %v2756 = vunpack.c.l.b16 %v566
    %v2757 = vunpack.c.h.b16 %v566
    %v2758 = vunpack.c.l.b16 %v567
    %v2759 = vunpack.c.h.b16 %v567
    %v2760 = vunpack.c.l.b16 %v568
    %v2761 = vunpack.c.h.b16 %v568
    %v2762 = vunpack.c.l.b16 %v569
    %v2763 = vunpack.c.h.b16 %v569
    %v2764 = vunpack.c.l.b16 %v570
    %v2765 = vunpack.c.h.b16 %v570
    %v2766 = vunpack.c.l.b16 %v571
    %v2767 = vunpack.c.h.b16 %v571
    %v2768 = vunpack.c.l.b16 %v572
    %v2769 = vunpack.c.h.b16 %v572
    %v2770 = vunpack.c.l.b16 %v573
    %v2771 = vunpack.c.h.b16 %v573
    %v2772 = vunpack.c.l.b16 %v574
    %v2773 = vunpack.c.h.b16 %v574
    %v2774 = vunpack.c.l.b16 %v575
    %v2775 = vunpack.c.h.b16 %v575
    %v2776 = vunpack.c.l.b16 %v576
    %v2777 = vunpack.c.h.b16 %v576
    %v2778 = vunpack.c.l.b16 %v577
    %v2779 = vunpack.c.h.b16 %v577
    %v2780 = vunpack.c.l.b16 %v578
    %v2781 = vunpack.c.h.b16 %v578
    %v2782 = vunpack.c.l.b16 %v579
    %v2783 = vunpack.c.h.b16 %v579
    %v2784 = vunpack.c.l.b16 %v580
    %v2785 = vunpack.c.h.b16 %v580
    %v2786 = vunpack.c.l.b16 %v581
    %v2787 = vunpack.c.h.b16 %v581
    %v2788 = vunpack.c.l.b16 %v582
    %v2789 = vunpack.c.h.b16 %v582
    %v2790 = vunpack.c.l.b16 %v583
    %v2791 = vunpack.c.h.b16 %v583
    %v2792 = vunpack.c.l.b16 %v584
    %v2793 = vunpack.c.h.b16 %v584
    %v2794 = vunpack.c.l.b16 %v585
    %v2795 = vunpack.c.h.b16 %v585
    %v2796 = vunpack.c.l.b16 %v586
    %v2797 = vunpack.c.h.b16 %v586
    %v2798 = vunpack.c.l.b16 %v587
    %v2799 = vunpack.c.h.b16 %v587
    %v2800 = vunpack.c.l.b16 %v588
    %v2801 = vunpack.c.h.b16 %v588
    %v2802 = vunpack.c.l.b16 %v589
    %v2803 = vunpack.c.h.b16 %v589
    %v2804 = vunpack.c.l.b16 %v590
    %v2805 = vunpack.c.h.b16 %v590
    %v2806 = vunpack.c.l.b16 %v591
    %v2807 = vunpack.c.h.b16 %v591
    %v2808 = vunpack.c.l.b16 %v592
    %v2809 = vunpack.c.h.b16 %v592
    %v2810 = vunpack.c.l.b16 %v593
    %v2811 = vunpack.c.h.b16 %v593
    %v2812 = vunpack.c.l.b16 %v594
    %v2813 = vunpack.c.h.b16 %v594
    %v2814 = vunpack.c.l.b16 %v595
    %v2815 = vunpack.c.h.b16 %v595
    %v2816 = vunpack.c.l.b16 %v596
    %v2817 = vunpack.c.h.b16 %v596
    %v2818 = vunpack.c.l.b16 %v597
    %v2819 = vunpack.c.h.b16 %v597
    %v2820 = vunpack.c.l.b16 %v598
    %v2821 = vunpack.c.h.b16 %v598
    %v2822 = vunpack.c.l.b16 %v599
    %v2823 = vunpack.c.h.b16 %v599
    %v2824 = vunpack.c.l.b16 %v600
    %v2825 = vunpack.c.h.b16 %v600
    %v2826 = vunpack.c.l.b16 %v601
    %v2827 = vunpack.c.h.b16 %v601
    %v2828 = vunpack.c.l.b16 %v602
    %v2829 = vunpack.c.h.b16 %v602
    %v2830 = vunpack.c.l.b16 %v603
    %v2831 = vunpack.c.h.b16 %v603
    %v2832 = vunpack.c.l.b16 %v604
    %v2833 = vunpack.c.h.b16 %v604
    %v2834 = vunpack.c.l.b16 %v605
    %v2835 = vunpack.c.h.b16 %v605
    %v2836 = vunpack.c.l.b16 %v606
    %v2837 = vunpack.c.h.b16 %v606
    %v2838 = vunpack.c.l.b16 %v607
    %v2839 = vunpack.c.h.b16 %v607
    %v2840 = vunpack.c.l.b16 %v608
    %v2841 = vunpack.c.h.b16 %v608
    %v2842 = vunpack.c.l.b16 %v609
    %v2843 = vunpack.c.h.b16 %v609
    %v2844 = vunpack.c.l.b16 %v610
    %v2845 = vunpack.c.h.b16 %v610
    %v2846 = vunpack.c.l.b16 %v611
    %v2847 = vunpack.c.h.b16 %v611
    %v2848 = vunpack.c.l.b16 %v612
    %v2849 = vunpack.c.h.b16 %v612
    %v2850 = vunpack.c.l.b16 %v613
    %v2851 = vunpack.c.h.b16 %v613
    %v2852 = vunpack.c.l.b16 %v614
    %v2853 = vunpack.c.h.b16 %v614
    %v2854 = vunpack.c.l.b16 %v615
    %v2855 = vunpack.c.h.b16 %v615
    %v2856 = vunpack.c.l.b16 %v616
    %v2857 = vunpack.c.h.b16 %v616
    %v2858 = vunpack.c.l.b16 %v617
    %v2859 = vunpack.c.h.b16 %v617
    %v2860 = vunpack.c.l.b16 %v618
    %v2861 = vunpack.c.h.b16 %v618
    %v2862 = vunpack.c.l.b16 %v619
    %v2863 = vunpack.c.h.b16 %v619
    %v2864 = vunpack.c.l.b16 %v620
    %v2865 = vunpack.c.h.b16 %v620
    %v2866 = vunpack.c.l.b16 %v621
    %v2867 = vunpack.c.h.b16 %v621
    %v2868 = vunpack.c.l.b16 %v622
    %v2869 = vunpack.c.h.b16 %v622
    %v2870 = vunpack.c.l.b16 %v623
    %v2871 = vunpack.c.h.b16 %v623
    %v2872 = vunpack.c.l.b16 %v624
    %v2873 = vunpack.c.h.b16 %v624
    %v2874 = vunpack.c.l.b16 %v625
    %v2875 = vunpack.c.h.b16 %v625
    %v2876 = vunpack.c.l.b16 %v626
    %v2877 = vunpack.c.h.b16 %v626
    %v2878 = vunpack.c.l.b16 %v627
    %v2879 = vunpack.c.h.b16 %v627
    %v2880 = vunpack.c.l.b16 %v628
    %v2881 = vunpack.c.h.b16 %v628
    %v2882 = vunpack.c.l.b16 %v629
    %v2883 = vunpack.c.h.b16 %v629
    %v2884 = vunpack.c.l.b16 %v630
    %v2885 = vunpack.c.h.b16 %v630
    %v2886 = vunpack.c.l.b16 %v631
    %v2887 = vunpack.c.h.b16 %v631
    %v2888 = vunpack.c.l.b16 %v632
    %v2889 = vunpack.c.h.b16 %v632
    %v2890 = vunpack.c.l.b16 %v633
    %v2891 = vunpack.c.h.b16 %v633
    %v2892 = vunpack.c.l.b16 %v634
    %v2893 = vunpack.c.h.b16 %v634
    %v2894 = vunpack.c.l.b16 %v635
    %v2895 = vunpack.c.h.b16 %v635
    %v2896 = vunpack.c.l.b16 %v636
    %v2897 = vunpack.c.h.b16 %v636
    %v2898 = vunpack.c.l.b16 %v637
    %v2899 = vunpack.c.h.b16 %v637
    %v2900 = vunpack.c.l.b16 %v638
    %v2901 = vunpack.c.h.b16 %v638
    %v2902 = vunpack.c.l.b16 %v639
    %v2903 = vunpack.c.h.b16 %v639
    %v2904 = vunpack.c.l.b16 %v640
    %v2905 = vunpack.c.h.b16 %v640
    %v2906 = vunpack.c.l.b16 %v641
    %v2907 = vunpack.c.h.b16 %v641
    %v2908 = vunpack.c.l.b16 %v642
    %v2909 = vunpack.c.h.b16 %v642
    %v2910 = vunpack.c.l.b16 %v643
    %v2911 = vunpack.c.h.b16 %v643
    %v2912 = vunpack.c.l.b16 %v644
    %v2913 = vunpack.c.h.b16 %v644
    %v2914 = vunpack.c.l.b16 %v645
    %v2915 = vunpack.c.h.b16 %v645
    %v2916 = vunpack.c.l.b16 %v646
    %v2917 = vunpack.c.h.b16 %v646
    %v2918 = vunpack.c.l.b16 %v647
    %v2919 = vunpack.c.h.b16 %v647
    %v2920 = vunpack.c.l.b16 %v648
    %v2921 = vunpack.c.h.b16 %v648
    %v2922 = vunpack.c.l.b16 %v649
    %v2923 = vunpack.c.h.b16 %v649
    %v2924 = vunpack.c.l.b16 %v650
    %v2925 = vunpack.c.h.b16 %v650
    %v2926 = vunpack.c.l.b16 %v651
    %v2927 = vunpack.c.h.b16 %v651
    %v2928 = vunpack.c.l.b16 %v652
    %v2929 = vunpack.c.h.b16 %v652
    %v2930 = vunpack.c.l.b16 %v653
    %v2931 = vunpack.c.h.b16 %v653
    %v2932 = vunpack.c.l.b16 %v654
    %v2933 = vunpack.c.h.b16 %v654
    %v2934 = vunpack.c.l.b16 %v655
    %v2935 = vunpack.c.h.b16 %v655
    %v2936 = vunpack.c.l.b16 %v656
    %v2937 = vunpack.c.h.b16 %v656
    %v2938 = vunpack.c.l.b16 %v657
    %v2939 = vunpack.c.h.b16 %v657
    %v2940 = vunpack.c.l.b16 %v658
    %v2941 = vunpack.c.h.b16 %v658
    %v2942 = vunpack.c.l.b16 %v659
    %v2943 = vunpack.c.h.b16 %v659
    %v2944 = vunpack.c.l.b16 %v660
    %v2945 = vunpack.c.h.b16 %v660
    %v2946 = vunpack.c.l.b16 %v661
    %v2947 = vunpack.c.h.b16 %v661
    %v2948 = vunpack.c.l.b16 %v662
    %v2949 = vunpack.c.h.b16 %v662
    %v2950 = vunpack.c.l.b16 %v663
    %v2951 = vunpack.c.h.b16 %v663
    %v2952 = vunpack.c.l.b16 %v664
    %v2953 = vunpack.c.h.b16 %v664
    %v2954 = vunpack.c.l.b16 %v665
    %v2955 = vunpack.c.h.b16 %v665
    %v2956 = vunpack.c.l.b16 %v666
    %v2957 = vunpack.c.h.b16 %v666
    %v2958 = vunpack.c.l.b16 %v667
    %v2959 = vunpack.c.h.b16 %v667
    %v2960 = vunpack.c.l.b16 %v668
    %v2961 = vunpack.c.h.b16 %v668
    %v2962 = vunpack.c.l.b16 %v669
    %v2963 = vunpack.c.h.b16 %v669
    %v2964 = vunpack.c.l.b16 %v670
    %v2965 = vunpack.c.h.b16 %v670
    %v2966 = vunpack.c.l.b16 %v671
    %v2967 = vunpack.c.h.b16 %v671
    %v2968 = vunpack.c.l.b16 %v672
    %v2969 = vunpack.c.h.b16 %v672
    %v2970 = vunpack.c.l.b16 %v673
    %v2971 = vunpack.c.h.b16 %v673
    %v2972 = vunpack.c.l.b16 %v674
    %v2973 = vunpack.c.h.b16 %v674
    %v2974 = vunpack.c.l.b16 %v675
    %v2975 = vunpack.c.h.b16 %v675
    %v2976 = vunpack.c.l.b16 %v676
    %v2977 = vunpack.c.h.b16 %v676
    %v2978 = vunpack.c.l.b16 %v677
    %v2979 = vunpack.c.h.b16 %v677
    %v2980 = vunpack.c.l.b16 %v678
    %v2981 = vunpack.c.h.b16 %v678
    %v2982 = vunpack.c.l.b16 %v679
    %v2983 = vunpack.c.h.b16 %v679
    %v2984 = vunpack.c.l.b16 %v680
    %v2985 = vunpack.c.h.b16 %v680
    %v2986 = vunpack.c.l.b16 %v681
    %v2987 = vunpack.c.h.b16 %v681
    %v2988 = vunpack.c.l.b16 %v682
    %v2989 = vunpack.c.h.b16 %v682
    %v2990 = vunpack.c.l.b16 %v683
    %v2991 = vunpack.c.h.b16 %v683
    %v2992 = vunpack.c.l.b16 %v684
    %v2993 = vunpack.c.h.b16 %v684
    %v2994 = vunpack.c.l.b16 %v685
    %v2995 = vunpack.c.h.b16 %v685
    %v2996 = vunpack.c.l.b16 %v686
    %v2997 = vunpack.c.h.b16 %v686
    %v2998 = vunpack.c.l.b16 %v687
    %v2999 = vunpack.c.h.b16 %v687
    %v3000 = vunpack.c.l.b16 %v688
    %v3001 = vunpack.c.h.b16 %v688
    %v3002 = vunpack.c.l.b16 %v689
    %v3003 = vunpack.c.h.b16 %v689
    %v3004 = vunpack.c.l.b16 %v690
    %v3005 = vunpack.c.h.b16 %v690
    %v3006 = vunpack.c.l.b16 %v691
    %v3007 = vunpack.c.h.b16 %v691
    %v3008 = vunpack.c.l.b16 %v692
    %v3009 = vunpack.c.h.b16 %v692
    %v3010 = vunpack.c.l.b16 %v693
    %v3011 = vunpack.c.h.b16 %v693
    %v3012 = vunpack.c.l.b16 %v694
    %v3013 = vunpack.c.h.b16 %v694
    %v3014 = vunpack.c.l.b16 %v695
    %v3015 = vunpack.c.h.b16 %v695
    %v3016 = vunpack.c.l.b16 %v696
    %v3017 = vunpack.c.h.b16 %v696
    %v3018 = vunpack.c.l.b16 %v697
    %v3019 = vunpack.c.h.b16 %v697
    %v3020 = vunpack.c.l.b16 %v698
    %v3021 = vunpack.c.h.b16 %v698
    %v3022 = vunpack.c.l.b16 %v699
    %v3023 = vunpack.c.h.b16 %v699
    %v3024 = vunpack.c.l.b16 %v700
    %v3025 = vunpack.c.h.b16 %v700
    %v3026 = vunpack.c.l.b16 %v701
    %v3027 = vunpack.c.h.b16 %v701
    %v3028 = vunpack.c.l.b16 %v702
    %v3029 = vunpack.c.h.b16 %v702
    %v3030 = vunpack.c.l.b16 %v703
    %v3031 = vunpack.c.h.b16 %v703
    %v3032 = vunpack.c.l.b16 %v704
    %v3033 = vunpack.c.h.b16 %v704
    %v3034 = vunpack.c.l.b16 %v705
    %v3035 = vunpack.c.h.b16 %v705
    %v3036 = vunpack.c.l.b16 %v706
    %v3037 = vunpack.c.h.b16 %v706
    %v3038 = vunpack.c.l.b16 %v707
    %v3039 = vunpack.c.h.b16 %v707
    %v3040 = vunpack.c.l.b16 %v708
    %v3041 = vunpack.c.h.b16 %v708
    %v3042 = vunpack.c.l.b16 %v709
    %v3043 = vunpack.c.h.b16 %v709
    %v3044 = vunpack.c.l.b16 %v710
    %v3045 = vunpack.c.h.b16 %v710
    %v3046 = vunpack.c.l.b16 %v711
    %v3047 = vunpack.c.h.b16 %v711
    %v3048 = vunpack.c.l.b16 %v712
    %v3049 = vunpack.c.h.b16 %v712
    %v3050 = vunpack.c.l.b16 %v713
    %v3051 = vunpack.c.h.b16 %v713
    %v3052 = vunpack.c.l.b16 %v714
    %v3053 = vunpack.c.h.b16 %v714
    %v3054 = vunpack.c.l.b16 %v715
    %v3055 = vunpack.c.h.b16 %v715
    %v3056 = vunpack.c.l.b16 %v716
    %v3057 = vunpack.c.h.b16 %v716
    %v3058 = vunpack.c.l.b16 %v717
    %v3059 = vunpack.c.h.b16 %v717
    %v3060 = vunpack.c.l.b16 %v718
    %v3061 = vunpack.c.h.b16 %v718
    %v3062 = vunpack.c.l.b16 %v719
    %v3063 = vunpack.c.h.b16 %v719
    %v3064 = vunpack.c.l.b16 %v720
    %v3065 = vunpack.c.h.b16 %v720
    %v3066 = vunpack.c.l.b16 %v721
    %v3067 = vunpack.c.h.b16 %v721
    %v3068 = vunpack.c.l.b16 %v722
    %v3069 = vunpack.c.h.b16 %v722
    %v3070 = vunpack.c.l.b16 %v723
    %v3071 = vunpack.c.h.b16 %v723
    %v3072 = vunpack.c.l.b16 %v724
    %v3073 = vunpack.c.h.b16 %v724
    %v3074 = vunpack.c.l.b16 %v725
    %v3075 = vunpack.c.h.b16 %v725
    %v3076 = vunpack.c.l.b16 %v726
    %v3077 = vunpack.c.h.b16 %v726
    %v3078 = vunpack.c.l.b16 %v727
    %v3079 = vunpack.c.h.b16 %v727
    %v3080 = vunpack.c.l.b16 %v728
    %v3081 = vunpack.c.h.b16 %v728
    %v3082 = vunpack.c.l.b16 %v729
    %v3083 = vunpack.c.h.b16 %v729
    %v3084 = vunpack.c.l.b16 %v730
    %v3085 = vunpack.c.h.b16 %v730
    %v3086 = vunpack.c.l.b16 %v731
    %v3087 = vunpack.c.h.b16 %v731
    %v3088 = vunpack.c.l.b16 %v732
    %v3089 = vunpack.c.h.b16 %v732
    %v3090 = vunpack.c.l.b16 %v733
    %v3091 = vunpack.c.h.b16 %v733
    %v3092 = vunpack.c.l.b16 %v734
    %v3093 = vunpack.c.h.b16 %v734
    %v3094 = vunpack.c.l.b16 %v735
    %v3095 = vunpack.c.h.b16 %v735
    %v3096 = vunpack.c.l.b16 %v736
    %v3097 = vunpack.c.h.b16 %v736
    %v3098 = vunpack.c.l.b16 %v737
    %v3099 = vunpack.c.h.b16 %v737
    %v3100 = vunpack.c.l.b16 %v738
    %v3101 = vunpack.c.h.b16 %v738
    %v3102 = vunpack.c.l.b16 %v739
    %v3103 = vunpack.c.h.b16 %v739
    %v3104 = vunpack.c.l.b16 %v740
    %v3105 = vunpack.c.h.b16 %v740
    %v3106 = vunpack.c.l.b16 %v741
    %v3107 = vunpack.c.h.b16 %v741
    %v3108 = vunpack.c.l.b16 %v742
    %v3109 = vunpack.c.h.b16 %v742
    %v3110 = vunpack.c.l.b16 %v743
    %v3111 = vunpack.c.h.b16 %v743
    %v3112 = vunpack.c.l.b16 %v744
    %v3113 = vunpack.c.h.b16 %v744
    %v3114 = vunpack.c.l.b16 %v745
    %v3115 = vunpack.c.h.b16 %v745
    %v3116 = vunpack.c.l.b16 %v746
    %v3117 = vunpack.c.h.b16 %v746
    %v3118 = vunpack.c.l.b16 %v747
    %v3119 = vunpack.c.h.b16 %v747
    %v3120 = vunpack.c.l.b16 %v748
    %v3121 = vunpack.c.h.b16 %v748
    %v3122 = vunpack.c.l.b16 %v749
    %v3123 = vunpack.c.h.b16 %v749
    %v3124 = vunpack.c.l.b16 %v750
    %v3125 = vunpack.c.h.b16 %v750
    %v3126 = vunpack.c.l.b16 %v751
    %v3127 = vunpack.c.h.b16 %v751
    %v3128 = vunpack.c.l.b16 %v752
    %v3129 = vunpack.c.h.b16 %v752
    %v3130 = vunpack.c.l.b16 %v753
    %v3131 = vunpack.c.h.b16 %v753
    %v3132 = vunpack.c.l.b16 %v754
    %v3133 = vunpack.c.h.b16 %v754
    %v3134 = vunpack.c.l.b16 %v755
    %v3135 = vunpack.c.h.b16 %v755
    %v3136 = vunpack.c.l.b16 %v756
    %v3137 = vunpack.c.h.b16 %v756
    %v3138 = vunpack.c.l.b16 %v757
    %v3139 = vunpack.c.h.b16 %v757
    %v3140 = vunpack.c.l.b16 %v758
    %v3141 = vunpack.c.h.b16 %v758
    %v3142 = vunpack.c.l.b16 %v759
    %v3143 = vunpack.c.h.b16 %v759
    %v3144 = vunpack.c.l.b16 %v760
    %v3145 = vunpack.c.h.b16 %v760
    %v3146 = vunpack.c.l.b16 %v761
    %v3147 = vunpack.c.h.b16 %v761
    %v3148 = vunpack.c.l.b16 %v762
    %v3149 = vunpack.c.h.b16 %v762
    %v3150 = vunpack.c.l.b16 %v763
    %v3151 = vunpack.c.h.b16 %v763
    %v3152 = vunpack.c.l.b16 %v764
    %v3153 = vunpack.c.h.b16 %v764
    %v3154 = vunpack.c.l.b16 %v765
    %v3155 = vunpack.c.h.b16 %v765
    %v3156 = vunpack.c.l.b16 %v766
    %v3157 = vunpack.c.h.b16 %v766
    %v3158 = vunpack.c.l.b16 %v767
    %v3159 = vunpack.c.h.b16 %v767
    %v3160 = vunpack.c.l.b16 %v768
    %v3161 = vunpack.c.h.b16 %v768
    %v3162 = vunpack.c.l.b16 %v769
    %v3163 = vunpack.c.h.b16 %v769
    %v3164 = vunpack.c.l.b16 %v770
    %v3165 = vunpack.c.h.b16 %v770
    %v3166 = vunpack.c.l.b16 %v771
    %v3167 = vunpack.c.h.b16 %v771
    %v3168 = vunpack.c.l.b16 %v772
    %v3169 = vunpack.c.h.b16 %v772
    %v3170 = vunpack.c.l.b16 %v773
    %v3171 = vunpack.c.h.b16 %v773
    %v3172 = vunpack.c.l.b16 %v774
    %v3173 = vunpack.c.h.b16 %v774
    %v3174 = vunpack.c.l.b16 %v775
    %v3175 = vunpack.c.h.b16 %v775
    %v3176 = vunpack.c.l.b16 %v776
    %v3177 = vunpack.c.h.b16 %v776
    %v3178 = vunpack.c.l.b16 %v777
    %v3179 = vunpack.c.h.b16 %v777
    %v3180 = vunpack.c.l.b16 %v778
    %v3181 = vunpack.c.h.b16 %v778
    %v3182 = vunpack.c.l.b16 %v779
    %v3183 = vunpack.c.h.b16 %v779
    %v3184 = vunpack.c.l.b16 %v780
    %v3185 = vunpack.c.h.b16 %v780
    %v3186 = vunpack.c.l.b16 %v781
    %v3187 = vunpack.c.h.b16 %v781
    %v3188 = vunpack.c.l.b16 %v782
    %v3189 = vunpack.c.h.b16 %v782
    %v3190 = vunpack.c.l.b16 %v783
    %v3191 = vunpack.c.h.b16 %v783
    %v3192 = vunpack.c.l.b16 %v784
    %v3193 = vunpack.c.h.b16 %v784
    %v3194 = vunpack.c.l.b16 %v785
    %v3195 = vunpack.c.h.b16 %v785
    %v3196 = vunpack.c.l.b16 %v786
    %v3197 = vunpack.c.h.b16 %v786
    %v3198 = vunpack.c.l.b16 %v787
    %v3199 = vunpack.c.h.b16 %v787
    %v3200 = vunpack.c.l.b16 %v788
    %v3201 = vunpack.c.h.b16 %v788
    %v3202 = vunpack.c.l.b16 %v789
    %v3203 = vunpack.c.h.b16 %v789
    %v3204 = vunpack.c.l.b16 %v790
    %v3205 = vunpack.c.h.b16 %v790
    %v3206 = vunpack.c.l.b16 %v791
    %v3207 = vunpack.c.h.b16 %v791
    %v3208 = vunpack.c.l.b16 %v792
    %v3209 = vunpack.c.h.b16 %v792
    %v3210 = vunpack.c.l.b16 %v793
    %v3211 = vunpack.c.h.b16 %v793
    %v3212 = vunpack.c.l.b16 %v794
    %v3213 = vunpack.c.h.b16 %v794
    %v3214 = vunpack.c.l.b16 %v795
    %v3215 = vunpack.c.h.b16 %v795
    %v3216 = vunpack.c.l.b16 %v796
    %v3217 = vunpack.c.h.b16 %v796
    %v3218 = vunpack.c.l.b16 %v797
    %v3219 = vunpack.c.h.b16 %v797
    %v3220 = vunpack.c.l.b16 %v798
    %v3221 = vunpack.c.h.b16 %v798
    %v3222 = vunpack.c.l.b16 %v799
    %v3223 = vunpack.c.h.b16 %v799
    %v3224 = vunpack.c.l.b16 %v800
    %v3225 = vunpack.c.h.b16 %v800
    %v3226 = vunpack.c.l.b16 %v801
    %v3227 = vunpack.c.h.b16 %v801
    %v3228 = vunpack.c.l.b16 %v802
    %v3229 = vunpack.c.h.b16 %v802
    %v3230 = vunpack.c.l.b16 %v803
    %v3231 = vunpack.c.h.b16 %v803
    %v3232 = vunpack.c.l.b16 %v804
    %v3233 = vunpack.c.h.b16 %v804
    %v3234 = vunpack.c.l.b16 %v805
    %v3235 = vunpack.c.h.b16 %v805
    %v3236 = vunpack.c.l.b16 %v806
    %v3237 = vunpack.c.h.b16 %v806
    %v3238 = vunpack.c.l.b16 %v807
    %v3239 = vunpack.c.h.b16 %v807
    %v3240 = vunpack.c.l.b16 %v808
    %v3241 = vunpack.c.h.b16 %v808
    %v3242 = vunpack.c.l.b16 %v809
    %v3243 = vunpack.c.h.b16 %v809
    %v3244 = vunpack.c.l.b16 %v810
    %v3245 = vunpack.c.h.b16 %v810
    %v3246 = vunpack.c.l.b16 %v811
    %v3247 = vunpack.c.h.b16 %v811
    %v3248 = vunpack.c.l.b16 %v812
    %v3249 = vunpack.c.h.b16 %v812
    %v3250 = vunpack.c.l.b16 %v813
    %v3251 = vunpack.c.h.b16 %v813
    %v3252 = vunpack.c.l.b16 %v814
    %v3253 = vunpack.c.h.b16 %v814
    %v3254 = vunpack.c.l.b16 %v815
    %v3255 = vunpack.c.h.b16 %v815
    %v3256 = vunpack.c.l.b16 %v816
    %v3257 = vunpack.c.h.b16 %v816
    %v3258 = vunpack.c.l.b16 %v817
    %v3259 = vunpack.c.h.b16 %v817
    %v3260 = vunpack.c.l.b16 %v818
    %v3261 = vunpack.c.h.b16 %v818
    %v3262 = vunpack.c.l.b16 %v819
    %v3263 = vunpack.c.h.b16 %v819
    %v3264 = vunpack.c.l.b16 %v820
    %v3265 = vunpack.c.h.b16 %v820
    %v3266 = vunpack.c.l.b16 %v821
    %v3267 = vunpack.c.h.b16 %v821
    %v3268 = vpack.c.b16 %v1704, %v1700
    %v3269 = vpack.c.b16 %v1705, %v1701
    %v3270 = vpack.c.b16 %v1706, %v1702
    %v3271 = vpack.c.b16 %v1707, %v1703
    %v3272 = vpack.c.b16 %v1712, %v1708
    %v3273 = vpack.c.b16 %v1713, %v1709
    %v3274 = vpack.c.b16 %v1714, %v1710
    %v3275 = vpack.c.b16 %v1715, %v1711
    %v3276 = vpack.c.b16 %v1720, %v1716
    %v3277 = vpack.c.b16 %v1721, %v1717
    %v3278 = vpack.c.b16 %v1722, %v1718
    %v3279 = vpack.c.b16 %v1723, %v1719
    %v3280 = vpack.c.b16 %v1728, %v1724
    %v3281 = vpack.c.b16 %v1729, %v1725
    %v3282 = vpack.c.b16 %v1730, %v1726
    %v3283 = vpack.c.b16 %v1731, %v1727
    %v3284 = vpack.c.b16 %v1736, %v1732
    %v3285 = vpack.c.b16 %v1737, %v1733
    %v3286 = vpack.c.b16 %v1738, %v1734
    %v3287 = vpack.c.b16 %v1739, %v1735
    %v3288 = vpack.c.b16 %v1744, %v1740
    %v3289 = vpack.c.b16 %v1745, %v1741
    %v3290 = vpack.c.b16 %v1746, %v1742
    %v3291 = vpack.c.b16 %v1747, %v1743
    %v3292 = vpack.c.b16 %v1752, %v1748
    %v3293 = vpack.c.b16 %v1753, %v1749
    %v3294 = vpack.c.b16 %v1754, %v1750
    %v3295 = vpack.c.b16 %v1755, %v1751
    %v3296 = vpack.c.b16 %v1760, %v1756
    %v3297 = vpack.c.b16 %v1761, %v1757
    %v3298 = vpack.c.b16 %v1762, %v1758
    %v3299 = vpack.c.b16 %v1763, %v1759
    %v3300 = vpack.c.b16 %v1768, %v1764
    %v3301 = vpack.c.b16 %v1769, %v1765
    %v3302 = vpack.c.b16 %v1770, %v1766
    %v3303 = vpack.c.b16 %v1771, %v1767
    %v3304 = vpack.c.b16 %v1776, %v1772
    %v3305 = vpack.c.b16 %v1777, %v1773
    %v3306 = vpack.c.b16 %v1778, %v1774
    %v3307 = vpack.c.b16 %v1779, %v1775
    %v3308 = vpack.c.b16 %v1784, %v1780
    %v3309 = vpack.c.b16 %v1785, %v1781
    %v3310 = vpack.c.b16 %v1786, %v1782
    %v3311 = vpack.c.b16 %v1787, %v1783
    %v3312 = vpack.c.b16 %v1792, %v1788
    %v3313 = vpack.c.b16 %v1793, %v1789
    %v3314 = vpack.c.b16 %v1794, %v1790
    %v3315 = vpack.c.b16 %v1795, %v1791
    %v3316 = vpack.c.b16 %v1800, %v1796
    %v3317 = vpack.c.b16 %v1801, %v1797
    %v3318 = vpack.c.b16 %v1802, %v1798
    %v3319 = vpack.c.b16 %v1803, %v1799
    %v3320 = vpack.c.b16 %v1808, %v1804
    %v3321 = vpack.c.b16 %v1809, %v1805
    %v3322 = vpack.c.b16 %v1810, %v1806
    %v3323 = vpack.c.b16 %v1811, %v1807
    %v3324 = vpack.c.b16 %v1816, %v1812
    %v3325 = vpack.c.b16 %v1817, %v1813
    %v3326 = vpack.c.b16 %v1818, %v1814
    %v3327 = vpack.c.b16 %v1819, %v1815
    %v3328 = vpack.c.b16 %v1824, %v1820
    %v3329 = vpack.c.b16 %v1825, %v1821
    %v3330 = vpack.c.b16 %v1826, %v1822
    %v3331 = vpack.c.b16 %v1827, %v1823
    %v3332 = vpack.c.b16 %v1832, %v1828
    %v3333 = vpack.c.b16 %v1833, %v1829
    %v3334 = vpack.c.b16 %v1834, %v1830
    %v3335 = vpack.c.b16 %v1835, %v1831
    %v3336 = vpack.c.b16 %v1840, %v1836
    %v3337 = vpack.c.b16 %v1841, %v1837
    %v3338 = vpack.c.b16 %v1842, %v1838
    %v3339 = vpack.c.b16 %v1843, %v1839
    %v3340 = vpack.c.b16 %v1848, %v1844
    %v3341 = vpack.c.b16 %v1849, %v1845
    %v3342 = vpack.c.b16 %v1850, %v1846
    %v3343 = vpack.c.b16 %v1851, %v1847
    %v3344 = vpack.c.b16 %v1856, %v1852
    %v3345 = vpack.c.b16 %v1857, %v1853
    %v3346 = vpack.c.b16 %v1858, %v1854
    %v3347 = vpack.c.b16 %v1859, %v1855
    %v3348 = vpack.c.b16 %v1864, %v1860
    %v3349 = vpack.c.b16 %v1865, %v1861
    %v3350 = vpack.c.b16 %v1866, %v1862
    %v3351 = vpack.c.b16 %v1867, %v1863
    %v3352 = vpack.c.b16 %v1872, %v1868
    %v3353 = vpack.c.b16 %v1873, %v1869
    %v3354 = vpack.c.b16 %v1874, %v1870
    %v3355 = vpack.c.b16 %v1875, %v1871
    %v3356 = vpack.c.b16 %v1880, %v1876
    %v3357 = vpack.c.b16 %v1881, %v1877
    %v3358 = vpack.c.b16 %v1882, %v1878
    %v3359 = vpack.c.b16 %v1883, %v1879
    %v3360 = vpack.c.b16 %v1888, %v1884
    %v3361 = vpack.c.b16 %v1889, %v1885
    %v3362 = vpack.c.b16 %v1890, %v1886
    %v3363 = vpack.c.b16 %v1891, %v1887
    %v3364 = vpack.c.b16 %v1896, %v1892
    %v3365 = vpack.c.b16 %v1897, %v1893
    %v3366 = vpack.c.b16 %v1898, %v1894
    %v3367 = vpack.c.b16 %v1899, %v1895
    %v3368 = vpack.c.b16 %v1904, %v1900
    %v3369 = vpack.c.b16 %v1905, %v1901
    %v3370 = vpack.c.b16 %v1906, %v1902
    %v3371 = vpack.c.b16 %v1907, %v1903
    %v3372 = vpack.c.b16 %v1912, %v1908
    %v3373 = vpack.c.b16 %v1913, %v1909
    %v3374 = vpack.c.b16 %v1914, %v1910
    %v3375 = vpack.c.b16 %v1915, %v1911
    %v3376 = vpack.c.b16 %v1920, %v1916
    %v3377 = vpack.c.b16 %v1921, %v1917
    %v3378 = vpack.c.b16 %v1922, %v1918
    %v3379 = vpack.c.b16 %v1923, %v1919
    %v3380 = vpack.c.b16 %v1928, %v1924
    %v3381 = vpack.c.b16 %v1929, %v1925
    %v3382 = vpack.c.b16 %v1930, %v1926
    %v3383 = vpack.c.b16 %v1931, %v1927
    %v3384 = vpack.c.b16 %v1936, %v1932
    %v3385 = vpack.c.b16 %v1937, %v1933
    %v3386 = vpack.c.b16 %v1938, %v1934
    %v3387 = vpack.c.b16 %v1939, %v1935
    %v3388 = vpack.c.b16 %v1944, %v1940
    %v3389 = vpack.c.b16 %v1945, %v1941
    %v3390 = vpack.c.b16 %v1946, %v1942
    %v3391 = vpack.c.b16 %v1947, %v1943
    %v3392 = vpack.c.b16 %v1952, %v1948
    %v3393 = vpack.c.b16 %v1953, %v1949
    %v3394 = vpack.c.b16 %v1954, %v1950
    %v3395 = vpack.c.b16 %v1955, %v1951
    %v3396 = vpack.c.b16 %v1960, %v1956
    %v3397 = vpack.c.b16 %v1961, %v1957
    %v3398 = vpack.c.b16 %v1962, %v1958
    %v3399 = vpack.c.b16 %v1963, %v1959
    %v3400 = vpack.c.b16 %v1968, %v1964
    %v3401 = vpack.c.b16 %v1969, %v1965
    %v3402 = vpack.c.b16 %v1970, %v1966
    %v3403 = vpack.c.b16 %v1971, %v1967
    %v3404 = vpack.c.b16 %v1976, %v1972
    %v3405 = vpack.c.b16 %v1977, %v1973
    %v3406 = vpack.c.b16 %v1978, %v1974
    %v3407 = vpack.c.b16 %v1979, %v1975
    %v3408 = vpack.c.b16 %v1984, %v1980
    %v3409 = vpack.c.b16 %v1985, %v1981
    %v3410 = vpack.c.b16 %v1986, %v1982
    %v3411 = vpack.c.b16 %v1987, %v1983
    %v3412 = vpack.c.b16 %v1992, %v1988
    %v3413 = vpack.c.b16 %v1993, %v1989
    %v3414 = vpack.c.b16 %v1994, %v1990
    %v3415 = vpack.c.b16 %v1995, %v1991
    %v3416 = vpack.c.b16 %v2000, %v1996
    %v3417 = vpack.c.b16 %v2001, %v1997
    %v3418 = vpack.c.b16 %v2002, %v1998
    %v3419 = vpack.c.b16 %v2003, %v1999
    %v3420 = vpack.c.b16 %v2008, %v2004
    %v3421 = vpack.c.b16 %v2009, %v2005
    %v3422 = vpack.c.b16 %v2010, %v2006
    %v3423 = vpack.c.b16 %v2011, %v2007
    %v3424 = vpack.c.b16 %v2016, %v2012
    %v3425 = vpack.c.b16 %v2017, %v2013
    %v3426 = vpack.c.b16 %v2018, %v2014
    %v3427 = vpack.c.b16 %v2019, %v2015
    %v3428 = vpack.c.b16 %v2024, %v2020
    %v3429 = vpack.c.b16 %v2025, %v2021
    %v3430 = vpack.c.b16 %v2026, %v2022
    %v3431 = vpack.c.b16 %v2027, %v2023
    %v3432 = vpack.c.b16 %v2032, %v2028
    %v3433 = vpack.c.b16 %v2033, %v2029
    %v3434 = vpack.c.b16 %v2034, %v2030
    %v3435 = vpack.c.b16 %v2035, %v2031
    %v3436 = vpack.c.b16 %v2040, %v2036
    %v3437 = vpack.c.b16 %v2041, %v2037
    %v3438 = vpack.c.b16 %v2042, %v2038
    %v3439 = vpack.c.b16 %v2043, %v2039
    %v3440 = vpack.c.b16 %v2048, %v2044
    %v3441 = vpack.c.b16 %v2049, %v2045
    %v3442 = vpack.c.b16 %v2050, %v2046
    %v3443 = vpack.c.b16 %v2051, %v2047
    %v3444 = vpack.c.b16 %v2056, %v2052
    %v3445 = vpack.c.b16 %v2057, %v2053
    %v3446 = vpack.c.b16 %v2058, %v2054
    %v3447 = vpack.c.b16 %v2059, %v2055
    %v3448 = vpack.c.b16 %v2064, %v2060
    %v3449 = vpack.c.b16 %v2065, %v2061
    %v3450 = vpack.c.b16 %v2066, %v2062
    %v3451 = vpack.c.b16 %v2067, %v2063
    %v3452 = vpack.c.b16 %v2072, %v2068
    %v3453 = vpack.c.b16 %v2073, %v2069
    %v3454 = vpack.c.b16 %v2074, %v2070
    %v3455 = vpack.c.b16 %v2075, %v2071
    %v3456 = vpack.c.b16 %v2080, %v2076
    %v3457 = vpack.c.b16 %v2081, %v2077
    %v3458 = vpack.c.b16 %v2082, %v2078
    %v3459 = vpack.c.b16 %v2083, %v2079
    %v3460 = vpack.c.b16 %v2088, %v2084
    %v3461 = vpack.c.b16 %v2089, %v2085
    %v3462 = vpack.c.b16 %v2090, %v2086
    %v3463 = vpack.c.b16 %v2091, %v2087
    %v3464 = vpack.c.b16 %v2096, %v2092
    %v3465 = vpack.c.b16 %v2097, %v2093
    %v3466 = vpack.c.b16 %v2098, %v2094
    %v3467 = vpack.c.b16 %v2099, %v2095
    %v3468 = vpack.c.b16 %v2104, %v2100
    %v3469 = vpack.c.b16 %v2105, %v2101
    %v3470 = vpack.c.b16 %v2106, %v2102
    %v3471 = vpack.c.b16 %v2107, %v2103
    %v3472 = vpack.c.b16 %v2112, %v2108
    %v3473 = vpack.c.b16 %v2113, %v2109
    %v3474 = vpack.c.b16 %v2114, %v2110
    %v3475 = vpack.c.b16 %v2115, %v2111
    %v3476 = vpack.c.b16 %v2120, %v2116
    %v3477 = vpack.c.b16 %v2121, %v2117
    %v3478 = vpack.c.b16 %v2122, %v2118
    %v3479 = vpack.c.b16 %v2123, %v2119
    %v3480 = vpack.c.b16 %v2128, %v2124
    %v3481 = vpack.c.b16 %v2129, %v2125
    %v3482 = vpack.c.b16 %v2130, %v2126
    %v3483 = vpack.c.b16 %v2131, %v2127
    %v3484 = vpack.c.b16 %v2136, %v2132
    %v3485 = vpack.c.b16 %v2137, %v2133
    %v3486 = vpack.c.b16 %v2138, %v2134
    %v3487 = vpack.c.b16 %v2139, %v2135
    %v3488 = vpack.c.b16 %v2144, %v2140
    %v3489 = vpack.c.b16 %v2145, %v2141
    %v3490 = vpack.c.b16 %v2146, %v2142
    %v3491 = vpack.c.b16 %v2147, %v2143
    %v3492 = vpack.c.b16 %v2152, %v2148
    %v3493 = vpack.c.b16 %v2153, %v2149
    %v3494 = vpack.c.b16 %v2154, %v2150
    %v3495 = vpack.c.b16 %v2155, %v2151
    %v3496 = vpack.c.b16 %v2160, %v2156
    %v3497 = vpack.c.b16 %v2161, %v2157
    %v3498 = vpack.c.b16 %v2162, %v2158
    %v3499 = vpack.c.b16 %v2163, %v2159
    %v3500 = vpack.c.b16 %v2168, %v2164
    %v3501 = vpack.c.b16 %v2169, %v2165
    %v3502 = vpack.c.b16 %v2170, %v2166
    %v3503 = vpack.c.b16 %v2171, %v2167
    %v3504 = vpack.c.b16 %v2176, %v2172
    %v3505 = vpack.c.b16 %v2177, %v2173
    %v3506 = vpack.c.b16 %v2178, %v2174
    %v3507 = vpack.c.b16 %v2179, %v2175
    %v3508 = vpack.c.b16 %v2184, %v2180
    %v3509 = vpack.c.b16 %v2185, %v2181
    %v3510 = vpack.c.b16 %v2186, %v2182
    %v3511 = vpack.c.b16 %v2187, %v2183
    %v3512 = vpack.c.b16 %v2192, %v2188
    %v3513 = vpack.c.b16 %v2193, %v2189
    %v3514 = vpack.c.b16 %v2194, %v2190
    %v3515 = vpack.c.b16 %v2195, %v2191
    %v3516 = vpack.c.b16 %v2200, %v2196
    %v3517 = vpack.c.b16 %v2201, %v2197
    %v3518 = vpack.c.b16 %v2202, %v2198
    %v3519 = vpack.c.b16 %v2203, %v2199
    %v3520 = vpack.c.b16 %v2208, %v2204
    %v3521 = vpack.c.b16 %v2209, %v2205
    %v3522 = vpack.c.b16 %v2210, %v2206
    %v3523 = vpack.c.b16 %v2211, %v2207
    %v3524 = vpack.c.b16 %v2216, %v2212
    %v3525 = vpack.c.b16 %v2217, %v2213
    %v3526 = vpack.c.b16 %v2218, %v2214
    %v3527 = vpack.c.b16 %v2219, %v2215
    %v3528 = vpack.c.b16 %v2224, %v2220
    %v3529 = vpack.c.b16 %v2225, %v2221
    %v3530 = vpack.c.b16 %v2226, %v2222
    %v3531 = vpack.c.b16 %v2227, %v2223
    %v3532 = vpack.c.b16 %v2232, %v2228
    %v3533 = vpack.c.b16 %v2233, %v2229
    %v3534 = vpack.c.b16 %v2234, %v2230
    %v3535 = vpack.c.b16 %v2235, %v2231
    %v3536 = vpack.c.b16 %v2240, %v2236
    %v3537 = vpack.c.b16 %v2241, %v2237
    %v3538 = vpack.c.b16 %v2242, %v2238
    %v3539 = vpack.c.b16 %v2243, %v2239
    %v3540 = vpack.c.b16 %v2248, %v2244
    %v3541 = vpack.c.b16 %v2249, %v2245
    %v3542 = vpack.c.b16 %v2250, %v2246
    %v3543 = vpack.c.b16 %v2251, %v2247
    %v3544 = vpack.c.b16 %v2256, %v2252
    %v3545 = vpack.c.b16 %v2257, %v2253
    %v3546 = vpack.c.b16 %v2258, %v2254
    %v3547 = vpack.c.b16 %v2259, %v2255
    %v3548 = vpack.c.b16 %v2264, %v2260
    %v3549 = vpack.c.b16 %v2265, %v2261
    %v3550 = vpack.c.b16 %v2266, %v2262
    %v3551 = vpack.c.b16 %v2267, %v2263
    %v3552 = vpack.c.b16 %v2272, %v2268
    %v3553 = vpack.c.b16 %v2273, %v2269
    %v3554 = vpack.c.b16 %v2274, %v2270
    %v3555 = vpack.c.b16 %v2275, %v2271
    %v3556 = vpack.c.b16 %v2280, %v2276
    %v3557 = vpack.c.b16 %v2281, %v2277
    %v3558 = vpack.c.b16 %v2282, %v2278
    %v3559 = vpack.c.b16 %v2283, %v2279
    %v3560 = vpack.c.b16 %v2288, %v2284
    %v3561 = vpack.c.b16 %v2289, %v2285
    %v3562 = vpack.c.b16 %v2290, %v2286
    %v3563 = vpack.c.b16 %v2291, %v2287
    %v3564 = vpack.c.b16 %v2296, %v2292
    %v3565 = vpack.c.b16 %v2297, %v2293
    %v3566 = vpack.c.b16 %v2298, %v2294
    %v3567 = vpack.c.b16 %v2299, %v2295
    %v3568 = vpack.c.b16 %v2304, %v2300
    %v3569 = vpack.c.b16 %v2305, %v2301
    %v3570 = vpack.c.b16 %v2306, %v2302
    %v3571 = vpack.c.b16 %v2307, %v2303
    %v3572 = vpack.c.b16 %v2312, %v2308
    %v3573 = vpack.c.b16 %v2313, %v2309
    %v3574 = vpack.c.b16 %v2314, %v2310
    %v3575 = vpack.c.b16 %v2315, %v2311
    %v3576 = vpack.c.b16 %v2320, %v2316
    %v3577 = vpack.c.b16 %v2321, %v2317
    %v3578 = vpack.c.b16 %v2322, %v2318
    %v3579 = vpack.c.b16 %v2323, %v2319
    %v3580 = vpack.c.b16 %v2328, %v2324
    %v3581 = vpack.c.b16 %v2329, %v2325
    %v3582 = vpack.c.b16 %v2330, %v2326
    %v3583 = vpack.c.b16 %v2331, %v2327
    %v3584 = vpack.c.b16 %v2336, %v2332
    %v3585 = vpack.c.b16 %v2337, %v2333
    %v3586 = vpack.c.b16 %v2338, %v2334
    %v3587 = vpack.c.b16 %v2339, %v2335
    %v3588 = vpack.c.b16 %v2344, %v2340
    %v3589 = vpack.c.b16 %v2345, %v2341
    %v3590 = vpack.c.b16 %v2346, %v2342
    %v3591 = vpack.c.b16 %v2347, %v2343
    %v3592 = vpack.c.b16 %v2352, %v2348
    %v3593 = vpack.c.b16 %v2353, %v2349
    %v3594 = vpack.c.b16 %v2354, %v2350
    %v3595 = vpack.c.b16 %v2355, %v2351
    %v3596 = vpack.c.b16 %v2360, %v2356
    %v3597 = vpack.c.b16 %v2361, %v2357
    %v3598 = vpack.c.b16 %v2362, %v2358
    %v3599 = vpack.c.b16 %v2363, %v2359
    %v3600 = vpack.c.b16 %v2368, %v2364
    %v3601 = vpack.c.b16 %v2369, %v2365
    %v3602 = vpack.c.b16 %v2370, %v2366
    %v3603 = vpack.c.b16 %v2371, %v2367
    %v3604 = vpack.c.b16 %v2376, %v2372
    %v3605 = vpack.c.b16 %v2377, %v2373
    %v3606 = vpack.c.b16 %v2378, %v2374
    %v3607 = vpack.c.b16 %v2379, %v2375
    %v3608 = vpack.c.b16 %v2384, %v2380
    %v3609 = vpack.c.b16 %v2385, %v2381
    %v3610 = vpack.c.b16 %v2386, %v2382
    %v3611 = vpack.c.b16 %v2387, %v2383
    %v3612 = vpack.c.b16 %v2392, %v2388
    %v3613 = vpack.c.b16 %v2393, %v2389
    %v3614 = vpack.c.b16 %v2394, %v2390
    %v3615 = vpack.c.b16 %v2395, %v2391
    %v3616 = vpack.c.b16 %v2400, %v2396
    %v3617 = vpack.c.b16 %v2401, %v2397
    %v3618 = vpack.c.b16 %v2402, %v2398
    %v3619 = vpack.c.b16 %v2403, %v2399
    %v3620 = vpack.c.b16 %v2408, %v2404
    %v3621 = vpack.c.b16 %v2409, %v2405
    %v3622 = vpack.c.b16 %v2410, %v2406
    %v3623 = vpack.c.b16 %v2411, %v2407
    %v3624 = vpack.c.b16 %v2416, %v2412
    %v3625 = vpack.c.b16 %v2417, %v2413
    %v3626 = vpack.c.b16 %v2418, %v2414
    %v3627 = vpack.c.b16 %v2419, %v2415
    %v3628 = vpack.c.b16 %v2424, %v2420
    %v3629 = vpack.c.b16 %v2425, %v2421
    %v3630 = vpack.c.b16 %v2426, %v2422
    %v3631 = vpack.c.b16 %v2427, %v2423
    %v3632 = vpack.c.b16 %v2432, %v2428
    %v3633 = vpack.c.b16 %v2433, %v2429
    %v3634 = vpack.c.b16 %v2434, %v2430
    %v3635 = vpack.c.b16 %v2435, %v2431
    %v3636 = vpack.c.b16 %v2440, %v2436
    %v3637 = vpack.c.b16 %v2441, %v2437
    %v3638 = vpack.c.b16 %v2442, %v2438
    %v3639 = vpack.c.b16 %v2443, %v2439
    %v3640 = vpack.c.b16 %v2448, %v2444
    %v3641 = vpack.c.b16 %v2449, %v2445
    %v3642 = vpack.c.b16 %v2450, %v2446
    %v3643 = vpack.c.b16 %v2451, %v2447
    %v3644 = vpack.c.b16 %v2456, %v2452
    %v3645 = vpack.c.b16 %v2457, %v2453
    %v3646 = vpack.c.b16 %v2458, %v2454
    %v3647 = vpack.c.b16 %v2459, %v2455
    %v3648 = vpack.c.b16 %v2464, %v2460
    %v3649 = vpack.c.b16 %v2465, %v2461
    %v3650 = vpack.c.b16 %v2466, %v2462
    %v3651 = vpack.c.b16 %v2467, %v2463
    %v3652 = vpack.c.b16 %v2472, %v2468
    %v3653 = vpack.c.b16 %v2473, %v2469
    %v3654 = vpack.c.b16 %v2474, %v2470
    %v3655 = vpack.c.b16 %v2475, %v2471
    %v3656 = vpack.c.b16 %v2480, %v2476
    %v3657 = vpack.c.b16 %v2481, %v2477
    %v3658 = vpack.c.b16 %v2482, %v2478
    %v3659 = vpack.c.b16 %v2483, %v2479
    %v3660 = vpack.c.b16 %v2488, %v2484
    %v3661 = vpack.c.b16 %v2489, %v2485
    %v3662 = vpack.c.b16 %v2490, %v2486
    %v3663 = vpack.c.b16 %v2491, %v2487
    %v3664 = vpack.c.b16 %v2496, %v2492
    %v3665 = vpack.c.b16 %v2497, %v2493
    %v3666 = vpack.c.b16 %v2498, %v2494
    %v3667 = vpack.c.b16 %v2499, %v2495
    %v3668 = vpack.c.b16 %v2504, %v2500
    %v3669 = vpack.c.b16 %v2505, %v2501
    %v3670 = vpack.c.b16 %v2506, %v2502
    %v3671 = vpack.c.b16 %v2507, %v2503
    %v3672 = vpack.c.b16 %v2512, %v2508
    %v3673 = vpack.c.b16 %v2513, %v2509
    %v3674 = vpack.c.b16 %v2514, %v2510
    %v3675 = vpack.c.b16 %v2515, %v2511
    %v3676 = vpack.c.b16 %v2520, %v2516
    %v3677 = vpack.c.b16 %v2521, %v2517
    %v3678 = vpack.c.b16 %v2522, %v2518
    %v3679 = vpack.c.b16 %v2523, %v2519
    %v3680 = vpack.c.b16 %v2528, %v2524
    %v3681 = vpack.c.b16 %v2529, %v2525
    %v3682 = vpack.c.b16 %v2530, %v2526
    %v3683 = vpack.c.b16 %v2531, %v2527
    %v3684 = vpack.c.b16 %v2536, %v2532
    %v3685 = vpack.c.b16 %v2537, %v2533
    %v3686 = vpack.c.b16 %v2538, %v2534
    %v3687 = vpack.c.b16 %v2539, %v2535
    %v3688 = vpack.c.b16 %v2544, %v2540
    %v3689 = vpack.c.b16 %v2545, %v2541
    %v3690 = vpack.c.b16 %v2546, %v2542
    %v3691 = vpack.c.b16 %v2547, %v2543
    %v3692 = vpack.c.b16 %v2552, %v2548
    %v3693 = vpack.c.b16 %v2553, %v2549
    %v3694 = vpack.c.b16 %v2554, %v2550
    %v3695 = vpack.c.b16 %v2555, %v2551
    %v3696 = vpack.c.b16 %v2560, %v2556
    %v3697 = vpack.c.b16 %v2561, %v2557
    %v3698 = vpack.c.b16 %v2562, %v2558
    %v3699 = vpack.c.b16 %v2563, %v2559
    %v3700 = vpack.c.b16 %v2568, %v2564
    %v3701 = vpack.c.b16 %v2569, %v2565
    %v3702 = vpack.c.b16 %v2570, %v2566
    %v3703 = vpack.c.b16 %v2571, %v2567
    %v3704 = vpack.c.b16 %v2576, %v2572
    %v3705 = vpack.c.b16 %v2577, %v2573
    %v3706 = vpack.c.b16 %v2578, %v2574
    %v3707 = vpack.c.b16 %v2579, %v2575
    %v3708 = vpack.c.b16 %v2584, %v2580
    %v3709 = vpack.c.b16 %v2585, %v2581
    %v3710 = vpack.c.b16 %v2586, %v2582
    %v3711 = vpack.c.b16 %v2587, %v2583
    %v3712 = vpack.c.b16 %v2592, %v2588
    %v3713 = vpack.c.b16 %v2593, %v2589
    %v3714 = vpack.c.b16 %v2594, %v2590
    %v3715 = vpack.c.b16 %v2595, %v2591
    %v3716 = vpack.c.b16 %v2600, %v2596
    %v3717 = vpack.c.b16 %v2601, %v2597
    %v3718 = vpack.c.b16 %v2602, %v2598
    %v3719 = vpack.c.b16 %v2603, %v2599
    %v3720 = vpack.c.b16 %v2608, %v2604
    %v3721 = vpack.c.b16 %v2609, %v2605
    %v3722 = vpack.c.b16 %v2610, %v2606
    %v3723 = vpack.c.b16 %v2611, %v2607
    %v3724 = vpack.c.b16 %v2616, %v2612
    %v3725 = vpack.c.b16 %v2617, %v2613
    %v3726 = vpack.c.b16 %v2618, %v2614
    %v3727 = vpack.c.b16 %v2619, %v2615
    %v3728 = vpack.c.b16 %v2624, %v2620
    %v3729 = vpack.c.b16 %v2625, %v2621
    %v3730 = vpack.c.b16 %v2626, %v2622
    %v3731 = vpack.c.b16 %v2627, %v2623
    %v3732 = vpack.c.b16 %v2632, %v2628
    %v3733 = vpack.c.b16 %v2633, %v2629
    %v3734 = vpack.c.b16 %v2634, %v2630
    %v3735 = vpack.c.b16 %v2635, %v2631
    %v3736 = vpack.c.b16 %v2640, %v2636
    %v3737 = vpack.c.b16 %v2641, %v2637
    %v3738 = vpack.c.b16 %v2642, %v2638
    %v3739 = vpack.c.b16 %v2643, %v2639
    %v3740 = vpack.c.b16 %v2648, %v2644
    %v3741 = vpack.c.b16 %v2649, %v2645
    %v3742 = vpack.c.b16 %v2650, %v2646
    %v3743 = vpack.c.b16 %v2651, %v2647
    %v3744 = vpack.c.b16 %v2656, %v2652
    %v3745 = vpack.c.b16 %v2657, %v2653
    %v3746 = vpack.c.b16 %v2658, %v2654
    %v3747 = vpack.c.b16 %v2659, %v2655
    %v3748 = vpack.c.b16 %v2664, %v2660
    %v3749 = vpack.c.b16 %v2665, %v2661
    %v3750 = vpack.c.b16 %v2666, %v2662
    %v3751 = vpack.c.b16 %v2667, %v2663
    %v3752 = vpack.c.b16 %v2672, %v2668
    %v3753 = vpack.c.b16 %v2673, %v2669
    %v3754 = vpack.c.b16 %v2674, %v2670
    %v3755 = vpack.c.b16 %v2675, %v2671
    %v3756 = vpack.c.b16 %v2680, %v2676
    %v3757 = vpack.c.b16 %v2681, %v2677
    %v3758 = vpack.c.b16 %v2682, %v2678
    %v3759 = vpack.c.b16 %v2683, %v2679
    %v3760 = vpack.c.b16 %v2688, %v2684
    %v3761 = vpack.c.b16 %v2689, %v2685
    %v3762 = vpack.c.b16 %v2690, %v2686
    %v3763 = vpack.c.b16 %v2691, %v2687
    %v3764 = vpack.c.b16 %v2696, %v2692
    %v3765 = vpack.c.b16 %v2697, %v2693
    %v3766 = vpack.c.b16 %v2698, %v2694
    %v3767 = vpack.c.b16 %v2699, %v2695
    %v3768 = vpack.c.b16 %v2704, %v2700
    %v3769 = vpack.c.b16 %v2705, %v2701
    %v3770 = vpack.c.b16 %v2706, %v2702
    %v3771 = vpack.c.b16 %v2707, %v2703
    %v3772 = vpack.c.b16 %v2712, %v2708
    %v3773 = vpack.c.b16 %v2713, %v2709
    %v3774 = vpack.c.b16 %v2714, %v2710
    %v3775 = vpack.c.b16 %v2715, %v2711
    %v3776 = vpack.c.b16 %v2720, %v2716
    %v3777 = vpack.c.b16 %v2721, %v2717
    %v3778 = vpack.c.b16 %v2722, %v2718
    %v3779 = vpack.c.b16 %v2723, %v2719
    %v3780 = vpack.c.b16 %v2728, %v2724
    %v3781 = vpack.c.b16 %v2729, %v2725
    %v3782 = vpack.c.b16 %v2730, %v2726
    %v3783 = vpack.c.b16 %v2731, %v2727
    %v3784 = vpack.c.b16 %v2736, %v2732
    %v3785 = vpack.c.b16 %v2737, %v2733
    %v3786 = vpack.c.b16 %v2738, %v2734
    %v3787 = vpack.c.b16 %v2739, %v2735
    %v3788 = vpack.c.b16 %v2744, %v2740
    %v3789 = vpack.c.b16 %v2745, %v2741
    %v3790 = vpack.c.b16 %v2746, %v2742
    %v3791 = vpack.c.b16 %v2747, %v2743
    %v3792 = vpack.c.b16 %v2752, %v2748
    %v3793 = vpack.c.b16 %v2753, %v2749
    %v3794 = vpack.c.b16 %v2754, %v2750
    %v3795 = vpack.c.b16 %v2755, %v2751
    %v3796 = vpack.c.b16 %v2760, %v2756
    %v3797 = vpack.c.b16 %v2761, %v2757
    %v3798 = vpack.c.b16 %v2762, %v2758
    %v3799 = vpack.c.b16 %v2763, %v2759
    %v3800 = vpack.c.b16 %v2768, %v2764
    %v3801 = vpack.c.b16 %v2769, %v2765
    %v3802 = vpack.c.b16 %v2770, %v2766
    %v3803 = vpack.c.b16 %v2771, %v2767
    %v3804 = vpack.c.b16 %v2776, %v2772
    %v3805 = vpack.c.b16 %v2777, %v2773
    %v3806 = vpack.c.b16 %v2778, %v2774
    %v3807 = vpack.c.b16 %v2779, %v2775
    %v3808 = vpack.c.b16 %v2784, %v2780
    %v3809 = vpack.c.b16 %v2785, %v2781
    %v3810 = vpack.c.b16 %v2786, %v2782
    %v3811 = vpack.c.b16 %v2787, %v2783
    %v3812 = vpack.c.b16 %v2792, %v2788
    %v3813 = vpack.c.b16 %v2793, %v2789
    %v3814 = vpack.c.b16 %v2794, %v2790
    %v3815 = vpack.c.b16 %v2795, %v2791
    %v3816 = vpack.c.b16 %v2800, %v2796
    %v3817 = vpack.c.b16 %v2801, %v2797
    %v3818 = vpack.c.b16 %v2802, %v2798
    %v3819 = vpack.c.b16 %v2803, %v2799
    %v3820 = vpack.c.b16 %v2808, %v2804
    %v3821 = vpack.c.b16 %v2809, %v2805
    %v3822 = vpack.c.b16 %v2810, %v2806
    %v3823 = vpack.c.b16 %v2811, %v2807
    %v3824 = vpack.c.b16 %v2816, %v2812
    %v3825 = vpack.c.b16 %v2817, %v2813
    %v3826 = vpack.c.b16 %v2818, %v2814
    %v3827 = vpack.c.b16 %v2819, %v2815
    %v3828 = vpack.c.b16 %v2824, %v2820
    %v3829 = vpack.c.b16 %v2825, %v2821
    %v3830 = vpack.c.b16 %v2826, %v2822
    %v3831 = vpack.c.b16 %v2827, %v2823
    %v3832 = vpack.c.b16 %v2832, %v2828
    %v3833 = vpack.c.b16 %v2833, %v2829
    %v3834 = vpack.c.b16 %v2834, %v2830
    %v3835 = vpack.c.b16 %v2835, %v2831
    %v3836 = vpack.c.b16 %v2840, %v2836
    %v3837 = vpack.c.b16 %v2841, %v2837
    %v3838 = vpack.c.b16 %v2842, %v2838
    %v3839 = vpack.c.b16 %v2843, %v2839
    %v3840 = vpack.c.b16 %v2848, %v2844
    %v3841 = vpack.c.b16 %v2849, %v2845
    %v3842 = vpack.c.b16 %v2850, %v2846
    %v3843 = vpack.c.b16 %v2851, %v2847
    %v3844 = vpack.c.b16 %v2856, %v2852
    %v3845 = vpack.c.b16 %v2857, %v2853
    %v3846 = vpack.c.b16 %v2858, %v2854
    %v3847 = vpack.c.b16 %v2859, %v2855
    %v3848 = vpack.c.b16 %v2864, %v2860
    %v3849 = vpack.c.b16 %v2865, %v2861
    %v3850 = vpack.c.b16 %v2866, %v2862
    %v3851 = vpack.c.b16 %v2867, %v2863
    %v3852 = vpack.c.b16 %v2872, %v2868
    %v3853 = vpack.c.b16 %v2873, %v2869
    %v3854 = vpack.c.b16 %v2874, %v2870
    %v3855 = vpack.c.b16 %v2875, %v2871
    %v3856 = vpack.c.b16 %v2880, %v2876
    %v3857 = vpack.c.b16 %v2881, %v2877
    %v3858 = vpack.c.b16 %v2882, %v2878
    %v3859 = vpack.c.b16 %v2883, %v2879
    %v3860 = vpack.c.b16 %v2888, %v2884
    %v3861 = vpack.c.b16 %v2889, %v2885
    %v3862 = vpack.c.b16 %v2890, %v2886
    %v3863 = vpack.c.b16 %v2891, %v2887
    %v3864 = vpack.c.b16 %v2896, %v2892
    %v3865 = vpack.c.b16 %v2897, %v2893
    %v3866 = vpack.c.b16 %v2898, %v2894
    %v3867 = vpack.c.b16 %v2899, %v2895
    %v3868 = vpack.c.b16 %v2904, %v2900
    %v3869 = vpack.c.b16 %v2905, %v2901
    %v3870 = vpack.c.b16 %v2906, %v2902
    %v3871 = vpack.c.b16 %v2907, %v2903
    %v3872 = vpack.c.b16 %v2912, %v2908
    %v3873 = vpack.c.b16 %v2913, %v2909
    %v3874 = vpack.c.b16 %v2914, %v2910
    %v3875 = vpack.c.b16 %v2915, %v2911
    %v3876 = vpack.c.b16 %v2920, %v2916
    %v3877 = vpack.c.b16 %v2921, %v2917
    %v3878 = vpack.c.b16 %v2922, %v2918
    %v3879 = vpack.c.b16 %v2923, %v2919
    %v3880 = vpack.c.b16 %v2928, %v2924
    %v3881 = vpack.c.b16 %v2929, %v2925
    %v3882 = vpack.c.b16 %v2930, %v2926
    %v3883 = vpack.c.b16 %v2931, %v2927
    %v3884 = vpack.c.b16 %v2936, %v2932
    %v3885 = vpack.c.b16 %v2937, %v2933
    %v3886 = vpack.c.b16 %v2938, %v2934
    %v3887 = vpack.c.b16 %v2939, %v2935
    %v3888 = vpack.c.b16 %v2944, %v2940
    %v3889 = vpack.c.b16 %v2945, %v2941
    %v3890 = vpack.c.b16 %v2946, %v2942
    %v3891 = vpack.c.b16 %v2947, %v2943
    %v3892 = vpack.c.b16 %v2952, %v2948
    %v3893 = vpack.c.b16 %v2953, %v2949
    %v3894 = vpack.c.b16 %v2954, %v2950
    %v3895 = vpack.c.b16 %v2955, %v2951
    %v3896 = vpack.c.b16 %v2960, %v2956
    %v3897 = vpack.c.b16 %v2961, %v2957
    %v3898 = vpack.c.b16 %v2962, %v2958
    %v3899 = vpack.c.b16 %v2963, %v2959
    %v3900 = vpack.c.b16 %v2968, %v2964
    %v3901 = vpack.c.b16 %v2969, %v2965
    %v3902 = vpack.c.b16 %v2970, %v2966
    %v3903 = vpack.c.b16 %v2971, %v2967
    %v3904 = vpack.c.b16 %v2976, %v2972
    %v3905 = vpack.c.b16 %v2977, %v2973
    %v3906 = vpack.c.b16 %v2978, %v2974
    %v3907 = vpack.c.b16 %v2979, %v2975
    %v3908 = vpack.c.b16 %v2984, %v2980
    %v3909 = vpack.c.b16 %v2985, %v2981
    %v3910 = vpack.c.b16 %v2986, %v2982
    %v3911 = vpack.c.b16 %v2987, %v2983
    %v3912 = vpack.c.b16 %v2992, %v2988
    %v3913 = vpack.c.b16 %v2993, %v2989
    %v3914 = vpack.c.b16 %v2994, %v2990
    %v3915 = vpack.c.b16 %v2995, %v2991
    %v3916 = vpack.c.b16 %v3000, %v2996
    %v3917 = vpack.c.b16 %v3001, %v2997
    %v3918 = vpack.c.b16 %v3002, %v2998
    %v3919 = vpack.c.b16 %v3003, %v2999
    %v3920 = vpack.c.b16 %v3008, %v3004
    %v3921 = vpack.c.b16 %v3009, %v3005
    %v3922 = vpack.c.b16 %v3010, %v3006
    %v3923 = vpack.c.b16 %v3011, %v3007
    %v3924 = vpack.c.b16 %v3016, %v3012
    %v3925 = vpack.c.b16 %v3017, %v3013
    %v3926 = vpack.c.b16 %v3018, %v3014
    %v3927 = vpack.c.b16 %v3019, %v3015
    %v3928 = vpack.c.b16 %v3024, %v3020
    %v3929 = vpack.c.b16 %v3025, %v3021
    %v3930 = vpack.c.b16 %v3026, %v3022
    %v3931 = vpack.c.b16 %v3027, %v3023
    %v3932 = vpack.c.b16 %v3032, %v3028
    %v3933 = vpack.c.b16 %v3033, %v3029
    %v3934 = vpack.c.b16 %v3034, %v3030
    %v3935 = vpack.c.b16 %v3035, %v3031
    %v3936 = vpack.c.b16 %v3040, %v3036
    %v3937 = vpack.c.b16 %v3041, %v3037
    %v3938 = vpack.c.b16 %v3042, %v3038
    %v3939 = vpack.c.b16 %v3043, %v3039
    %v3940 = vpack.c.b16 %v3048, %v3044
    %v3941 = vpack.c.b16 %v3049, %v3045
    %v3942 = vpack.c.b16 %v3050, %v3046
    %v3943 = vpack.c.b16 %v3051, %v3047
    %v3944 = vpack.c.b16 %v3056, %v3052
    %v3945 = vpack.c.b16 %v3057, %v3053
    %v3946 = vpack.c.b16 %v3058, %v3054
    %v3947 = vpack.c.b16 %v3059, %v3055
    %v3948 = vpack.c.b16 %v3064, %v3060
    %v3949 = vpack.c.b16 %v3065, %v3061
    %v3950 = vpack.c.b16 %v3066, %v3062
    %v3951 = vpack.c.b16 %v3067, %v3063
    %v3952 = vpack.c.b16 %v3072, %v3068
    %v3953 = vpack.c.b16 %v3073, %v3069
    %v3954 = vpack.c.b16 %v3074, %v3070
    %v3955 = vpack.c.b16 %v3075, %v3071
    %v3956 = vpack.c.b16 %v3080, %v3076
    %v3957 = vpack.c.b16 %v3081, %v3077
    %v3958 = vpack.c.b16 %v3082, %v3078
    %v3959 = vpack.c.b16 %v3083, %v3079
    %v3960 = vpack.c.b16 %v3088, %v3084
    %v3961 = vpack.c.b16 %v3089, %v3085
    %v3962 = vpack.c.b16 %v3090, %v3086
    %v3963 = vpack.c.b16 %v3091, %v3087
    %v3964 = vpack.c.b16 %v3096, %v3092
    %v3965 = vpack.c.b16 %v3097, %v3093
    %v3966 = vpack.c.b16 %v3098, %v3094
    %v3967 = vpack.c.b16 %v3099, %v3095
    %v3968 = vpack.c.b16 %v3104, %v3100
    %v3969 = vpack.c.b16 %v3105, %v3101
    %v3970 = vpack.c.b16 %v3106, %v3102
    %v3971 = vpack.c.b16 %v3107, %v3103
    %v3972 = vpack.c.b16 %v3112, %v3108
    %v3973 = vpack.c.b16 %v3113, %v3109
    %v3974 = vpack.c.b16 %v3114, %v3110
    %v3975 = vpack.c.b16 %v3115, %v3111
    %v3976 = vpack.c.b16 %v3120, %v3116
    %v3977 = vpack.c.b16 %v3121, %v3117
    %v3978 = vpack.c.b16 %v3122, %v3118
    %v3979 = vpack.c.b16 %v3123, %v3119
    %v3980 = vpack.c.b16 %v3128, %v3124
    %v3981 = vpack.c.b16 %v3129, %v3125
    %v3982 = vpack.c.b16 %v3130, %v3126
    %v3983 = vpack.c.b16 %v3131, %v3127
    %v3984 = vpack.c.b16 %v3136, %v3132
    %v3985 = vpack.c.b16 %v3137, %v3133
    %v3986 = vpack.c.b16 %v3138, %v3134
    %v3987 = vpack.c.b16 %v3139, %v3135
    %v3988 = vpack.c.b16 %v3144, %v3140
    %v3989 = vpack.c.b16 %v3145, %v3141
    %v3990 = vpack.c.b16 %v3146, %v3142
    %v3991 = vpack.c.b16 %v3147, %v3143
    %v3992 = vpack.c.b16 %v3152, %v3148
    %v3993 = vpack.c.b16 %v3153, %v3149
    %v3994 = vpack.c.b16 %v3154, %v3150
    %v3995 = vpack.c.b16 %v3155, %v3151
    %v3996 = vpack.c.b16 %v3160, %v3156
    %v3997 = vpack.c.b16 %v3161, %v3157
    %v3998 = vpack.c.b16 %v3162, %v3158
    %v3999 = vpack.c.b16 %v3163, %v3159
    %v4000 = vpack.c.b16 %v3168, %v3164
    %v4001 = vpack.c.b16 %v3169, %v3165
    %v4002 = vpack.c.b16 %v3170, %v3166
    %v4003 = vpack.c.b16 %v3171, %v3167
    %v4004 = vpack.c.b16 %v3176, %v3172
    %v4005 = vpack.c.b16 %v3177, %v3173
    %v4006 = vpack.c.b16 %v3178, %v3174
    %v4007 = vpack.c.b16 %v3179, %v3175
    %v4008 = vpack.c.b16 %v3184, %v3180
    %v4009 = vpack.c.b16 %v3185, %v3181
    %v4010 = vpack.c.b16 %v3186, %v3182
    %v4011 = vpack.c.b16 %v3187, %v3183
    %v4012 = vpack.c.b16 %v3192, %v3188
    %v4013 = vpack.c.b16 %v3193, %v3189
    %v4014 = vpack.c.b16 %v3194, %v3190
    %v4015 = vpack.c.b16 %v3195, %v3191
    %v4016 = vpack.c.b16 %v3200, %v3196
    %v4017 = vpack.c.b16 %v3201, %v3197
    %v4018 = vpack.c.b16 %v3202, %v3198
    %v4019 = vpack.c.b16 %v3203, %v3199
    %v4020 = vpack.c.b16 %v3208, %v3204
    %v4021 = vpack.c.b16 %v3209, %v3205
    %v4022 = vpack.c.b16 %v3210, %v3206
    %v4023 = vpack.c.b16 %v3211, %v3207
    %v4024 = vpack.c.b16 %v3216, %v3212
    %v4025 = vpack.c.b16 %v3217, %v3213
    %v4026 = vpack.c.b16 %v3218, %v3214
    %v4027 = vpack.c.b16 %v3219, %v3215
    %v4028 = vpack.c.b16 %v3224, %v3220
    %v4029 = vpack.c.b16 %v3225, %v3221
    %v4030 = vpack.c.b16 %v3226, %v3222
    %v4031 = vpack.c.b16 %v3227, %v3223
    %v4032 = vpack.c.b16 %v3232, %v3228
    %v4033 = vpack.c.b16 %v3233, %v3229
    %v4034 = vpack.c.b16 %v3234, %v3230
    %v4035 = vpack.c.b16 %v3235, %v3231
    %v4036 = vpack.c.b16 %v3240, %v3236
    %v4037 = vpack.c.b16 %v3241, %v3237
    %v4038 = vpack.c.b16 %v3242, %v3238
    %v4039 = vpack.c.b16 %v3243, %v3239
    %v4040 = vpack.c.b16 %v3248, %v3244
    %v4041 = vpack.c.b16 %v3249, %v3245
    %v4042 = vpack.c.b16 %v3250, %v3246
    %v4043 = vpack.c.b16 %v3251, %v3247
    %v4044 = vpack.c.b16 %v3256, %v3252
    %v4045 = vpack.c.b16 %v3257, %v3253
    %v4046 = vpack.c.b16 %v3258, %v3254
    %v4047 = vpack.c.b16 %v3259, %v3255
    %v4048 = vpack.c.b16 %v3264, %v3260
    %v4049 = vpack.c.b16 %v3265, %v3261
    %v4050 = vpack.c.b16 %v3266, %v3262
    %v4051 = vpack.c.b16 %v3267, %v3263
    %vm4836 = vcmask 523264
    %v4837 = vsel %vm4836, %v891, 0
    %4839 = vmatpush.bf16.msra.mxu0 %v3296
    %4840 = vmatpush.bf16.msra.mxu0 %v3292
    %4841 = vmatpush.bf16.msra.mxu0 %v3288
    %4842 = vmatpush.bf16.msra.mxu0 %v3284
    %4843 = vmatpush.bf16.msra.mxu0 %v3280
    %4844 = vmatpush.bf16.msra.mxu0 %v3276
    %4845 = vmatpush.bf16.msra.mxu0 %v3272
    %4846 = vmatpush.bf16.msra.mxu0 %v3268
    %4847 = vmatmul.bf16.gmra.mxu0 %v843
    %v4848 = vpop.f32.mrf.mxu0
    %v4849 = vadd.f32 %v824, %v4848
    %v4850 = vpop.f32.mrf.mxu0
    %4851 = vdwg.mxu0
    %4852 = vmatpush.bf16.msra.mxu0 %v3328
    %4853 = vmatpush.bf16.msra.mxu0 %v3324
    %4854 = vmatpush.bf16.msra.mxu0 %v3320
    %4855 = vmatpush.bf16.msra.mxu0 %v3316
    %4856 = vmatpush.bf16.msra.mxu0 %v3312
    %4857 = vmatpush.bf16.msra.mxu0 %v3308
    %4858 = vmatpush.bf16.msra.mxu0 %v3304
    %4859 = vmatpush.bf16.msra.mxu0 %v3300
    %4860 = vmatmul.bf16.gmra.mxu0 %v844
    %v4861 = vpop.f32.mrf.mxu0
    %v4862 = vadd.f32 %v4849, %v4861
    %v4863 = vpop.f32.mrf.mxu0
    %4864 = vdwg.mxu0
    %4865 = vmatpush.bf16.msra.mxu0 %v3360
    %4866 = vmatpush.bf16.msra.mxu0 %v3356
    %4867 = vmatpush.bf16.msra.mxu0 %v3352
    %4868 = vmatpush.bf16.msra.mxu0 %v3348
    %4869 = vmatpush.bf16.msra.mxu0 %v3344
    %4870 = vmatpush.bf16.msra.mxu0 %v3340
    %4871 = vmatpush.bf16.msra.mxu0 %v3336
    %4872 = vmatpush.bf16.msra.mxu0 %v3332
    %4873 = vmatmul.bf16.gmra.mxu0 %v845
    %v4874 = vpop.f32.mrf.mxu0
    %v4875 = vadd.f32 %v4862, %v4874
    %v4876 = vpop.f32.mrf.mxu0
    %4877 = vdwg.mxu0
    %4878 = vmatpush.bf16.msra.mxu0 %v3392
    %4879 = vmatpush.bf16.msra.mxu0 %v3388
    %4880 = vmatpush.bf16.msra.mxu0 %v3384
    %4881 = vmatpush.bf16.msra.mxu0 %v3380
    %4882 = vmatpush.bf16.msra.mxu0 %v3376
    %4883 = vmatpush.bf16.msra.mxu0 %v3372
    %4884 = vmatpush.bf16.msra.mxu0 %v3368
    %4885 = vmatpush.bf16.msra.mxu0 %v3364
    %4886 = vmatmul.bf16.gmra.mxu0 %v846
    %v4887 = vpop.f32.mrf.mxu0
    %v4888 = vadd.f32 %v4875, %v4887
    %v4889 = vpop.f32.mrf.mxu0
    %4890 = vdwg.mxu0
    %4891 = vmatpush.bf16.msra.mxu0 %v3424
    %4892 = vmatpush.bf16.msra.mxu0 %v3420
    %4893 = vmatpush.bf16.msra.mxu0 %v3416
    %4894 = vmatpush.bf16.msra.mxu0 %v3412
    %4895 = vmatpush.bf16.msra.mxu0 %v3408
    %4896 = vmatpush.bf16.msra.mxu0 %v3404
    %4897 = vmatpush.bf16.msra.mxu0 %v3400
    %4898 = vmatpush.bf16.msra.mxu0 %v3396
    %4899 = vmatmul.bf16.gmra.mxu0 %v847
    %v4900 = vpop.f32.mrf.mxu0
    %v4901 = vadd.f32 %v4888, %v4900
    %v4902 = vpop.f32.mrf.mxu0
    %4903 = vdwg.mxu0
    %4904 = vmatpush.bf16.msra.mxu0 %v3456
    %4905 = vmatpush.bf16.msra.mxu0 %v3452
    %4906 = vmatpush.bf16.msra.mxu0 %v3448
    %4907 = vmatpush.bf16.msra.mxu0 %v3444
    %4908 = vmatpush.bf16.msra.mxu0 %v3440
    %4909 = vmatpush.bf16.msra.mxu0 %v3436
    %4910 = vmatpush.bf16.msra.mxu0 %v3432
    %4911 = vmatpush.bf16.msra.mxu0 %v3428
    %4912 = vmatmul.bf16.gmra.mxu0 %v848
    %v4913 = vpop.f32.mrf.mxu0
    %v4914 = vadd.f32 %v4901, %v4913
    %v4915 = vpop.f32.mrf.mxu0
    %4916 = vdwg.mxu0
    %4917 = vmatpush.bf16.msra.mxu0 %v3488
    %4918 = vmatpush.bf16.msra.mxu0 %v3484
    %4919 = vmatpush.bf16.msra.mxu0 %v3480
    %4920 = vmatpush.bf16.msra.mxu0 %v3476
    %4921 = vmatpush.bf16.msra.mxu0 %v3472
    %4922 = vmatpush.bf16.msra.mxu0 %v3468
    %4923 = vmatpush.bf16.msra.mxu0 %v3464
    %4924 = vmatpush.bf16.msra.mxu0 %v3460
    %4925 = vmatmul.bf16.gmra.mxu0 %v849
    %v4926 = vpop.f32.mrf.mxu0
    %v4927 = vadd.f32 %v4914, %v4926
    %v4928 = vpop.f32.mrf.mxu0
    %4929 = vdwg.mxu0
    %4930 = vmatpush.bf16.msra.mxu0 %v3520
    %4931 = vmatpush.bf16.msra.mxu0 %v3516
    %4932 = vmatpush.bf16.msra.mxu0 %v3512
    %4933 = vmatpush.bf16.msra.mxu0 %v3508
    %4934 = vmatpush.bf16.msra.mxu0 %v3504
    %4935 = vmatpush.bf16.msra.mxu0 %v3500
    %4936 = vmatpush.bf16.msra.mxu0 %v3496
    %4937 = vmatpush.bf16.msra.mxu0 %v3492
    %4938 = vmatmul.bf16.gmra.mxu0 %v850
    %v4939 = vpop.f32.mrf.mxu0
    %v4940 = vadd.f32 %v4927, %v4939
    %v4941 = vpop.f32.mrf.mxu0
    %4942 = vdwg.mxu0
    %4943 = vmatpush.bf16.msra.mxu0 %v3552
    %4944 = vmatpush.bf16.msra.mxu0 %v3548
    %4945 = vmatpush.bf16.msra.mxu0 %v3544
    %4946 = vmatpush.bf16.msra.mxu0 %v3540
    %4947 = vmatpush.bf16.msra.mxu0 %v3536
    %4948 = vmatpush.bf16.msra.mxu0 %v3532
    %4949 = vmatpush.bf16.msra.mxu0 %v3528
    %4950 = vmatpush.bf16.msra.mxu0 %v3524
    %4951 = vmatmul.bf16.gmra.mxu0 %v859
    %v4952 = vpop.f32.mrf.mxu0
    %v4953 = vadd.f32 %v4940, %v4952
    %v4954 = vpop.f32.mrf.mxu0
    %4955 = vdwg.mxu0
    %4956 = vmatpush.bf16.msra.mxu0 %v3584
    %4957 = vmatpush.bf16.msra.mxu0 %v3580
    %4958 = vmatpush.bf16.msra.mxu0 %v3576
    %4959 = vmatpush.bf16.msra.mxu0 %v3572
    %4960 = vmatpush.bf16.msra.mxu0 %v3568
    %4961 = vmatpush.bf16.msra.mxu0 %v3564
    %4962 = vmatpush.bf16.msra.mxu0 %v3560
    %4963 = vmatpush.bf16.msra.mxu0 %v3556
    %4964 = vmatmul.bf16.gmra.mxu0 %v860
    %v4965 = vpop.f32.mrf.mxu0
    %v4966 = vadd.f32 %v4953, %v4965
    %v4967 = vpop.f32.mrf.mxu0
    %4968 = vdwg.mxu0
    %4969 = vmatpush.bf16.msra.mxu0 %v3616
    %4970 = vmatpush.bf16.msra.mxu0 %v3612
    %4971 = vmatpush.bf16.msra.mxu0 %v3608
    %4972 = vmatpush.bf16.msra.mxu0 %v3604
    %4973 = vmatpush.bf16.msra.mxu0 %v3600
    %4974 = vmatpush.bf16.msra.mxu0 %v3596
    %4975 = vmatpush.bf16.msra.mxu0 %v3592
    %4976 = vmatpush.bf16.msra.mxu0 %v3588
    %4977 = vmatmul.bf16.gmra.mxu0 %v861
    %v4978 = vpop.f32.mrf.mxu0
    %v4979 = vadd.f32 %v4966, %v4978
    %v4980 = vpop.f32.mrf.mxu0
    %4981 = vdwg.mxu0
    %4982 = vmatpush.bf16.msra.mxu0 %v3648
    %4983 = vmatpush.bf16.msra.mxu0 %v3644
    %4984 = vmatpush.bf16.msra.mxu0 %v3640
    %4985 = vmatpush.bf16.msra.mxu0 %v3636
    %4986 = vmatpush.bf16.msra.mxu0 %v3632
    %4987 = vmatpush.bf16.msra.mxu0 %v3628
    %4988 = vmatpush.bf16.msra.mxu0 %v3624
    %4989 = vmatpush.bf16.msra.mxu0 %v3620
    %4990 = vmatmul.bf16.gmra.mxu0 %v862
    %v4991 = vpop.f32.mrf.mxu0
    %v4992 = vadd.f32 %v4979, %v4991
    %v4993 = vpop.f32.mrf.mxu0
    %4994 = vdwg.mxu0
    %4995 = vmatpush.bf16.msra.mxu0 %v3680
    %4996 = vmatpush.bf16.msra.mxu0 %v3676
    %4997 = vmatpush.bf16.msra.mxu0 %v3672
    %4998 = vmatpush.bf16.msra.mxu0 %v3668
    %4999 = vmatpush.bf16.msra.mxu0 %v3664
    %5000 = vmatpush.bf16.msra.mxu0 %v3660
    %5001 = vmatpush.bf16.msra.mxu0 %v3656
    %5002 = vmatpush.bf16.msra.mxu0 %v3652
    %5003 = vmatmul.bf16.gmra.mxu0 %v863
    %v5004 = vpop.f32.mrf.mxu0
    %v5005 = vadd.f32 %v4992, %v5004
    %v5006 = vpop.f32.mrf.mxu0
    %5007 = vdwg.mxu0
    %5008 = vmatpush.bf16.msra.mxu0 %v3712
    %5009 = vmatpush.bf16.msra.mxu0 %v3708
    %5010 = vmatpush.bf16.msra.mxu0 %v3704
    %5011 = vmatpush.bf16.msra.mxu0 %v3700
    %5012 = vmatpush.bf16.msra.mxu0 %v3696
    %5013 = vmatpush.bf16.msra.mxu0 %v3692
    %5014 = vmatpush.bf16.msra.mxu0 %v3688
    %5015 = vmatpush.bf16.msra.mxu0 %v3684
    %5016 = vmatmul.bf16.gmra.mxu0 %v864
    %v5017 = vpop.f32.mrf.mxu0
    %v5018 = vadd.f32 %v5005, %v5017
    %v5019 = vpop.f32.mrf.mxu0
    %5020 = vdwg.mxu0
    %5021 = vmatpush.bf16.msra.mxu0 %v3744
    %5022 = vmatpush.bf16.msra.mxu0 %v3740
    %5023 = vmatpush.bf16.msra.mxu0 %v3736
    %5024 = vmatpush.bf16.msra.mxu0 %v3732
    %5025 = vmatpush.bf16.msra.mxu0 %v3728
    %5026 = vmatpush.bf16.msra.mxu0 %v3724
    %5027 = vmatpush.bf16.msra.mxu0 %v3720
    %5028 = vmatpush.bf16.msra.mxu0 %v3716
    %5029 = vmatmul.bf16.gmra.mxu0 %v865
    %v5030 = vpop.f32.mrf.mxu0
    %v5031 = vadd.f32 %v5018, %v5030
    %v5032 = vpop.f32.mrf.mxu0
    %5033 = vdwg.mxu0
    %5034 = vmatpush.bf16.msra.mxu0 %v3776
    %5035 = vmatpush.bf16.msra.mxu0 %v3772
    %5036 = vmatpush.bf16.msra.mxu0 %v3768
    %5037 = vmatpush.bf16.msra.mxu0 %v3764
    %5038 = vmatpush.bf16.msra.mxu0 %v3760
    %5039 = vmatpush.bf16.msra.mxu0 %v3756
    %5040 = vmatpush.bf16.msra.mxu0 %v3752
    %5041 = vmatpush.bf16.msra.mxu0 %v3748
    %5042 = vmatmul.bf16.gmra.mxu0 %v866
    %v5043 = vpop.f32.mrf.mxu0
    %v5044 = vadd.f32 %v5031, %v5043
    %v5045 = vpop.f32.mrf.mxu0
    %5046 = vdwg.mxu0
    %5047 = vmatpush.bf16.msra.mxu0 %v3808
    %5048 = vmatpush.bf16.msra.mxu0 %v3804
    %5049 = vmatpush.bf16.msra.mxu0 %v3800
    %5050 = vmatpush.bf16.msra.mxu0 %v3796
    %5051 = vmatpush.bf16.msra.mxu0 %v3792
    %5052 = vmatpush.bf16.msra.mxu0 %v3788
    %5053 = vmatpush.bf16.msra.mxu0 %v3784
    %5054 = vmatpush.bf16.msra.mxu0 %v3780
    %5055 = vmatmul.bf16.gmra.mxu0 %v875
    %v5056 = vpop.f32.mrf.mxu0
    %v5057 = vadd.f32 %v5044, %v5056
    %v5058 = vpop.f32.mrf.mxu0
    %5059 = vdwg.mxu0
    %5060 = vmatpush.bf16.msra.mxu0 %v3840
    %5061 = vmatpush.bf16.msra.mxu0 %v3836
    %5062 = vmatpush.bf16.msra.mxu0 %v3832
    %5063 = vmatpush.bf16.msra.mxu0 %v3828
    %5064 = vmatpush.bf16.msra.mxu0 %v3824
    %5065 = vmatpush.bf16.msra.mxu0 %v3820
    %5066 = vmatpush.bf16.msra.mxu0 %v3816
    %5067 = vmatpush.bf16.msra.mxu0 %v3812
    %5068 = vmatmul.bf16.gmra.mxu0 %v876
    %v5069 = vpop.f32.mrf.mxu0
    %v5070 = vadd.f32 %v5057, %v5069
    %v5071 = vpop.f32.mrf.mxu0
    %5072 = vdwg.mxu0
    %5073 = vmatpush.bf16.msra.mxu0 %v3872
    %5074 = vmatpush.bf16.msra.mxu0 %v3868
    %5075 = vmatpush.bf16.msra.mxu0 %v3864
    %5076 = vmatpush.bf16.msra.mxu0 %v3860
    %5077 = vmatpush.bf16.msra.mxu0 %v3856
    %5078 = vmatpush.bf16.msra.mxu0 %v3852
    %5079 = vmatpush.bf16.msra.mxu0 %v3848
    %5080 = vmatpush.bf16.msra.mxu0 %v3844
    %5081 = vmatmul.bf16.gmra.mxu0 %v877
    %v5082 = vpop.f32.mrf.mxu0
    %v5083 = vadd.f32 %v5070, %v5082
    %v5084 = vpop.f32.mrf.mxu0
    %5085 = vdwg.mxu0
    %5086 = vmatpush.bf16.msra.mxu0 %v3904
    %5087 = vmatpush.bf16.msra.mxu0 %v3900
    %5088 = vmatpush.bf16.msra.mxu0 %v3896
    %5089 = vmatpush.bf16.msra.mxu0 %v3892
    %5090 = vmatpush.bf16.msra.mxu0 %v3888
    %5091 = vmatpush.bf16.msra.mxu0 %v3884
    %5092 = vmatpush.bf16.msra.mxu0 %v3880
    %5093 = vmatpush.bf16.msra.mxu0 %v3876
    %5094 = vmatmul.bf16.gmra.mxu0 %v878
    %v5095 = vpop.f32.mrf.mxu0
    %v5096 = vadd.f32 %v5083, %v5095
    %v5097 = vpop.f32.mrf.mxu0
    %5098 = vdwg.mxu0
    %5099 = vmatpush.bf16.msra.mxu0 %v3936
    %5100 = vmatpush.bf16.msra.mxu0 %v3932
    %5101 = vmatpush.bf16.msra.mxu0 %v3928
    %5102 = vmatpush.bf16.msra.mxu0 %v3924
    %5103 = vmatpush.bf16.msra.mxu0 %v3920
    %5104 = vmatpush.bf16.msra.mxu0 %v3916
    %5105 = vmatpush.bf16.msra.mxu0 %v3912
    %5106 = vmatpush.bf16.msra.mxu0 %v3908
    %5107 = vmatmul.bf16.gmra.mxu0 %v879
    %v5108 = vpop.f32.mrf.mxu0
    %v5109 = vadd.f32 %v5096, %v5108
    %v5110 = vpop.f32.mrf.mxu0
    %5111 = vdwg.mxu0
    %5112 = vmatpush.bf16.msra.mxu0 %v3968
    %5113 = vmatpush.bf16.msra.mxu0 %v3964
    %5114 = vmatpush.bf16.msra.mxu0 %v3960
    %5115 = vmatpush.bf16.msra.mxu0 %v3956
    %5116 = vmatpush.bf16.msra.mxu0 %v3952
    %5117 = vmatpush.bf16.msra.mxu0 %v3948
    %5118 = vmatpush.bf16.msra.mxu0 %v3944
    %5119 = vmatpush.bf16.msra.mxu0 %v3940
    %5120 = vmatmul.bf16.gmra.mxu0 %v880
    %v5121 = vpop.f32.mrf.mxu0
    %v5122 = vadd.f32 %v5109, %v5121
    %v5123 = vpop.f32.mrf.mxu0
    %5124 = vdwg.mxu0
    %5125 = vmatpush.bf16.msra.mxu0 %v4000
    %5126 = vmatpush.bf16.msra.mxu0 %v3996
    %5127 = vmatpush.bf16.msra.mxu0 %v3992
    %5128 = vmatpush.bf16.msra.mxu0 %v3988
    %5129 = vmatpush.bf16.msra.mxu0 %v3984
    %5130 = vmatpush.bf16.msra.mxu0 %v3980
    %5131 = vmatpush.bf16.msra.mxu0 %v3976
    %5132 = vmatpush.bf16.msra.mxu0 %v3972
    %5133 = vmatmul.bf16.gmra.mxu0 %v881
    %v5134 = vpop.f32.mrf.mxu0
    %v5135 = vadd.f32 %v5122, %v5134
    %v5136 = vpop.f32.mrf.mxu0
    %5137 = vdwg.mxu0
    %5138 = vmatpush.bf16.msra.mxu0 %v4032
    %5139 = vmatpush.bf16.msra.mxu0 %v4028
    %5140 = vmatpush.bf16.msra.mxu0 %v4024
    %5141 = vmatpush.bf16.msra.mxu0 %v4020
    %5142 = vmatpush.bf16.msra.mxu0 %v4016
    %5143 = vmatpush.bf16.msra.mxu0 %v4012
    %5144 = vmatpush.bf16.msra.mxu0 %v4008
    %5145 = vmatpush.bf16.msra.mxu0 %v4004
    %5146 = vmatmul.bf16.gmra.mxu0 %v882
    %v5147 = vpop.f32.mrf.mxu0
    %v5148 = vadd.f32 %v5135, %v5147
    %v5149 = vpop.f32.mrf.mxu0
    %5150 = vdwg.mxu0
    %5151 = vmatpush.bf16.msra.mxu0 0
    %5152 = vmatpush.bf16.msra.mxu0 0
    %5153 = vmatpush.bf16.msra.mxu0 0
    %5154 = vmatpush.bf16.msra.mxu0 0
    %5155 = vmatpush.bf16.msra.mxu0 %v4048
    %5156 = vmatpush.bf16.msra.mxu0 %v4044
    %5157 = vmatpush.bf16.msra.mxu0 %v4040
    %5158 = vmatpush.bf16.msra.mxu0 %v4036
    %5159 = vmatmul.bf16.gmra.mxu0 %v4837
    %v5160 = vpop.f32.mrf.mxu0
    %v5161 = vadd.f32 %v5148, %v5160
    %v5162 = vpop.f32.mrf.mxu0
    %5163 = vdwg.mxu0
    %5164 = vmatpush.bf16.msra.mxu0 %v3297
    %5165 = vmatpush.bf16.msra.mxu0 %v3293
    %5166 = vmatpush.bf16.msra.mxu0 %v3289
    %5167 = vmatpush.bf16.msra.mxu0 %v3285
    %5168 = vmatpush.bf16.msra.mxu0 %v3281
    %5169 = vmatpush.bf16.msra.mxu0 %v3277
    %5170 = vmatpush.bf16.msra.mxu0 %v3273
    %5171 = vmatpush.bf16.msra.mxu0 %v3269
    %5172 = vmatmul.bf16.gmra.mxu0 %v843
    %v5173 = vpop.f32.mrf.mxu0
    %v5174 = vadd.f32 %v825, %v5173
    %v5175 = vpop.f32.mrf.mxu0
    %5176 = vdwg.mxu0
    %5177 = vmatpush.bf16.msra.mxu0 %v3329
    %5178 = vmatpush.bf16.msra.mxu0 %v3325
    %5179 = vmatpush.bf16.msra.mxu0 %v3321
    %5180 = vmatpush.bf16.msra.mxu0 %v3317
    %5181 = vmatpush.bf16.msra.mxu0 %v3313
    %5182 = vmatpush.bf16.msra.mxu0 %v3309
    %5183 = vmatpush.bf16.msra.mxu0 %v3305
    %5184 = vmatpush.bf16.msra.mxu0 %v3301
    %5185 = vmatmul.bf16.gmra.mxu0 %v844
    %v5186 = vpop.f32.mrf.mxu0
    %v5187 = vadd.f32 %v5174, %v5186
    %v5188 = vpop.f32.mrf.mxu0
    %5189 = vdwg.mxu0
    %5190 = vmatpush.bf16.msra.mxu0 %v3361
    %5191 = vmatpush.bf16.msra.mxu0 %v3357
    %5192 = vmatpush.bf16.msra.mxu0 %v3353
    %5193 = vmatpush.bf16.msra.mxu0 %v3349
    %5194 = vmatpush.bf16.msra.mxu0 %v3345
    %5195 = vmatpush.bf16.msra.mxu0 %v3341
    %5196 = vmatpush.bf16.msra.mxu0 %v3337
    %5197 = vmatpush.bf16.msra.mxu0 %v3333
    %5198 = vmatmul.bf16.gmra.mxu0 %v845
    %v5199 = vpop.f32.mrf.mxu0
    %v5200 = vadd.f32 %v5187, %v5199
    %v5201 = vpop.f32.mrf.mxu0
    %5202 = vdwg.mxu0
    %5203 = vmatpush.bf16.msra.mxu0 %v3393
    %5204 = vmatpush.bf16.msra.mxu0 %v3389
    %5205 = vmatpush.bf16.msra.mxu0 %v3385
    %5206 = vmatpush.bf16.msra.mxu0 %v3381
    %5207 = vmatpush.bf16.msra.mxu0 %v3377
    %5208 = vmatpush.bf16.msra.mxu0 %v3373
    %5209 = vmatpush.bf16.msra.mxu0 %v3369
    %5210 = vmatpush.bf16.msra.mxu0 %v3365
    %5211 = vmatmul.bf16.gmra.mxu0 %v846
    %v5212 = vpop.f32.mrf.mxu0
    %v5213 = vadd.f32 %v5200, %v5212
    %v5214 = vpop.f32.mrf.mxu0
    %5215 = vdwg.mxu0
    %5216 = vmatpush.bf16.msra.mxu0 %v3425
    %5217 = vmatpush.bf16.msra.mxu0 %v3421
    %5218 = vmatpush.bf16.msra.mxu0 %v3417
    %5219 = vmatpush.bf16.msra.mxu0 %v3413
    %5220 = vmatpush.bf16.msra.mxu0 %v3409
    %5221 = vmatpush.bf16.msra.mxu0 %v3405
    %5222 = vmatpush.bf16.msra.mxu0 %v3401
    %5223 = vmatpush.bf16.msra.mxu0 %v3397
    %5224 = vmatmul.bf16.gmra.mxu0 %v847
    %v5225 = vpop.f32.mrf.mxu0
    %v5226 = vadd.f32 %v5213, %v5225
    %v5227 = vpop.f32.mrf.mxu0
    %5228 = vdwg.mxu0
    %5229 = vmatpush.bf16.msra.mxu0 %v3457
    %5230 = vmatpush.bf16.msra.mxu0 %v3453
    %5231 = vmatpush.bf16.msra.mxu0 %v3449
    %5232 = vmatpush.bf16.msra.mxu0 %v3445
    %5233 = vmatpush.bf16.msra.mxu0 %v3441
    %5234 = vmatpush.bf16.msra.mxu0 %v3437
    %5235 = vmatpush.bf16.msra.mxu0 %v3433
    %5236 = vmatpush.bf16.msra.mxu0 %v3429
    %5237 = vmatmul.bf16.gmra.mxu0 %v848
    %v5238 = vpop.f32.mrf.mxu0
    %v5239 = vadd.f32 %v5226, %v5238
    %v5240 = vpop.f32.mrf.mxu0
    %5241 = vdwg.mxu0
    %5242 = vmatpush.bf16.msra.mxu0 %v3489
    %5243 = vmatpush.bf16.msra.mxu0 %v3485
    %5244 = vmatpush.bf16.msra.mxu0 %v3481
    %5245 = vmatpush.bf16.msra.mxu0 %v3477
    %5246 = vmatpush.bf16.msra.mxu0 %v3473
    %5247 = vmatpush.bf16.msra.mxu0 %v3469
    %5248 = vmatpush.bf16.msra.mxu0 %v3465
    %5249 = vmatpush.bf16.msra.mxu0 %v3461
    %5250 = vmatmul.bf16.gmra.mxu0 %v849
    %v5251 = vpop.f32.mrf.mxu0
    %v5252 = vadd.f32 %v5239, %v5251
    %v5253 = vpop.f32.mrf.mxu0
    %5254 = vdwg.mxu0
    %5255 = vmatpush.bf16.msra.mxu0 %v3521
    %5256 = vmatpush.bf16.msra.mxu0 %v3517
    %5257 = vmatpush.bf16.msra.mxu0 %v3513
    %5258 = vmatpush.bf16.msra.mxu0 %v3509
    %5259 = vmatpush.bf16.msra.mxu0 %v3505
    %5260 = vmatpush.bf16.msra.mxu0 %v3501
    %5261 = vmatpush.bf16.msra.mxu0 %v3497
    %5262 = vmatpush.bf16.msra.mxu0 %v3493
    %5263 = vmatmul.bf16.gmra.mxu0 %v850
    %v5264 = vpop.f32.mrf.mxu0
    %v5265 = vadd.f32 %v5252, %v5264
    %v5266 = vpop.f32.mrf.mxu0
    %5267 = vdwg.mxu0
    %5268 = vmatpush.bf16.msra.mxu0 %v3553
    %5269 = vmatpush.bf16.msra.mxu0 %v3549
    %5270 = vmatpush.bf16.msra.mxu0 %v3545
    %5271 = vmatpush.bf16.msra.mxu0 %v3541
    %5272 = vmatpush.bf16.msra.mxu0 %v3537
    %5273 = vmatpush.bf16.msra.mxu0 %v3533
    %5274 = vmatpush.bf16.msra.mxu0 %v3529
    %5275 = vmatpush.bf16.msra.mxu0 %v3525
    %5276 = vmatmul.bf16.gmra.mxu0 %v859
    %v5277 = vpop.f32.mrf.mxu0
    %v5278 = vadd.f32 %v5265, %v5277
    %v5279 = vpop.f32.mrf.mxu0
    %5280 = vdwg.mxu0
    %5281 = vmatpush.bf16.msra.mxu0 %v3585
    %5282 = vmatpush.bf16.msra.mxu0 %v3581
    %5283 = vmatpush.bf16.msra.mxu0 %v3577
    %5284 = vmatpush.bf16.msra.mxu0 %v3573
    %5285 = vmatpush.bf16.msra.mxu0 %v3569
    %5286 = vmatpush.bf16.msra.mxu0 %v3565
    %5287 = vmatpush.bf16.msra.mxu0 %v3561
    %5288 = vmatpush.bf16.msra.mxu0 %v3557
    %5289 = vmatmul.bf16.gmra.mxu0 %v860
    %v5290 = vpop.f32.mrf.mxu0
    %v5291 = vadd.f32 %v5278, %v5290
    %v5292 = vpop.f32.mrf.mxu0
    %5293 = vdwg.mxu0
    %5294 = vmatpush.bf16.msra.mxu0 %v3617
    %5295 = vmatpush.bf16.msra.mxu0 %v3613
    %5296 = vmatpush.bf16.msra.mxu0 %v3609
    %5297 = vmatpush.bf16.msra.mxu0 %v3605
    %5298 = vmatpush.bf16.msra.mxu0 %v3601
    %5299 = vmatpush.bf16.msra.mxu0 %v3597
    %5300 = vmatpush.bf16.msra.mxu0 %v3593
    %5301 = vmatpush.bf16.msra.mxu0 %v3589
    %5302 = vmatmul.bf16.gmra.mxu0 %v861
    %v5303 = vpop.f32.mrf.mxu0
    %v5304 = vadd.f32 %v5291, %v5303
    %v5305 = vpop.f32.mrf.mxu0
    %5306 = vdwg.mxu0
    %5307 = vmatpush.bf16.msra.mxu0 %v3649
    %5308 = vmatpush.bf16.msra.mxu0 %v3645
    %5309 = vmatpush.bf16.msra.mxu0 %v3641
    %5310 = vmatpush.bf16.msra.mxu0 %v3637
    %5311 = vmatpush.bf16.msra.mxu0 %v3633
    %5312 = vmatpush.bf16.msra.mxu0 %v3629
    %5313 = vmatpush.bf16.msra.mxu0 %v3625
    %5314 = vmatpush.bf16.msra.mxu0 %v3621
    %5315 = vmatmul.bf16.gmra.mxu0 %v862
    %v5316 = vpop.f32.mrf.mxu0
    %v5317 = vadd.f32 %v5304, %v5316
    %v5318 = vpop.f32.mrf.mxu0
    %5319 = vdwg.mxu0
    %5320 = vmatpush.bf16.msra.mxu0 %v3681
    %5321 = vmatpush.bf16.msra.mxu0 %v3677
    %5322 = vmatpush.bf16.msra.mxu0 %v3673
    %5323 = vmatpush.bf16.msra.mxu0 %v3669
    %5324 = vmatpush.bf16.msra.mxu0 %v3665
    %5325 = vmatpush.bf16.msra.mxu0 %v3661
    %5326 = vmatpush.bf16.msra.mxu0 %v3657
    %5327 = vmatpush.bf16.msra.mxu0 %v3653
    %5328 = vmatmul.bf16.gmra.mxu0 %v863
    %v5329 = vpop.f32.mrf.mxu0
    %v5330 = vadd.f32 %v5317, %v5329
    %v5331 = vpop.f32.mrf.mxu0
    %5332 = vdwg.mxu0
    %5333 = vmatpush.bf16.msra.mxu0 %v3713
    %5334 = vmatpush.bf16.msra.mxu0 %v3709
    %5335 = vmatpush.bf16.msra.mxu0 %v3705
    %5336 = vmatpush.bf16.msra.mxu0 %v3701
    %5337 = vmatpush.bf16.msra.mxu0 %v3697
    %5338 = vmatpush.bf16.msra.mxu0 %v3693
    %5339 = vmatpush.bf16.msra.mxu0 %v3689
    %5340 = vmatpush.bf16.msra.mxu0 %v3685
    %5341 = vmatmul.bf16.gmra.mxu0 %v864
    %v5342 = vpop.f32.mrf.mxu0
    %v5343 = vadd.f32 %v5330, %v5342
    %v5344 = vpop.f32.mrf.mxu0
    %5345 = vdwg.mxu0
    %5346 = vmatpush.bf16.msra.mxu0 %v3745
    %5347 = vmatpush.bf16.msra.mxu0 %v3741
    %5348 = vmatpush.bf16.msra.mxu0 %v3737
    %5349 = vmatpush.bf16.msra.mxu0 %v3733
    %5350 = vmatpush.bf16.msra.mxu0 %v3729
    %5351 = vmatpush.bf16.msra.mxu0 %v3725
    %5352 = vmatpush.bf16.msra.mxu0 %v3721
    %5353 = vmatpush.bf16.msra.mxu0 %v3717
    %5354 = vmatmul.bf16.gmra.mxu0 %v865
    %v5355 = vpop.f32.mrf.mxu0
    %v5356 = vadd.f32 %v5343, %v5355
    %v5357 = vpop.f32.mrf.mxu0
    %5358 = vdwg.mxu0
    %5359 = vmatpush.bf16.msra.mxu0 %v3777
    %5360 = vmatpush.bf16.msra.mxu0 %v3773
    %5361 = vmatpush.bf16.msra.mxu0 %v3769
    %5362 = vmatpush.bf16.msra.mxu0 %v3765
    %5363 = vmatpush.bf16.msra.mxu0 %v3761
    %5364 = vmatpush.bf16.msra.mxu0 %v3757
    %5365 = vmatpush.bf16.msra.mxu0 %v3753
    %5366 = vmatpush.bf16.msra.mxu0 %v3749
    %5367 = vmatmul.bf16.gmra.mxu0 %v866
    %v5368 = vpop.f32.mrf.mxu0
    %v5369 = vadd.f32 %v5356, %v5368
    %v5370 = vpop.f32.mrf.mxu0
    %5371 = vdwg.mxu0
    %5372 = vmatpush.bf16.msra.mxu0 %v3809
    %5373 = vmatpush.bf16.msra.mxu0 %v3805
    %5374 = vmatpush.bf16.msra.mxu0 %v3801
    %5375 = vmatpush.bf16.msra.mxu0 %v3797
    %5376 = vmatpush.bf16.msra.mxu0 %v3793
    %5377 = vmatpush.bf16.msra.mxu0 %v3789
    %5378 = vmatpush.bf16.msra.mxu0 %v3785
    %5379 = vmatpush.bf16.msra.mxu0 %v3781
    %5380 = vmatmul.bf16.gmra.mxu0 %v875
    %v5381 = vpop.f32.mrf.mxu0
    %v5382 = vadd.f32 %v5369, %v5381
    %v5383 = vpop.f32.mrf.mxu0
    %5384 = vdwg.mxu0
    %5385 = vmatpush.bf16.msra.mxu0 %v3841
    %5386 = vmatpush.bf16.msra.mxu0 %v3837
    %5387 = vmatpush.bf16.msra.mxu0 %v3833
    %5388 = vmatpush.bf16.msra.mxu0 %v3829
    %5389 = vmatpush.bf16.msra.mxu0 %v3825
    %5390 = vmatpush.bf16.msra.mxu0 %v3821
    %5391 = vmatpush.bf16.msra.mxu0 %v3817
    %5392 = vmatpush.bf16.msra.mxu0 %v3813
    %5393 = vmatmul.bf16.gmra.mxu0 %v876
    %v5394 = vpop.f32.mrf.mxu0
    %v5395 = vadd.f32 %v5382, %v5394
    %v5396 = vpop.f32.mrf.mxu0
    %5397 = vdwg.mxu0
    %5398 = vmatpush.bf16.msra.mxu0 %v3873
    %5399 = vmatpush.bf16.msra.mxu0 %v3869
    %5400 = vmatpush.bf16.msra.mxu0 %v3865
    %5401 = vmatpush.bf16.msra.mxu0 %v3861
    %5402 = vmatpush.bf16.msra.mxu0 %v3857
    %5403 = vmatpush.bf16.msra.mxu0 %v3853
    %5404 = vmatpush.bf16.msra.mxu0 %v3849
    %5405 = vmatpush.bf16.msra.mxu0 %v3845
    %5406 = vmatmul.bf16.gmra.mxu0 %v877
    %v5407 = vpop.f32.mrf.mxu0
    %v5408 = vadd.f32 %v5395, %v5407
    %v5409 = vpop.f32.mrf.mxu0
    %5410 = vdwg.mxu0
    %5411 = vmatpush.bf16.msra.mxu0 %v3905
    %5412 = vmatpush.bf16.msra.mxu0 %v3901
    %5413 = vmatpush.bf16.msra.mxu0 %v3897
    %5414 = vmatpush.bf16.msra.mxu0 %v3893
    %5415 = vmatpush.bf16.msra.mxu0 %v3889
    %5416 = vmatpush.bf16.msra.mxu0 %v3885
    %5417 = vmatpush.bf16.msra.mxu0 %v3881
    %5418 = vmatpush.bf16.msra.mxu0 %v3877
    %5419 = vmatmul.bf16.gmra.mxu0 %v878
    %v5420 = vpop.f32.mrf.mxu0
    %v5421 = vadd.f32 %v5408, %v5420
    %v5422 = vpop.f32.mrf.mxu0
    %5423 = vdwg.mxu0
    %5424 = vmatpush.bf16.msra.mxu0 %v3937
    %5425 = vmatpush.bf16.msra.mxu0 %v3933
    %5426 = vmatpush.bf16.msra.mxu0 %v3929
    %5427 = vmatpush.bf16.msra.mxu0 %v3925
    %5428 = vmatpush.bf16.msra.mxu0 %v3921
    %5429 = vmatpush.bf16.msra.mxu0 %v3917
    %5430 = vmatpush.bf16.msra.mxu0 %v3913
    %5431 = vmatpush.bf16.msra.mxu0 %v3909
    %5432 = vmatmul.bf16.gmra.mxu0 %v879
    %v5433 = vpop.f32.mrf.mxu0
    %v5434 = vadd.f32 %v5421, %v5433
    %v5435 = vpop.f32.mrf.mxu0
    %5436 = vdwg.mxu0
    %5437 = vmatpush.bf16.msra.mxu0 %v3969
    %5438 = vmatpush.bf16.msra.mxu0 %v3965
    %5439 = vmatpush.bf16.msra.mxu0 %v3961
    %5440 = vmatpush.bf16.msra.mxu0 %v3957
    %5441 = vmatpush.bf16.msra.mxu0 %v3953
    %5442 = vmatpush.bf16.msra.mxu0 %v3949
    %5443 = vmatpush.bf16.msra.mxu0 %v3945
    %5444 = vmatpush.bf16.msra.mxu0 %v3941
    %5445 = vmatmul.bf16.gmra.mxu0 %v880
    %v5446 = vpop.f32.mrf.mxu0
    %v5447 = vadd.f32 %v5434, %v5446
    %v5448 = vpop.f32.mrf.mxu0
    %5449 = vdwg.mxu0
    %5450 = vmatpush.bf16.msra.mxu0 %v4001
    %5451 = vmatpush.bf16.msra.mxu0 %v3997
    %5452 = vmatpush.bf16.msra.mxu0 %v3993
    %5453 = vmatpush.bf16.msra.mxu0 %v3989
    %5454 = vmatpush.bf16.msra.mxu0 %v3985
    %5455 = vmatpush.bf16.msra.mxu0 %v3981
    %5456 = vmatpush.bf16.msra.mxu0 %v3977
    %5457 = vmatpush.bf16.msra.mxu0 %v3973
    %5458 = vmatmul.bf16.gmra.mxu0 %v881
    %v5459 = vpop.f32.mrf.mxu0
    %v5460 = vadd.f32 %v5447, %v5459
    %v5461 = vpop.f32.mrf.mxu0
    %5462 = vdwg.mxu0
    %5463 = vmatpush.bf16.msra.mxu0 %v4033
    %5464 = vmatpush.bf16.msra.mxu0 %v4029
    %5465 = vmatpush.bf16.msra.mxu0 %v4025
    %5466 = vmatpush.bf16.msra.mxu0 %v4021
    %5467 = vmatpush.bf16.msra.mxu0 %v4017
    %5468 = vmatpush.bf16.msra.mxu0 %v4013
    %5469 = vmatpush.bf16.msra.mxu0 %v4009
    %5470 = vmatpush.bf16.msra.mxu0 %v4005
    %5471 = vmatmul.bf16.gmra.mxu0 %v882
    %v5472 = vpop.f32.mrf.mxu0
    %v5473 = vadd.f32 %v5460, %v5472
    %v5474 = vpop.f32.mrf.mxu0
    %5475 = vdwg.mxu0
    %5476 = vmatpush.bf16.msra.mxu0 0
    %5477 = vmatpush.bf16.msra.mxu0 0
    %5478 = vmatpush.bf16.msra.mxu0 0
    %5479 = vmatpush.bf16.msra.mxu0 0
    %5480 = vmatpush.bf16.msra.mxu0 %v4049
    %5481 = vmatpush.bf16.msra.mxu0 %v4045
    %5482 = vmatpush.bf16.msra.mxu0 %v4041
    %5483 = vmatpush.bf16.msra.mxu0 %v4037
    %5484 = vmatmul.bf16.gmra.mxu0 %v4837
    %v5485 = vpop.f32.mrf.mxu0
    %v5486 = vadd.f32 %v5473, %v5485
    %v5487 = vpop.f32.mrf.mxu0
    %5488 = vdwg.mxu0
    %5489 = vmatpush.bf16.msra.mxu0 %v3298
    %5490 = vmatpush.bf16.msra.mxu0 %v3294
    %5491 = vmatpush.bf16.msra.mxu0 %v3290
    %5492 = vmatpush.bf16.msra.mxu0 %v3286
    %5493 = vmatpush.bf16.msra.mxu0 %v3282
    %5494 = vmatpush.bf16.msra.mxu0 %v3278
    %5495 = vmatpush.bf16.msra.mxu0 %v3274
    %5496 = vmatpush.bf16.msra.mxu0 %v3270
    %5497 = vmatmul.bf16.gmra.mxu0 %v843
    %v5498 = vpop.f32.mrf.mxu0
    %v5499 = vadd.f32 %v826, %v5498
    %v5500 = vpop.f32.mrf.mxu0
    %5501 = vdwg.mxu0
    %5502 = vmatpush.bf16.msra.mxu0 %v3330
    %5503 = vmatpush.bf16.msra.mxu0 %v3326
    %5504 = vmatpush.bf16.msra.mxu0 %v3322
    %5505 = vmatpush.bf16.msra.mxu0 %v3318
    %5506 = vmatpush.bf16.msra.mxu0 %v3314
    %5507 = vmatpush.bf16.msra.mxu0 %v3310
    %5508 = vmatpush.bf16.msra.mxu0 %v3306
    %5509 = vmatpush.bf16.msra.mxu0 %v3302
    %5510 = vmatmul.bf16.gmra.mxu0 %v844
    %v5511 = vpop.f32.mrf.mxu0
    %v5512 = vadd.f32 %v5499, %v5511
    %v5513 = vpop.f32.mrf.mxu0
    %5514 = vdwg.mxu0
    %5515 = vmatpush.bf16.msra.mxu0 %v3362
    %5516 = vmatpush.bf16.msra.mxu0 %v3358
    %5517 = vmatpush.bf16.msra.mxu0 %v3354
    %5518 = vmatpush.bf16.msra.mxu0 %v3350
    %5519 = vmatpush.bf16.msra.mxu0 %v3346
    %5520 = vmatpush.bf16.msra.mxu0 %v3342
    %5521 = vmatpush.bf16.msra.mxu0 %v3338
    %5522 = vmatpush.bf16.msra.mxu0 %v3334
    %5523 = vmatmul.bf16.gmra.mxu0 %v845
    %v5524 = vpop.f32.mrf.mxu0
    %v5525 = vadd.f32 %v5512, %v5524
    %v5526 = vpop.f32.mrf.mxu0
    %5527 = vdwg.mxu0
    %5528 = vmatpush.bf16.msra.mxu0 %v3394
    %5529 = vmatpush.bf16.msra.mxu0 %v3390
    %5530 = vmatpush.bf16.msra.mxu0 %v3386
    %5531 = vmatpush.bf16.msra.mxu0 %v3382
    %5532 = vmatpush.bf16.msra.mxu0 %v3378
    %5533 = vmatpush.bf16.msra.mxu0 %v3374
    %5534 = vmatpush.bf16.msra.mxu0 %v3370
    %5535 = vmatpush.bf16.msra.mxu0 %v3366
    %5536 = vmatmul.bf16.gmra.mxu0 %v846
    %v5537 = vpop.f32.mrf.mxu0
    %v5538 = vadd.f32 %v5525, %v5537
    %v5539 = vpop.f32.mrf.mxu0
    %5540 = vdwg.mxu0
    %5541 = vmatpush.bf16.msra.mxu0 %v3426
    %5542 = vmatpush.bf16.msra.mxu0 %v3422
    %5543 = vmatpush.bf16.msra.mxu0 %v3418
    %5544 = vmatpush.bf16.msra.mxu0 %v3414
    %5545 = vmatpush.bf16.msra.mxu0 %v3410
    %5546 = vmatpush.bf16.msra.mxu0 %v3406
    %5547 = vmatpush.bf16.msra.mxu0 %v3402
    %5548 = vmatpush.bf16.msra.mxu0 %v3398
    %5549 = vmatmul.bf16.gmra.mxu0 %v847
    %v5550 = vpop.f32.mrf.mxu0
    %v5551 = vadd.f32 %v5538, %v5550
    %v5552 = vpop.f32.mrf.mxu0
    %5553 = vdwg.mxu0
    %5554 = vmatpush.bf16.msra.mxu0 %v3458
    %5555 = vmatpush.bf16.msra.mxu0 %v3454
    %5556 = vmatpush.bf16.msra.mxu0 %v3450
    %5557 = vmatpush.bf16.msra.mxu0 %v3446
    %5558 = vmatpush.bf16.msra.mxu0 %v3442
    %5559 = vmatpush.bf16.msra.mxu0 %v3438
    %5560 = vmatpush.bf16.msra.mxu0 %v3434
    %5561 = vmatpush.bf16.msra.mxu0 %v3430
    %5562 = vmatmul.bf16.gmra.mxu0 %v848
    %v5563 = vpop.f32.mrf.mxu0
    %v5564 = vadd.f32 %v5551, %v5563
    %v5565 = vpop.f32.mrf.mxu0
    %5566 = vdwg.mxu0
    %5567 = vmatpush.bf16.msra.mxu0 %v3490
    %5568 = vmatpush.bf16.msra.mxu0 %v3486
    %5569 = vmatpush.bf16.msra.mxu0 %v3482
    %5570 = vmatpush.bf16.msra.mxu0 %v3478
    %5571 = vmatpush.bf16.msra.mxu0 %v3474
    %5572 = vmatpush.bf16.msra.mxu0 %v3470
    %5573 = vmatpush.bf16.msra.mxu0 %v3466
    %5574 = vmatpush.bf16.msra.mxu0 %v3462
    %5575 = vmatmul.bf16.gmra.mxu0 %v849
    %v5576 = vpop.f32.mrf.mxu0
    %v5577 = vadd.f32 %v5564, %v5576
    %v5578 = vpop.f32.mrf.mxu0
    %5579 = vdwg.mxu0
    %5580 = vmatpush.bf16.msra.mxu0 %v3522
    %5581 = vmatpush.bf16.msra.mxu0 %v3518
    %5582 = vmatpush.bf16.msra.mxu0 %v3514
    %5583 = vmatpush.bf16.msra.mxu0 %v3510
    %5584 = vmatpush.bf16.msra.mxu0 %v3506
    %5585 = vmatpush.bf16.msra.mxu0 %v3502
    %5586 = vmatpush.bf16.msra.mxu0 %v3498
    %5587 = vmatpush.bf16.msra.mxu0 %v3494
    %5588 = vmatmul.bf16.gmra.mxu0 %v850
    %v5589 = vpop.f32.mrf.mxu0
    %v5590 = vadd.f32 %v5577, %v5589
    %v5591 = vpop.f32.mrf.mxu0
    %5592 = vdwg.mxu0
    %5593 = vmatpush.bf16.msra.mxu0 %v3554
    %5594 = vmatpush.bf16.msra.mxu0 %v3550
    %5595 = vmatpush.bf16.msra.mxu0 %v3546
    %5596 = vmatpush.bf16.msra.mxu0 %v3542
    %5597 = vmatpush.bf16.msra.mxu0 %v3538
    %5598 = vmatpush.bf16.msra.mxu0 %v3534
    %5599 = vmatpush.bf16.msra.mxu0 %v3530
    %5600 = vmatpush.bf16.msra.mxu0 %v3526
    %5601 = vmatmul.bf16.gmra.mxu0 %v859
    %v5602 = vpop.f32.mrf.mxu0
    %v5603 = vadd.f32 %v5590, %v5602
    %v5604 = vpop.f32.mrf.mxu0
    %5605 = vdwg.mxu0
    %5606 = vmatpush.bf16.msra.mxu0 %v3586
    %5607 = vmatpush.bf16.msra.mxu0 %v3582
    %5608 = vmatpush.bf16.msra.mxu0 %v3578
    %5609 = vmatpush.bf16.msra.mxu0 %v3574
    %5610 = vmatpush.bf16.msra.mxu0 %v3570
    %5611 = vmatpush.bf16.msra.mxu0 %v3566
    %5612 = vmatpush.bf16.msra.mxu0 %v3562
    %5613 = vmatpush.bf16.msra.mxu0 %v3558
    %5614 = vmatmul.bf16.gmra.mxu0 %v860
    %v5615 = vpop.f32.mrf.mxu0
    %v5616 = vadd.f32 %v5603, %v5615
    %v5617 = vpop.f32.mrf.mxu0
    %5618 = vdwg.mxu0
    %5619 = vmatpush.bf16.msra.mxu0 %v3618
    %5620 = vmatpush.bf16.msra.mxu0 %v3614
    %5621 = vmatpush.bf16.msra.mxu0 %v3610
    %5622 = vmatpush.bf16.msra.mxu0 %v3606
    %5623 = vmatpush.bf16.msra.mxu0 %v3602
    %5624 = vmatpush.bf16.msra.mxu0 %v3598
    %5625 = vmatpush.bf16.msra.mxu0 %v3594
    %5626 = vmatpush.bf16.msra.mxu0 %v3590
    %5627 = vmatmul.bf16.gmra.mxu0 %v861
    %v5628 = vpop.f32.mrf.mxu0
    %v5629 = vadd.f32 %v5616, %v5628
    %v5630 = vpop.f32.mrf.mxu0
    %5631 = vdwg.mxu0
    %5632 = vmatpush.bf16.msra.mxu0 %v3650
    %5633 = vmatpush.bf16.msra.mxu0 %v3646
    %5634 = vmatpush.bf16.msra.mxu0 %v3642
    %5635 = vmatpush.bf16.msra.mxu0 %v3638
    %5636 = vmatpush.bf16.msra.mxu0 %v3634
    %5637 = vmatpush.bf16.msra.mxu0 %v3630
    %5638 = vmatpush.bf16.msra.mxu0 %v3626
    %5639 = vmatpush.bf16.msra.mxu0 %v3622
    %5640 = vmatmul.bf16.gmra.mxu0 %v862
    %v5641 = vpop.f32.mrf.mxu0
    %v5642 = vadd.f32 %v5629, %v5641
    %v5643 = vpop.f32.mrf.mxu0
    %5644 = vdwg.mxu0
    %5645 = vmatpush.bf16.msra.mxu0 %v3682
    %5646 = vmatpush.bf16.msra.mxu0 %v3678
    %5647 = vmatpush.bf16.msra.mxu0 %v3674
    %5648 = vmatpush.bf16.msra.mxu0 %v3670
    %5649 = vmatpush.bf16.msra.mxu0 %v3666
    %5650 = vmatpush.bf16.msra.mxu0 %v3662
    %5651 = vmatpush.bf16.msra.mxu0 %v3658
    %5652 = vmatpush.bf16.msra.mxu0 %v3654
    %5653 = vmatmul.bf16.gmra.mxu0 %v863
    %v5654 = vpop.f32.mrf.mxu0
    %v5655 = vadd.f32 %v5642, %v5654
    %v5656 = vpop.f32.mrf.mxu0
    %5657 = vdwg.mxu0
    %5658 = vmatpush.bf16.msra.mxu0 %v3714
    %5659 = vmatpush.bf16.msra.mxu0 %v3710
    %5660 = vmatpush.bf16.msra.mxu0 %v3706
    %5661 = vmatpush.bf16.msra.mxu0 %v3702
    %5662 = vmatpush.bf16.msra.mxu0 %v3698
    %5663 = vmatpush.bf16.msra.mxu0 %v3694
    %5664 = vmatpush.bf16.msra.mxu0 %v3690
    %5665 = vmatpush.bf16.msra.mxu0 %v3686
    %5666 = vmatmul.bf16.gmra.mxu0 %v864
    %v5667 = vpop.f32.mrf.mxu0
    %v5668 = vadd.f32 %v5655, %v5667
    %v5669 = vpop.f32.mrf.mxu0
    %5670 = vdwg.mxu0
    %5671 = vmatpush.bf16.msra.mxu0 %v3746
    %5672 = vmatpush.bf16.msra.mxu0 %v3742
    %5673 = vmatpush.bf16.msra.mxu0 %v3738
    %5674 = vmatpush.bf16.msra.mxu0 %v3734
    %5675 = vmatpush.bf16.msra.mxu0 %v3730
    %5676 = vmatpush.bf16.msra.mxu0 %v3726
    %5677 = vmatpush.bf16.msra.mxu0 %v3722
    %5678 = vmatpush.bf16.msra.mxu0 %v3718
    %5679 = vmatmul.bf16.gmra.mxu0 %v865
    %v5680 = vpop.f32.mrf.mxu0
    %v5681 = vadd.f32 %v5668, %v5680
    %v5682 = vpop.f32.mrf.mxu0
    %5683 = vdwg.mxu0
    %5684 = vmatpush.bf16.msra.mxu0 %v3778
    %5685 = vmatpush.bf16.msra.mxu0 %v3774
    %5686 = vmatpush.bf16.msra.mxu0 %v3770
    %5687 = vmatpush.bf16.msra.mxu0 %v3766
    %5688 = vmatpush.bf16.msra.mxu0 %v3762
    %5689 = vmatpush.bf16.msra.mxu0 %v3758
    %5690 = vmatpush.bf16.msra.mxu0 %v3754
    %5691 = vmatpush.bf16.msra.mxu0 %v3750
    %5692 = vmatmul.bf16.gmra.mxu0 %v866
    %v5693 = vpop.f32.mrf.mxu0
    %v5694 = vadd.f32 %v5681, %v5693
    %v5695 = vpop.f32.mrf.mxu0
    %5696 = vdwg.mxu0
    %5697 = vmatpush.bf16.msra.mxu0 %v3810
    %5698 = vmatpush.bf16.msra.mxu0 %v3806
    %5699 = vmatpush.bf16.msra.mxu0 %v3802
    %5700 = vmatpush.bf16.msra.mxu0 %v3798
    %5701 = vmatpush.bf16.msra.mxu0 %v3794
    %5702 = vmatpush.bf16.msra.mxu0 %v3790
    %5703 = vmatpush.bf16.msra.mxu0 %v3786
    %5704 = vmatpush.bf16.msra.mxu0 %v3782
    %5705 = vmatmul.bf16.gmra.mxu0 %v875
    %v5706 = vpop.f32.mrf.mxu0
    %v5707 = vadd.f32 %v5694, %v5706
    %v5708 = vpop.f32.mrf.mxu0
    %5709 = vdwg.mxu0
    %5710 = vmatpush.bf16.msra.mxu0 %v3842
    %5711 = vmatpush.bf16.msra.mxu0 %v3838
    %5712 = vmatpush.bf16.msra.mxu0 %v3834
    %5713 = vmatpush.bf16.msra.mxu0 %v3830
    %5714 = vmatpush.bf16.msra.mxu0 %v3826
    %5715 = vmatpush.bf16.msra.mxu0 %v3822
    %5716 = vmatpush.bf16.msra.mxu0 %v3818
    %5717 = vmatpush.bf16.msra.mxu0 %v3814
    %5718 = vmatmul.bf16.gmra.mxu0 %v876
    %v5719 = vpop.f32.mrf.mxu0
    %v5720 = vadd.f32 %v5707, %v5719
    %v5721 = vpop.f32.mrf.mxu0
    %5722 = vdwg.mxu0
    %5723 = vmatpush.bf16.msra.mxu0 %v3874
    %5724 = vmatpush.bf16.msra.mxu0 %v3870
    %5725 = vmatpush.bf16.msra.mxu0 %v3866
    %5726 = vmatpush.bf16.msra.mxu0 %v3862
    %5727 = vmatpush.bf16.msra.mxu0 %v3858
    %5728 = vmatpush.bf16.msra.mxu0 %v3854
    %5729 = vmatpush.bf16.msra.mxu0 %v3850
    %5730 = vmatpush.bf16.msra.mxu0 %v3846
    %5731 = vmatmul.bf16.gmra.mxu0 %v877
    %v5732 = vpop.f32.mrf.mxu0
    %v5733 = vadd.f32 %v5720, %v5732
    %v5734 = vpop.f32.mrf.mxu0
    %5735 = vdwg.mxu0
    %5736 = vmatpush.bf16.msra.mxu0 %v3906
    %5737 = vmatpush.bf16.msra.mxu0 %v3902
    %5738 = vmatpush.bf16.msra.mxu0 %v3898
    %5739 = vmatpush.bf16.msra.mxu0 %v3894
    %5740 = vmatpush.bf16.msra.mxu0 %v3890
    %5741 = vmatpush.bf16.msra.mxu0 %v3886
    %5742 = vmatpush.bf16.msra.mxu0 %v3882
    %5743 = vmatpush.bf16.msra.mxu0 %v3878
    %5744 = vmatmul.bf16.gmra.mxu0 %v878
    %v5745 = vpop.f32.mrf.mxu0
    %v5746 = vadd.f32 %v5733, %v5745
    %v5747 = vpop.f32.mrf.mxu0
    %5748 = vdwg.mxu0
    %5749 = vmatpush.bf16.msra.mxu0 %v3938
    %5750 = vmatpush.bf16.msra.mxu0 %v3934
    %5751 = vmatpush.bf16.msra.mxu0 %v3930
    %5752 = vmatpush.bf16.msra.mxu0 %v3926
    %5753 = vmatpush.bf16.msra.mxu0 %v3922
    %5754 = vmatpush.bf16.msra.mxu0 %v3918
    %5755 = vmatpush.bf16.msra.mxu0 %v3914
    %5756 = vmatpush.bf16.msra.mxu0 %v3910
    %5757 = vmatmul.bf16.gmra.mxu0 %v879
    %v5758 = vpop.f32.mrf.mxu0
    %v5759 = vadd.f32 %v5746, %v5758
    %v5760 = vpop.f32.mrf.mxu0
    %5761 = vdwg.mxu0
    %5762 = vmatpush.bf16.msra.mxu0 %v3970
    %5763 = vmatpush.bf16.msra.mxu0 %v3966
    %5764 = vmatpush.bf16.msra.mxu0 %v3962
    %5765 = vmatpush.bf16.msra.mxu0 %v3958
    %5766 = vmatpush.bf16.msra.mxu0 %v3954
    %5767 = vmatpush.bf16.msra.mxu0 %v3950
    %5768 = vmatpush.bf16.msra.mxu0 %v3946
    %5769 = vmatpush.bf16.msra.mxu0 %v3942
    %5770 = vmatmul.bf16.gmra.mxu0 %v880
    %v5771 = vpop.f32.mrf.mxu0
    %v5772 = vadd.f32 %v5759, %v5771
    %v5773 = vpop.f32.mrf.mxu0
    %5774 = vdwg.mxu0
    %5775 = vmatpush.bf16.msra.mxu0 %v4002
    %5776 = vmatpush.bf16.msra.mxu0 %v3998
    %5777 = vmatpush.bf16.msra.mxu0 %v3994
    %5778 = vmatpush.bf16.msra.mxu0 %v3990
    %5779 = vmatpush.bf16.msra.mxu0 %v3986
    %5780 = vmatpush.bf16.msra.mxu0 %v3982
    %5781 = vmatpush.bf16.msra.mxu0 %v3978
    %5782 = vmatpush.bf16.msra.mxu0 %v3974
    %5783 = vmatmul.bf16.gmra.mxu0 %v881
    %v5784 = vpop.f32.mrf.mxu0
    %v5785 = vadd.f32 %v5772, %v5784
    %v5786 = vpop.f32.mrf.mxu0
    %5787 = vdwg.mxu0
    %5788 = vmatpush.bf16.msra.mxu0 %v4034
    %5789 = vmatpush.bf16.msra.mxu0 %v4030
    %5790 = vmatpush.bf16.msra.mxu0 %v4026
    %5791 = vmatpush.bf16.msra.mxu0 %v4022
    %5792 = vmatpush.bf16.msra.mxu0 %v4018
    %5793 = vmatpush.bf16.msra.mxu0 %v4014
    %5794 = vmatpush.bf16.msra.mxu0 %v4010
    %5795 = vmatpush.bf16.msra.mxu0 %v4006
    %5796 = vmatmul.bf16.gmra.mxu0 %v882
    %v5797 = vpop.f32.mrf.mxu0
    %v5798 = vadd.f32 %v5785, %v5797
    %v5799 = vpop.f32.mrf.mxu0
    %5800 = vdwg.mxu0
    %5801 = vmatpush.bf16.msra.mxu0 0
    %5802 = vmatpush.bf16.msra.mxu0 0
    %5803 = vmatpush.bf16.msra.mxu0 0
    %5804 = vmatpush.bf16.msra.mxu0 0
    %5805 = vmatpush.bf16.msra.mxu0 %v4050
    %5806 = vmatpush.bf16.msra.mxu0 %v4046
    %5807 = vmatpush.bf16.msra.mxu0 %v4042
    %5808 = vmatpush.bf16.msra.mxu0 %v4038
    %5809 = vmatmul.bf16.gmra.mxu0 %v4837
    %v5810 = vpop.f32.mrf.mxu0
    %v5811 = vadd.f32 %v5798, %v5810
    %v5812 = vpop.f32.mrf.mxu0
    %5813 = vdwg.mxu0
    %5814 = vmatpush.bf16.msra.mxu0 %v3299
    %5815 = vmatpush.bf16.msra.mxu0 %v3295
    %5816 = vmatpush.bf16.msra.mxu0 %v3291
    %5817 = vmatpush.bf16.msra.mxu0 %v3287
    %5818 = vmatpush.bf16.msra.mxu0 %v3283
    %5819 = vmatpush.bf16.msra.mxu0 %v3279
    %5820 = vmatpush.bf16.msra.mxu0 %v3275
    %5821 = vmatpush.bf16.msra.mxu0 %v3271
    %5822 = vmatmul.bf16.gmra.mxu0 %v843
    %v5823 = vpop.f32.mrf.mxu0
    %v5824 = vadd.f32 %v827, %v5823
    %v5825 = vpop.f32.mrf.mxu0
    %5826 = vdwg.mxu0
    %5827 = vmatpush.bf16.msra.mxu0 %v3331
    %5828 = vmatpush.bf16.msra.mxu0 %v3327
    %5829 = vmatpush.bf16.msra.mxu0 %v3323
    %5830 = vmatpush.bf16.msra.mxu0 %v3319
    %5831 = vmatpush.bf16.msra.mxu0 %v3315
    %5832 = vmatpush.bf16.msra.mxu0 %v3311
    %5833 = vmatpush.bf16.msra.mxu0 %v3307
    %5834 = vmatpush.bf16.msra.mxu0 %v3303
    %5835 = vmatmul.bf16.gmra.mxu0 %v844
    %v5836 = vpop.f32.mrf.mxu0
    %v5837 = vadd.f32 %v5824, %v5836
    %v5838 = vpop.f32.mrf.mxu0
    %5839 = vdwg.mxu0
    %5840 = vmatpush.bf16.msra.mxu0 %v3363
    %5841 = vmatpush.bf16.msra.mxu0 %v3359
    %5842 = vmatpush.bf16.msra.mxu0 %v3355
    %5843 = vmatpush.bf16.msra.mxu0 %v3351
    %5844 = vmatpush.bf16.msra.mxu0 %v3347
    %5845 = vmatpush.bf16.msra.mxu0 %v3343
    %5846 = vmatpush.bf16.msra.mxu0 %v3339
    %5847 = vmatpush.bf16.msra.mxu0 %v3335
    %5848 = vmatmul.bf16.gmra.mxu0 %v845
    %v5849 = vpop.f32.mrf.mxu0
    %v5850 = vadd.f32 %v5837, %v5849
    %v5851 = vpop.f32.mrf.mxu0
    %5852 = vdwg.mxu0
    %5853 = vmatpush.bf16.msra.mxu0 %v3395
    %5854 = vmatpush.bf16.msra.mxu0 %v3391
    %5855 = vmatpush.bf16.msra.mxu0 %v3387
    %5856 = vmatpush.bf16.msra.mxu0 %v3383
    %5857 = vmatpush.bf16.msra.mxu0 %v3379
    %5858 = vmatpush.bf16.msra.mxu0 %v3375
    %5859 = vmatpush.bf16.msra.mxu0 %v3371
    %5860 = vmatpush.bf16.msra.mxu0 %v3367
    %5861 = vmatmul.bf16.gmra.mxu0 %v846
    %v5862 = vpop.f32.mrf.mxu0
    %v5863 = vadd.f32 %v5850, %v5862
    %v5864 = vpop.f32.mrf.mxu0
    %5865 = vdwg.mxu0
    %5866 = vmatpush.bf16.msra.mxu0 %v3427
    %5867 = vmatpush.bf16.msra.mxu0 %v3423
    %5868 = vmatpush.bf16.msra.mxu0 %v3419
    %5869 = vmatpush.bf16.msra.mxu0 %v3415
    %5870 = vmatpush.bf16.msra.mxu0 %v3411
    %5871 = vmatpush.bf16.msra.mxu0 %v3407
    %5872 = vmatpush.bf16.msra.mxu0 %v3403
    %5873 = vmatpush.bf16.msra.mxu0 %v3399
    %5874 = vmatmul.bf16.gmra.mxu0 %v847
    %v5875 = vpop.f32.mrf.mxu0
    %v5876 = vadd.f32 %v5863, %v5875
    %v5877 = vpop.f32.mrf.mxu0
    %5878 = vdwg.mxu0
    %5879 = vmatpush.bf16.msra.mxu0 %v3459
    %5880 = vmatpush.bf16.msra.mxu0 %v3455
    %5881 = vmatpush.bf16.msra.mxu0 %v3451
    %5882 = vmatpush.bf16.msra.mxu0 %v3447
    %5883 = vmatpush.bf16.msra.mxu0 %v3443
    %5884 = vmatpush.bf16.msra.mxu0 %v3439
    %5885 = vmatpush.bf16.msra.mxu0 %v3435
    %5886 = vmatpush.bf16.msra.mxu0 %v3431
    %5887 = vmatmul.bf16.gmra.mxu0 %v848
    %v5888 = vpop.f32.mrf.mxu0
    %v5889 = vadd.f32 %v5876, %v5888
    %v5890 = vpop.f32.mrf.mxu0
    %5891 = vdwg.mxu0
    %5892 = vmatpush.bf16.msra.mxu0 %v3491
    %5893 = vmatpush.bf16.msra.mxu0 %v3487
    %5894 = vmatpush.bf16.msra.mxu0 %v3483
    %5895 = vmatpush.bf16.msra.mxu0 %v3479
    %5896 = vmatpush.bf16.msra.mxu0 %v3475
    %5897 = vmatpush.bf16.msra.mxu0 %v3471
    %5898 = vmatpush.bf16.msra.mxu0 %v3467
    %5899 = vmatpush.bf16.msra.mxu0 %v3463
    %5900 = vmatmul.bf16.gmra.mxu0 %v849
    %v5901 = vpop.f32.mrf.mxu0
    %v5902 = vadd.f32 %v5889, %v5901
    %v5903 = vpop.f32.mrf.mxu0
    %5904 = vdwg.mxu0
    %5905 = vmatpush.bf16.msra.mxu0 %v3523
    %5906 = vmatpush.bf16.msra.mxu0 %v3519
    %5907 = vmatpush.bf16.msra.mxu0 %v3515
    %5908 = vmatpush.bf16.msra.mxu0 %v3511
    %5909 = vmatpush.bf16.msra.mxu0 %v3507
    %5910 = vmatpush.bf16.msra.mxu0 %v3503
    %5911 = vmatpush.bf16.msra.mxu0 %v3499
    %5912 = vmatpush.bf16.msra.mxu0 %v3495
    %5913 = vmatmul.bf16.gmra.mxu0 %v850
    %v5914 = vpop.f32.mrf.mxu0
    %v5915 = vadd.f32 %v5902, %v5914
    %v5916 = vpop.f32.mrf.mxu0
    %5917 = vdwg.mxu0
    %5918 = vmatpush.bf16.msra.mxu0 %v3555
    %5919 = vmatpush.bf16.msra.mxu0 %v3551
    %5920 = vmatpush.bf16.msra.mxu0 %v3547
    %5921 = vmatpush.bf16.msra.mxu0 %v3543
    %5922 = vmatpush.bf16.msra.mxu0 %v3539
    %5923 = vmatpush.bf16.msra.mxu0 %v3535
    %5924 = vmatpush.bf16.msra.mxu0 %v3531
    %5925 = vmatpush.bf16.msra.mxu0 %v3527
    %5926 = vmatmul.bf16.gmra.mxu0 %v859
    %v5927 = vpop.f32.mrf.mxu0
    %v5928 = vadd.f32 %v5915, %v5927
    %v5929 = vpop.f32.mrf.mxu0
    %5930 = vdwg.mxu0
    %5931 = vmatpush.bf16.msra.mxu0 %v3587
    %5932 = vmatpush.bf16.msra.mxu0 %v3583
    %5933 = vmatpush.bf16.msra.mxu0 %v3579
    %5934 = vmatpush.bf16.msra.mxu0 %v3575
    %5935 = vmatpush.bf16.msra.mxu0 %v3571
    %5936 = vmatpush.bf16.msra.mxu0 %v3567
    %5937 = vmatpush.bf16.msra.mxu0 %v3563
    %5938 = vmatpush.bf16.msra.mxu0 %v3559
    %5939 = vmatmul.bf16.gmra.mxu0 %v860
    %v5940 = vpop.f32.mrf.mxu0
    %v5941 = vadd.f32 %v5928, %v5940
    %v5942 = vpop.f32.mrf.mxu0
    %5943 = vdwg.mxu0
    %5944 = vmatpush.bf16.msra.mxu0 %v3619
    %5945 = vmatpush.bf16.msra.mxu0 %v3615
    %5946 = vmatpush.bf16.msra.mxu0 %v3611
    %5947 = vmatpush.bf16.msra.mxu0 %v3607
    %5948 = vmatpush.bf16.msra.mxu0 %v3603
    %5949 = vmatpush.bf16.msra.mxu0 %v3599
    %5950 = vmatpush.bf16.msra.mxu0 %v3595
    %5951 = vmatpush.bf16.msra.mxu0 %v3591
    %5952 = vmatmul.bf16.gmra.mxu0 %v861
    %v5953 = vpop.f32.mrf.mxu0
    %v5954 = vadd.f32 %v5941, %v5953
    %v5955 = vpop.f32.mrf.mxu0
    %5956 = vdwg.mxu0
    %5957 = vmatpush.bf16.msra.mxu0 %v3651
    %5958 = vmatpush.bf16.msra.mxu0 %v3647
    %5959 = vmatpush.bf16.msra.mxu0 %v3643
    %5960 = vmatpush.bf16.msra.mxu0 %v3639
    %5961 = vmatpush.bf16.msra.mxu0 %v3635
    %5962 = vmatpush.bf16.msra.mxu0 %v3631
    %5963 = vmatpush.bf16.msra.mxu0 %v3627
    %5964 = vmatpush.bf16.msra.mxu0 %v3623
    %5965 = vmatmul.bf16.gmra.mxu0 %v862
    %v5966 = vpop.f32.mrf.mxu0
    %v5967 = vadd.f32 %v5954, %v5966
    %v5968 = vpop.f32.mrf.mxu0
    %5969 = vdwg.mxu0
    %5970 = vmatpush.bf16.msra.mxu0 %v3683
    %5971 = vmatpush.bf16.msra.mxu0 %v3679
    %5972 = vmatpush.bf16.msra.mxu0 %v3675
    %5973 = vmatpush.bf16.msra.mxu0 %v3671
    %5974 = vmatpush.bf16.msra.mxu0 %v3667
    %5975 = vmatpush.bf16.msra.mxu0 %v3663
    %5976 = vmatpush.bf16.msra.mxu0 %v3659
    %5977 = vmatpush.bf16.msra.mxu0 %v3655
    %5978 = vmatmul.bf16.gmra.mxu0 %v863
    %v5979 = vpop.f32.mrf.mxu0
    %v5980 = vadd.f32 %v5967, %v5979
    %v5981 = vpop.f32.mrf.mxu0
    %5982 = vdwg.mxu0
    %5983 = vmatpush.bf16.msra.mxu0 %v3715
    %5984 = vmatpush.bf16.msra.mxu0 %v3711
    %5985 = vmatpush.bf16.msra.mxu0 %v3707
    %5986 = vmatpush.bf16.msra.mxu0 %v3703
    %5987 = vmatpush.bf16.msra.mxu0 %v3699
    %5988 = vmatpush.bf16.msra.mxu0 %v3695
    %5989 = vmatpush.bf16.msra.mxu0 %v3691
    %5990 = vmatpush.bf16.msra.mxu0 %v3687
    %5991 = vmatmul.bf16.gmra.mxu0 %v864
    %v5992 = vpop.f32.mrf.mxu0
    %v5993 = vadd.f32 %v5980, %v5992
    %v5994 = vpop.f32.mrf.mxu0
    %5995 = vdwg.mxu0
    %5996 = vmatpush.bf16.msra.mxu0 %v3747
    %5997 = vmatpush.bf16.msra.mxu0 %v3743
    %5998 = vmatpush.bf16.msra.mxu0 %v3739
    %5999 = vmatpush.bf16.msra.mxu0 %v3735
    %6000 = vmatpush.bf16.msra.mxu0 %v3731
    %6001 = vmatpush.bf16.msra.mxu0 %v3727
    %6002 = vmatpush.bf16.msra.mxu0 %v3723
    %6003 = vmatpush.bf16.msra.mxu0 %v3719
    %6004 = vmatmul.bf16.gmra.mxu0 %v865
    %v6005 = vpop.f32.mrf.mxu0
    %v6006 = vadd.f32 %v5993, %v6005
    %v6007 = vpop.f32.mrf.mxu0
    %6008 = vdwg.mxu0
    %6009 = vmatpush.bf16.msra.mxu0 %v3779
    %6010 = vmatpush.bf16.msra.mxu0 %v3775
    %6011 = vmatpush.bf16.msra.mxu0 %v3771
    %6012 = vmatpush.bf16.msra.mxu0 %v3767
    %6013 = vmatpush.bf16.msra.mxu0 %v3763
    %6014 = vmatpush.bf16.msra.mxu0 %v3759
    %6015 = vmatpush.bf16.msra.mxu0 %v3755
    %6016 = vmatpush.bf16.msra.mxu0 %v3751
    %6017 = vmatmul.bf16.gmra.mxu0 %v866
    %v6018 = vpop.f32.mrf.mxu0
    %v6019 = vadd.f32 %v6006, %v6018
    %v6020 = vpop.f32.mrf.mxu0
    %6021 = vdwg.mxu0
    %6022 = vmatpush.bf16.msra.mxu0 %v3811
    %6023 = vmatpush.bf16.msra.mxu0 %v3807
    %6024 = vmatpush.bf16.msra.mxu0 %v3803
    %6025 = vmatpush.bf16.msra.mxu0 %v3799
    %6026 = vmatpush.bf16.msra.mxu0 %v3795
    %6027 = vmatpush.bf16.msra.mxu0 %v3791
    %6028 = vmatpush.bf16.msra.mxu0 %v3787
    %6029 = vmatpush.bf16.msra.mxu0 %v3783
    %6030 = vmatmul.bf16.gmra.mxu0 %v875
    %v6031 = vpop.f32.mrf.mxu0
    %v6032 = vadd.f32 %v6019, %v6031
    %v6033 = vpop.f32.mrf.mxu0
    %6034 = vdwg.mxu0
    %6035 = vmatpush.bf16.msra.mxu0 %v3843
    %6036 = vmatpush.bf16.msra.mxu0 %v3839
    %6037 = vmatpush.bf16.msra.mxu0 %v3835
    %6038 = vmatpush.bf16.msra.mxu0 %v3831
    %6039 = vmatpush.bf16.msra.mxu0 %v3827
    %6040 = vmatpush.bf16.msra.mxu0 %v3823
    %6041 = vmatpush.bf16.msra.mxu0 %v3819
    %6042 = vmatpush.bf16.msra.mxu0 %v3815
    %6043 = vmatmul.bf16.gmra.mxu0 %v876
    %v6044 = vpop.f32.mrf.mxu0
    %v6045 = vadd.f32 %v6032, %v6044
    %v6046 = vpop.f32.mrf.mxu0
    %6047 = vdwg.mxu0
    %6048 = vmatpush.bf16.msra.mxu0 %v3875
    %6049 = vmatpush.bf16.msra.mxu0 %v3871
    %6050 = vmatpush.bf16.msra.mxu0 %v3867
    %6051 = vmatpush.bf16.msra.mxu0 %v3863
    %6052 = vmatpush.bf16.msra.mxu0 %v3859
    %6053 = vmatpush.bf16.msra.mxu0 %v3855
    %6054 = vmatpush.bf16.msra.mxu0 %v3851
    %6055 = vmatpush.bf16.msra.mxu0 %v3847
    %6056 = vmatmul.bf16.gmra.mxu0 %v877
    %v6057 = vpop.f32.mrf.mxu0
    %v6058 = vadd.f32 %v6045, %v6057
    %v6059 = vpop.f32.mrf.mxu0
    %6060 = vdwg.mxu0
    %6061 = vmatpush.bf16.msra.mxu0 %v3907
    %6062 = vmatpush.bf16.msra.mxu0 %v3903
    %6063 = vmatpush.bf16.msra.mxu0 %v3899
    %6064 = vmatpush.bf16.msra.mxu0 %v3895
    %6065 = vmatpush.bf16.msra.mxu0 %v3891
    %6066 = vmatpush.bf16.msra.mxu0 %v3887
    %6067 = vmatpush.bf16.msra.mxu0 %v3883
    %6068 = vmatpush.bf16.msra.mxu0 %v3879
    %6069 = vmatmul.bf16.gmra.mxu0 %v878
    %v6070 = vpop.f32.mrf.mxu0
    %v6071 = vadd.f32 %v6058, %v6070
    %v6072 = vpop.f32.mrf.mxu0
    %6073 = vdwg.mxu0
    %6074 = vmatpush.bf16.msra.mxu0 %v3939
    %6075 = vmatpush.bf16.msra.mxu0 %v3935
    %6076 = vmatpush.bf16.msra.mxu0 %v3931
    %6077 = vmatpush.bf16.msra.mxu0 %v3927
    %6078 = vmatpush.bf16.msra.mxu0 %v3923
    %6079 = vmatpush.bf16.msra.mxu0 %v3919
    %6080 = vmatpush.bf16.msra.mxu0 %v3915
    %6081 = vmatpush.bf16.msra.mxu0 %v3911
    %6082 = vmatmul.bf16.gmra.mxu0 %v879
    %v6083 = vpop.f32.mrf.mxu0
    %v6084 = vadd.f32 %v6071, %v6083
    %v6085 = vpop.f32.mrf.mxu0
    %6086 = vdwg.mxu0
    %6087 = vmatpush.bf16.msra.mxu0 %v3971
    %6088 = vmatpush.bf16.msra.mxu0 %v3967
    %6089 = vmatpush.bf16.msra.mxu0 %v3963
    %6090 = vmatpush.bf16.msra.mxu0 %v3959
    %6091 = vmatpush.bf16.msra.mxu0 %v3955
    %6092 = vmatpush.bf16.msra.mxu0 %v3951
    %6093 = vmatpush.bf16.msra.mxu0 %v3947
    %6094 = vmatpush.bf16.msra.mxu0 %v3943
    %6095 = vmatmul.bf16.gmra.mxu0 %v880
    %v6096 = vpop.f32.mrf.mxu0
    %v6097 = vadd.f32 %v6084, %v6096
    %v6098 = vpop.f32.mrf.mxu0
    %6099 = vdwg.mxu0
    %6100 = vmatpush.bf16.msra.mxu0 %v4003
    %6101 = vmatpush.bf16.msra.mxu0 %v3999
    %6102 = vmatpush.bf16.msra.mxu0 %v3995
    %6103 = vmatpush.bf16.msra.mxu0 %v3991
    %6104 = vmatpush.bf16.msra.mxu0 %v3987
    %6105 = vmatpush.bf16.msra.mxu0 %v3983
    %6106 = vmatpush.bf16.msra.mxu0 %v3979
    %6107 = vmatpush.bf16.msra.mxu0 %v3975
    %6108 = vmatmul.bf16.gmra.mxu0 %v881
    %v6109 = vpop.f32.mrf.mxu0
    %v6110 = vadd.f32 %v6097, %v6109
    %v6111 = vpop.f32.mrf.mxu0
    %6112 = vdwg.mxu0
    %6113 = vmatpush.bf16.msra.mxu0 %v4035
    %6114 = vmatpush.bf16.msra.mxu0 %v4031
    %6115 = vmatpush.bf16.msra.mxu0 %v4027
    %6116 = vmatpush.bf16.msra.mxu0 %v4023
    %6117 = vmatpush.bf16.msra.mxu0 %v4019
    %6118 = vmatpush.bf16.msra.mxu0 %v4015
    %6119 = vmatpush.bf16.msra.mxu0 %v4011
    %6120 = vmatpush.bf16.msra.mxu0 %v4007
    %6121 = vmatmul.bf16.gmra.mxu0 %v882
    %v6122 = vpop.f32.mrf.mxu0
    %v6123 = vadd.f32 %v6110, %v6122
    %v6124 = vpop.f32.mrf.mxu0
    %6125 = vdwg.mxu0
    %6126 = vmatpush.bf16.msra.mxu0 0
    %6127 = vmatpush.bf16.msra.mxu0 0
    %6128 = vmatpush.bf16.msra.mxu0 0
    %6129 = vmatpush.bf16.msra.mxu0 0
    %6130 = vmatpush.bf16.msra.mxu0 %v4051
    %6131 = vmatpush.bf16.msra.mxu0 %v4047
    %6132 = vmatpush.bf16.msra.mxu0 %v4043
    %6133 = vmatpush.bf16.msra.mxu0 %v4039
    %6134 = vmatmul.bf16.gmra.mxu0 %v4837
    %v6135 = vpop.f32.mrf.mxu0
    %v6136 = vadd.f32 %v6123, %v6135
    %v6137 = vpop.f32.mrf.mxu0
    %6138 = vdwg.mxu0
    %v6139 = vmax.f32 %v5161, 0.0
    %v6140 = vmax.f32 %v5486, 0.0
    %v6141 = vmax.f32 %v5811, 0.0
    %v6142 = vmax.f32 %v6136, 0.0
    %v6143 = vpack.c.bf16 %v6139, %v6139
    %v6144 = vpack.c.bf16 %v6140, %v6140
    %v6145 = vpack.c.bf16 %v6141, %v6141
    %v6146 = vpack.c.bf16 %v6142, %v6142
    %v6147 = vld [vmem:[%s3] sm:$0xf]
    %v6148 = vld [vmem:[%s3 + $0x4] sm:$0xf]
    %v6149 = vld [vmem:[%s3 + $0x8] sm:$0xf]
    %v6150 = vld [vmem:[%s3 + $0xc] sm:$0xf]
    %v6151 = vld [vmem:[%s3 + $0x10] sm:$0xf]
    %v6152 = vld [vmem:[%s3 + $0x14] sm:$0xf]
    %v6153 = vld [vmem:[%s3 + $0x18] sm:$0xf]
    %v6154 = vld [vmem:[%s3 + $0x1c] sm:$0xf]
    %v6155 = vld [vmem:[%s3 + $0x20] sm:$0xf]
    %v6156 = vld [vmem:[%s3 + $0x24] sm:$0xf]
    %v6157 = vld [vmem:[%s3 + $0x28] sm:$0xf]
    %v6158 = vld [vmem:[%s3 + $0x2c] sm:$0xf]
    %v6159 = vld [vmem:[%s3 + $0x30] sm:$0xf]
    %v6160 = vld [vmem:[%s3 + $0x34] sm:$0xf]
    %v6161 = vld [vmem:[%s3 + $0x38] sm:$0xf]
    %v6162 = vld [vmem:[%s3 + $0x3c] sm:$0xf]
    %v6163 = vld [vmem:[%s3 + $0x40] sm:$0xf]
    %v6164 = vld [vmem:[%s3 + $0x44] sm:$0xf]
    %v6165 = vld [vmem:[%s3 + $0x48] sm:$0xf]
    %v6166 = vld [vmem:[%s3 + $0x4c] sm:$0xf]
    %v6167 = vld [vmem:[%s3 + $0x50] sm:$0xf]
    %v6168 = vld [vmem:[%s3 + $0x54] sm:$0xf]
    %v6169 = vld [vmem:[%s3 + $0x58] sm:$0xf]
    %v6170 = vld [vmem:[%s3 + $0x5c] sm:$0xf]
    %v6171 = vld [vmem:[%s3 + $0x60] sm:$0xf]
    %v6172 = vld [vmem:[%s3 + $0x64] sm:$0xf]
    %v6173 = vld [vmem:[%s3 + $0x68] sm:$0xf]
    %v6174 = vld [vmem:[%s3 + $0x6c] sm:$0xf]
    %v6175 = vld [vmem:[%s3 + $0x70] sm:$0xf]
    %v6176 = vld [vmem:[%s3 + $0x74] sm:$0xf]
    %v6177 = vld [vmem:[%s3 + $0x78] sm:$0xf]
    %v6178 = vld [vmem:[%s3 + $0x7c] sm:$0xf]
    %v6179 = vld [vmem:[%s3 + $0x80] sm:$0xf]
    %v6180 = vld [vmem:[%s3 + $0x84] sm:$0xf]
    %v6181 = vld [vmem:[%s3 + $0x88] sm:$0xf]
    %v6182 = vld [vmem:[%s3 + $0x8c] sm:$0xf]
    %v6183 = vld [vmem:[%s3 + $0x90] sm:$0xf]
    %v6184 = vld [vmem:[%s3 + $0x94] sm:$0xf]
    %v6185 = vld [vmem:[%s3 + $0x98] sm:$0xf]
    %v6186 = vld [vmem:[%s3 + $0x9c] sm:$0xf]
    %v6187 = vld [vmem:[%s3 + $0xa0] sm:$0xf]
    %v6188 = vld [vmem:[%s3 + $0xa4] sm:$0xf]
    %v6189 = vld [vmem:[%s3 + $0xa8] sm:$0xf]
    %v6190 = vld [vmem:[%s3 + $0xac] sm:$0xf]
    %v6191 = vld [vmem:[%s3 + $0xb0] sm:$0xf]
    %v6192 = vld [vmem:[%s3 + $0xb4] sm:$0xf]
    %v6193 = vld [vmem:[%s3 + $0xb8] sm:$0xf]
    %v6194 = vld [vmem:[%s3 + $0xbc] sm:$0xf]
    %v6195 = vld [vmem:[%s3 + $0xc0] sm:$0xf]
    %v6196 = vld [vmem:[%s3 + $0xc4] sm:$0xf]
    %v6197 = vld [vmem:[%s3 + $0xc8] sm:$0xf]
    %v6198 = vld [vmem:[%s3 + $0xcc] sm:$0xf]
    %v6199 = vld [vmem:[%s3 + $0xd0] sm:$0xf]
    %v6200 = vld [vmem:[%s3 + $0xd4] sm:$0xf]
    %v6201 = vld [vmem:[%s3 + $0xd8] sm:$0xf]
    %v6202 = vld [vmem:[%s3 + $0xdc] sm:$0xf]
    %v6203 = vld [vmem:[%s3 + $0xe0] sm:$0xf]
    %v6204 = vld [vmem:[%s3 + $0xe4] sm:$0xf]
    %v6205 = vld [vmem:[%s3 + $0xe8] sm:$0xf]
    %v6206 = vld [vmem:[%s3 + $0xec] sm:$0xf]
    %v6207 = vld [vmem:[%s3 + $0xf0] sm:$0xf]
    %v6208 = vld [vmem:[%s3 + $0xf4] sm:$0xf]
    %v6209 = vld [vmem:[%s3 + $0xf8] sm:$0xf]
    %v6210 = vld [vmem:[%s3 + $0xfc] sm:$0xf]
    %v6211 = vld [vmem:[%s4] sm:$0x1]
    %v6213 = vperm.slane %v6211, 0
    %v6279 = vunpack.c.l.b16 %v6147
    %v6280 = vunpack.c.l.b16 %v6148
    %v6281 = vunpack.c.l.b16 %v6149
    %v6282 = vunpack.c.l.b16 %v6150
    %v6283 = vunpack.c.l.b16 %v6151
    %v6284 = vunpack.c.l.b16 %v6152
    %v6285 = vunpack.c.l.b16 %v6153
    %v6286 = vunpack.c.l.b16 %v6154
    %v6287 = vunpack.c.l.b16 %v6155
    %v6288 = vunpack.c.l.b16 %v6156
    %v6289 = vunpack.c.l.b16 %v6157
    %v6290 = vunpack.c.l.b16 %v6158
    %v6291 = vunpack.c.l.b16 %v6159
    %v6292 = vunpack.c.l.b16 %v6160
    %v6293 = vunpack.c.l.b16 %v6161
    %v6294 = vunpack.c.l.b16 %v6162
    %v6295 = vunpack.c.l.b16 %v6163
    %v6296 = vunpack.c.l.b16 %v6164
    %v6297 = vunpack.c.l.b16 %v6165
    %v6298 = vunpack.c.l.b16 %v6166
    %v6299 = vunpack.c.l.b16 %v6167
    %v6300 = vunpack.c.l.b16 %v6168
    %v6301 = vunpack.c.l.b16 %v6169
    %v6302 = vunpack.c.l.b16 %v6170
    %v6303 = vunpack.c.l.b16 %v6171
    %v6304 = vunpack.c.l.b16 %v6172
    %v6305 = vunpack.c.l.b16 %v6173
    %v6306 = vunpack.c.l.b16 %v6174
    %v6307 = vunpack.c.l.b16 %v6175
    %v6308 = vunpack.c.l.b16 %v6176
    %v6309 = vunpack.c.l.b16 %v6177
    %v6310 = vunpack.c.l.b16 %v6178
    %v6311 = vunpack.c.l.b16 %v6179
    %v6312 = vunpack.c.l.b16 %v6180
    %v6313 = vunpack.c.l.b16 %v6181
    %v6314 = vunpack.c.l.b16 %v6182
    %v6315 = vunpack.c.l.b16 %v6183
    %v6316 = vunpack.c.l.b16 %v6184
    %v6317 = vunpack.c.l.b16 %v6185
    %v6318 = vunpack.c.l.b16 %v6186
    %v6319 = vunpack.c.l.b16 %v6187
    %v6320 = vunpack.c.l.b16 %v6188
    %v6321 = vunpack.c.l.b16 %v6189
    %v6322 = vunpack.c.l.b16 %v6190
    %v6323 = vunpack.c.l.b16 %v6191
    %v6324 = vunpack.c.l.b16 %v6192
    %v6325 = vunpack.c.l.b16 %v6193
    %v6326 = vunpack.c.l.b16 %v6194
    %v6327 = vunpack.c.l.b16 %v6195
    %v6328 = vunpack.c.l.b16 %v6196
    %v6329 = vunpack.c.l.b16 %v6197
    %v6330 = vunpack.c.l.b16 %v6198
    %v6331 = vunpack.c.l.b16 %v6199
    %v6332 = vunpack.c.l.b16 %v6200
    %v6333 = vunpack.c.l.b16 %v6201
    %v6334 = vunpack.c.l.b16 %v6202
    %v6335 = vunpack.c.l.b16 %v6203
    %v6336 = vunpack.c.l.b16 %v6204
    %v6337 = vunpack.c.l.b16 %v6205
    %v6338 = vunpack.c.l.b16 %v6206
    %v6339 = vunpack.c.l.b16 %v6207
    %v6340 = vunpack.c.l.b16 %v6208
    %v6341 = vunpack.c.l.b16 %v6209
    %v6342 = vunpack.c.l.b16 %v6210
    %v6343 = vpack.c.b16 %v6280, %v6279
    %v6344 = vpack.c.b16 %v6282, %v6281
    %v6345 = vpack.c.b16 %v6284, %v6283
    %v6346 = vpack.c.b16 %v6286, %v6285
    %v6347 = vpack.c.b16 %v6288, %v6287
    %v6348 = vpack.c.b16 %v6290, %v6289
    %v6349 = vpack.c.b16 %v6292, %v6291
    %v6350 = vpack.c.b16 %v6294, %v6293
    %v6351 = vpack.c.b16 %v6296, %v6295
    %v6352 = vpack.c.b16 %v6298, %v6297
    %v6353 = vpack.c.b16 %v6300, %v6299
    %v6354 = vpack.c.b16 %v6302, %v6301
    %v6355 = vpack.c.b16 %v6304, %v6303
    %v6356 = vpack.c.b16 %v6306, %v6305
    %v6357 = vpack.c.b16 %v6308, %v6307
    %v6358 = vpack.c.b16 %v6310, %v6309
    %v6359 = vpack.c.b16 %v6312, %v6311
    %v6360 = vpack.c.b16 %v6314, %v6313
    %v6361 = vpack.c.b16 %v6316, %v6315
    %v6362 = vpack.c.b16 %v6318, %v6317
    %v6363 = vpack.c.b16 %v6320, %v6319
    %v6364 = vpack.c.b16 %v6322, %v6321
    %v6365 = vpack.c.b16 %v6324, %v6323
    %v6366 = vpack.c.b16 %v6326, %v6325
    %v6367 = vpack.c.b16 %v6328, %v6327
    %v6368 = vpack.c.b16 %v6330, %v6329
    %v6369 = vpack.c.b16 %v6332, %v6331
    %v6370 = vpack.c.b16 %v6334, %v6333
    %v6371 = vpack.c.b16 %v6336, %v6335
    %v6372 = vpack.c.b16 %v6338, %v6337
    %v6373 = vpack.c.b16 %v6340, %v6339
    %v6374 = vpack.c.b16 %v6342, %v6341
    %6407 = vmatpush.bf16.msra.mxu0 %v6350
    %6408 = vmatpush.bf16.msra.mxu0 %v6349
    %6409 = vmatpush.bf16.msra.mxu0 %v6348
    %6410 = vmatpush.bf16.msra.mxu0 %v6347
    %6411 = vmatpush.bf16.msra.mxu0 %v6346
    %6412 = vmatpush.bf16.msra.mxu0 %v6345
    %6413 = vmatpush.bf16.msra.mxu0 %v6344
    %6414 = vmatpush.bf16.msra.mxu0 %v6343
    %6415 = vmatmul.bf16.gmra.mxu0 %v6143
    %v6416 = vpop.f32.mrf.mxu0
    %v6417 = vadd.f32 %v6213, %v6416
    %v6418 = vpop.f32.mrf.mxu0
    %6419 = vdwg.mxu0
    %6420 = vmatpush.bf16.msra.mxu0 %v6358
    %6421 = vmatpush.bf16.msra.mxu0 %v6357
    %6422 = vmatpush.bf16.msra.mxu0 %v6356
    %6423 = vmatpush.bf16.msra.mxu0 %v6355
    %6424 = vmatpush.bf16.msra.mxu0 %v6354
    %6425 = vmatpush.bf16.msra.mxu0 %v6353
    %6426 = vmatpush.bf16.msra.mxu0 %v6352
    %6427 = vmatpush.bf16.msra.mxu0 %v6351
    %6428 = vmatmul.bf16.gmra.mxu0 %v6144
    %v6429 = vpop.f32.mrf.mxu0
    %v6430 = vadd.f32 %v6417, %v6429
    %v6431 = vpop.f32.mrf.mxu0
    %6432 = vdwg.mxu0
    %6433 = vmatpush.bf16.msra.mxu0 %v6366
    %6434 = vmatpush.bf16.msra.mxu0 %v6365
    %6435 = vmatpush.bf16.msra.mxu0 %v6364
    %6436 = vmatpush.bf16.msra.mxu0 %v6363
    %6437 = vmatpush.bf16.msra.mxu0 %v6362
    %6438 = vmatpush.bf16.msra.mxu0 %v6361
    %6439 = vmatpush.bf16.msra.mxu0 %v6360
    %6440 = vmatpush.bf16.msra.mxu0 %v6359
    %6441 = vmatmul.bf16.gmra.mxu0 %v6145
    %v6442 = vpop.f32.mrf.mxu0
    %v6443 = vadd.f32 %v6430, %v6442
    %v6444 = vpop.f32.mrf.mxu0
    %6445 = vdwg.mxu0
    %6446 = vmatpush.bf16.msra.mxu0 %v6374
    %6447 = vmatpush.bf16.msra.mxu0 %v6373
    %6448 = vmatpush.bf16.msra.mxu0 %v6372
    %6449 = vmatpush.bf16.msra.mxu0 %v6371
    %6450 = vmatpush.bf16.msra.mxu0 %v6370
    %6451 = vmatpush.bf16.msra.mxu0 %v6369
    %6452 = vmatpush.bf16.msra.mxu0 %v6368
    %6453 = vmatpush.bf16.msra.mxu0 %v6367
    %6454 = vmatmul.bf16.gmra.mxu0 %v6146
    %v6455 = vpop.f32.mrf.mxu0
    %v6456 = vadd.f32 %v6443, %v6455
    %v6457 = vpop.f32.mrf.mxu0
    %6458 = vdwg.mxu0
    %6459 = vst [vmem:[#allocation2] sm:$0xff] %v6456
    // Predicated region
    $region22: #{conv_q_forward.7} parent=1 // pred_check
      _
    $region23: #{conv_q_forward.7} parent=1 // pred_check_branch
      %6461 = sbr.rel (0) target = $region25
    $region24: #{conv_q_forward.7} parent=1 // pred_region
      %6463 = vsyncadd [#allocation3], 96
      %s6464 = sshll.u32 [#allocation2], 4
      %s6465 = int_to_ptr.vmem [resolvable:$true] %s6464
      %s6466 = sshll.u32 %s5, 4
      %s6467 = int_to_ptr.hbm [resolvable:$true] %s6466
      %6472 = dma.vmem_to_hbm [thread:$0]  %s6465, 32, %s6467, [#allocation3], 32, 32, 2
    $region25: #{conv_q_forward.7} parent=1 // pred_fallthru
      _
    // Predicated region
    $region26: #{conv_q_forward.7} parent=1 // pred_check
      _
    $region27: #{conv_q_forward.7} parent=1 // pred_check_branch
      %6474 = sbr.rel (0) target = $region29
    $region28: #{conv_q_forward.7} parent=1 // pred_region
      %6476 = dma.done [#allocation3], 128
    $region29: #{conv_q_forward.7} parent=1 // pred_fallthru
      _
    %6477 = vsyncpa [#allocation3], 1

</llo_original>
